<compile_context>
chip_gen: v7x
topology: tpu7x:2x2x1
jax: 0.10.0
libtpu: 0.0.40
codegen_flags: <defaults>
</compile_context>

<pallas_src>
import jax
import jax.numpy as jnp
from jax import lax
from jax.experimental import pallas as pl
from jax.experimental.pallas import tpu as pltpu

BN_EPS = 1e-5


# ----------------------------------------------------------------------------
# One proj head: 1x1 conv -> 3x3 depthwise (pad=1, groups=C) -> 1x1 conv (+BN folded)
# ----------------------------------------------------------------------------
def _proj_head(x_ref, w1_ref, b1_ref, wd_ref, bd_ref, w2_ref, b2_ref, o_ref, yp_ref):
    bb, H, W, Cout = o_ref.shape
    Cin = x_ref.shape[3]
    Wpad = yp_ref.shape[2]

    # ---- 1x1 conv #1 on the unpadded rows (bf16 MXU operands, f32 accumulate) ----
    x = x_ref[...].reshape(bb * H * W, Cin).astype(jnp.bfloat16)
    y0 = jnp.dot(x, w1_ref[...], preferred_element_type=jnp.float32)
    y0 = y0 + b1_ref[...]                               # (bb*H*W, Cout)

    # ---- zero ONLY the halo of the padded scratch (not the whole buffer) ----
    # The 9 tap windows below only ever read rows 0..H+1 and cols 0..W+1; the
    # interior (rows 1..H, cols 1..W) is fully overwritten by the scatter, so
    # zeroing the two halo rows + two halo columns is sufficient.  Done every
    # grid step so correctness does not depend on scratch persistence
    # (robust under CORE_PARALLEL sharding on v7x).
    yp_ref[:, 0:1, :, :] = jnp.zeros((bb, 1, Wpad, Cout), jnp.float32)             # top row
    yp_ref[:, H + 1:H + 2, :, :] = jnp.zeros((bb, 1, Wpad, Cout), jnp.float32)     # bottom row
    yp_ref[:, 1:H + 1, 0:1, :] = jnp.zeros((bb, H, 1, Cout), jnp.float32)          # left col
    yp_ref[:, 1:H + 1, W + 1:W + 2, :] = jnp.zeros((bb, H, 1, Cout), jnp.float32)  # right col

    # ---- scatter the *biased* conv1 output into the interior (PyTorch semantics:
    #      the depthwise conv's padding=1 pads the biased conv1 output with zeros) ----
    yp_ref[:, 1:H + 1, 1:W + 1, :] = y0.reshape(bb, H, W, Cout)

    # ---- 3x3 depthwise conv: 9 shifted MACs.  Each tap window is read straight
    #      from the scratch REF inside the loop (slices of a ref are free address
    #      math); only `acc` stays live -> no vreg spills even at C=256. ----
    wd = wd_ref[...]                                    # (9, Cout)
    acc = jnp.broadcast_to(bd_ref[...].reshape(1, 1, 1, Cout), (bb, H, W, Cout))
    for dh in range(3):
        for dw in range(3):
            acc = acc + (yp_ref[:, dh:dh + H, dw:dw + W, :]
                         * wd[3 * dh + dw].reshape(1, 1, 1, Cout))

    # ---- 1x1 conv #2 (BatchNorm pre-folded into w2/b2 by the wrapper) ----
    z = jnp.dot(acc.reshape(bb * H * W, Cout).astype(jnp.bfloat16), w2_ref[...],
                preferred_element_type=jnp.float32)
    z = z + b2_ref[...]
    o_ref[...] = z.reshape(bb, H, W, Cout).astype(o_ref.dtype)


def _dual_proj_kernel(x1_ref, x2_ref,
                      w1a, b1a, wda, bda, w2a, b2a,
                      w1b, b1b, wdb, bdb, w2b, b2b,
                      o1_ref, o2_ref, yp1_ref, yp2_ref):
    _proj_head(x1_ref, w1a, b1a, wda, bda, w2a, b2a, o1_ref, yp1_ref)
    _proj_head(x2_ref, w1b, b1b, wdb, bdb, w2b, b2b, o2_ref, yp2_ref)


# ----------------------------------------------------------------------------
# Wrapper: one pallas_call for both proj heads
# ----------------------------------------------------------------------------
def dual_proj_pallas(x1_nhwc, x2_nhwc, kp1, kp2, *, nb=1, core_parallel=False):
    """x1_nhwc: (B,H,W,Cin1), x2_nhwc: (B,H,W,Cin2) float32 -> two NHWC float32 outputs."""
    B, H, W, Cin1 = x1_nhwc.shape
    Cin2 = x2_nhwc.shape[3]
    C1 = kp1["w1"].shape[1]
    C2 = kp2["w1"].shape[1]

    assert B % nb == 0
    bb = B // nb
    Hp = H + 2
    Wpad = ((W + 2 + 7) // 8) * 8                       # 8-aligned padded W (sublane) axis

    param_keys = ("w1", "b1", "wd", "bd", "w2", "b2")
    params = [kp1[k] for k in param_keys] + [kp2[k] for k in param_keys]

    xmap = lambda i: (i, 0, 0, 0)
    cmap = lambda i: (0, 0)

    in_specs = [pl.BlockSpec((bb, H, W, Cin1), xmap),
                pl.BlockSpec((bb, H, W, Cin2), xmap)]
    in_specs += [pl.BlockSpec(p.shape, cmap) for p in params]

    out_shape = (jax.ShapeDtypeStruct((B, H, W, C1), jnp.float32),
                 jax.ShapeDtypeStruct((B, H, W, C2), jnp.float32))
    out_specs = (pl.BlockSpec((bb, H, W, C1), xmap),
                 pl.BlockSpec((bb, H, W, C2), xmap))

    # v7x (2 TCs): CORE_PARALLEL actually shards the batch grid axis across cores.
    # v5e/v6e (1 TC): single grid step, "arbitrary" (plain "parallel" is a no-op).
    if core_parallel and nb > 1:
        semantics = (pltpu.CORE_PARALLEL,)
    else:
        semantics = ("arbitrary",)

    flops = 2 * B * H * W * (Cin1 * C1 + 9 * C1 + C1 * C1 +
                             Cin2 * C2 + 9 * C2 + C2 * C2)
    bytes_accessed = (sum(int(a.size) * a.dtype.itemsize for a in (x1_nhwc, x2_nhwc)) +
                      sum(int(p.size) * p.dtype.itemsize for p in params) +
                      4 * B * H * W * (C1 + C2))

    # TODO(synk): at real backbone resolutions (e.g. 56x56) add an H-blocking grid
    # axis (1-row in-kernel halo) and set vmem_limit_bytes explicitly so the f32
    # scratch + double-buffered I/O fit v7x's smaller 64 MiB VMEM.
    return pl.pallas_call(
        _dual_proj_kernel,
        out_shape=out_shape,
        grid_spec=pltpu.PrefetchScalarGridSpec(
            num_scalar_prefetch=0,
            grid=(nb,),
            in_specs=in_specs,
            out_specs=out_specs,
            scratch_shapes=[pltpu.VMEM((bb, Hp, Wpad, C1), jnp.float32),
                            pltpu.VMEM((bb, Hp, Wpad, C2), jnp.float32)],
        ),
        compiler_params=pltpu.CompilerParams(dimension_semantics=semantics),
        cost_estimate=pl.CostEstimate(flops=flops, transcendentals=0,
                                      bytes_accessed=bytes_accessed),
    )(x1_nhwc, x2_nhwc, *params)


# ----------------------------------------------------------------------------
# Deterministic parameter init (synthetic; shapes follow the module __init__)
# ----------------------------------------------------------------------------
def init_proj_params(key, cin, cout):
    ks = jax.random.split(key, 10)
    w1 = 0.05 * jax.random.normal(ks[0], (cin, cout), jnp.float32)      # (Cin, Cout)
    b1 = 0.05 * jax.random.normal(ks[1], (1, cout), jnp.float32)
    wd = 0.05 * jax.random.normal(ks[2], (9, cout), jnp.float32)        # 3x3 depthwise taps
    bd = 0.05 * jax.random.normal(ks[3], (1, cout), jnp.float32)
    w2 = 0.05 * jax.random.normal(ks[4], (cout, cout), jnp.float32)
    b2 = 0.05 * jax.random.normal(ks[5], (1, cout), jnp.float32)
    gamma = 1.0 + 0.1 * jax.random.normal(ks[6], (cout,), jnp.float32)
    beta = 0.1 * jax.random.normal(ks[7], (cout,), jnp.float32)
    mean = 0.1 * jax.random.normal(ks[8], (cout,), jnp.float32)
    var = jnp.abs(jax.random.normal(ks[9], (cout,), jnp.float32)) + 0.5
    return dict(w1=w1, b1=b1, wd=wd, bd=bd, w2=w2, b2=b2,
                gamma=gamma, beta=beta, mean=mean, var=var)


def prepare_kernel_params(p):
    """Fold eval-mode BatchNorm into the second 1x1 conv and cast matmul weights to bf16."""
    scale = p["gamma"] / jnp.sqrt(p["var"] + BN_EPS)            # (Cout,)
    shift = p["beta"] - p["mean"] * scale
    w2f = (p["w2"] * scale[None, :]).astype(jnp.bfloat16)        # column-wise scale
    b2f = (p["b2"] * scale[None, :] + shift[None, :]).astype(jnp.float32)
    return dict(w1=p["w1"].astype(jnp.bfloat16), b1=p["b1"],
                wd=p["wd"], bd=p["bd"], w2=w2f, b2=b2f)


# ----------------------------------------------------------------------------
# Full-module forward (matches Feature_Extractor.forward semantics)
# ----------------------------------------------------------------------------
def make_forward(nb=1, core_parallel=False):
    @jax.jit
    def feature_extractor_forward(x, x_ir, x1, x2, x3, kp1, kp2):
        # TODO(synk): self.irback(x) / self.lmback(x) backbones are external modules;
        # their outputs (x_ir, x1, x2, x3) are passed in as precomputed stand-ins.
        del x  # nominal module input; only consumed by the (absent) backbones
        y1, y2 = dual_proj_pallas(jnp.transpose(x1, (0, 2, 3, 1)),   # NCHW -> NHWC
                                  jnp.transpose(x2, (0, 2, 3, 1)),
                                  kp1, kp2, nb=nb, core_parallel=core_parallel)
        # NCHW only at the module boundary (PyTorch convention); internals stay NHWC.
        y1 = jnp.transpose(y1, (0, 3, 1, 2))
        y2 = jnp.transpose(y2, (0, 3, 1, 2))
        return x_ir, [y1, y2, x3]
    return feature_extractor_forward


def _num_tensorcores():
    """Best-effort query of TensorCores per chip (v7x has 2). Defaults to 1."""
    try:
        info = pltpu.get_tpu_info()
        for name in ("num_tensorcores", "tensorcore_count", "num_cores",
                     "cores_per_chip", "num_cores_per_chip"):
            n = getattr(info, name, None)
            if isinstance(n, int) and n >= 1:
                return n
    except Exception:
        pass
    return 1


# ----------------------------------------------------------------------------
# Pure-JAX reference (NCHW, PyTorch conv semantics) for validation
# ----------------------------------------------------------------------------
def ref_proj_nchw(x, p):
    cin = x.shape[1]
    cout = p["w1"].shape[1]
    dn = ("NCHW", "OIHW", "NCHW")
    w1_oihw = p["w1"].T.reshape(cout, cin, 1, 1)
    y = lax.conv_general_dilated(x, w1_oihw, (1, 1), "VALID", dimension_numbers=dn,
                                 precision=lax.Precision.HIGHEST)
    y = y + p["b1"].reshape(1, cout, 1, 1)
    wd_oihw = jnp.transpose(p["wd"].reshape(3, 3, cout), (2, 0, 1)).reshape(cout, 1, 3, 3)
    y = lax.conv_general_dilated(y, wd_oihw, (1, 1), ((1, 1), (1, 1)),
                                 dimension_numbers=dn, feature_group_count=cout,
                                 precision=lax.Precision.HIGHEST)
    y = y + p["bd"].reshape(1, cout, 1, 1)
    w2_oihw = p["w2"].T.reshape(cout, cout, 1, 1)
    y = lax.conv_general_dilated(y, w2_oihw, (1, 1), "VALID", dimension_numbers=dn,
                                 precision=lax.Precision.HIGHEST)
    y = y + p["b2"].reshape(1, cout, 1, 1)
    y = (y - p["mean"].reshape(1, cout, 1, 1)) / jnp.sqrt(p["var"].reshape(1, cout, 1, 1) + BN_EPS)
    y = y * p["gamma"].reshape(1, cout, 1, 1) + p["beta"].reshape(1, cout, 1, 1)
    return y


if __name__ == "__main__":
    key = jax.random.PRNGKey(0)
    kx, kir, k1, k2, k3, kpk1, kpk2 = jax.random.split(key, 7)

    B = 2
    # Nominal module input (would feed the backbones):
    x = jax.random.normal(kx, (B, 3, 16, 16), jnp.float32)
    # Backbone feature stand-ins (see TODO above), NCHW like PyTorch:
    x_ir = jax.random.normal(kir, (B, 7), jnp.float32)           # iresnet50(num_features=7)
    x1 = jax.random.normal(k1, (B, 64, 8, 8), jnp.float32)       # MobileFaceNet stage 1 (64 ch)
    x2 = jax.random.normal(k2, (B, 128, 8, 8), jnp.float32)      # MobileFaceNet stage 2 (128 ch)
    x3 = jax.random.normal(k3, (B, 136), jnp.float32)            # MobileFaceNet final output

    p1 = init_proj_params(kpk1, 64, 128)    # proj1: dim1 = [64, 128]
    p2 = init_proj_params(kpk2, 128, 256)   # proj2: dim2 = [128, 256]
    kparams1 = prepare_kernel_params(p1)    # BN folded + bf16 matmul weights
    kparams2 = prepare_kernel_params(p2)

    # Generation-dependent grid: single step on 1-TC chips (v5e/v6e); 2 batch
    # blocks sharded across cores with CORE_PARALLEL on 2-TC chips (v7x).
    n_tc = _num_tensorcores()
    nb = 2 if (n_tc >= 2 and B >= 2 and B % 2 == 0) else 1
    fwd = make_forward(nb=nb, core_parallel=(nb == 2))
    try:
        out_ir, out_lm = fwd(x, x_ir, x1, x2, x3, kparams1, kparams2)
        jax.block_until_ready(out_lm)
    except Exception:
        # Safe fallback: single grid step, no cross-core sharding.
        fwd = make_forward(nb=1, core_parallel=False)
        out_ir, out_lm = fwd(x, x_ir, x1, x2, x3, kparams1, kparams2)
        jax.block_until_ready(out_lm)

    # Validate the Pallas proj heads against a pure-JAX reference.
    ref1 = ref_proj_nchw(x1, p1)
    ref2 = ref_proj_nchw(x2, p2)
    assert out_lm[0].shape == (B, 128, 8, 8) and out_lm[1].shape == (B, 256, 8, 8)
    assert jnp.allclose(out_lm[0], ref1, atol=1e-2, rtol=1e-2)
    assert jnp.allclose(out_lm[1], ref2, atol=1e-2, rtol=1e-2)
    assert jnp.array_equal(out_ir, x_ir) and jnp.array_equal(out_lm[2], x3)

    print("KERNEL_OK")
</pallas_src>

<mosaic_0001>
module attributes {stable_mosaic.version = 11 : i64} {
  func.func @_dual_proj_kernel(%arg0: i32, %arg1: memref<2x8x8x64xf32, #tpu.memory_space<vmem>>, %arg2: memref<2x8x8x128xf32, #tpu.memory_space<vmem>>, %arg3: memref<64x128xbf16, #tpu.memory_space<vmem>>, %arg4: memref<1x128xf32, #tpu.memory_space<vmem>>, %arg5: memref<9x128xf32, #tpu.memory_space<vmem>>, %arg6: memref<1x128xf32, #tpu.memory_space<vmem>>, %arg7: memref<128x128xbf16, #tpu.memory_space<vmem>>, %arg8: memref<1x128xf32, #tpu.memory_space<vmem>>, %arg9: memref<128x256xbf16, #tpu.memory_space<vmem>>, %arg10: memref<1x256xf32, #tpu.memory_space<vmem>>, %arg11: memref<9x256xf32, #tpu.memory_space<vmem>>, %arg12: memref<1x256xf32, #tpu.memory_space<vmem>>, %arg13: memref<256x256xbf16, #tpu.memory_space<vmem>>, %arg14: memref<1x256xf32, #tpu.memory_space<vmem>>, %arg15: memref<2x8x8x128xf32, #tpu.memory_space<vmem>>, %arg16: memref<2x8x8x256xf32, #tpu.memory_space<vmem>>, %arg17: memref<2x10x16x128xf32, #tpu.memory_space<vmem>>, %arg18: memref<2x10x16x256xf32, #tpu.memory_space<vmem>>) attributes {dimension_semantics = [#tpu.dimension_semantics<arbitrary>], iteration_bounds = array<i64: 1>, scalar_prefetch = 0 : i64, scratch_operands = 2 : i64, tpu.core_type = #tpu.core_type<tc>, window_params = [{transform_indices = @transform_0, window_bounds = array<i64: 2, 8, 8, 64>}, {transform_indices = @transform_1, window_bounds = array<i64: 2, 8, 8, 128>}, {pipeline_mode = #tpu.pipeline_mode<synchronous>, transform_indices = @transform_2, window_bounds = array<i64: 64, 128>}, {pipeline_mode = #tpu.pipeline_mode<synchronous>, transform_indices = @transform_3, window_bounds = array<i64: 1, 128>}, {pipeline_mode = #tpu.pipeline_mode<synchronous>, transform_indices = @transform_4, window_bounds = array<i64: 9, 128>}, {pipeline_mode = #tpu.pipeline_mode<synchronous>, transform_indices = @transform_5, window_bounds = array<i64: 1, 128>}, {pipeline_mode = #tpu.pipeline_mode<synchronous>, transform_indices = @transform_6, window_bounds = array<i64: 128, 128>}, {pipeline_mode = #tpu.pipeline_mode<synchronous>, transform_indices = @transform_7, window_bounds = array<i64: 1, 128>}, {pipeline_mode = #tpu.pipeline_mode<synchronous>, transform_indices = @transform_8, window_bounds = array<i64: 128, 256>}, {pipeline_mode = #tpu.pipeline_mode<synchronous>, transform_indices = @transform_9, window_bounds = array<i64: 1, 256>}, {pipeline_mode = #tpu.pipeline_mode<synchronous>, transform_indices = @transform_10, window_bounds = array<i64: 9, 256>}, {pipeline_mode = #tpu.pipeline_mode<synchronous>, transform_indices = @transform_11, window_bounds = array<i64: 1, 256>}, {pipeline_mode = #tpu.pipeline_mode<synchronous>, transform_indices = @transform_12, window_bounds = array<i64: 256, 256>}, {pipeline_mode = #tpu.pipeline_mode<synchronous>, transform_indices = @transform_13, window_bounds = array<i64: 1, 256>}, {transform_indices = @transform_14, window_bounds = array<i64: 2, 8, 8, 128>}, {transform_indices = @transform_15, window_bounds = array<i64: 2, 8, 8, 256>}]} {
    %c0 = arith.constant 0 : index
    %c0_0 = arith.constant 0 : index
    %c0_1 = arith.constant 0 : index
    %c0_2 = arith.constant 0 : index
    %0 = vector.load %arg1[%c0, %c0_0, %c0_1, %c0_2] : memref<2x8x8x64xf32, #tpu.memory_space<vmem>>, vector<2x8x8x64xf32>
    %1 = vector.shape_cast %0 : vector<2x8x8x64xf32> to vector<128x64xf32>
    %2 = arith.truncf %1 : vector<128x64xf32> to vector<128x64xbf16>
    %c0_3 = arith.constant 0 : index
    %c0_4 = arith.constant 0 : index
    %3 = vector.load %arg3[%c0_3, %c0_4] : memref<64x128xbf16, #tpu.memory_space<vmem>>, vector<64x128xbf16>
    %cst = arith.constant dense<0.000000e+00> : vector<128x128xf32>
    %4 = tpu.matmul %2, %3, %cst {dimension_numbers = #tpu.dot_dimension_numbers<[1], [0], [0], [1], [0, 0, 1, 1], [], []>} : vector<128x64xbf16>, vector<64x128xbf16>, vector<128x128xf32> -> vector<128x128xf32>
    %c0_5 = arith.constant 0 : index
    %c0_6 = arith.constant 0 : index
    %5 = vector.load %arg4[%c0_5, %c0_6] : memref<1x128xf32, #tpu.memory_space<vmem>>, vector<1x128xf32>
    %6 = vector.broadcast %5 : vector<1x128xf32> to vector<128x128xf32>
    %7 = arith.addf %4, %6 : vector<128x128xf32>
    %cst_7 = arith.constant 0.000000e+00 : f32
    %8 = vector.broadcast %cst_7 : f32 to vector<2x1x16x128xf32>
    %c0_8 = arith.constant 0 : index
    %c0_9 = arith.constant 0 : index
    %c0_10 = arith.constant 0 : index
    %c0_11 = arith.constant 0 : index
    %9 = vector.load %arg17[%c0_8, %c0_9, %c0_10, %c0_11] : memref<2x10x16x128xf32, #tpu.memory_space<vmem>>, vector<2x1x16x128xf32>
    tpu.vector_store %arg17[%c0_8, %c0_9, %c0_10, %c0_11], %8 {strides = array<i32>} : memref<2x10x16x128xf32, #tpu.memory_space<vmem>>, vector<2x1x16x128xf32>,
    %cst_12 = arith.constant 0.000000e+00 : f32
    %10 = vector.broadcast %cst_12 : f32 to vector<2x1x16x128xf32>
    %c0_13 = arith.constant 0 : index
    %c9 = arith.constant 9 : index
    %c0_14 = arith.constant 0 : index
    %c0_15 = arith.constant 0 : index
    %11 = vector.load %arg17[%c0_13, %c9, %c0_14, %c0_15] : memref<2x10x16x128xf32, #tpu.memory_space<vmem>>, vector<2x1x16x128xf32>
    tpu.vector_store %arg17[%c0_13, %c9, %c0_14, %c0_15], %10 {strides = array<i32>} : memref<2x10x16x128xf32, #tpu.memory_space<vmem>>, vector<2x1x16x128xf32>,
    %cst_16 = arith.constant 0.000000e+00 : f32
    %12 = vector.broadcast %cst_16 : f32 to vector<2x8x1x128xf32>
    %c0_17 = arith.constant 0 : index
    %c1 = arith.constant 1 : index
    %c0_18 = arith.constant 0 : index
    %c0_19 = arith.constant 0 : index
    %13 = vector.load %arg17[%c0_17, %c1, %c0_18, %c0_19] : memref<2x10x16x128xf32, #tpu.memory_space<vmem>>, vector<2x8x1x128xf32>
    tpu.vector_store %arg17[%c0_17, %c1, %c0_18, %c0_19], %12 {strides = array<i32>} : memref<2x10x16x128xf32, #tpu.memory_space<vmem>>, vector<2x8x1x128xf32>,
    %cst_20 = arith.constant 0.000000e+00 : f32
    %14 = vector.broadcast %cst_20 : f32 to vector<2x8x1x128xf32>
    %c0_21 = arith.constant 0 : index
    %c1_22 = arith.constant 1 : index
    %c9_23 = arith.constant 9 : index
    %c0_24 = arith.constant 0 : index
    %15 = vector.load %arg17[%c0_21, %c1_22, %c9_23, %c0_24] : memref<2x10x16x128xf32, #tpu.memory_space<vmem>>, vector<2x8x1x128xf32>
    tpu.vector_store %arg17[%c0_21, %c1_22, %c9_23, %c0_24], %14 {strides = array<i32>} : memref<2x10x16x128xf32, #tpu.memory_space<vmem>>, vector<2x8x1x128xf32>,
    %16 = vector.shape_cast %7 : vector<128x128xf32> to vector<2x8x8x128xf32>
    %c0_25 = arith.constant 0 : index
    %c1_26 = arith.constant 1 : index
    %c1_27 = arith.constant 1 : index
    %c0_28 = arith.constant 0 : index
    %17 = vector.load %arg17[%c0_25, %c1_26, %c1_27, %c0_28] : memref<2x10x16x128xf32, #tpu.memory_space<vmem>>, vector<2x8x8x128xf32>
    tpu.vector_store %arg17[%c0_25, %c1_26, %c1_27, %c0_28], %16 {strides = array<i32>} : memref<2x10x16x128xf32, #tpu.memory_space<vmem>>, vector<2x8x8x128xf32>,
    %c0_29 = arith.constant 0 : index
    %c0_30 = arith.constant 0 : index
    %18 = vector.load %arg5[%c0_29, %c0_30] : memref<9x128xf32, #tpu.memory_space<vmem>>, vector<9x128xf32>
    %c0_31 = arith.constant 0 : index
    %c0_32 = arith.constant 0 : index
    %19 = vector.load %arg6[%c0_31, %c0_32] : memref<1x128xf32, #tpu.memory_space<vmem>>, vector<1x128xf32>
    %20 = vector.shape_cast %19 : vector<1x128xf32> to vector<1x1x1x128xf32>
    %21 = vector.shape_cast %20 : vector<1x1x1x128xf32> to vector<1x1x1x128xf32>
    %22 = vector.broadcast %21 : vector<1x1x1x128xf32> to vector<2x8x8x128xf32>
    %c0_33 = arith.constant 0 : index
    %c0_34 = arith.constant 0 : index
    %c0_35 = arith.constant 0 : index
    %c0_36 = arith.constant 0 : index
    %23 = vector.load %arg17[%c0_33, %c0_34, %c0_35, %c0_36] : memref<2x10x16x128xf32, #tpu.memory_space<vmem>>, vector<2x8x8x128xf32>
    %24 = vector.extract_strided_slice %18 {offsets = [0, 0], sizes = [1, 128], strides = [1, 1]} : vector<9x128xf32> to vector<1x128xf32>
    %25 = vector.shape_cast %24 : vector<1x128xf32> to vector<128xf32>
    %26 = vector.shape_cast %25 : vector<128xf32> to vector<1x1x1x128xf32>
    %27 = vector.broadcast %26 : vector<1x1x1x128xf32> to vector<2x8x8x128xf32>
    %28 = arith.mulf %23, %27 : vector<2x8x8x128xf32>
    %29 = arith.addf %22, %28 : vector<2x8x8x128xf32>
    %c0_37 = arith.constant 0 : index
    %c0_38 = arith.constant 0 : index
    %c1_39 = arith.constant 1 : index
    %c0_40 = arith.constant 0 : index
    %30 = vector.load %arg17[%c0_37, %c0_38, %c1_39, %c0_40] : memref<2x10x16x128xf32, #tpu.memory_space<vmem>>, vector<2x8x8x128xf32>
    %31 = vector.extract_strided_slice %18 {offsets = [1, 0], sizes = [1, 128], strides = [1, 1]} : vector<9x128xf32> to vector<1x128xf32>
    %32 = vector.shape_cast %31 : vector<1x128xf32> to vector<128xf32>
    %33 = vector.shape_cast %32 : vector<128xf32> to vector<1x1x1x128xf32>
    %34 = vector.broadcast %33 : vector<1x1x1x128xf32> to vector<2x8x8x128xf32>
    %35 = arith.mulf %30, %34 : vector<2x8x8x128xf32>
    %36 = arith.addf %29, %35 : vector<2x8x8x128xf32>
    %c0_41 = arith.constant 0 : index
    %c0_42 = arith.constant 0 : index
    %c2 = arith.constant 2 : index
    %c0_43 = arith.constant 0 : index
    %37 = vector.load %arg17[%c0_41, %c0_42, %c2, %c0_43] : memref<2x10x16x128xf32, #tpu.memory_space<vmem>>, vector<2x8x8x128xf32>
    %38 = vector.extract_strided_slice %18 {offsets = [2, 0], sizes = [1, 128], strides = [1, 1]} : vector<9x128xf32> to vector<1x128xf32>
    %39 = vector.shape_cast %38 : vector<1x128xf32> to vector<128xf32>
    %40 = vector.shape_cast %39 : vector<128xf32> to vector<1x1x1x128xf32>
    %41 = vector.broadcast %40 : vector<1x1x1x128xf32> to vector<2x8x8x128xf32>
    %42 = arith.mulf %37, %41 : vector<2x8x8x128xf32>
    %43 = arith.addf %36, %42 : vector<2x8x8x128xf32>
    %c0_44 = arith.constant 0 : index
    %c1_45 = arith.constant 1 : index
    %c0_46 = arith.constant 0 : index
    %c0_47 = arith.constant 0 : index
    %44 = vector.load %arg17[%c0_44, %c1_45, %c0_46, %c0_47] : memref<2x10x16x128xf32, #tpu.memory_space<vmem>>, vector<2x8x8x128xf32>
    %45 = vector.extract_strided_slice %18 {offsets = [3, 0], sizes = [1, 128], strides = [1, 1]} : vector<9x128xf32> to vector<1x128xf32>
    %46 = vector.shape_cast %45 : vector<1x128xf32> to vector<128xf32>
    %47 = vector.shape_cast %46 : vector<128xf32> to vector<1x1x1x128xf32>
    %48 = vector.broadcast %47 : vector<1x1x1x128xf32> to vector<2x8x8x128xf32>
    %49 = arith.mulf %44, %48 : vector<2x8x8x128xf32>
    %50 = arith.addf %43, %49 : vector<2x8x8x128xf32>
    %c0_48 = arith.constant 0 : index
    %c1_49 = arith.constant 1 : index
    %c1_50 = arith.constant 1 : index
    %c0_51 = arith.constant 0 : index
    %51 = vector.load %arg17[%c0_48, %c1_49, %c1_50, %c0_51] : memref<2x10x16x128xf32, #tpu.memory_space<vmem>>, vector<2x8x8x128xf32>
    %52 = vector.extract_strided_slice %18 {offsets = [4, 0], sizes = [1, 128], strides = [1, 1]} : vector<9x128xf32> to vector<1x128xf32>
    %53 = vector.shape_cast %52 : vector<1x128xf32> to vector<128xf32>
    %54 = vector.shape_cast %53 : vector<128xf32> to vector<1x1x1x128xf32>
    %55 = vector.broadcast %54 : vector<1x1x1x128xf32> to vector<2x8x8x128xf32>
    %56 = arith.mulf %51, %55 : vector<2x8x8x128xf32>
    %57 = arith.addf %50, %56 : vector<2x8x8x128xf32>
    %c0_52 = arith.constant 0 : index
    %c1_53 = arith.constant 1 : index
    %c2_54 = arith.constant 2 : index
    %c0_55 = arith.constant 0 : index
    %58 = vector.load %arg17[%c0_52, %c1_53, %c2_54, %c0_55] : memref<2x10x16x128xf32, #tpu.memory_space<vmem>>, vector<2x8x8x128xf32>
    %59 = vector.extract_strided_slice %18 {offsets = [5, 0], sizes = [1, 128], strides = [1, 1]} : vector<9x128xf32> to vector<1x128xf32>
    %60 = vector.shape_cast %59 : vector<1x128xf32> to vector<128xf32>
    %61 = vector.shape_cast %60 : vector<128xf32> to vector<1x1x1x128xf32>
    %62 = vector.broadcast %61 : vector<1x1x1x128xf32> to vector<2x8x8x128xf32>
    %63 = arith.mulf %58, %62 : vector<2x8x8x128xf32>
    %64 = arith.addf %57, %63 : vector<2x8x8x128xf32>
    %c0_56 = arith.constant 0 : index
    %c2_57 = arith.constant 2 : index
    %c0_58 = arith.constant 0 : index
    %c0_59 = arith.constant 0 : index
    %65 = vector.load %arg17[%c0_56, %c2_57, %c0_58, %c0_59] : memref<2x10x16x128xf32, #tpu.memory_space<vmem>>, vector<2x8x8x128xf32>
    %66 = vector.extract_strided_slice %18 {offsets = [6, 0], sizes = [1, 128], strides = [1, 1]} : vector<9x128xf32> to vector<1x128xf32>
    %67 = vector.shape_cast %66 : vector<1x128xf32> to vector<128xf32>
    %68 = vector.shape_cast %67 : vector<128xf32> to vector<1x1x1x128xf32>
    %69 = vector.broadcast %68 : vector<1x1x1x128xf32> to vector<2x8x8x128xf32>
    %70 = arith.mulf %65, %69 : vector<2x8x8x128xf32>
    %71 = arith.addf %64, %70 : vector<2x8x8x128xf32>
    %c0_60 = arith.constant 0 : index
    %c2_61 = arith.constant 2 : index
    %c1_62 = arith.constant 1 : index
    %c0_63 = arith.constant 0 : index
    %72 = vector.load %arg17[%c0_60, %c2_61, %c1_62, %c0_63] : memref<2x10x16x128xf32, #tpu.memory_space<vmem>>, vector<2x8x8x128xf32>
    %73 = vector.extract_strided_slice %18 {offsets = [7, 0], sizes = [1, 128], strides = [1, 1]} : vector<9x128xf32> to vector<1x128xf32>
    %74 = vector.shape_cast %73 : vector<1x128xf32> to vector<128xf32>
    %75 = vector.shape_cast %74 : vector<128xf32> to vector<1x1x1x128xf32>
    %76 = vector.broadcast %75 : vector<1x1x1x128xf32> to vector<2x8x8x128xf32>
    %77 = arith.mulf %72, %76 : vector<2x8x8x128xf32>
    %78 = arith.addf %71, %77 : vector<2x8x8x128xf32>
    %c0_64 = arith.constant 0 : index
    %c2_65 = arith.constant 2 : index
    %c2_66 = arith.constant 2 : index
    %c0_67 = arith.constant 0 : index
    %79 = vector.load %arg17[%c0_64, %c2_65, %c2_66, %c0_67] : memref<2x10x16x128xf32, #tpu.memory_space<vmem>>, vector<2x8x8x128xf32>
    %80 = vector.extract_strided_slice %18 {offsets = [8, 0], sizes = [1, 128], strides = [1, 1]} : vector<9x128xf32> to vector<1x128xf32>
    %81 = vector.shape_cast %80 : vector<1x128xf32> to vector<128xf32>
    %82 = vector.shape_cast %81 : vector<128xf32> to vector<1x1x1x128xf32>
    %83 = vector.broadcast %82 : vector<1x1x1x128xf32> to vector<2x8x8x128xf32>
    %84 = arith.mulf %79, %83 : vector<2x8x8x128xf32>
    %85 = arith.addf %78, %84 : vector<2x8x8x128xf32>
    %86 = vector.shape_cast %85 : vector<2x8x8x128xf32> to vector<128x128xf32>
    %87 = arith.truncf %86 : vector<128x128xf32> to vector<128x128xbf16>
    %c0_68 = arith.constant 0 : index
    %c0_69 = arith.constant 0 : index
    %88 = vector.load %arg7[%c0_68, %c0_69] : memref<128x128xbf16, #tpu.memory_space<vmem>>, vector<128x128xbf16>
    %cst_70 = arith.constant dense<0.000000e+00> : vector<128x128xf32>
    %89 = tpu.matmul %87, %88, %cst_70 {dimension_numbers = #tpu.dot_dimension_numbers<[1], [0], [0], [1], [0, 0, 1, 1], [], []>} : vector<128x128xbf16>, vector<128x128xbf16>, vector<128x128xf32> -> vector<128x128xf32>
    %c0_71 = arith.constant 0 : index
    %c0_72 = arith.constant 0 : index
    %90 = vector.load %arg8[%c0_71, %c0_72] : memref<1x128xf32, #tpu.memory_space<vmem>>, vector<1x128xf32>
    %91 = vector.broadcast %90 : vector<1x128xf32> to vector<128x128xf32>
    %92 = arith.addf %89, %91 : vector<128x128xf32>
    %93 = vector.shape_cast %92 : vector<128x128xf32> to vector<2x8x8x128xf32>
    %c0_73 = arith.constant 0 : index
    %c0_74 = arith.constant 0 : index
    %c0_75 = arith.constant 0 : index
    %c0_76 = arith.constant 0 : index
    %94 = vector.load %arg15[%c0_73, %c0_74, %c0_75, %c0_76] : memref<2x8x8x128xf32, #tpu.memory_space<vmem>>, vector<2x8x8x128xf32>
    tpu.vector_store %arg15[%c0_73, %c0_74, %c0_75, %c0_76], %93 {strides = array<i32>} : memref<2x8x8x128xf32, #tpu.memory_space<vmem>>, vector<2x8x8x128xf32>,
    %c0_77 = arith.constant 0 : index
    %c0_78 = arith.constant 0 : index
    %c0_79 = arith.constant 0 : index
    %c0_80 = arith.constant 0 : index
    %95 = vector.load %arg2[%c0_77, %c0_78, %c0_79, %c0_80] : memref<2x8x8x128xf32, #tpu.memory_space<vmem>>, vector<2x8x8x128xf32>
    %96 = vector.shape_cast %95 : vector<2x8x8x128xf32> to vector<128x128xf32>
    %97 = arith.truncf %96 : vector<128x128xf32> to vector<128x128xbf16>
    %c0_81 = arith.constant 0 : index
    %c0_82 = arith.constant 0 : index
    %98 = vector.load %arg9[%c0_81, %c0_82] : memref<128x256xbf16, #tpu.memory_space<vmem>>, vector<128x256xbf16>
    %cst_83 = arith.constant dense<0.000000e+00> : vector<128x256xf32>
    %99 = tpu.matmul %97, %98, %cst_83 {dimension_numbers = #tpu.dot_dimension_numbers<[1], [0], [0], [1], [0, 0, 1, 1], [], []>} : vector<128x128xbf16>, vector<128x256xbf16>, vector<128x256xf32> -> vector<128x256xf32>
    %c0_84 = arith.constant 0 : index
    %c0_85 = arith.constant 0 : index
    %100 = vector.load %arg10[%c0_84, %c0_85] : memref<1x256xf32, #tpu.memory_space<vmem>>, vector<1x256xf32>
    %101 = vector.broadcast %100 : vector<1x256xf32> to vector<128x256xf32>
    %102 = arith.addf %99, %101 : vector<128x256xf32>
    %cst_86 = arith.constant 0.000000e+00 : f32
    %103 = vector.broadcast %cst_86 : f32 to vector<2x1x16x256xf32>
    %c0_87 = arith.constant 0 : index
    %c0_88 = arith.constant 0 : index
    %c0_89 = arith.constant 0 : index
    %c0_90 = arith.constant 0 : index
    %104 = vector.load %arg18[%c0_87, %c0_88, %c0_89, %c0_90] : memref<2x10x16x256xf32, #tpu.memory_space<vmem>>, vector<2x1x16x256xf32>
    tpu.vector_store %arg18[%c0_87, %c0_88, %c0_89, %c0_90], %103 {strides = array<i32>} : memref<2x10x16x256xf32, #tpu.memory_space<vmem>>, vector<2x1x16x256xf32>,
    %cst_91 = arith.constant 0.000000e+00 : f32
    %105 = vector.broadcast %cst_91 : f32 to vector<2x1x16x256xf32>
    %c0_92 = arith.constant 0 : index
    %c9_93 = arith.constant 9 : index
    %c0_94 = arith.constant 0 : index
    %c0_95 = arith.constant 0 : index
    %106 = vector.load %arg18[%c0_92, %c9_93, %c0_94, %c0_95] : memref<2x10x16x256xf32, #tpu.memory_space<vmem>>, vector<2x1x16x256xf32>
    tpu.vector_store %arg18[%c0_92, %c9_93, %c0_94, %c0_95], %105 {strides = array<i32>} : memref<2x10x16x256xf32, #tpu.memory_space<vmem>>, vector<2x1x16x256xf32>,
    %cst_96 = arith.constant 0.000000e+00 : f32
    %107 = vector.broadcast %cst_96 : f32 to vector<2x8x1x256xf32>
    %c0_97 = arith.constant 0 : index
    %c1_98 = arith.constant 1 : index
    %c0_99 = arith.constant 0 : index
    %c0_100 = arith.constant 0 : index
    %108 = vector.load %arg18[%c0_97, %c1_98, %c0_99, %c0_100] : memref<2x10x16x256xf32, #tpu.memory_space<vmem>>, vector<2x8x1x256xf32>
    tpu.vector_store %arg18[%c0_97, %c1_98, %c0_99, %c0_100], %107 {strides = array<i32>} : memref<2x10x16x256xf32, #tpu.memory_space<vmem>>, vector<2x8x1x256xf32>,
    %cst_101 = arith.constant 0.000000e+00 : f32
    %109 = vector.broadcast %cst_101 : f32 to vector<2x8x1x256xf32>
    %c0_102 = arith.constant 0 : index
    %c1_103 = arith.constant 1 : index
    %c9_104 = arith.constant 9 : index
    %c0_105 = arith.constant 0 : index
    %110 = vector.load %arg18[%c0_102, %c1_103, %c9_104, %c0_105] : memref<2x10x16x256xf32, #tpu.memory_space<vmem>>, vector<2x8x1x256xf32>
    tpu.vector_store %arg18[%c0_102, %c1_103, %c9_104, %c0_105], %109 {strides = array<i32>} : memref<2x10x16x256xf32, #tpu.memory_space<vmem>>, vector<2x8x1x256xf32>,
    %111 = vector.shape_cast %102 : vector<128x256xf32> to vector<2x8x8x256xf32>
    %c0_106 = arith.constant 0 : index
    %c1_107 = arith.constant 1 : index
    %c1_108 = arith.constant 1 : index
    %c0_109 = arith.constant 0 : index
    %112 = vector.load %arg18[%c0_106, %c1_107, %c1_108, %c0_109] : memref<2x10x16x256xf32, #tpu.memory_space<vmem>>, vector<2x8x8x256xf32>
    tpu.vector_store %arg18[%c0_106, %c1_107, %c1_108, %c0_109], %111 {strides = array<i32>} : memref<2x10x16x256xf32, #tpu.memory_space<vmem>>, vector<2x8x8x256xf32>,
    %c0_110 = arith.constant 0 : index
    %c0_111 = arith.constant 0 : index
    %113 = vector.load %arg11[%c0_110, %c0_111] : memref<9x256xf32, #tpu.memory_space<vmem>>, vector<9x256xf32>
    %c0_112 = arith.constant 0 : index
    %c0_113 = arith.constant 0 : index
    %114 = vector.load %arg12[%c0_112, %c0_113] : memref<1x256xf32, #tpu.memory_space<vmem>>, vector<1x256xf32>
    %115 = vector.shape_cast %114 : vector<1x256xf32> to vector<1x1x1x256xf32>
    %116 = vector.shape_cast %115 : vector<1x1x1x256xf32> to vector<1x1x1x256xf32>
    %117 = vector.broadcast %116 : vector<1x1x1x256xf32> to vector<2x8x8x256xf32>
    %c0_114 = arith.constant 0 : index
    %c0_115 = arith.constant 0 : index
    %c0_116 = arith.constant 0 : index
    %c0_117 = arith.constant 0 : index
    %118 = vector.load %arg18[%c0_114, %c0_115, %c0_116, %c0_117] : memref<2x10x16x256xf32, #tpu.memory_space<vmem>>, vector<2x8x8x256xf32>
    %119 = vector.extract_strided_slice %113 {offsets = [0, 0], sizes = [1, 256], strides = [1, 1]} : vector<9x256xf32> to vector<1x256xf32>
    %120 = vector.shape_cast %119 : vector<1x256xf32> to vector<256xf32>
    %121 = vector.shape_cast %120 : vector<256xf32> to vector<1x1x1x256xf32>
    %122 = vector.broadcast %121 : vector<1x1x1x256xf32> to vector<2x8x8x256xf32>
    %123 = arith.mulf %118, %122 : vector<2x8x8x256xf32>
    %124 = arith.addf %117, %123 : vector<2x8x8x256xf32>
    %c0_118 = arith.constant 0 : index
    %c0_119 = arith.constant 0 : index
    %c1_120 = arith.constant 1 : index
    %c0_121 = arith.constant 0 : index
    %125 = vector.load %arg18[%c0_118, %c0_119, %c1_120, %c0_121] : memref<2x10x16x256xf32, #tpu.memory_space<vmem>>, vector<2x8x8x256xf32>
    %126 = vector.extract_strided_slice %113 {offsets = [1, 0], sizes = [1, 256], strides = [1, 1]} : vector<9x256xf32> to vector<1x256xf32>
    %127 = vector.shape_cast %126 : vector<1x256xf32> to vector<256xf32>
    %128 = vector.shape_cast %127 : vector<256xf32> to vector<1x1x1x256xf32>
    %129 = vector.broadcast %128 : vector<1x1x1x256xf32> to vector<2x8x8x256xf32>
    %130 = arith.mulf %125, %129 : vector<2x8x8x256xf32>
    %131 = arith.addf %124, %130 : vector<2x8x8x256xf32>
    %c0_122 = arith.constant 0 : index
    %c0_123 = arith.constant 0 : index
    %c2_124 = arith.constant 2 : index
    %c0_125 = arith.constant 0 : index
    %132 = vector.load %arg18[%c0_122, %c0_123, %c2_124, %c0_125] : memref<2x10x16x256xf32, #tpu.memory_space<vmem>>, vector<2x8x8x256xf32>
    %133 = vector.extract_strided_slice %113 {offsets = [2, 0], sizes = [1, 256], strides = [1, 1]} : vector<9x256xf32> to vector<1x256xf32>
    %134 = vector.shape_cast %133 : vector<1x256xf32> to vector<256xf32>
    %135 = vector.shape_cast %134 : vector<256xf32> to vector<1x1x1x256xf32>
    %136 = vector.broadcast %135 : vector<1x1x1x256xf32> to vector<2x8x8x256xf32>
    %137 = arith.mulf %132, %136 : vector<2x8x8x256xf32>
    %138 = arith.addf %131, %137 : vector<2x8x8x256xf32>
    %c0_126 = arith.constant 0 : index
    %c1_127 = arith.constant 1 : index
    %c0_128 = arith.constant 0 : index
    %c0_129 = arith.constant 0 : index
    %139 = vector.load %arg18[%c0_126, %c1_127, %c0_128, %c0_129] : memref<2x10x16x256xf32, #tpu.memory_space<vmem>>, vector<2x8x8x256xf32>
    %140 = vector.extract_strided_slice %113 {offsets = [3, 0], sizes = [1, 256], strides = [1, 1]} : vector<9x256xf32> to vector<1x256xf32>
    %141 = vector.shape_cast %140 : vector<1x256xf32> to vector<256xf32>
    %142 = vector.shape_cast %141 : vector<256xf32> to vector<1x1x1x256xf32>
    %143 = vector.broadcast %142 : vector<1x1x1x256xf32> to vector<2x8x8x256xf32>
    %144 = arith.mulf %139, %143 : vector<2x8x8x256xf32>
    %145 = arith.addf %138, %144 : vector<2x8x8x256xf32>
    %c0_130 = arith.constant 0 : index
    %c1_131 = arith.constant 1 : index
    %c1_132 = arith.constant 1 : index
    %c0_133 = arith.constant 0 : index
    %146 = vector.load %arg18[%c0_130, %c1_131, %c1_132, %c0_133] : memref<2x10x16x256xf32, #tpu.memory_space<vmem>>, vector<2x8x8x256xf32>
    %147 = vector.extract_strided_slice %113 {offsets = [4, 0], sizes = [1, 256], strides = [1, 1]} : vector<9x256xf32> to vector<1x256xf32>
    %148 = vector.shape_cast %147 : vector<1x256xf32> to vector<256xf32>
    %149 = vector.shape_cast %148 : vector<256xf32> to vector<1x1x1x256xf32>
    %150 = vector.broadcast %149 : vector<1x1x1x256xf32> to vector<2x8x8x256xf32>
    %151 = arith.mulf %146, %150 : vector<2x8x8x256xf32>
    %152 = arith.addf %145, %151 : vector<2x8x8x256xf32>
    %c0_134 = arith.constant 0 : index
    %c1_135 = arith.constant 1 : index
    %c2_136 = arith.constant 2 : index
    %c0_137 = arith.constant 0 : index
    %153 = vector.load %arg18[%c0_134, %c1_135, %c2_136, %c0_137] : memref<2x10x16x256xf32, #tpu.memory_space<vmem>>, vector<2x8x8x256xf32>
    %154 = vector.extract_strided_slice %113 {offsets = [5, 0], sizes = [1, 256], strides = [1, 1]} : vector<9x256xf32> to vector<1x256xf32>
    %155 = vector.shape_cast %154 : vector<1x256xf32> to vector<256xf32>
    %156 = vector.shape_cast %155 : vector<256xf32> to vector<1x1x1x256xf32>
    %157 = vector.broadcast %156 : vector<1x1x1x256xf32> to vector<2x8x8x256xf32>
    %158 = arith.mulf %153, %157 : vector<2x8x8x256xf32>
    %159 = arith.addf %152, %158 : vector<2x8x8x256xf32>
    %c0_138 = arith.constant 0 : index
    %c2_139 = arith.constant 2 : index
    %c0_140 = arith.constant 0 : index
    %c0_141 = arith.constant 0 : index
    %160 = vector.load %arg18[%c0_138, %c2_139, %c0_140, %c0_141] : memref<2x10x16x256xf32, #tpu.memory_space<vmem>>, vector<2x8x8x256xf32>
    %161 = vector.extract_strided_slice %113 {offsets = [6, 0], sizes = [1, 256], strides = [1, 1]} : vector<9x256xf32> to vector<1x256xf32>
    %162 = vector.shape_cast %161 : vector<1x256xf32> to vector<256xf32>
    %163 = vector.shape_cast %162 : vector<256xf32> to vector<1x1x1x256xf32>
    %164 = vector.broadcast %163 : vector<1x1x1x256xf32> to vector<2x8x8x256xf32>
    %165 = arith.mulf %160, %164 : vector<2x8x8x256xf32>
    %166 = arith.addf %159, %165 : vector<2x8x8x256xf32>
    %c0_142 = arith.constant 0 : index
    %c2_143 = arith.constant 2 : index
    %c1_144 = arith.constant 1 : index
    %c0_145 = arith.constant 0 : index
    %167 = vector.load %arg18[%c0_142, %c2_143, %c1_144, %c0_145] : memref<2x10x16x256xf32, #tpu.memory_space<vmem>>, vector<2x8x8x256xf32>
    %168 = vector.extract_strided_slice %113 {offsets = [7, 0], sizes = [1, 256], strides = [1, 1]} : vector<9x256xf32> to vector<1x256xf32>
    %169 = vector.shape_cast %168 : vector<1x256xf32> to vector<256xf32>
    %170 = vector.shape_cast %169 : vector<256xf32> to vector<1x1x1x256xf32>
    %171 = vector.broadcast %170 : vector<1x1x1x256xf32> to vector<2x8x8x256xf32>
    %172 = arith.mulf %167, %171 : vector<2x8x8x256xf32>
    %173 = arith.addf %166, %172 : vector<2x8x8x256xf32>
    %c0_146 = arith.constant 0 : index
    %c2_147 = arith.constant 2 : index
    %c2_148 = arith.constant 2 : index
    %c0_149 = arith.constant 0 : index
    %174 = vector.load %arg18[%c0_146, %c2_147, %c2_148, %c0_149] : memref<2x10x16x256xf32, #tpu.memory_space<vmem>>, vector<2x8x8x256xf32>
    %175 = vector.extract_strided_slice %113 {offsets = [8, 0], sizes = [1, 256], strides = [1, 1]} : vector<9x256xf32> to vector<1x256xf32>
    %176 = vector.shape_cast %175 : vector<1x256xf32> to vector<256xf32>
    %177 = vector.shape_cast %176 : vector<256xf32> to vector<1x1x1x256xf32>
    %178 = vector.broadcast %177 : vector<1x1x1x256xf32> to vector<2x8x8x256xf32>
    %179 = arith.mulf %174, %178 : vector<2x8x8x256xf32>
    %180 = arith.addf %173, %179 : vector<2x8x8x256xf32>
    %181 = vector.shape_cast %180 : vector<2x8x8x256xf32> to vector<128x256xf32>
    %182 = arith.truncf %181 : vector<128x256xf32> to vector<128x256xbf16>
    %c0_150 = arith.constant 0 : index
    %c0_151 = arith.constant 0 : index
    %183 = vector.load %arg13[%c0_150, %c0_151] : memref<256x256xbf16, #tpu.memory_space<vmem>>, vector<256x256xbf16>
    %cst_152 = arith.constant dense<0.000000e+00> : vector<128x256xf32>
    %184 = tpu.matmul %182, %183, %cst_152 {dimension_numbers = #tpu.dot_dimension_numbers<[1], [0], [0], [1], [0, 0, 1, 1], [], []>} : vector<128x256xbf16>, vector<256x256xbf16>, vector<128x256xf32> -> vector<128x256xf32>
    %c0_153 = arith.constant 0 : index
    %c0_154 = arith.constant 0 : index
    %185 = vector.load %arg14[%c0_153, %c0_154] : memref<1x256xf32, #tpu.memory_space<vmem>>, vector<1x256xf32>
    %186 = vector.broadcast %185 : vector<1x256xf32> to vector<128x256xf32>
    %187 = arith.addf %184, %186 : vector<128x256xf32>
    %188 = vector.shape_cast %187 : vector<128x256xf32> to vector<2x8x8x256xf32>
    %c0_155 = arith.constant 0 : index
    %c0_156 = arith.constant 0 : index
    %c0_157 = arith.constant 0 : index
    %c0_158 = arith.constant 0 : index
    %189 = vector.load %arg16[%c0_155, %c0_156, %c0_157, %c0_158] : memref<2x8x8x256xf32, #tpu.memory_space<vmem>>, vector<2x8x8x256xf32>
    tpu.vector_store %arg16[%c0_155, %c0_156, %c0_157, %c0_158], %188 {strides = array<i32>} : memref<2x8x8x256xf32, #tpu.memory_space<vmem>>, vector<2x8x8x256xf32>,
    return
  }
  func.func @transform_0(%arg0: i32) -> (i32, i32, i32, i32) {
    %c0_i32 = arith.constant 0 : i32
    %c0_i32_0 = arith.constant 0 : i32
    %c0_i32_1 = arith.constant 0 : i32
    %c0_i32_2 = arith.constant 0 : i32
    return %arg0, %c0_i32, %c0_i32_0, %c0_i32_1 : i32, i32, i32, i32
  }
  func.func @transform_1(%arg0: i32) -> (i32, i32, i32, i32) {
    %c0_i32 = arith.constant 0 : i32
    %c0_i32_0 = arith.constant 0 : i32
    %c0_i32_1 = arith.constant 0 : i32
    %c0_i32_2 = arith.constant 0 : i32
    return %arg0, %c0_i32, %c0_i32_0, %c0_i32_1 : i32, i32, i32, i32
  }
  func.func @transform_2(%arg0: i32) -> (i32, i32) {
    %c0_i32 = arith.constant 0 : i32
    %c0_i32_0 = arith.constant 0 : i32
    %c0_i32_1 = arith.constant 0 : i32
    return %c0_i32, %c0_i32_0 : i32, i32
  }
  func.func @transform_3(%arg0: i32) -> (i32, i32) {
    %c0_i32 = arith.constant 0 : i32
    %c0_i32_0 = arith.constant 0 : i32
    %c0_i32_1 = arith.constant 0 : i32
    return %c0_i32, %c0_i32_0 : i32, i32
  }
  func.func @transform_4(%arg0: i32) -> (i32, i32) {
    %c0_i32 = arith.constant 0 : i32
    %c0_i32_0 = arith.constant 0 : i32
    %c0_i32_1 = arith.constant 0 : i32
    return %c0_i32, %c0_i32_0 : i32, i32
  }
  func.func @transform_5(%arg0: i32) -> (i32, i32) {
    %c0_i32 = arith.constant 0 : i32
    %c0_i32_0 = arith.constant 0 : i32
    %c0_i32_1 = arith.constant 0 : i32
    return %c0_i32, %c0_i32_0 : i32, i32
  }
  func.func @transform_6(%arg0: i32) -> (i32, i32) {
    %c0_i32 = arith.constant 0 : i32
    %c0_i32_0 = arith.constant 0 : i32
    %c0_i32_1 = arith.constant 0 : i32
    return %c0_i32, %c0_i32_0 : i32, i32
  }
  func.func @transform_7(%arg0: i32) -> (i32, i32) {
    %c0_i32 = arith.constant 0 : i32
    %c0_i32_0 = arith.constant 0 : i32
    %c0_i32_1 = arith.constant 0 : i32
    return %c0_i32, %c0_i32_0 : i32, i32
  }
  func.func @transform_8(%arg0: i32) -> (i32, i32) {
    %c0_i32 = arith.constant 0 : i32
    %c0_i32_0 = arith.constant 0 : i32
    %c0_i32_1 = arith.constant 0 : i32
    return %c0_i32, %c0_i32_0 : i32, i32
  }
  func.func @transform_9(%arg0: i32) -> (i32, i32) {
    %c0_i32 = arith.constant 0 : i32
    %c0_i32_0 = arith.constant 0 : i32
    %c0_i32_1 = arith.constant 0 : i32
    return %c0_i32, %c0_i32_0 : i32, i32
  }
  func.func @transform_10(%arg0: i32) -> (i32, i32) {
    %c0_i32 = arith.constant 0 : i32
    %c0_i32_0 = arith.constant 0 : i32
    %c0_i32_1 = arith.constant 0 : i32
    return %c0_i32, %c0_i32_0 : i32, i32
  }
  func.func @transform_11(%arg0: i32) -> (i32, i32) {
    %c0_i32 = arith.constant 0 : i32
    %c0_i32_0 = arith.constant 0 : i32
    %c0_i32_1 = arith.constant 0 : i32
    return %c0_i32, %c0_i32_0 : i32, i32
  }
  func.func @transform_12(%arg0: i32) -> (i32, i32) {
    %c0_i32 = arith.constant 0 : i32
    %c0_i32_0 = arith.constant 0 : i32
    %c0_i32_1 = arith.constant 0 : i32
    return %c0_i32, %c0_i32_0 : i32, i32
  }
  func.func @transform_13(%arg0: i32) -> (i32, i32) {
    %c0_i32 = arith.constant 0 : i32
    %c0_i32_0 = arith.constant 0 : i32
    %c0_i32_1 = arith.constant 0 : i32
    return %c0_i32, %c0_i32_0 : i32, i32
  }
  func.func @transform_14(%arg0: i32) -> (i32, i32, i32, i32) {
    %c0_i32 = arith.constant 0 : i32
    %c0_i32_0 = arith.constant 0 : i32
    %c0_i32_1 = arith.constant 0 : i32
    %c0_i32_2 = arith.constant 0 : i32
    return %arg0, %c0_i32, %c0_i32_0, %c0_i32_1 : i32, i32, i32, i32
  }
  func.func @transform_15(%arg0: i32) -> (i32, i32, i32, i32) {
    %c0_i32 = arith.constant 0 : i32
    %c0_i32_0 = arith.constant 0 : i32
    %c0_i32_1 = arith.constant 0 : i32
    %c0_i32_2 = arith.constant 0 : i32
    return %arg0, %c0_i32, %c0_i32_0, %c0_i32_1 : i32, i32, i32, i32
  }
}

module attributes {stable_mosaic.version = 11 : i64} {
  func.func @_dual_proj_kernel(%arg0: i32, %arg1: memref<2x8x8x64xf32, #tpu.memory_space<vmem>>, %arg2: memref<2x8x8x128xf32, #tpu.memory_space<vmem>>, %arg3: memref<64x128xbf16, #tpu.memory_space<vmem>>, %arg4: memref<1x128xf32, #tpu.memory_space<vmem>>, %arg5: memref<9x128xf32, #tpu.memory_space<vmem>>, %arg6: memref<1x128xf32, #tpu.memory_space<vmem>>, %arg7: memref<128x128xbf16, #tpu.memory_space<vmem>>, %arg8: memref<1x128xf32, #tpu.memory_space<vmem>>, %arg9: memref<128x256xbf16, #tpu.memory_space<vmem>>, %arg10: memref<1x256xf32, #tpu.memory_space<vmem>>, %arg11: memref<9x256xf32, #tpu.memory_space<vmem>>, %arg12: memref<1x256xf32, #tpu.memory_space<vmem>>, %arg13: memref<256x256xbf16, #tpu.memory_space<vmem>>, %arg14: memref<1x256xf32, #tpu.memory_space<vmem>>, %arg15: memref<2x8x8x128xf32, #tpu.memory_space<vmem>>, %arg16: memref<2x8x8x256xf32, #tpu.memory_space<vmem>>, %arg17: memref<2x10x16x128xf32, #tpu.memory_space<vmem>>, %arg18: memref<2x10x16x256xf32, #tpu.memory_space<vmem>>) attributes {dimension_semantics = [#tpu.dimension_semantics<arbitrary>], iteration_bounds = array<i64: 1>, scalar_prefetch = 0 : i64, scratch_operands = 2 : i64, tpu.core_type = #tpu.core_type<tc>, window_params = [{transform_indices = @transform_0, window_bounds = array<i64: 2, 8, 8, 64>}, {transform_indices = @transform_1, window_bounds = array<i64: 2, 8, 8, 128>}, {pipeline_mode = #tpu.pipeline_mode<synchronous>, transform_indices = @transform_2, window_bounds = array<i64: 64, 128>}, {pipeline_mode = #tpu.pipeline_mode<synchronous>, transform_indices = @transform_3, window_bounds = array<i64: 1, 128>}, {pipeline_mode = #tpu.pipeline_mode<synchronous>, transform_indices = @transform_4, window_bounds = array<i64: 9, 128>}, {pipeline_mode = #tpu.pipeline_mode<synchronous>, transform_indices = @transform_5, window_bounds = array<i64: 1, 128>}, {pipeline_mode = #tpu.pipeline_mode<synchronous>, transform_indices = @transform_6, window_bounds = array<i64: 128, 128>}, {pipeline_mode = #tpu.pipeline_mode<synchronous>, transform_indices = @transform_7, window_bounds = array<i64: 1, 128>}, {pipeline_mode = #tpu.pipeline_mode<synchronous>, transform_indices = @transform_8, window_bounds = array<i64: 128, 256>}, {pipeline_mode = #tpu.pipeline_mode<synchronous>, transform_indices = @transform_9, window_bounds = array<i64: 1, 256>}, {pipeline_mode = #tpu.pipeline_mode<synchronous>, transform_indices = @transform_10, window_bounds = array<i64: 9, 256>}, {pipeline_mode = #tpu.pipeline_mode<synchronous>, transform_indices = @transform_11, window_bounds = array<i64: 1, 256>}, {pipeline_mode = #tpu.pipeline_mode<synchronous>, transform_indices = @transform_12, window_bounds = array<i64: 256, 256>}, {pipeline_mode = #tpu.pipeline_mode<synchronous>, transform_indices = @transform_13, window_bounds = array<i64: 1, 256>}, {transform_indices = @transform_14, window_bounds = array<i64: 2, 8, 8, 128>}, {transform_indices = @transform_15, window_bounds = array<i64: 2, 8, 8, 256>}]} {
    %c0 = arith.constant 0 : index
    %c0_0 = arith.constant 0 : index
    %c0_1 = arith.constant 0 : index
    %c0_2 = arith.constant 0 : index
    %0 = vector.load %arg1[%c0, %c0_0, %c0_1, %c0_2] : memref<2x8x8x64xf32, #tpu.memory_space<vmem>>, vector<2x8x8x64xf32>
    %1 = vector.shape_cast %0 : vector<2x8x8x64xf32> to vector<128x64xf32>
    %2 = arith.truncf %1 : vector<128x64xf32> to vector<128x64xbf16>
    %c0_3 = arith.constant 0 : index
    %c0_4 = arith.constant 0 : index
    %3 = vector.load %arg3[%c0_3, %c0_4] : memref<64x128xbf16, #tpu.memory_space<vmem>>, vector<64x128xbf16>
    %cst = arith.constant dense<0.000000e+00> : vector<128x128xf32>
    %4 = tpu.matmul %2, %3, %cst {dimension_numbers = #tpu.dot_dimension_numbers<[1], [0], [0], [1], [0, 0, 1, 1], [], []>} : vector<128x64xbf16>, vector<64x128xbf16>, vector<128x128xf32> -> vector<128x128xf32>
    %c0_5 = arith.constant 0 : index
    %c0_6 = arith.constant 0 : index
    %5 = vector.load %arg4[%c0_5, %c0_6] : memref<1x128xf32, #tpu.memory_space<vmem>>, vector<1x128xf32>
    %6 = vector.broadcast %5 : vector<1x128xf32> to vector<128x128xf32>
    %7 = arith.addf %4, %6 : vector<128x128xf32>
    %cst_7 = arith.constant 0.000000e+00 : f32
    %8 = vector.broadcast %cst_7 : f32 to vector<2x1x16x128xf32>
    %c0_8 = arith.constant 0 : index
    %c0_9 = arith.constant 0 : index
    %c0_10 = arith.constant 0 : index
    %c0_11 = arith.constant 0 : index
    %9 = vector.load %arg17[%c0_8, %c0_9, %c0_10, %c0_11] : memref<2x10x16x128xf32, #tpu.memory_space<vmem>>, vector<2x1x16x128xf32>
    tpu.vector_store %arg17[%c0_8, %c0_9, %c0_10, %c0_11], %8 {strides = array<i32>} : memref<2x10x16x128xf32, #tpu.memory_space<vmem>>, vector<2x1x16x128xf32>,
    %cst_12 = arith.constant 0.000000e+00 : f32
    %10 = vector.broadcast %cst_12 : f32 to vector<2x1x16x128xf32>
    %c0_13 = arith.constant 0 : index
    %c9 = arith.constant 9 : index
    %c0_14 = arith.constant 0 : index
    %c0_15 = arith.constant 0 : index
    %11 = vector.load %arg17[%c0_13, %c9, %c0_14, %c0_15] : memref<2x10x16x128xf32, #tpu.memory_space<vmem>>, vector<2x1x16x128xf32>
    tpu.vector_store %arg17[%c0_13, %c9, %c0_14, %c0_15], %10 {strides = array<i32>} : memref<2x10x16x128xf32, #tpu.memory_space<vmem>>, vector<2x1x16x128xf32>,
    %cst_16 = arith.constant 0.000000e+00 : f32
    %12 = vector.broadcast %cst_16 : f32 to vector<2x8x1x128xf32>
    %c0_17 = arith.constant 0 : index
    %c1 = arith.constant 1 : index
    %c0_18 = arith.constant 0 : index
    %c0_19 = arith.constant 0 : index
    %13 = vector.load %arg17[%c0_17, %c1, %c0_18, %c0_19] : memref<2x10x16x128xf32, #tpu.memory_space<vmem>>, vector<2x8x1x128xf32>
    tpu.vector_store %arg17[%c0_17, %c1, %c0_18, %c0_19], %12 {strides = array<i32>} : memref<2x10x16x128xf32, #tpu.memory_space<vmem>>, vector<2x8x1x128xf32>,
    %cst_20 = arith.constant 0.000000e+00 : f32
    %14 = vector.broadcast %cst_20 : f32 to vector<2x8x1x128xf32>
    %c0_21 = arith.constant 0 : index
    %c1_22 = arith.constant 1 : index
    %c9_23 = arith.constant 9 : index
    %c0_24 = arith.constant 0 : index
    %15 = vector.load %arg17[%c0_21, %c1_22, %c9_23, %c0_24] : memref<2x10x16x128xf32, #tpu.memory_space<vmem>>, vector<2x8x1x128xf32>
    tpu.vector_store %arg17[%c0_21, %c1_22, %c9_23, %c0_24], %14 {strides = array<i32>} : memref<2x10x16x128xf32, #tpu.memory_space<vmem>>, vector<2x8x1x128xf32>,
    %16 = vector.shape_cast %7 : vector<128x128xf32> to vector<2x8x8x128xf32>
    %c0_25 = arith.constant 0 : index
    %c1_26 = arith.constant 1 : index
    %c1_27 = arith.constant 1 : index
    %c0_28 = arith.constant 0 : index
    %17 = vector.load %arg17[%c0_25, %c1_26, %c1_27, %c0_28] : memref<2x10x16x128xf32, #tpu.memory_space<vmem>>, vector<2x8x8x128xf32>
    tpu.vector_store %arg17[%c0_25, %c1_26, %c1_27, %c0_28], %16 {strides = array<i32>} : memref<2x10x16x128xf32, #tpu.memory_space<vmem>>, vector<2x8x8x128xf32>,
    %c0_29 = arith.constant 0 : index
    %c0_30 = arith.constant 0 : index
    %18 = vector.load %arg5[%c0_29, %c0_30] : memref<9x128xf32, #tpu.memory_space<vmem>>, vector<9x128xf32>
    %c0_31 = arith.constant 0 : index
    %c0_32 = arith.constant 0 : index
    %19 = vector.load %arg6[%c0_31, %c0_32] : memref<1x128xf32, #tpu.memory_space<vmem>>, vector<1x128xf32>
    %20 = vector.shape_cast %19 : vector<1x128xf32> to vector<1x1x1x128xf32>
    %21 = vector.shape_cast %20 : vector<1x1x1x128xf32> to vector<1x1x1x128xf32>
    %22 = vector.broadcast %21 : vector<1x1x1x128xf32> to vector<2x8x8x128xf32>
    %c0_33 = arith.constant 0 : index
    %c0_34 = arith.constant 0 : index
    %c0_35 = arith.constant 0 : index
    %c0_36 = arith.constant 0 : index
    %23 = vector.load %arg17[%c0_33, %c0_34, %c0_35, %c0_36] : memref<2x10x16x128xf32, #tpu.memory_space<vmem>>, vector<2x8x8x128xf32>
    %24 = vector.extract_strided_slice %18 {offsets = [0, 0], sizes = [1, 128], strides = [1, 1]} : vector<9x128xf32> to vector<1x128xf32>
    %25 = vector.shape_cast %24 : vector<1x128xf32> to vector<128xf32>
    %26 = vector.shape_cast %25 : vector<128xf32> to vector<1x1x1x128xf32>
    %27 = vector.broadcast %26 : vector<1x1x1x128xf32> to vector<2x8x8x128xf32>
    %28 = arith.mulf %23, %27 : vector<2x8x8x128xf32>
    %29 = arith.addf %22, %28 : vector<2x8x8x128xf32>
    %c0_37 = arith.constant 0 : index
    %c0_38 = arith.constant 0 : index
    %c1_39 = arith.constant 1 : index
    %c0_40 = arith.constant 0 : index
    %30 = vector.load %arg17[%c0_37, %c0_38, %c1_39, %c0_40] : memref<2x10x16x128xf32, #tpu.memory_space<vmem>>, vector<2x8x8x128xf32>
    %31 = vector.extract_strided_slice %18 {offsets = [1, 0], sizes = [1, 128], strides = [1, 1]} : vector<9x128xf32> to vector<1x128xf32>
    %32 = vector.shape_cast %31 : vector<1x128xf32> to vector<128xf32>
    %33 = vector.shape_cast %32 : vector<128xf32> to vector<1x1x1x128xf32>
    %34 = vector.broadcast %33 : vector<1x1x1x128xf32> to vector<2x8x8x128xf32>
    %35 = arith.mulf %30, %34 : vector<2x8x8x128xf32>
    %36 = arith.addf %29, %35 : vector<2x8x8x128xf32>
    %c0_41 = arith.constant 0 : index
    %c0_42 = arith.constant 0 : index
    %c2 = arith.constant 2 : index
    %c0_43 = arith.constant 0 : index
    %37 = vector.load %arg17[%c0_41, %c0_42, %c2, %c0_43] : memref<2x10x16x128xf32, #tpu.memory_space<vmem>>, vector<2x8x8x128xf32>
    %38 = vector.extract_strided_slice %18 {offsets = [2, 0], sizes = [1, 128], strides = [1, 1]} : vector<9x128xf32> to vector<1x128xf32>
    %39 = vector.shape_cast %38 : vector<1x128xf32> to vector<128xf32>
    %40 = vector.shape_cast %39 : vector<128xf32> to vector<1x1x1x128xf32>
    %41 = vector.broadcast %40 : vector<1x1x1x128xf32> to vector<2x8x8x128xf32>
    %42 = arith.mulf %37, %41 : vector<2x8x8x128xf32>
    %43 = arith.addf %36, %42 : vector<2x8x8x128xf32>
    %c0_44 = arith.constant 0 : index
    %c1_45 = arith.constant 1 : index
    %c0_46 = arith.constant 0 : index
    %c0_47 = arith.constant 0 : index
    %44 = vector.load %arg17[%c0_44, %c1_45, %c0_46, %c0_47] : memref<2x10x16x128xf32, #tpu.memory_space<vmem>>, vector<2x8x8x128xf32>
    %45 = vector.extract_strided_slice %18 {offsets = [3, 0], sizes = [1, 128], strides = [1, 1]} : vector<9x128xf32> to vector<1x128xf32>
    %46 = vector.shape_cast %45 : vector<1x128xf32> to vector<128xf32>
    %47 = vector.shape_cast %46 : vector<128xf32> to vector<1x1x1x128xf32>
    %48 = vector.broadcast %47 : vector<1x1x1x128xf32> to vector<2x8x8x128xf32>
    %49 = arith.mulf %44, %48 : vector<2x8x8x128xf32>
    %50 = arith.addf %43, %49 : vector<2x8x8x128xf32>
    %c0_48 = arith.constant 0 : index
    %c1_49 = arith.constant 1 : index
    %c1_50 = arith.constant 1 : index
    %c0_51 = arith.constant 0 : index
    %51 = vector.load %arg17[%c0_48, %c1_49, %c1_50, %c0_51] : memref<2x10x16x128xf32, #tpu.memory_space<vmem>>, vector<2x8x8x128xf32>
    %52 = vector.extract_strided_slice %18 {offsets = [4, 0], sizes = [1, 128], strides = [1, 1]} : vector<9x128xf32> to vector<1x128xf32>
    %53 = vector.shape_cast %52 : vector<1x128xf32> to vector<128xf32>
    %54 = vector.shape_cast %53 : vector<128xf32> to vector<1x1x1x128xf32>
    %55 = vector.broadcast %54 : vector<1x1x1x128xf32> to vector<2x8x8x128xf32>
    %56 = arith.mulf %51, %55 : vector<2x8x8x128xf32>
    %57 = arith.addf %50, %56 : vector<2x8x8x128xf32>
    %c0_52 = arith.constant 0 : index
    %c1_53 = arith.constant 1 : index
    %c2_54 = arith.constant 2 : index
    %c0_55 = arith.constant 0 : index
    %58 = vector.load %arg17[%c0_52, %c1_53, %c2_54, %c0_55] : memref<2x10x16x128xf32, #tpu.memory_space<vmem>>, vector<2x8x8x128xf32>
    %59 = vector.extract_strided_slice %18 {offsets = [5, 0], sizes = [1, 128], strides = [1, 1]} : vector<9x128xf32> to vector<1x128xf32>
    %60 = vector.shape_cast %59 : vector<1x128xf32> to vector<128xf32>
    %61 = vector.shape_cast %60 : vector<128xf32> to vector<1x1x1x128xf32>
    %62 = vector.broadcast %61 : vector<1x1x1x128xf32> to vector<2x8x8x128xf32>
    %63 = arith.mulf %58, %62 : vector<2x8x8x128xf32>
    %64 = arith.addf %57, %63 : vector<2x8x8x128xf32>
    %c0_56 = arith.constant 0 : index
    %c2_57 = arith.constant 2 : index
    %c0_58 = arith.constant 0 : index
    %c0_59 = arith.constant 0 : index
    %65 = vector.load %arg17[%c0_56, %c2_57, %c0_58, %c0_59] : memref<2x10x16x128xf32, #tpu.memory_space<vmem>>, vector<2x8x8x128xf32>
    %66 = vector.extract_strided_slice %18 {offsets = [6, 0], sizes = [1, 128], strides = [1, 1]} : vector<9x128xf32> to vector<1x128xf32>
    %67 = vector.shape_cast %66 : vector<1x128xf32> to vector<128xf32>
    %68 = vector.shape_cast %67 : vector<128xf32> to vector<1x1x1x128xf32>
    %69 = vector.broadcast %68 : vector<1x1x1x128xf32> to vector<2x8x8x128xf32>
    %70 = arith.mulf %65, %69 : vector<2x8x8x128xf32>
    %71 = arith.addf %64, %70 : vector<2x8x8x128xf32>
    %c0_60 = arith.constant 0 : index
    %c2_61 = arith.constant 2 : index
    %c1_62 = arith.constant 1 : index
    %c0_63 = arith.constant 0 : index
    %72 = vector.load %arg17[%c0_60, %c2_61, %c1_62, %c0_63] : memref<2x10x16x128xf32, #tpu.memory_space<vmem>>, vector<2x8x8x128xf32>
    %73 = vector.extract_strided_slice %18 {offsets = [7, 0], sizes = [1, 128], strides = [1, 1]} : vector<9x128xf32> to vector<1x128xf32>
    %74 = vector.shape_cast %73 : vector<1x128xf32> to vector<128xf32>
    %75 = vector.shape_cast %74 : vector<128xf32> to vector<1x1x1x128xf32>
    %76 = vector.broadcast %75 : vector<1x1x1x128xf32> to vector<2x8x8x128xf32>
    %77 = arith.mulf %72, %76 : vector<2x8x8x128xf32>
    %78 = arith.addf %71, %77 : vector<2x8x8x128xf32>
    %c0_64 = arith.constant 0 : index
    %c2_65 = arith.constant 2 : index
    %c2_66 = arith.constant 2 : index
    %c0_67 = arith.constant 0 : index
    %79 = vector.load %arg17[%c0_64, %c2_65, %c2_66, %c0_67] : memref<2x10x16x128xf32, #tpu.memory_space<vmem>>, vector<2x8x8x128xf32>
    %80 = vector.extract_strided_slice %18 {offsets = [8, 0], sizes = [1, 128], strides = [1, 1]} : vector<9x128xf32> to vector<1x128xf32>
    %81 = vector.shape_cast %80 : vector<1x128xf32> to vector<128xf32>
    %82 = vector.shape_cast %81 : vector<128xf32> to vector<1x1x1x128xf32>
    %83 = vector.broadcast %82 : vector<1x1x1x128xf32> to vector<2x8x8x128xf32>
    %84 = arith.mulf %79, %83 : vector<2x8x8x128xf32>
    %85 = arith.addf %78, %84 : vector<2x8x8x128xf32>
    %86 = vector.shape_cast %85 : vector<2x8x8x128xf32> to vector<128x128xf32>
    %87 = arith.truncf %86 : vector<128x128xf32> to vector<128x128xbf16>
    %c0_68 = arith.constant 0 : index
    %c0_69 = arith.constant 0 : index
    %88 = vector.load %arg7[%c0_68, %c0_69] : memref<128x128xbf16, #tpu.memory_space<vmem>>, vector<128x128xbf16>
    %cst_70 = arith.constant dense<0.000000e+00> : vector<128x128xf32>
    %89 = tpu.matmul %87, %88, %cst_70 {dimension_numbers = #tpu.dot_dimension_numbers<[1], [0], [0], [1], [0, 0, 1, 1], [], []>} : vector<128x128xbf16>, vector<128x128xbf16>, vector<128x128xf32> -> vector<128x128xf32>
    %c0_71 = arith.constant 0 : index
    %c0_72 = arith.constant 0 : index
    %90 = vector.load %arg8[%c0_71, %c0_72] : memref<1x128xf32, #tpu.memory_space<vmem>>, vector<1x128xf32>
    %91 = vector.broadcast %90 : vector<1x128xf32> to vector<128x128xf32>
    %92 = arith.addf %89, %91 : vector<128x128xf32>
    %93 = vector.shape_cast %92 : vector<128x128xf32> to vector<2x8x8x128xf32>
    %c0_73 = arith.constant 0 : index
    %c0_74 = arith.constant 0 : index
    %c0_75 = arith.constant 0 : index
    %c0_76 = arith.constant 0 : index
    %94 = vector.load %arg15[%c0_73, %c0_74, %c0_75, %c0_76] : memref<2x8x8x128xf32, #tpu.memory_space<vmem>>, vector<2x8x8x128xf32>
    tpu.vector_store %arg15[%c0_73, %c0_74, %c0_75, %c0_76], %93 {strides = array<i32>} : memref<2x8x8x128xf32, #tpu.memory_space<vmem>>, vector<2x8x8x128xf32>,
    %c0_77 = arith.constant 0 : index
    %c0_78 = arith.constant 0 : index
    %c0_79 = arith.constant 0 : index
    %c0_80 = arith.constant 0 : index
    %95 = vector.load %arg2[%c0_77, %c0_78, %c0_79, %c0_80] : memref<2x8x8x128xf32, #tpu.memory_space<vmem>>, vector<2x8x8x128xf32>
    %96 = vector.shape_cast %95 : vector<2x8x8x128xf32> to vector<128x128xf32>
    %97 = arith.truncf %96 : vector<128x128xf32> to vector<128x128xbf16>
    %c0_81 = arith.constant 0 : index
    %c0_82 = arith.constant 0 : index
    %98 = vector.load %arg9[%c0_81, %c0_82] : memref<128x256xbf16, #tpu.memory_space<vmem>>, vector<128x256xbf16>
    %cst_83 = arith.constant dense<0.000000e+00> : vector<128x256xf32>
    %99 = tpu.matmul %97, %98, %cst_83 {dimension_numbers = #tpu.dot_dimension_numbers<[1], [0], [0], [1], [0, 0, 1, 1], [], []>} : vector<128x128xbf16>, vector<128x256xbf16>, vector<128x256xf32> -> vector<128x256xf32>
    %c0_84 = arith.constant 0 : index
    %c0_85 = arith.constant 0 : index
    %100 = vector.load %arg10[%c0_84, %c0_85] : memref<1x256xf32, #tpu.memory_space<vmem>>, vector<1x256xf32>
    %101 = vector.broadcast %100 : vector<1x256xf32> to vector<128x256xf32>
    %102 = arith.addf %99, %101 : vector<128x256xf32>
    %cst_86 = arith.constant 0.000000e+00 : f32
    %103 = vector.broadcast %cst_86 : f32 to vector<2x1x16x256xf32>
    %c0_87 = arith.constant 0 : index
    %c0_88 = arith.constant 0 : index
    %c0_89 = arith.constant 0 : index
    %c0_90 = arith.constant 0 : index
    %104 = vector.load %arg18[%c0_87, %c0_88, %c0_89, %c0_90] : memref<2x10x16x256xf32, #tpu.memory_space<vmem>>, vector<2x1x16x256xf32>
    tpu.vector_store %arg18[%c0_87, %c0_88, %c0_89, %c0_90], %103 {strides = array<i32>} : memref<2x10x16x256xf32, #tpu.memory_space<vmem>>, vector<2x1x16x256xf32>,
    %cst_91 = arith.constant 0.000000e+00 : f32
    %105 = vector.broadcast %cst_91 : f32 to vector<2x1x16x256xf32>
    %c0_92 = arith.constant 0 : index
    %c9_93 = arith.constant 9 : index
    %c0_94 = arith.constant 0 : index
    %c0_95 = arith.constant 0 : index
    %106 = vector.load %arg18[%c0_92, %c9_93, %c0_94, %c0_95] : memref<2x10x16x256xf32, #tpu.memory_space<vmem>>, vector<2x1x16x256xf32>
    tpu.vector_store %arg18[%c0_92, %c9_93, %c0_94, %c0_95], %105 {strides = array<i32>} : memref<2x10x16x256xf32, #tpu.memory_space<vmem>>, vector<2x1x16x256xf32>,
    %cst_96 = arith.constant 0.000000e+00 : f32
    %107 = vector.broadcast %cst_96 : f32 to vector<2x8x1x256xf32>
    %c0_97 = arith.constant 0 : index
    %c1_98 = arith.constant 1 : index
    %c0_99 = arith.constant 0 : index
    %c0_100 = arith.constant 0 : index
    %108 = vector.load %arg18[%c0_97, %c1_98, %c0_99, %c0_100] : memref<2x10x16x256xf32, #tpu.memory_space<vmem>>, vector<2x8x1x256xf32>
    tpu.vector_store %arg18[%c0_97, %c1_98, %c0_99, %c0_100], %107 {strides = array<i32>} : memref<2x10x16x256xf32, #tpu.memory_space<vmem>>, vector<2x8x1x256xf32>,
    %cst_101 = arith.constant 0.000000e+00 : f32
    %109 = vector.broadcast %cst_101 : f32 to vector<2x8x1x256xf32>
    %c0_102 = arith.constant 0 : index
    %c1_103 = arith.constant 1 : index
    %c9_104 = arith.constant 9 : index
    %c0_105 = arith.constant 0 : index
    %110 = vector.load %arg18[%c0_102, %c1_103, %c9_104, %c0_105] : memref<2x10x16x256xf32, #tpu.memory_space<vmem>>, vector<2x8x1x256xf32>
    tpu.vector_store %arg18[%c0_102, %c1_103, %c9_104, %c0_105], %109 {strides = array<i32>} : memref<2x10x16x256xf32, #tpu.memory_space<vmem>>, vector<2x8x1x256xf32>,
    %111 = vector.shape_cast %102 : vector<128x256xf32> to vector<2x8x8x256xf32>
    %c0_106 = arith.constant 0 : index
    %c1_107 = arith.constant 1 : index
    %c1_108 = arith.constant 1 : index
    %c0_109 = arith.constant 0 : index
    %112 = vector.load %arg18[%c0_106, %c1_107, %c1_108, %c0_109] : memref<2x10x16x256xf32, #tpu.memory_space<vmem>>, vector<2x8x8x256xf32>
    tpu.vector_store %arg18[%c0_106, %c1_107, %c1_108, %c0_109], %111 {strides = array<i32>} : memref<2x10x16x256xf32, #tpu.memory_space<vmem>>, vector<2x8x8x256xf32>,
    %c0_110 = arith.constant 0 : index
    %c0_111 = arith.constant 0 : index
    %113 = vector.load %arg11[%c0_110, %c0_111] : memref<9x256xf32, #tpu.memory_space<vmem>>, vector<9x256xf32>
    %c0_112 = arith.constant 0 : index
    %c0_113 = arith.constant 0 : index
    %114 = vector.load %arg12[%c0_112, %c0_113] : memref<1x256xf32, #tpu.memory_space<vmem>>, vector<1x256xf32>
    %115 = vector.shape_cast %114 : vector<1x256xf32> to vector<1x1x1x256xf32>
    %116 = vector.shape_cast %115 : vector<1x1x1x256xf32> to vector<1x1x1x256xf32>
    %117 = vector.broadcast %116 : vector<1x1x1x256xf32> to vector<2x8x8x256xf32>
    %c0_114 = arith.constant 0 : index
    %c0_115 = arith.constant 0 : index
    %c0_116 = arith.constant 0 : index
    %c0_117 = arith.constant 0 : index
    %118 = vector.load %arg18[%c0_114, %c0_115, %c0_116, %c0_117] : memref<2x10x16x256xf32, #tpu.memory_space<vmem>>, vector<2x8x8x256xf32>
    %119 = vector.extract_strided_slice %113 {offsets = [0, 0], sizes = [1, 256], strides = [1, 1]} : vector<9x256xf32> to vector<1x256xf32>
    %120 = vector.shape_cast %119 : vector<1x256xf32> to vector<256xf32>
    %121 = vector.shape_cast %120 : vector<256xf32> to vector<1x1x1x256xf32>
    %122 = vector.broadcast %121 : vector<1x1x1x256xf32> to vector<2x8x8x256xf32>
    %123 = arith.mulf %118, %122 : vector<2x8x8x256xf32>
    %124 = arith.addf %117, %123 : vector<2x8x8x256xf32>
    %c0_118 = arith.constant 0 : index
    %c0_119 = arith.constant 0 : index
    %c1_120 = arith.constant 1 : index
    %c0_121 = arith.constant 0 : index
    %125 = vector.load %arg18[%c0_118, %c0_119, %c1_120, %c0_121] : memref<2x10x16x256xf32, #tpu.memory_space<vmem>>, vector<2x8x8x256xf32>
    %126 = vector.extract_strided_slice %113 {offsets = [1, 0], sizes = [1, 256], strides = [1, 1]} : vector<9x256xf32> to vector<1x256xf32>
    %127 = vector.shape_cast %126 : vector<1x256xf32> to vector<256xf32>
    %128 = vector.shape_cast %127 : vector<256xf32> to vector<1x1x1x256xf32>
    %129 = vector.broadcast %128 : vector<1x1x1x256xf32> to vector<2x8x8x256xf32>
    %130 = arith.mulf %125, %129 : vector<2x8x8x256xf32>
    %131 = arith.addf %124, %130 : vector<2x8x8x256xf32>
    %c0_122 = arith.constant 0 : index
    %c0_123 = arith.constant 0 : index
    %c2_124 = arith.constant 2 : index
    %c0_125 = arith.constant 0 : index
    %132 = vector.load %arg18[%c0_122, %c0_123, %c2_124, %c0_125] : memref<2x10x16x256xf32, #tpu.memory_space<vmem>>, vector<2x8x8x256xf32>
    %133 = vector.extract_strided_slice %113 {offsets = [2, 0], sizes = [1, 256], strides = [1, 1]} : vector<9x256xf32> to vector<1x256xf32>
    %134 = vector.shape_cast %133 : vector<1x256xf32> to vector<256xf32>
    %135 = vector.shape_cast %134 : vector<256xf32> to vector<1x1x1x256xf32>
    %136 = vector.broadcast %135 : vector<1x1x1x256xf32> to vector<2x8x8x256xf32>
    %137 = arith.mulf %132, %136 : vector<2x8x8x256xf32>
    %138 = arith.addf %131, %137 : vector<2x8x8x256xf32>
    %c0_126 = arith.constant 0 : index
    %c1_127 = arith.constant 1 : index
    %c0_128 = arith.constant 0 : index
    %c0_129 = arith.constant 0 : index
    %139 = vector.load %arg18[%c0_126, %c1_127, %c0_128, %c0_129] : memref<2x10x16x256xf32, #tpu.memory_space<vmem>>, vector<2x8x8x256xf32>
    %140 = vector.extract_strided_slice %113 {offsets = [3, 0], sizes = [1, 256], strides = [1, 1]} : vector<9x256xf32> to vector<1x256xf32>
    %141 = vector.shape_cast %140 : vector<1x256xf32> to vector<256xf32>
    %142 = vector.shape_cast %141 : vector<256xf32> to vector<1x1x1x256xf32>
    %143 = vector.broadcast %142 : vector<1x1x1x256xf32> to vector<2x8x8x256xf32>
    %144 = arith.mulf %139, %143 : vector<2x8x8x256xf32>
    %145 = arith.addf %138, %144 : vector<2x8x8x256xf32>
    %c0_130 = arith.constant 0 : index
    %c1_131 = arith.constant 1 : index
    %c1_132 = arith.constant 1 : index
    %c0_133 = arith.constant 0 : index
    %146 = vector.load %arg18[%c0_130, %c1_131, %c1_132, %c0_133] : memref<2x10x16x256xf32, #tpu.memory_space<vmem>>, vector<2x8x8x256xf32>
    %147 = vector.extract_strided_slice %113 {offsets = [4, 0], sizes = [1, 256], strides = [1, 1]} : vector<9x256xf32> to vector<1x256xf32>
    %148 = vector.shape_cast %147 : vector<1x256xf32> to vector<256xf32>
    %149 = vector.shape_cast %148 : vector<256xf32> to vector<1x1x1x256xf32>
    %150 = vector.broadcast %149 : vector<1x1x1x256xf32> to vector<2x8x8x256xf32>
    %151 = arith.mulf %146, %150 : vector<2x8x8x256xf32>
    %152 = arith.addf %145, %151 : vector<2x8x8x256xf32>
    %c0_134 = arith.constant 0 : index
    %c1_135 = arith.constant 1 : index
    %c2_136 = arith.constant 2 : index
    %c0_137 = arith.constant 0 : index
    %153 = vector.load %arg18[%c0_134, %c1_135, %c2_136, %c0_137] : memref<2x10x16x256xf32, #tpu.memory_space<vmem>>, vector<2x8x8x256xf32>
    %154 = vector.extract_strided_slice %113 {offsets = [5, 0], sizes = [1, 256], strides = [1, 1]} : vector<9x256xf32> to vector<1x256xf32>
    %155 = vector.shape_cast %154 : vector<1x256xf32> to vector<256xf32>
    %156 = vector.shape_cast %155 : vector<256xf32> to vector<1x1x1x256xf32>
    %157 = vector.broadcast %156 : vector<1x1x1x256xf32> to vector<2x8x8x256xf32>
    %158 = arith.mulf %153, %157 : vector<2x8x8x256xf32>
    %159 = arith.addf %152, %158 : vector<2x8x8x256xf32>
    %c0_138 = arith.constant 0 : index
    %c2_139 = arith.constant 2 : index
    %c0_140 = arith.constant 0 : index
    %c0_141 = arith.constant 0 : index
    %160 = vector.load %arg18[%c0_138, %c2_139, %c0_140, %c0_141] : memref<2x10x16x256xf32, #tpu.memory_space<vmem>>, vector<2x8x8x256xf32>
    %161 = vector.extract_strided_slice %113 {offsets = [6, 0], sizes = [1, 256], strides = [1, 1]} : vector<9x256xf32> to vector<1x256xf32>
    %162 = vector.shape_cast %161 : vector<1x256xf32> to vector<256xf32>
    %163 = vector.shape_cast %162 : vector<256xf32> to vector<1x1x1x256xf32>
    %164 = vector.broadcast %163 : vector<1x1x1x256xf32> to vector<2x8x8x256xf32>
    %165 = arith.mulf %160, %164 : vector<2x8x8x256xf32>
    %166 = arith.addf %159, %165 : vector<2x8x8x256xf32>
    %c0_142 = arith.constant 0 : index
    %c2_143 = arith.constant 2 : index
    %c1_144 = arith.constant 1 : index
    %c0_145 = arith.constant 0 : index
    %167 = vector.load %arg18[%c0_142, %c2_143, %c1_144, %c0_145] : memref<2x10x16x256xf32, #tpu.memory_space<vmem>>, vector<2x8x8x256xf32>
    %168 = vector.extract_strided_slice %113 {offsets = [7, 0], sizes = [1, 256], strides = [1, 1]} : vector<9x256xf32> to vector<1x256xf32>
    %169 = vector.shape_cast %168 : vector<1x256xf32> to vector<256xf32>
    %170 = vector.shape_cast %169 : vector<256xf32> to vector<1x1x1x256xf32>
    %171 = vector.broadcast %170 : vector<1x1x1x256xf32> to vector<2x8x8x256xf32>
    %172 = arith.mulf %167, %171 : vector<2x8x8x256xf32>
    %173 = arith.addf %166, %172 : vector<2x8x8x256xf32>
    %c0_146 = arith.constant 0 : index
    %c2_147 = arith.constant 2 : index
    %c2_148 = arith.constant 2 : index
    %c0_149 = arith.constant 0 : index
    %174 = vector.load %arg18[%c0_146, %c2_147, %c2_148, %c0_149] : memref<2x10x16x256xf32, #tpu.memory_space<vmem>>, vector<2x8x8x256xf32>
    %175 = vector.extract_strided_slice %113 {offsets = [8, 0], sizes = [1, 256], strides = [1, 1]} : vector<9x256xf32> to vector<1x256xf32>
    %176 = vector.shape_cast %175 : vector<1x256xf32> to vector<256xf32>
    %177 = vector.shape_cast %176 : vector<256xf32> to vector<1x1x1x256xf32>
    %178 = vector.broadcast %177 : vector<1x1x1x256xf32> to vector<2x8x8x256xf32>
    %179 = arith.mulf %174, %178 : vector<2x8x8x256xf32>
    %180 = arith.addf %173, %179 : vector<2x8x8x256xf32>
    %181 = vector.shape_cast %180 : vector<2x8x8x256xf32> to vector<128x256xf32>
    %182 = arith.truncf %181 : vector<128x256xf32> to vector<128x256xbf16>
    %c0_150 = arith.constant 0 : index
    %c0_151 = arith.constant 0 : index
    %183 = vector.load %arg13[%c0_150, %c0_151] : memref<256x256xbf16, #tpu.memory_space<vmem>>, vector<256x256xbf16>
    %cst_152 = arith.constant dense<0.000000e+00> : vector<128x256xf32>
    %184 = tpu.matmul %182, %183, %cst_152 {dimension_numbers = #tpu.dot_dimension_numbers<[1], [0], [0], [1], [0, 0, 1, 1], [], []>} : vector<128x256xbf16>, vector<256x256xbf16>, vector<128x256xf32> -> vector<128x256xf32>
    %c0_153 = arith.constant 0 : index
    %c0_154 = arith.constant 0 : index
    %185 = vector.load %arg14[%c0_153, %c0_154] : memref<1x256xf32, #tpu.memory_space<vmem>>, vector<1x256xf32>
    %186 = vector.broadcast %185 : vector<1x256xf32> to vector<128x256xf32>
    %187 = arith.addf %184, %186 : vector<128x256xf32>
    %188 = vector.shape_cast %187 : vector<128x256xf32> to vector<2x8x8x256xf32>
    %c0_155 = arith.constant 0 : index
    %c0_156 = arith.constant 0 : index
    %c0_157 = arith.constant 0 : index
    %c0_158 = arith.constant 0 : index
    %189 = vector.load %arg16[%c0_155, %c0_156, %c0_157, %c0_158] : memref<2x8x8x256xf32, #tpu.memory_space<vmem>>, vector<2x8x8x256xf32>
    tpu.vector_store %arg16[%c0_155, %c0_156, %c0_157, %c0_158], %188 {strides = array<i32>} : memref<2x8x8x256xf32, #tpu.memory_space<vmem>>, vector<2x8x8x256xf32>,
    return
  }
  func.func @transform_0(%arg0: i32) -> (i32, i32, i32, i32) {
    %c0_i32 = arith.constant 0 : i32
    %c0_i32_0 = arith.constant 0 : i32
    %c0_i32_1 = arith.constant 0 : i32
    %c0_i32_2 = arith.constant 0 : i32
    return %arg0, %c0_i32, %c0_i32_0, %c0_i32_1 : i32, i32, i32, i32
  }
  func.func @transform_1(%arg0: i32) -> (i32, i32, i32, i32) {
    %c0_i32 = arith.constant 0 : i32
    %c0_i32_0 = arith.constant 0 : i32
    %c0_i32_1 = arith.constant 0 : i32
    %c0_i32_2 = arith.constant 0 : i32
    return %arg0, %c0_i32, %c0_i32_0, %c0_i32_1 : i32, i32, i32, i32
  }
  func.func @transform_2(%arg0: i32) -> (i32, i32) {
    %c0_i32 = arith.constant 0 : i32
    %c0_i32_0 = arith.constant 0 : i32
    %c0_i32_1 = arith.constant 0 : i32
    return %c0_i32, %c0_i32_0 : i32, i32
  }
  func.func @transform_3(%arg0: i32) -> (i32, i32) {
    %c0_i32 = arith.constant 0 : i32
    %c0_i32_0 = arith.constant 0 : i32
    %c0_i32_1 = arith.constant 0 : i32
    return %c0_i32, %c0_i32_0 : i32, i32
  }
  func.func @transform_4(%arg0: i32) -> (i32, i32) {
    %c0_i32 = arith.constant 0 : i32
    %c0_i32_0 = arith.constant 0 : i32
    %c0_i32_1 = arith.constant 0 : i32
    return %c0_i32, %c0_i32_0 : i32, i32
  }
  func.func @transform_5(%arg0: i32) -> (i32, i32) {
    %c0_i32 = arith.constant 0 : i32
    %c0_i32_0 = arith.constant 0 : i32
    %c0_i32_1 = arith.constant 0 : i32
    return %c0_i32, %c0_i32_0 : i32, i32
  }
  func.func @transform_6(%arg0: i32) -> (i32, i32) {
    %c0_i32 = arith.constant 0 : i32
    %c0_i32_0 = arith.constant 0 : i32
    %c0_i32_1 = arith.constant 0 : i32
    return %c0_i32, %c0_i32_0 : i32, i32
  }
  func.func @transform_7(%arg0: i32) -> (i32, i32) {
    %c0_i32 = arith.constant 0 : i32
    %c0_i32_0 = arith.constant 0 : i32
    %c0_i32_1 = arith.constant 0 : i32
    return %c0_i32, %c0_i32_0 : i32, i32
  }
  func.func @transform_8(%arg0: i32) -> (i32, i32) {
    %c0_i32 = arith.constant 0 : i32
    %c0_i32_0 = arith.constant 0 : i32
    %c0_i32_1 = arith.constant 0 : i32
    return %c0_i32, %c0_i32_0 : i32, i32
  }
  func.func @transform_9(%arg0: i32) -> (i32, i32) {
    %c0_i32 = arith.constant 0 : i32
    %c0_i32_0 = arith.constant 0 : i32
    %c0_i32_1 = arith.constant 0 : i32
    return %c0_i32, %c0_i32_0 : i32, i32
  }
  func.func @transform_10(%arg0: i32) -> (i32, i32) {
    %c0_i32 = arith.constant 0 : i32
    %c0_i32_0 = arith.constant 0 : i32
    %c0_i32_1 = arith.constant 0 : i32
    return %c0_i32, %c0_i32_0 : i32, i32
  }
  func.func @transform_11(%arg0: i32) -> (i32, i32) {
    %c0_i32 = arith.constant 0 : i32
    %c0_i32_0 = arith.constant 0 : i32
    %c0_i32_1 = arith.constant 0 : i32
    return %c0_i32, %c0_i32_0 : i32, i32
  }
  func.func @transform_12(%arg0: i32) -> (i32, i32) {
    %c0_i32 = arith.constant 0 : i32
    %c0_i32_0 = arith.constant 0 : i32
    %c0_i32_1 = arith.constant 0 : i32
    return %c0_i32, %c0_i32_0 : i32, i32
  }
  func.func @transform_13(%arg0: i32) -> (i32, i32) {
    %c0_i32 = arith.constant 0 : i32
    %c0_i32_0 = arith.constant 0 : i32
    %c0_i32_1 = arith.constant 0 : i32
    return %c0_i32, %c0_i32_0 : i32, i32
  }
  func.func @transform_14(%arg0: i32) -> (i32, i32, i32, i32) {
    %c0_i32 = arith.constant 0 : i32
    %c0_i32_0 = arith.constant 0 : i32
    %c0_i32_1 = arith.constant 0 : i32
    %c0_i32_2 = arith.constant 0 : i32
    return %arg0, %c0_i32, %c0_i32_0, %c0_i32_1 : i32, i32, i32, i32
  }
  func.func @transform_15(%arg0: i32) -> (i32, i32, i32, i32) {
    %c0_i32 = arith.constant 0 : i32
    %c0_i32_0 = arith.constant 0 : i32
    %c0_i32_1 = arith.constant 0 : i32
    %c0_i32_2 = arith.constant 0 : i32
    return %arg0, %c0_i32, %c0_i32_0, %c0_i32_1 : i32, i32, i32, i32
  }
}

</mosaic_0001>

<llo_original>
// kernel: feature_extractor_forward.1
$region0: #{feature_extractor_forward.1}
  #allocation0 [shape = 'u32[]', space=smem, size = 0x4, offset = 0x4, fixed_abs, tag = 'smem constant byte address 0x4 - core index']
  #allocation1 [shape = 'u32[144,128]{1,0:T(1,128)}', space=vmem, size = 0x12000, scoped, tag = 'internal scratch']
  #allocation2 [shape = 'f32[2,10,16,128]{3,2,1,0:T(8,128)}', space=vmem, size = 0x28000, scoped, tag = 'scratch operand']
  #allocation3 [shape = 'f32[2,10,16,256]{3,2,1,0:T(8,128)}', space=vmem, size = 0x50000, scoped, tag = 'scratch operand']
  %s0 = inlined_call_operand.hbm [shape: f32[2,8,8,64], index: 0, kind: input, shape index: {}]
  %s1 = inlined_call_operand.hbm [shape: f32[2,8,8,128], index: 1, kind: input, shape index: {}]
  %s2 = inlined_call_operand.vmem [shape: bf16[64,128], index: 2, kind: input, shape index: {}]
  %s3 = inlined_call_operand.hbm [shape: f32[1,128], index: 3, kind: input, shape index: {}]
  %s4 = inlined_call_operand.hbm [shape: f32[9,128], index: 4, kind: input, shape index: {}]
  %s5 = inlined_call_operand.hbm [shape: f32[1,128], index: 5, kind: input, shape index: {}]
  %s6 = inlined_call_operand.hbm [shape: bf16[128,128], index: 6, kind: input, shape index: {}]
  %s7 = inlined_call_operand.hbm [shape: f32[1,128], index: 7, kind: input, shape index: {}]
  %s8 = inlined_call_operand.hbm [shape: bf16[128,256], index: 8, kind: input, shape index: {}]
  %s9 = inlined_call_operand.hbm [shape: f32[1,256], index: 9, kind: input, shape index: {}]
  %s10 = inlined_call_operand.vmem [shape: f32[9,256], index: 10, kind: input, shape index: {}]
  %s11 = inlined_call_operand.hbm [shape: f32[1,256], index: 11, kind: input, shape index: {}]
  %s12 = inlined_call_operand.hbm [shape: bf16[256,256], index: 12, kind: input, shape index: {}]
  %s13 = inlined_call_operand.hbm [shape: f32[1,256], index: 13, kind: input, shape index: {}]
  %s14 = inlined_call_operand.hbm [shape: f32[2,8,8,128], index: 14, kind: output, shape index: {0}]
  %s15 = inlined_call_operand.hbm [shape: f32[2,8,8,256], index: 15, kind: output, shape index: {1}]
  %16 = xla_tuple %s14, %s15
  %s17 = sld [smem:[#allocation0]]
  $region122: #{feature_extractor_forward.1} parent=0
    _
  %s19 = ssub.s32 1, %s17
  %s20 = scalar_select 0, %s19, %s17
  $region1: #{feature_extractor_forward.1} parent=0
    #allocation4 [shape = 'u8[65536]{0}', space=vmem, size = 0x10000, scoped, tag = 'input window, operand 0, single buffered']
    #allocation5 [shape = 's32[1]{0}', space=sflag, size = 0x4, scoped, tag = 'scoped memory for feature_extractor_forward.1']
    #allocation6 [shape = 's32[1]{0}', space=sflag, size = 0x4, scoped, tag = 'scoped memory for feature_extractor_forward.1']
    #allocation7 [shape = 'u8[65536]{0}', space=vmem, size = 0x10000, scoped, tag = 'input window, operand 1, single buffered']
    #allocation8 [shape = 's32[1]{0}', space=sflag, size = 0x4, scoped, tag = 'scoped memory for feature_extractor_forward.1']
    #allocation9 [shape = 'u8[512]{0}', space=vmem, size = 0x400, scoped, tag = 'input window, operand 3, single buffered']
    #allocation10 [shape = 'u8[8192]{0}', space=vmem, size = 0x2000, scoped, tag = 'input window, operand 4, single buffered']
    #allocation11 [shape = 's32[1]{0}', space=sflag, size = 0x4, scoped, tag = 'scoped memory for feature_extractor_forward.1']
    #allocation12 [shape = 'u8[512]{0}', space=vmem, size = 0x400, scoped, tag = 'input window, operand 5, single buffered']
    #allocation13 [shape = 'u8[32768]{0}', space=vmem, size = 0x8000, scoped, tag = 'input window, operand 6, single buffered']
    #allocation14 [shape = 's32[1]{0}', space=sflag, size = 0x4, scoped, tag = 'scoped memory for feature_extractor_forward.1']
    #allocation15 [shape = 'u8[512]{0}', space=vmem, size = 0x400, scoped, tag = 'input window, operand 7, single buffered']
    #allocation16 [shape = 'u8[65536]{0}', space=vmem, size = 0x10000, scoped, tag = 'input window, operand 8, single buffered']
    #allocation17 [shape = 's32[1]{0}', space=sflag, size = 0x4, scoped, tag = 'scoped memory for feature_extractor_forward.1']
    #allocation18 [shape = 'u8[1024]{0}', space=vmem, size = 0x400, scoped, tag = 'input window, operand 9, single buffered']
    #allocation19 [shape = 'u8[1024]{0}', space=vmem, size = 0x400, scoped, tag = 'input window, operand 11, single buffered']
    #allocation20 [shape = 's32[1]{0}', space=sflag, size = 0x4, scoped, tag = 'scoped memory for feature_extractor_forward.1']
    #allocation21 [shape = 'u8[131072]{0}', space=vmem, size = 0x20000, scoped, tag = 'input window, operand 12, single buffered']
    #allocation22 [shape = 'u8[1024]{0}', space=vmem, size = 0x400, scoped, tag = 'input window, operand 13, single buffered']
    #allocation23 [shape = 's32[1]{0}', space=sflag, size = 0x4, scoped, tag = 'scoped memory for feature_extractor_forward.1']
    #allocation24 [shape = 'u8[65536]{0}', space=vmem, size = 0x10000, scoped, tag = 'output window, operand 0, single buffered']
    #allocation25 [shape = 'u8[131072]{0}', space=vmem, size = 0x20000, scoped, tag = 'output window, operand 1, single buffered']
    #allocation26 [shape = 's32[1]{0}', space=sflag, size = 0x4, scoped, tag = 'scoped memory for feature_extractor_forward.1']
    %21 = vsyncpa [#allocation5], 0
    %22 = vsyncpa [#allocation8], 0
    %23 = vsyncpa [#allocation11], 0
    %24 = vsyncpa [#allocation14], 0
    %25 = vsyncpa [#allocation17], 0
    %26 = vsyncpa [#allocation20], 0
    %27 = vsyncpa [#allocation23], 0
    %28 = vsyncpa [#allocation6], 0
    %29 = vsyncpa [#allocation26], 0
    // Predicated region
    $region2: #{feature_extractor_forward.1} parent=1 // pred_check
      _
    $region3: #{feature_extractor_forward.1} parent=1 // pred_check_branch
      %31 = sbr.rel (0) target = $region5
    $region4: #{feature_extractor_forward.1} parent=1 // pred_region
      %s33 = ssub.s32 2048, 2048
      %34 = vsyncadd [#allocation5], %s33
      %s35 = sshll.u32 [#allocation4], 4
      %s36 = int_to_ptr.vmem [resolvable:$true] %s35
      %41 = dma.hbm_to_vmem [thread:$0]  %s0, 2048, %s36, [#allocation5], 128, 128, 8
    $region5: #{feature_extractor_forward.1} parent=1 // pred_fallthru
      _
    // Predicated region
    $region6: #{feature_extractor_forward.1} parent=1 // pred_check
      _
    $region7: #{feature_extractor_forward.1} parent=1 // pred_check_branch
      %43 = sbr.rel (0) target = $region9
    $region8: #{feature_extractor_forward.1} parent=1 // pred_region
      %s45 = ssub.s32 2048, 2048
      %46 = vsyncadd [#allocation8], %s45
      %s47 = sshll.u32 [#allocation7], 4
      %s48 = int_to_ptr.vmem [resolvable:$true] %s47
      %53 = dma.hbm_to_vmem [thread:$0]  %s1, 2048, %s48, [#allocation8], 128, 128, 8
    $region9: #{feature_extractor_forward.1} parent=1 // pred_fallthru
      _
    // Predicated region
    $region10: #{feature_extractor_forward.1} parent=1 // pred_check
      _
    $region11: #{feature_extractor_forward.1} parent=1 // pred_check_branch
      %55 = sbr.rel (0) target = $region13
    $region12: #{feature_extractor_forward.1} parent=1 // pred_region
      _
    $region13: #{feature_extractor_forward.1} parent=1 // pred_fallthru
      _
    // Predicated region
    $region14: #{feature_extractor_forward.1} parent=1 // pred_check
      _
    $region15: #{feature_extractor_forward.1} parent=1 // pred_check_branch
      %57 = sbr.rel (0) target = $region17
    $region16: #{feature_extractor_forward.1} parent=1 // pred_region
      %s59 = ssub.s32 16, 16
      %60 = vsyncadd [#allocation8], %s59
      %s62 = sshll.u32 [#allocation9], 4
      %s63 = int_to_ptr.vmem [resolvable:$true] %s62
      %65 = dma.hbm_to_vmem [thread:$0]  %s3, 16, %s63, [#allocation8]
    $region17: #{feature_extractor_forward.1} parent=1 // pred_fallthru
      _
    // Predicated region
    $region18: #{feature_extractor_forward.1} parent=1 // pred_check
      _
    $region19: #{feature_extractor_forward.1} parent=1 // pred_check_branch
      %67 = sbr.rel (0) target = $region21
    $region20: #{feature_extractor_forward.1} parent=1 // pred_region
      %s69 = ssub.s32 256, 256
      %70 = vsyncadd [#allocation11], %s69
      %s71 = sshll.u32 [#allocation10], 4
      %s72 = int_to_ptr.vmem [resolvable:$true] %s71
      %77 = dma.hbm_to_vmem [thread:$0]  %s4, 256, %s72, [#allocation11], 128, 128, 8
    $region21: #{feature_extractor_forward.1} parent=1 // pred_fallthru
      _
    // Predicated region
    $region22: #{feature_extractor_forward.1} parent=1 // pred_check
      _
    $region23: #{feature_extractor_forward.1} parent=1 // pred_check_branch
      %79 = sbr.rel (0) target = $region25
    $region24: #{feature_extractor_forward.1} parent=1 // pred_region
      %s81 = ssub.s32 16, 16
      %82 = vsyncadd [#allocation11], %s81
      %s84 = sshll.u32 [#allocation12], 4
      %s85 = int_to_ptr.vmem [resolvable:$true] %s84
      %87 = dma.hbm_to_vmem [thread:$0]  %s5, 16, %s85, [#allocation11]
    $region25: #{feature_extractor_forward.1} parent=1 // pred_fallthru
      _
    // Predicated region
    $region26: #{feature_extractor_forward.1} parent=1 // pred_check
      _
    $region27: #{feature_extractor_forward.1} parent=1 // pred_check_branch
      %89 = sbr.rel (0) target = $region29
    $region28: #{feature_extractor_forward.1} parent=1 // pred_region
      %s91 = ssub.s32 1024, 1024
      %92 = vsyncadd [#allocation14], %s91
      %s93 = sshll.u32 [#allocation13], 4
      %s94 = int_to_ptr.vmem [resolvable:$true] %s93
      %99 = dma.hbm_to_vmem [thread:$0]  %s6, 1024, %s94, [#allocation14], 64, 64, 4
    $region29: #{feature_extractor_forward.1} parent=1 // pred_fallthru
      _
    // Predicated region
    $region30: #{feature_extractor_forward.1} parent=1 // pred_check
      _
    $region31: #{feature_extractor_forward.1} parent=1 // pred_check_branch
      %101 = sbr.rel (0) target = $region33
    $region32: #{feature_extractor_forward.1} parent=1 // pred_region
      %s103 = ssub.s32 16, 16
      %104 = vsyncadd [#allocation14], %s103
      %s106 = sshll.u32 [#allocation15], 4
      %s107 = int_to_ptr.vmem [resolvable:$true] %s106
      %109 = dma.hbm_to_vmem [thread:$0]  %s7, 16, %s107, [#allocation14]
    $region33: #{feature_extractor_forward.1} parent=1 // pred_fallthru
      _
    // Predicated region
    $region34: #{feature_extractor_forward.1} parent=1 // pred_check
      _
    $region35: #{feature_extractor_forward.1} parent=1 // pred_check_branch
      %111 = sbr.rel (0) target = $region37
    $region36: #{feature_extractor_forward.1} parent=1 // pred_region
      %s113 = ssub.s32 2048, 2048
      %114 = vsyncadd [#allocation17], %s113
      %s115 = sshll.u32 [#allocation16], 4
      %s116 = int_to_ptr.vmem [resolvable:$true] %s115
      %121 = dma.hbm_to_vmem [thread:$0]  %s8, 2048, %s116, [#allocation17], 128, 128, 8
    $region37: #{feature_extractor_forward.1} parent=1 // pred_fallthru
      _
    // Predicated region
    $region38: #{feature_extractor_forward.1} parent=1 // pred_check
      _
    $region39: #{feature_extractor_forward.1} parent=1 // pred_check_branch
      %123 = sbr.rel (0) target = $region41
    $region40: #{feature_extractor_forward.1} parent=1 // pred_region
      %s125 = ssub.s32 32, 32
      %126 = vsyncadd [#allocation17], %s125
      %s128 = sshll.u32 [#allocation18], 4
      %s129 = int_to_ptr.vmem [resolvable:$true] %s128
      %131 = dma.hbm_to_vmem [thread:$0]  %s9, 32, %s129, [#allocation17]
    $region41: #{feature_extractor_forward.1} parent=1 // pred_fallthru
      _
    // Predicated region
    $region42: #{feature_extractor_forward.1} parent=1 // pred_check
      _
    $region43: #{feature_extractor_forward.1} parent=1 // pred_check_branch
      %133 = sbr.rel (0) target = $region45
    $region44: #{feature_extractor_forward.1} parent=1 // pred_region
      _
    $region45: #{feature_extractor_forward.1} parent=1 // pred_fallthru
      _
    // Predicated region
    $region46: #{feature_extractor_forward.1} parent=1 // pred_check
      _
    $region47: #{feature_extractor_forward.1} parent=1 // pred_check_branch
      %135 = sbr.rel (0) target = $region49
    $region48: #{feature_extractor_forward.1} parent=1 // pred_region
      %s137 = ssub.s32 32, 32
      %138 = vsyncadd [#allocation20], %s137
      %s140 = sshll.u32 [#allocation19], 4
      %s141 = int_to_ptr.vmem [resolvable:$true] %s140
      %143 = dma.hbm_to_vmem [thread:$0]  %s11, 32, %s141, [#allocation20]
    $region49: #{feature_extractor_forward.1} parent=1 // pred_fallthru
      _
    // Predicated region
    $region50: #{feature_extractor_forward.1} parent=1 // pred_check
      _
    $region51: #{feature_extractor_forward.1} parent=1 // pred_check_branch
      %145 = sbr.rel (0) target = $region53
    $region52: #{feature_extractor_forward.1} parent=1 // pred_region
      %s147 = ssub.s32 4096, 4096
      %148 = vsyncadd [#allocation20], %s147
      %s149 = sshll.u32 [#allocation21], 4
      %s150 = int_to_ptr.vmem [resolvable:$true] %s149
      %155 = dma.hbm_to_vmem [thread:$0]  %s12, 4096, %s150, [#allocation20], 128, 128, 8
    $region53: #{feature_extractor_forward.1} parent=1 // pred_fallthru
      _
    // Predicated region
    $region54: #{feature_extractor_forward.1} parent=1 // pred_check
      _
    $region55: #{feature_extractor_forward.1} parent=1 // pred_check_branch
      %157 = sbr.rel (0) target = $region57
    $region56: #{feature_extractor_forward.1} parent=1 // pred_region
      %s159 = ssub.s32 32, 32
      %160 = vsyncadd [#allocation23], %s159
      %s162 = sshll.u32 [#allocation22], 4
      %s163 = int_to_ptr.vmem [resolvable:$true] %s162
      %165 = dma.hbm_to_vmem [thread:$0]  %s13, 32, %s163, [#allocation23]
    $region57: #{feature_extractor_forward.1} parent=1 // pred_fallthru
      _
    // Predicated region
    $region58: #{feature_extractor_forward.1} parent=1 // pred_check
      _
    $region59: #{feature_extractor_forward.1} parent=1 // pred_check_branch
      %167 = sbr.rel (0) target = $region61
    $region60: #{feature_extractor_forward.1} parent=1 // pred_region
      %168 = dma.done [#allocation5], 2048
    $region61: #{feature_extractor_forward.1} parent=1 // pred_fallthru
      _
    // Predicated region
    $region62: #{feature_extractor_forward.1} parent=1 // pred_check
      _
    $region63: #{feature_extractor_forward.1} parent=1 // pred_check_branch
      %170 = sbr.rel (0) target = $region65
    $region64: #{feature_extractor_forward.1} parent=1 // pred_region
      %171 = dma.done [#allocation8], 2048
    $region65: #{feature_extractor_forward.1} parent=1 // pred_fallthru
      _
    // Predicated region
    $region66: #{feature_extractor_forward.1} parent=1 // pred_check
      _
    $region67: #{feature_extractor_forward.1} parent=1 // pred_check_branch
      %173 = sbr.rel (0) target = $region69
    $region68: #{feature_extractor_forward.1} parent=1 // pred_region
      %174 = dma.done [#allocation8], 16
    $region69: #{feature_extractor_forward.1} parent=1 // pred_fallthru
      _
    // Predicated region
    $region70: #{feature_extractor_forward.1} parent=1 // pred_check
      _
    $region71: #{feature_extractor_forward.1} parent=1 // pred_check_branch
      %176 = sbr.rel (0) target = $region73
    $region72: #{feature_extractor_forward.1} parent=1 // pred_region
      %177 = dma.done [#allocation11], 256
    $region73: #{feature_extractor_forward.1} parent=1 // pred_fallthru
      _
    // Predicated region
    $region74: #{feature_extractor_forward.1} parent=1 // pred_check
      _
    $region75: #{feature_extractor_forward.1} parent=1 // pred_check_branch
      %179 = sbr.rel (0) target = $region77
    $region76: #{feature_extractor_forward.1} parent=1 // pred_region
      %180 = dma.done [#allocation11], 16
    $region77: #{feature_extractor_forward.1} parent=1 // pred_fallthru
      _
    // Predicated region
    $region78: #{feature_extractor_forward.1} parent=1 // pred_check
      _
    $region79: #{feature_extractor_forward.1} parent=1 // pred_check_branch
      %182 = sbr.rel (0) target = $region81
    $region80: #{feature_extractor_forward.1} parent=1 // pred_region
      %183 = dma.done [#allocation14], 1024
    $region81: #{feature_extractor_forward.1} parent=1 // pred_fallthru
      _
    // Predicated region
    $region82: #{feature_extractor_forward.1} parent=1 // pred_check
      _
    $region83: #{feature_extractor_forward.1} parent=1 // pred_check_branch
      %185 = sbr.rel (0) target = $region85
    $region84: #{feature_extractor_forward.1} parent=1 // pred_region
      %186 = dma.done [#allocation14], 16
    $region85: #{feature_extractor_forward.1} parent=1 // pred_fallthru
      _
    // Predicated region
    $region86: #{feature_extractor_forward.1} parent=1 // pred_check
      _
    $region87: #{feature_extractor_forward.1} parent=1 // pred_check_branch
      %188 = sbr.rel (0) target = $region89
    $region88: #{feature_extractor_forward.1} parent=1 // pred_region
      %189 = dma.done [#allocation17], 2048
    $region89: #{feature_extractor_forward.1} parent=1 // pred_fallthru
      _
    // Predicated region
    $region90: #{feature_extractor_forward.1} parent=1 // pred_check
      _
    $region91: #{feature_extractor_forward.1} parent=1 // pred_check_branch
      %191 = sbr.rel (0) target = $region93
    $region92: #{feature_extractor_forward.1} parent=1 // pred_region
      %192 = dma.done [#allocation17], 32
    $region93: #{feature_extractor_forward.1} parent=1 // pred_fallthru
      _
    // Predicated region
    $region94: #{feature_extractor_forward.1} parent=1 // pred_check
      _
    $region95: #{feature_extractor_forward.1} parent=1 // pred_check_branch
      %194 = sbr.rel (0) target = $region97
    $region96: #{feature_extractor_forward.1} parent=1 // pred_region
      %195 = dma.done [#allocation20], 32
    $region97: #{feature_extractor_forward.1} parent=1 // pred_fallthru
      _
    // Predicated region
    $region98: #{feature_extractor_forward.1} parent=1 // pred_check
      _
    $region99: #{feature_extractor_forward.1} parent=1 // pred_check_branch
      %197 = sbr.rel (0) target = $region101
    $region100: #{feature_extractor_forward.1} parent=1 // pred_region
      %198 = dma.done [#allocation20], 4096
    $region101: #{feature_extractor_forward.1} parent=1 // pred_fallthru
      _
    // Predicated region
    $region102: #{feature_extractor_forward.1} parent=1 // pred_check
      _
    $region103: #{feature_extractor_forward.1} parent=1 // pred_check_branch
      %200 = sbr.rel (0) target = $region105
    $region104: #{feature_extractor_forward.1} parent=1 // pred_region
      %201 = dma.done [#allocation23], 32
    $region105: #{feature_extractor_forward.1} parent=1 // pred_fallthru
      _
    %v203 = vld [vmem:[#allocation4] sm:$0xff]
    %v204 = vld [vmem:[#allocation4 + $0x8] sm:$0xff]
    %v205 = vld [vmem:[#allocation4 + $0x10] sm:$0xff]
    %v206 = vld [vmem:[#allocation4 + $0x18] sm:$0xff]
    %v207 = vld [vmem:[#allocation4 + $0x20] sm:$0xff]
    %v208 = vld [vmem:[#allocation4 + $0x28] sm:$0xff]
    %v209 = vld [vmem:[#allocation4 + $0x30] sm:$0xff]
    %v210 = vld [vmem:[#allocation4 + $0x38] sm:$0xff]
    %v211 = vld [vmem:[#allocation4 + $0x40] sm:$0xff]
    %v212 = vld [vmem:[#allocation4 + $0x48] sm:$0xff]
    %v213 = vld [vmem:[#allocation4 + $0x50] sm:$0xff]
    %v214 = vld [vmem:[#allocation4 + $0x58] sm:$0xff]
    %v215 = vld [vmem:[#allocation4 + $0x60] sm:$0xff]
    %v216 = vld [vmem:[#allocation4 + $0x68] sm:$0xff]
    %v217 = vld [vmem:[#allocation4 + $0x70] sm:$0xff]
    %v218 = vld [vmem:[#allocation4 + $0x78] sm:$0xff]
    %v219 = vpack.c.bf16 %v204, %v203
    %v220 = vpack.c.bf16 %v206, %v205
    %v221 = vpack.c.bf16 %v208, %v207
    %v222 = vpack.c.bf16 %v210, %v209
    %v223 = vpack.c.bf16 %v212, %v211
    %v224 = vpack.c.bf16 %v214, %v213
    %v225 = vpack.c.bf16 %v216, %v215
    %v226 = vpack.c.bf16 %v218, %v217
    %v227 = vld [vmem:[%s2] sm:$0xf]
    %v228 = vld [vmem:[%s2 + $0x4] sm:$0xf]
    %v229 = vld [vmem:[%s2 + $0x8] sm:$0xf]
    %v230 = vld [vmem:[%s2 + $0xc] sm:$0xf]
    %v231 = vld [vmem:[%s2 + $0x10] sm:$0xf]
    %v232 = vld [vmem:[%s2 + $0x14] sm:$0xf]
    %v233 = vld [vmem:[%s2 + $0x18] sm:$0xf]
    %v234 = vld [vmem:[%s2 + $0x1c] sm:$0xf]
    %v235 = vld [vmem:[#allocation9] sm:$0x1]
    %v237 = vlaneseq
    %v238 = vshrl.u32 %v237, 7
    %v239 = vsub.s32 0, %v238
    %v240 = vrot.slane %v235, %v239
    %v250 = vunpack.c.l.b16 %v227
    %v251 = vunpack.c.l.b16 %v228
    %v252 = vunpack.c.l.b16 %v229
    %v253 = vunpack.c.l.b16 %v230
    %v254 = vunpack.c.l.b16 %v231
    %v255 = vunpack.c.l.b16 %v232
    %v256 = vunpack.c.l.b16 %v233
    %v257 = vunpack.c.l.b16 %v234
    %v258 = vpack.c.b16 %v251, %v250
    %v259 = vpack.c.b16 %v253, %v252
    %v260 = vpack.c.b16 %v255, %v254
    %v261 = vpack.c.b16 %v257, %v256
    %vm266 = vcmask 523264
    %v268 = vsel %vm266, %v219, 0
    %v271 = vsel %vm266, %v220, 0
    %v274 = vsel %vm266, %v221, 0
    %v277 = vsel %vm266, %v222, 0
    %v280 = vsel %vm266, %v223, 0
    %v283 = vsel %vm266, %v224, 0
    %v286 = vsel %vm266, %v225, 0
    %v289 = vsel %vm266, %v226, 0
    %291 = vmatprep.subr.bf16.mxu0 0
    %292 = vmatpush1.bf16.msra.mxu0 %v258
    %293 = vmatprep.subr.bf16.mxu0 0
    %294 = vmatpush1.bf16.msra.mxu0 %v259
    %295 = vmatprep.subr.bf16.mxu0 0
    %296 = vmatpush1.bf16.msra.mxu0 %v260
    %297 = vmatprep.subr.bf16.mxu0 0
    %298 = vmatpush1.bf16.msra.mxu0 %v261
    %299 = vmatprep.subr.bf16.mxu0 0
    %300 = vmatpush1.bf16.msra.mxu0 0
    %301 = vmatprep.subr.bf16.mxu0 0
    %302 = vmatpush1.bf16.msra.mxu0 0
    %303 = vmatprep.subr.bf16.mxu0 0
    %304 = vmatpush1.bf16.msra.mxu0 0
    %305 = vmatprep.subr.bf16.mxu0 0
    %306 = vmatpush1.bf16.msra.mxu0 0
    %307 = vmatprep.subr.bf16.mxu0 0
    %308 = vmatpush1.bf16.msra.mxu0 0
    %309 = vmatprep.subr.bf16.mxu0 0
    %310 = vmatpush1.bf16.msra.mxu0 0
    %311 = vmatprep.subr.bf16.mxu0 0
    %312 = vmatpush1.bf16.msra.mxu0 0
    %313 = vmatprep.subr.bf16.mxu0 0
    %314 = vmatpush1.bf16.msra.mxu0 0
    %315 = vmatprep.subr.bf16.mxu0 0
    %316 = vmatpush1.bf16.msra.mxu0 0
    %317 = vmatprep.subr.bf16.mxu0 0
    %318 = vmatpush1.bf16.msra.mxu0 0
    %319 = vmatprep.subr.bf16.mxu0 0
    %320 = vmatpush1.bf16.msra.mxu0 0
    %321 = vmatprep.subr.bf16.mxu0 0
    %322 = vmatpush1.bf16.msra.mxu0 0
    %323 = vmatprep.mubr.bf16.mxu0 0
    %324 = vmatmul.mubr.bf16.gmra.mrb[0].mxu0 %v268
    %v325 = vpop.f32.mrb[0].mxu0
    %v326 = vadd.f32 %v240, %v325
    %v327 = vpop.f32.mrb[0].mxu0
    %v328 = vpop.f32.mrb[0].mxu0
    %v329 = vadd.f32 %v240, %v328
    %v330 = vpop.f32.mrb[0].mxu0
    %331 = vmatprep.mubr.bf16.mxu0 0
    %332 = vmatmul.mubr.bf16.gmra.mrb[0].mxu0 %v271
    %v333 = vpop.f32.mrb[0].mxu0
    %v334 = vadd.f32 %v240, %v333
    %v335 = vpop.f32.mrb[0].mxu0
    %v336 = vpop.f32.mrb[0].mxu0
    %v337 = vadd.f32 %v240, %v336
    %v338 = vpop.f32.mrb[0].mxu0
    %339 = vmatprep.mubr.bf16.mxu0 0
    %340 = vmatmul.mubr.bf16.gmra.mrb[0].mxu0 %v274
    %v341 = vpop.f32.mrb[0].mxu0
    %v342 = vadd.f32 %v240, %v341
    %v343 = vpop.f32.mrb[0].mxu0
    %v344 = vpop.f32.mrb[0].mxu0
    %v345 = vadd.f32 %v240, %v344
    %v346 = vpop.f32.mrb[0].mxu0
    %347 = vmatprep.mubr.bf16.mxu0 0
    %348 = vmatmul.mubr.bf16.gmra.mrb[0].mxu0 %v277
    %v349 = vpop.f32.mrb[0].mxu0
    %v350 = vadd.f32 %v240, %v349
    %v351 = vpop.f32.mrb[0].mxu0
    %v352 = vpop.f32.mrb[0].mxu0
    %v353 = vadd.f32 %v240, %v352
    %v354 = vpop.f32.mrb[0].mxu0
    %355 = vmatprep.mubr.bf16.mxu0 0
    %356 = vmatmul.mubr.bf16.gmra.mrb[0].mxu0 %v280
    %v357 = vpop.f32.mrb[0].mxu0
    %v358 = vadd.f32 %v240, %v357
    %v359 = vpop.f32.mrb[0].mxu0
    %v360 = vpop.f32.mrb[0].mxu0
    %v361 = vadd.f32 %v240, %v360
    %v362 = vpop.f32.mrb[0].mxu0
    %363 = vmatprep.mubr.bf16.mxu0 0
    %364 = vmatmul.mubr.bf16.gmra.mrb[0].mxu0 %v283
    %v365 = vpop.f32.mrb[0].mxu0
    %v366 = vadd.f32 %v240, %v365
    %v367 = vpop.f32.mrb[0].mxu0
    %v368 = vpop.f32.mrb[0].mxu0
    %v369 = vadd.f32 %v240, %v368
    %v370 = vpop.f32.mrb[0].mxu0
    %371 = vmatprep.mubr.bf16.mxu0 0
    %372 = vmatmul.mubr.bf16.gmra.mrb[0].mxu0 %v286
    %v373 = vpop.f32.mrb[0].mxu0
    %v374 = vadd.f32 %v240, %v373
    %v375 = vpop.f32.mrb[0].mxu0
    %v376 = vpop.f32.mrb[0].mxu0
    %v377 = vadd.f32 %v240, %v376
    %v378 = vpop.f32.mrb[0].mxu0
    %379 = vmatprep.mubr.bf16.mxu0 0
    %380 = vmatmul.mubr.bf16.gmra.mrb[0].mxu0 %v289
    %v381 = vpop.f32.mrb[0].mxu0
    %v382 = vadd.f32 %v240, %v381
    %v383 = vpop.f32.mrb[0].mxu0
    %v384 = vpop.f32.mrb[0].mxu0
    %v385 = vadd.f32 %v240, %v384
    %v386 = vpop.f32.mrb[0].mxu0
    %387 = vdwg.mxu0
    %388 = vst [vmem:[#allocation2] sm:$0xff] 0.0
    %389 = vst [vmem:[#allocation2 + $0x8] sm:$0xff] 0.0
    %390 = vst [vmem:[#allocation2 + $0xa0] sm:$0xff] 0.0
    %391 = vst [vmem:[#allocation2 + $0xa8] sm:$0xff] 0.0
    %s392 = scalar_lea.vmem [#allocation2], 144
    %393 = vst [vmem:[%s392] sm:$0xff] 0.0
    %394 = vst [vmem:[%s392 + $0x8] sm:$0xff] 0.0
    %395 = vst [vmem:[%s392 + $0xa0] sm:$0xff] 0.0
    %396 = vst [vmem:[%s392 + $0xa8] sm:$0xff] 0.0
    %s397 = scalar_lea.vmem [#allocation2], 16
    %398 = vst [vmem:[%s397] sm:$0x1] 0.0
    %399 = vst [vmem:[%s397 + $0x10] sm:$0x1] 0.0
    %400 = vst [vmem:[%s397 + $0x20] sm:$0x1] 0.0
    %401 = vst [vmem:[%s397 + $0x30] sm:$0x1] 0.0
    %402 = vst [vmem:[%s397 + $0x40] sm:$0x1] 0.0
    %403 = vst [vmem:[%s397 + $0x50] sm:$0x1] 0.0
    %404 = vst [vmem:[%s397 + $0x60] sm:$0x1] 0.0
    %405 = vst [vmem:[%s397 + $0x70] sm:$0x1] 0.0
    %406 = vst [vmem:[%s397 + $0xa0] sm:$0x1] 0.0
    %407 = vst [vmem:[%s397 + $0xb0] sm:$0x1] 0.0
    %408 = vst [vmem:[%s397 + $0xc0] sm:$0x1] 0.0
    %409 = vst [vmem:[%s397 + $0xd0] sm:$0x1] 0.0
    %410 = vst [vmem:[%s397 + $0xe0] sm:$0x1] 0.0
    %411 = vst [vmem:[%s397 + $0xf0] sm:$0x1] 0.0
    %412 = vst [vmem:[%s397 + $0x100] sm:$0x1] 0.0
    %413 = vst [vmem:[%s397 + $0x110] sm:$0x1] 0.0
    %414 = vst [vmem:[%s397 + $0x9] sm:$0x1] 0.0
    %415 = vst [vmem:[%s397 + $0x19] sm:$0x1] 0.0
    %416 = vst [vmem:[%s397 + $0x29] sm:$0x1] 0.0
    %417 = vst [vmem:[%s397 + $0x39] sm:$0x1] 0.0
    %418 = vst [vmem:[%s397 + $0x49] sm:$0x1] 0.0
    %419 = vst [vmem:[%s397 + $0x59] sm:$0x1] 0.0
    %420 = vst [vmem:[%s397 + $0x69] sm:$0x1] 0.0
    %421 = vst [vmem:[%s397 + $0x79] sm:$0x1] 0.0
    %422 = vst [vmem:[%s397 + $0xa9] sm:$0x1] 0.0
    %423 = vst [vmem:[%s397 + $0xb9] sm:$0x1] 0.0
    %424 = vst [vmem:[%s397 + $0xc9] sm:$0x1] 0.0
    %425 = vst [vmem:[%s397 + $0xd9] sm:$0x1] 0.0
    %426 = vst [vmem:[%s397 + $0xe9] sm:$0x1] 0.0
    %427 = vst [vmem:[%s397 + $0xf9] sm:$0x1] 0.0
    %428 = vst [vmem:[%s397 + $0x109] sm:$0x1] 0.0
    %429 = vst [vmem:[%s397 + $0x119] sm:$0x1] 0.0
    %430 = vst [vmem:[%s397 + $0x1] sm:$0xff] %v326
    %431 = vst [vmem:[%s397 + $0x11] sm:$0xff] %v329
    %432 = vst [vmem:[%s397 + $0x21] sm:$0xff] %v334
    %433 = vst [vmem:[%s397 + $0x31] sm:$0xff] %v337
    %434 = vst [vmem:[%s397 + $0x41] sm:$0xff] %v342
    %435 = vst [vmem:[%s397 + $0x51] sm:$0xff] %v345
    %436 = vst [vmem:[%s397 + $0x61] sm:$0xff] %v350
    %437 = vst [vmem:[%s397 + $0x71] sm:$0xff] %v353
    %438 = vst [vmem:[%s397 + $0xa1] sm:$0xff] %v358
    %439 = vst [vmem:[%s397 + $0xb1] sm:$0xff] %v361
    %440 = vst [vmem:[%s397 + $0xc1] sm:$0xff] %v366
    %441 = vst [vmem:[%s397 + $0xd1] sm:$0xff] %v369
    %442 = vst [vmem:[%s397 + $0xe1] sm:$0xff] %v374
    %443 = vst [vmem:[%s397 + $0xf1] sm:$0xff] %v377
    %444 = vst [vmem:[%s397 + $0x101] sm:$0xff] %v382
    %445 = vst [vmem:[%s397 + $0x111] sm:$0xff] %v385
    %v446 = vld [vmem:[#allocation10] sm:$0xff]
    %v447 = vld [vmem:[#allocation10 + $0x8] sm:$0x1]
    %v448 = vld [vmem:[#allocation12] sm:$0x1]
    %v450 = vlaneseq
    %v451 = vshrl.u32 %v450, 7
    %v452 = vsub.s32 0, %v451
    %v453 = vrot.slane %v448, %v452
    %v455 = vld [vmem:[#allocation2] sm:$0xff]
    %v456 = vld [vmem:[#allocation2 + $0x10] sm:$0xff]
    %v457 = vld [vmem:[#allocation2 + $0x20] sm:$0xff]
    %v458 = vld [vmem:[#allocation2 + $0x30] sm:$0xff]
    %v459 = vld [vmem:[#allocation2 + $0x40] sm:$0xff]
    %v460 = vld [vmem:[#allocation2 + $0x50] sm:$0xff]
    %v461 = vld [vmem:[#allocation2 + $0x60] sm:$0xff]
    %v462 = vld [vmem:[#allocation2 + $0x70] sm:$0xff]
    %v463 = vld [vmem:[#allocation2 + $0xa0] sm:$0xff]
    %v464 = vld [vmem:[#allocation2 + $0xb0] sm:$0xff]
    %v465 = vld [vmem:[#allocation2 + $0xc0] sm:$0xff]
    %v466 = vld [vmem:[#allocation2 + $0xd0] sm:$0xff]
    %v467 = vld [vmem:[#allocation2 + $0xe0] sm:$0xff]
    %v468 = vld [vmem:[#allocation2 + $0xf0] sm:$0xff]
    %v469 = vld [vmem:[#allocation2 + $0x100] sm:$0xff]
    %v470 = vld [vmem:[#allocation2 + $0x110] sm:$0xff]
    %v471 = vlaneseq
    %v472 = vshrl.u32 %v471, 7
    %v473 = vsub.s32 0, %v472
    %v474 = vrot.slane %v446, %v473
    %v475 = vmul.f32 %v455, %v474
    %v476 = vmul.f32 %v456, %v474
    %v477 = vmul.f32 %v457, %v474
    %v478 = vmul.f32 %v458, %v474
    %v479 = vmul.f32 %v459, %v474
    %v480 = vmul.f32 %v460, %v474
    %v481 = vmul.f32 %v461, %v474
    %v482 = vmul.f32 %v462, %v474
    %v483 = vmul.f32 %v463, %v474
    %v484 = vmul.f32 %v464, %v474
    %v485 = vmul.f32 %v465, %v474
    %v486 = vmul.f32 %v466, %v474
    %v487 = vmul.f32 %v467, %v474
    %v488 = vmul.f32 %v468, %v474
    %v489 = vmul.f32 %v469, %v474
    %v490 = vmul.f32 %v470, %v474
    %v491 = vadd.f32 %v453, %v475
    %v492 = vadd.f32 %v453, %v476
    %v493 = vadd.f32 %v453, %v477
    %v494 = vadd.f32 %v453, %v478
    %v495 = vadd.f32 %v453, %v479
    %v496 = vadd.f32 %v453, %v480
    %v497 = vadd.f32 %v453, %v481
    %v498 = vadd.f32 %v453, %v482
    %v499 = vadd.f32 %v453, %v483
    %v500 = vadd.f32 %v453, %v484
    %v501 = vadd.f32 %v453, %v485
    %v502 = vadd.f32 %v453, %v486
    %v503 = vadd.f32 %v453, %v487
    %v504 = vadd.f32 %v453, %v488
    %v505 = vadd.f32 %v453, %v489
    %v506 = vadd.f32 %v453, %v490
    %v507 = vld [vmem:[#allocation2 + $0x1] sm:$0xff]
    %v508 = vld [vmem:[#allocation2 + $0x11] sm:$0xff]
    %v509 = vld [vmem:[#allocation2 + $0x21] sm:$0xff]
    %v510 = vld [vmem:[#allocation2 + $0x31] sm:$0xff]
    %v511 = vld [vmem:[#allocation2 + $0x41] sm:$0xff]
    %v512 = vld [vmem:[#allocation2 + $0x51] sm:$0xff]
    %v513 = vld [vmem:[#allocation2 + $0x61] sm:$0xff]
    %v514 = vld [vmem:[#allocation2 + $0x71] sm:$0xff]
    %v515 = vld [vmem:[#allocation2 + $0xa1] sm:$0xff]
    %v516 = vld [vmem:[#allocation2 + $0xb1] sm:$0xff]
    %v517 = vld [vmem:[#allocation2 + $0xc1] sm:$0xff]
    %v518 = vld [vmem:[#allocation2 + $0xd1] sm:$0xff]
    %v519 = vld [vmem:[#allocation2 + $0xe1] sm:$0xff]
    %v520 = vld [vmem:[#allocation2 + $0xf1] sm:$0xff]
    %v521 = vld [vmem:[#allocation2 + $0x101] sm:$0xff]
    %v522 = vld [vmem:[#allocation2 + $0x111] sm:$0xff]
    %v523 = vlaneseq
    %v524 = vshrl.u32 %v523, 7
    %v525 = vsub.s32 1, %v524
    %v526 = vrot.slane %v446, %v525
    %v527 = vmul.f32 %v507, %v526
    %v528 = vmul.f32 %v508, %v526
    %v529 = vmul.f32 %v509, %v526
    %v530 = vmul.f32 %v510, %v526
    %v531 = vmul.f32 %v511, %v526
    %v532 = vmul.f32 %v512, %v526
    %v533 = vmul.f32 %v513, %v526
    %v534 = vmul.f32 %v514, %v526
    %v535 = vmul.f32 %v515, %v526
    %v536 = vmul.f32 %v516, %v526
    %v537 = vmul.f32 %v517, %v526
    %v538 = vmul.f32 %v518, %v526
    %v539 = vmul.f32 %v519, %v526
    %v540 = vmul.f32 %v520, %v526
    %v541 = vmul.f32 %v521, %v526
    %v542 = vmul.f32 %v522, %v526
    %v543 = vadd.f32 %v491, %v527
    %v544 = vadd.f32 %v492, %v528
    %v545 = vadd.f32 %v493, %v529
    %v546 = vadd.f32 %v494, %v530
    %v547 = vadd.f32 %v495, %v531
    %v548 = vadd.f32 %v496, %v532
    %v549 = vadd.f32 %v497, %v533
    %v550 = vadd.f32 %v498, %v534
    %v551 = vadd.f32 %v499, %v535
    %v552 = vadd.f32 %v500, %v536
    %v553 = vadd.f32 %v501, %v537
    %v554 = vadd.f32 %v502, %v538
    %v555 = vadd.f32 %v503, %v539
    %v556 = vadd.f32 %v504, %v540
    %v557 = vadd.f32 %v505, %v541
    %v558 = vadd.f32 %v506, %v542
    %v559 = vld [vmem:[#allocation2 + $0x2] sm:$0xff]
    %v560 = vld [vmem:[#allocation2 + $0x12] sm:$0xff]
    %v561 = vld [vmem:[#allocation2 + $0x22] sm:$0xff]
    %v562 = vld [vmem:[#allocation2 + $0x32] sm:$0xff]
    %v563 = vld [vmem:[#allocation2 + $0x42] sm:$0xff]
    %v564 = vld [vmem:[#allocation2 + $0x52] sm:$0xff]
    %v565 = vld [vmem:[#allocation2 + $0x62] sm:$0xff]
    %v566 = vld [vmem:[#allocation2 + $0x72] sm:$0xff]
    %v567 = vld [vmem:[#allocation2 + $0xa2] sm:$0xff]
    %v568 = vld [vmem:[#allocation2 + $0xb2] sm:$0xff]
    %v569 = vld [vmem:[#allocation2 + $0xc2] sm:$0xff]
    %v570 = vld [vmem:[#allocation2 + $0xd2] sm:$0xff]
    %v571 = vld [vmem:[#allocation2 + $0xe2] sm:$0xff]
    %v572 = vld [vmem:[#allocation2 + $0xf2] sm:$0xff]
    %v573 = vld [vmem:[#allocation2 + $0x102] sm:$0xff]
    %v574 = vld [vmem:[#allocation2 + $0x112] sm:$0xff]
    %v575 = vlaneseq
    %v576 = vshrl.u32 %v575, 7
    %v577 = vsub.s32 2, %v576
    %v578 = vrot.slane %v446, %v577
    %v579 = vmul.f32 %v559, %v578
    %v580 = vmul.f32 %v560, %v578
    %v581 = vmul.f32 %v561, %v578
    %v582 = vmul.f32 %v562, %v578
    %v583 = vmul.f32 %v563, %v578
    %v584 = vmul.f32 %v564, %v578
    %v585 = vmul.f32 %v565, %v578
    %v586 = vmul.f32 %v566, %v578
    %v587 = vmul.f32 %v567, %v578
    %v588 = vmul.f32 %v568, %v578
    %v589 = vmul.f32 %v569, %v578
    %v590 = vmul.f32 %v570, %v578
    %v591 = vmul.f32 %v571, %v578
    %v592 = vmul.f32 %v572, %v578
    %v593 = vmul.f32 %v573, %v578
    %v594 = vmul.f32 %v574, %v578
    %v595 = vadd.f32 %v543, %v579
    %v596 = vadd.f32 %v544, %v580
    %v597 = vadd.f32 %v545, %v581
    %v598 = vadd.f32 %v546, %v582
    %v599 = vadd.f32 %v547, %v583
    %v600 = vadd.f32 %v548, %v584
    %v601 = vadd.f32 %v549, %v585
    %v602 = vadd.f32 %v550, %v586
    %v603 = vadd.f32 %v551, %v587
    %v604 = vadd.f32 %v552, %v588
    %v605 = vadd.f32 %v553, %v589
    %v606 = vadd.f32 %v554, %v590
    %v607 = vadd.f32 %v555, %v591
    %v608 = vadd.f32 %v556, %v592
    %v609 = vadd.f32 %v557, %v593
    %v610 = vadd.f32 %v558, %v594
    %v611 = vld [vmem:[%s397] sm:$0xff]
    %v612 = vld [vmem:[%s397 + $0x10] sm:$0xff]
    %v613 = vld [vmem:[%s397 + $0x20] sm:$0xff]
    %v614 = vld [vmem:[%s397 + $0x30] sm:$0xff]
    %v615 = vld [vmem:[%s397 + $0x40] sm:$0xff]
    %v616 = vld [vmem:[%s397 + $0x50] sm:$0xff]
    %v617 = vld [vmem:[%s397 + $0x60] sm:$0xff]
    %v618 = vld [vmem:[%s397 + $0x70] sm:$0xff]
    %v619 = vld [vmem:[%s397 + $0xa0] sm:$0xff]
    %v620 = vld [vmem:[%s397 + $0xb0] sm:$0xff]
    %v621 = vld [vmem:[%s397 + $0xc0] sm:$0xff]
    %v622 = vld [vmem:[%s397 + $0xd0] sm:$0xff]
    %v623 = vld [vmem:[%s397 + $0xe0] sm:$0xff]
    %v624 = vld [vmem:[%s397 + $0xf0] sm:$0xff]
    %v625 = vld [vmem:[%s397 + $0x100] sm:$0xff]
    %v626 = vld [vmem:[%s397 + $0x110] sm:$0xff]
    %v627 = vlaneseq
    %v628 = vshrl.u32 %v627, 7
    %v629 = vsub.s32 3, %v628
    %v630 = vrot.slane %v446, %v629
    %v631 = vmul.f32 %v611, %v630
    %v632 = vmul.f32 %v612, %v630
    %v633 = vmul.f32 %v613, %v630
    %v634 = vmul.f32 %v614, %v630
    %v635 = vmul.f32 %v615, %v630
    %v636 = vmul.f32 %v616, %v630
    %v637 = vmul.f32 %v617, %v630
    %v638 = vmul.f32 %v618, %v630
    %v639 = vmul.f32 %v619, %v630
    %v640 = vmul.f32 %v620, %v630
    %v641 = vmul.f32 %v621, %v630
    %v642 = vmul.f32 %v622, %v630
    %v643 = vmul.f32 %v623, %v630
    %v644 = vmul.f32 %v624, %v630
    %v645 = vmul.f32 %v625, %v630
    %v646 = vmul.f32 %v626, %v630
    %v647 = vadd.f32 %v595, %v631
    %v648 = vadd.f32 %v596, %v632
    %v649 = vadd.f32 %v597, %v633
    %v650 = vadd.f32 %v598, %v634
    %v651 = vadd.f32 %v599, %v635
    %v652 = vadd.f32 %v600, %v636
    %v653 = vadd.f32 %v601, %v637
    %v654 = vadd.f32 %v602, %v638
    %v655 = vadd.f32 %v603, %v639
    %v656 = vadd.f32 %v604, %v640
    %v657 = vadd.f32 %v605, %v641
    %v658 = vadd.f32 %v606, %v642
    %v659 = vadd.f32 %v607, %v643
    %v660 = vadd.f32 %v608, %v644
    %v661 = vadd.f32 %v609, %v645
    %v662 = vadd.f32 %v610, %v646
    %v663 = vld [vmem:[%s397 + $0x1] sm:$0xff]
    %v664 = vld [vmem:[%s397 + $0x11] sm:$0xff]
    %v665 = vld [vmem:[%s397 + $0x21] sm:$0xff]
    %v666 = vld [vmem:[%s397 + $0x31] sm:$0xff]
    %v667 = vld [vmem:[%s397 + $0x41] sm:$0xff]
    %v668 = vld [vmem:[%s397 + $0x51] sm:$0xff]
    %v669 = vld [vmem:[%s397 + $0x61] sm:$0xff]
    %v670 = vld [vmem:[%s397 + $0x71] sm:$0xff]
    %v671 = vld [vmem:[%s397 + $0xa1] sm:$0xff]
    %v672 = vld [vmem:[%s397 + $0xb1] sm:$0xff]
    %v673 = vld [vmem:[%s397 + $0xc1] sm:$0xff]
    %v674 = vld [vmem:[%s397 + $0xd1] sm:$0xff]
    %v675 = vld [vmem:[%s397 + $0xe1] sm:$0xff]
    %v676 = vld [vmem:[%s397 + $0xf1] sm:$0xff]
    %v677 = vld [vmem:[%s397 + $0x101] sm:$0xff]
    %v678 = vld [vmem:[%s397 + $0x111] sm:$0xff]
    %v679 = vlaneseq
    %v680 = vshrl.u32 %v679, 7
    %v681 = vsub.s32 4, %v680
    %v682 = vrot.slane %v446, %v681
    %v683 = vmul.f32 %v663, %v682
    %v684 = vmul.f32 %v664, %v682
    %v685 = vmul.f32 %v665, %v682
    %v686 = vmul.f32 %v666, %v682
    %v687 = vmul.f32 %v667, %v682
    %v688 = vmul.f32 %v668, %v682
    %v689 = vmul.f32 %v669, %v682
    %v690 = vmul.f32 %v670, %v682
    %v691 = vmul.f32 %v671, %v682
    %v692 = vmul.f32 %v672, %v682
    %v693 = vmul.f32 %v673, %v682
    %v694 = vmul.f32 %v674, %v682
    %v695 = vmul.f32 %v675, %v682
    %v696 = vmul.f32 %v676, %v682
    %v697 = vmul.f32 %v677, %v682
    %v698 = vmul.f32 %v678, %v682
    %v699 = vadd.f32 %v647, %v683
    %v700 = vadd.f32 %v648, %v684
    %v701 = vadd.f32 %v649, %v685
    %v702 = vadd.f32 %v650, %v686
    %v703 = vadd.f32 %v651, %v687
    %v704 = vadd.f32 %v652, %v688
    %v705 = vadd.f32 %v653, %v689
    %v706 = vadd.f32 %v654, %v690
    %v707 = vadd.f32 %v655, %v691
    %v708 = vadd.f32 %v656, %v692
    %v709 = vadd.f32 %v657, %v693
    %v710 = vadd.f32 %v658, %v694
    %v711 = vadd.f32 %v659, %v695
    %v712 = vadd.f32 %v660, %v696
    %v713 = vadd.f32 %v661, %v697
    %v714 = vadd.f32 %v662, %v698
    %v715 = vld [vmem:[%s397 + $0x2] sm:$0xff]
    %v716 = vld [vmem:[%s397 + $0x12] sm:$0xff]
    %v717 = vld [vmem:[%s397 + $0x22] sm:$0xff]
    %v718 = vld [vmem:[%s397 + $0x32] sm:$0xff]
    %v719 = vld [vmem:[%s397 + $0x42] sm:$0xff]
    %v720 = vld [vmem:[%s397 + $0x52] sm:$0xff]
    %v721 = vld [vmem:[%s397 + $0x62] sm:$0xff]
    %v722 = vld [vmem:[%s397 + $0x72] sm:$0xff]
    %v723 = vld [vmem:[%s397 + $0xa2] sm:$0xff]
    %v724 = vld [vmem:[%s397 + $0xb2] sm:$0xff]
    %v725 = vld [vmem:[%s397 + $0xc2] sm:$0xff]
    %v726 = vld [vmem:[%s397 + $0xd2] sm:$0xff]
    %v727 = vld [vmem:[%s397 + $0xe2] sm:$0xff]
    %v728 = vld [vmem:[%s397 + $0xf2] sm:$0xff]
    %v729 = vld [vmem:[%s397 + $0x102] sm:$0xff]
    %v730 = vld [vmem:[%s397 + $0x112] sm:$0xff]
    %v731 = vlaneseq
    %v732 = vshrl.u32 %v731, 7
    %v733 = vsub.s32 5, %v732
    %v734 = vrot.slane %v446, %v733
    %v735 = vmul.f32 %v715, %v734
    %v736 = vmul.f32 %v716, %v734
    %v737 = vmul.f32 %v717, %v734
    %v738 = vmul.f32 %v718, %v734
    %v739 = vmul.f32 %v719, %v734
    %v740 = vmul.f32 %v720, %v734
    %v741 = vmul.f32 %v721, %v734
    %v742 = vmul.f32 %v722, %v734
    %v743 = vmul.f32 %v723, %v734
    %v744 = vmul.f32 %v724, %v734
    %v745 = vmul.f32 %v725, %v734
    %v746 = vmul.f32 %v726, %v734
    %v747 = vmul.f32 %v727, %v734
    %v748 = vmul.f32 %v728, %v734
    %v749 = vmul.f32 %v729, %v734
    %v750 = vmul.f32 %v730, %v734
    %v751 = vadd.f32 %v699, %v735
    %v752 = vadd.f32 %v700, %v736
    %v753 = vadd.f32 %v701, %v737
    %v754 = vadd.f32 %v702, %v738
    %v755 = vadd.f32 %v703, %v739
    %v756 = vadd.f32 %v704, %v740
    %v757 = vadd.f32 %v705, %v741
    %v758 = vadd.f32 %v706, %v742
    %v759 = vadd.f32 %v707, %v743
    %v760 = vadd.f32 %v708, %v744
    %v761 = vadd.f32 %v709, %v745
    %v762 = vadd.f32 %v710, %v746
    %v763 = vadd.f32 %v711, %v747
    %v764 = vadd.f32 %v712, %v748
    %v765 = vadd.f32 %v713, %v749
    %v766 = vadd.f32 %v714, %v750
    %s767 = scalar_lea.vmem [#allocation2], 32
    %v768 = vld [vmem:[%s767] sm:$0xff]
    %v769 = vld [vmem:[%s767 + $0x10] sm:$0xff]
    %v770 = vld [vmem:[%s767 + $0x20] sm:$0xff]
    %v771 = vld [vmem:[%s767 + $0x30] sm:$0xff]
    %v772 = vld [vmem:[%s767 + $0x40] sm:$0xff]
    %v773 = vld [vmem:[%s767 + $0x50] sm:$0xff]
    %v774 = vld [vmem:[%s767 + $0x60] sm:$0xff]
    %v775 = vld [vmem:[%s767 + $0x70] sm:$0xff]
    %v776 = vld [vmem:[%s767 + $0xa0] sm:$0xff]
    %v777 = vld [vmem:[%s767 + $0xb0] sm:$0xff]
    %v778 = vld [vmem:[%s767 + $0xc0] sm:$0xff]
    %v779 = vld [vmem:[%s767 + $0xd0] sm:$0xff]
    %v780 = vld [vmem:[%s767 + $0xe0] sm:$0xff]
    %v781 = vld [vmem:[%s767 + $0xf0] sm:$0xff]
    %v782 = vld [vmem:[%s767 + $0x100] sm:$0xff]
    %v783 = vld [vmem:[%s767 + $0x110] sm:$0xff]
    %v784 = vlaneseq
    %v785 = vshrl.u32 %v784, 7
    %v786 = vsub.s32 6, %v785
    %v787 = vrot.slane %v446, %v786
    %v788 = vmul.f32 %v768, %v787
    %v789 = vmul.f32 %v769, %v787
    %v790 = vmul.f32 %v770, %v787
    %v791 = vmul.f32 %v771, %v787
    %v792 = vmul.f32 %v772, %v787
    %v793 = vmul.f32 %v773, %v787
    %v794 = vmul.f32 %v774, %v787
    %v795 = vmul.f32 %v775, %v787
    %v796 = vmul.f32 %v776, %v787
    %v797 = vmul.f32 %v777, %v787
    %v798 = vmul.f32 %v778, %v787
    %v799 = vmul.f32 %v779, %v787
    %v800 = vmul.f32 %v780, %v787
    %v801 = vmul.f32 %v781, %v787
    %v802 = vmul.f32 %v782, %v787
    %v803 = vmul.f32 %v783, %v787
    %v804 = vadd.f32 %v751, %v788
    %v805 = vadd.f32 %v752, %v789
    %v806 = vadd.f32 %v753, %v790
    %v807 = vadd.f32 %v754, %v791
    %v808 = vadd.f32 %v755, %v792
    %v809 = vadd.f32 %v756, %v793
    %v810 = vadd.f32 %v757, %v794
    %v811 = vadd.f32 %v758, %v795
    %v812 = vadd.f32 %v759, %v796
    %v813 = vadd.f32 %v760, %v797
    %v814 = vadd.f32 %v761, %v798
    %v815 = vadd.f32 %v762, %v799
    %v816 = vadd.f32 %v763, %v800
    %v817 = vadd.f32 %v764, %v801
    %v818 = vadd.f32 %v765, %v802
    %v819 = vadd.f32 %v766, %v803
    %v820 = vld [vmem:[%s767 + $0x1] sm:$0xff]
    %v821 = vld [vmem:[%s767 + $0x11] sm:$0xff]
    %v822 = vld [vmem:[%s767 + $0x21] sm:$0xff]
    %v823 = vld [vmem:[%s767 + $0x31] sm:$0xff]
    %v824 = vld [vmem:[%s767 + $0x41] sm:$0xff]
    %v825 = vld [vmem:[%s767 + $0x51] sm:$0xff]
    %v826 = vld [vmem:[%s767 + $0x61] sm:$0xff]
    %v827 = vld [vmem:[%s767 + $0x71] sm:$0xff]
    %v828 = vld [vmem:[%s767 + $0xa1] sm:$0xff]
    %v829 = vld [vmem:[%s767 + $0xb1] sm:$0xff]
    %v830 = vld [vmem:[%s767 + $0xc1] sm:$0xff]
    %v831 = vld [vmem:[%s767 + $0xd1] sm:$0xff]
    %v832 = vld [vmem:[%s767 + $0xe1] sm:$0xff]
    %v833 = vld [vmem:[%s767 + $0xf1] sm:$0xff]
    %v834 = vld [vmem:[%s767 + $0x101] sm:$0xff]
    %v835 = vld [vmem:[%s767 + $0x111] sm:$0xff]
    %v836 = vlaneseq
    %v837 = vshrl.u32 %v836, 7
    %v838 = vsub.s32 7, %v837
    %v839 = vrot.slane %v446, %v838
    %v840 = vmul.f32 %v820, %v839
    %v841 = vmul.f32 %v821, %v839
    %v842 = vmul.f32 %v822, %v839
    %v843 = vmul.f32 %v823, %v839
    %v844 = vmul.f32 %v824, %v839
    %v845 = vmul.f32 %v825, %v839
    %v846 = vmul.f32 %v826, %v839
    %v847 = vmul.f32 %v827, %v839
    %v848 = vmul.f32 %v828, %v839
    %v849 = vmul.f32 %v829, %v839
    %v850 = vmul.f32 %v830, %v839
    %v851 = vmul.f32 %v831, %v839
    %v852 = vmul.f32 %v832, %v839
    %v853 = vmul.f32 %v833, %v839
    %v854 = vmul.f32 %v834, %v839
    %v855 = vmul.f32 %v835, %v839
    %v856 = vadd.f32 %v804, %v840
    %v857 = vadd.f32 %v805, %v841
    %v858 = vadd.f32 %v806, %v842
    %v859 = vadd.f32 %v807, %v843
    %v860 = vadd.f32 %v808, %v844
    %v861 = vadd.f32 %v809, %v845
    %v862 = vadd.f32 %v810, %v846
    %v863 = vadd.f32 %v811, %v847
    %v864 = vadd.f32 %v812, %v848
    %v865 = vadd.f32 %v813, %v849
    %v866 = vadd.f32 %v814, %v850
    %v867 = vadd.f32 %v815, %v851
    %v868 = vadd.f32 %v816, %v852
    %v869 = vadd.f32 %v817, %v853
    %v870 = vadd.f32 %v818, %v854
    %v871 = vadd.f32 %v819, %v855
    %v872 = vld [vmem:[%s767 + $0x2] sm:$0xff]
    %v873 = vld [vmem:[%s767 + $0x12] sm:$0xff]
    %v874 = vld [vmem:[%s767 + $0x22] sm:$0xff]
    %v875 = vld [vmem:[%s767 + $0x32] sm:$0xff]
    %v876 = vld [vmem:[%s767 + $0x42] sm:$0xff]
    %v877 = vld [vmem:[%s767 + $0x52] sm:$0xff]
    %v878 = vld [vmem:[%s767 + $0x62] sm:$0xff]
    %v879 = vld [vmem:[%s767 + $0x72] sm:$0xff]
    %v880 = vld [vmem:[%s767 + $0xa2] sm:$0xff]
    %v881 = vld [vmem:[%s767 + $0xb2] sm:$0xff]
    %v882 = vld [vmem:[%s767 + $0xc2] sm:$0xff]
    %v883 = vld [vmem:[%s767 + $0xd2] sm:$0xff]
    %v884 = vld [vmem:[%s767 + $0xe2] sm:$0xff]
    %v885 = vld [vmem:[%s767 + $0xf2] sm:$0xff]
    %v886 = vld [vmem:[%s767 + $0x102] sm:$0xff]
    %v887 = vld [vmem:[%s767 + $0x112] sm:$0xff]
    %v888 = vlaneseq
    %v889 = vshrl.u32 %v888, 7
    %v890 = vsub.s32 0, %v889
    %v891 = vrot.slane %v447, %v890
    %v892 = vmul.f32 %v872, %v891
    %v893 = vmul.f32 %v873, %v891
    %v894 = vmul.f32 %v874, %v891
    %v895 = vmul.f32 %v875, %v891
    %v896 = vmul.f32 %v876, %v891
    %v897 = vmul.f32 %v877, %v891
    %v898 = vmul.f32 %v878, %v891
    %v899 = vmul.f32 %v879, %v891
    %v900 = vmul.f32 %v880, %v891
    %v901 = vmul.f32 %v881, %v891
    %v902 = vmul.f32 %v882, %v891
    %v903 = vmul.f32 %v883, %v891
    %v904 = vmul.f32 %v884, %v891
    %v905 = vmul.f32 %v885, %v891
    %v906 = vmul.f32 %v886, %v891
    %v907 = vmul.f32 %v887, %v891
    %v908 = vadd.f32 %v856, %v892
    %v909 = vadd.f32 %v857, %v893
    %v910 = vadd.f32 %v858, %v894
    %v911 = vadd.f32 %v859, %v895
    %v912 = vadd.f32 %v860, %v896
    %v913 = vadd.f32 %v861, %v897
    %v914 = vadd.f32 %v862, %v898
    %v915 = vadd.f32 %v863, %v899
    %v916 = vadd.f32 %v864, %v900
    %v917 = vadd.f32 %v865, %v901
    %v918 = vadd.f32 %v866, %v902
    %v919 = vadd.f32 %v867, %v903
    %v920 = vadd.f32 %v868, %v904
    %v921 = vadd.f32 %v869, %v905
    %v922 = vadd.f32 %v870, %v906
    %v923 = vadd.f32 %v871, %v907
    %v924 = vpack.c.bf16 %v909, %v908
    %v925 = vpack.c.bf16 %v911, %v910
    %v926 = vpack.c.bf16 %v913, %v912
    %v927 = vpack.c.bf16 %v915, %v914
    %v928 = vpack.c.bf16 %v917, %v916
    %v929 = vpack.c.bf16 %v919, %v918
    %v930 = vpack.c.bf16 %v921, %v920
    %v931 = vpack.c.bf16 %v923, %v922
    %v932 = vld [vmem:[#allocation13] sm:$0xf]
    %v933 = vld [vmem:[#allocation13 + $0x4] sm:$0xf]
    %v934 = vld [vmem:[#allocation13 + $0x8] sm:$0xf]
    %v935 = vld [vmem:[#allocation13 + $0xc] sm:$0xf]
    %v936 = vld [vmem:[#allocation13 + $0x10] sm:$0xf]
    %v937 = vld [vmem:[#allocation13 + $0x14] sm:$0xf]
    %v938 = vld [vmem:[#allocation13 + $0x18] sm:$0xf]
    %v939 = vld [vmem:[#allocation13 + $0x1c] sm:$0xf]
    %v940 = vld [vmem:[#allocation13 + $0x20] sm:$0xf]
    %v941 = vld [vmem:[#allocation13 + $0x24] sm:$0xf]
    %v942 = vld [vmem:[#allocation13 + $0x28] sm:$0xf]
    %v943 = vld [vmem:[#allocation13 + $0x2c] sm:$0xf]
    %v944 = vld [vmem:[#allocation13 + $0x30] sm:$0xf]
    %v945 = vld [vmem:[#allocation13 + $0x34] sm:$0xf]
    %v946 = vld [vmem:[#allocation13 + $0x38] sm:$0xf]
    %v947 = vld [vmem:[#allocation13 + $0x3c] sm:$0xf]
    %v948 = vld [vmem:[#allocation15] sm:$0x1]
    %v950 = vlaneseq
    %v951 = vshrl.u32 %v950, 7
    %v952 = vsub.s32 0, %v951
    %v953 = vrot.slane %v948, %v952
    %v971 = vunpack.c.l.b16 %v932
    %v972 = vunpack.c.l.b16 %v933
    %v973 = vunpack.c.l.b16 %v934
    %v974 = vunpack.c.l.b16 %v935
    %v975 = vunpack.c.l.b16 %v936
    %v976 = vunpack.c.l.b16 %v937
    %v977 = vunpack.c.l.b16 %v938
    %v978 = vunpack.c.l.b16 %v939
    %v979 = vunpack.c.l.b16 %v940
    %v980 = vunpack.c.l.b16 %v941
    %v981 = vunpack.c.l.b16 %v942
    %v982 = vunpack.c.l.b16 %v943
    %v983 = vunpack.c.l.b16 %v944
    %v984 = vunpack.c.l.b16 %v945
    %v985 = vunpack.c.l.b16 %v946
    %v986 = vunpack.c.l.b16 %v947
    %v987 = vpack.c.b16 %v972, %v971
    %v988 = vpack.c.b16 %v974, %v973
    %v989 = vpack.c.b16 %v976, %v975
    %v990 = vpack.c.b16 %v978, %v977
    %v991 = vpack.c.b16 %v980, %v979
    %v992 = vpack.c.b16 %v982, %v981
    %v993 = vpack.c.b16 %v984, %v983
    %v994 = vpack.c.b16 %v986, %v985
    %1003 = vmatprep.subr.bf16.mxu0 0
    %1004 = vmatpush1.bf16.msra.mxu0 %v987
    %1005 = vmatprep.subr.bf16.mxu0 0
    %1006 = vmatpush1.bf16.msra.mxu0 %v988
    %1007 = vmatprep.subr.bf16.mxu0 0
    %1008 = vmatpush1.bf16.msra.mxu0 %v989
    %1009 = vmatprep.subr.bf16.mxu0 0
    %1010 = vmatpush1.bf16.msra.mxu0 %v990
    %1011 = vmatprep.subr.bf16.mxu0 0
    %1012 = vmatpush1.bf16.msra.mxu0 %v991
    %1013 = vmatprep.subr.bf16.mxu0 0
    %1014 = vmatpush1.bf16.msra.mxu0 %v992
    %1015 = vmatprep.subr.bf16.mxu0 0
    %1016 = vmatpush1.bf16.msra.mxu0 %v993
    %1017 = vmatprep.subr.bf16.mxu0 0
    %1018 = vmatpush1.bf16.msra.mxu0 %v994
    %1019 = vmatprep.subr.bf16.mxu0 0
    %1020 = vmatpush1.bf16.msra.mxu0 0
    %1021 = vmatprep.subr.bf16.mxu0 0
    %1022 = vmatpush1.bf16.msra.mxu0 0
    %1023 = vmatprep.subr.bf16.mxu0 0
    %1024 = vmatpush1.bf16.msra.mxu0 0
    %1025 = vmatprep.subr.bf16.mxu0 0
    %1026 = vmatpush1.bf16.msra.mxu0 0
    %1027 = vmatprep.subr.bf16.mxu0 0
    %1028 = vmatpush1.bf16.msra.mxu0 0
    %1029 = vmatprep.subr.bf16.mxu0 0
    %1030 = vmatpush1.bf16.msra.mxu0 0
    %1031 = vmatprep.subr.bf16.mxu0 0
    %1032 = vmatpush1.bf16.msra.mxu0 0
    %1033 = vmatprep.subr.bf16.mxu0 0
    %1034 = vmatpush1.bf16.msra.mxu0 0
    %1035 = vmatprep.mubr.bf16.mxu0 0
    %1036 = vmatmul.mubr.bf16.gmra.mrb[0].mxu0 %v924
    %v1037 = vpop.f32.mrb[0].mxu0
    %v1038 = vadd.f32 %v953, %v1037
    %v1039 = vpop.f32.mrb[0].mxu0
    %v1040 = vpop.f32.mrb[0].mxu0
    %v1041 = vadd.f32 %v953, %v1040
    %v1042 = vpop.f32.mrb[0].mxu0
    %1043 = vmatprep.mubr.bf16.mxu0 0
    %1044 = vmatmul.mubr.bf16.gmra.mrb[0].mxu0 %v925
    %v1045 = vpop.f32.mrb[0].mxu0
    %v1046 = vadd.f32 %v953, %v1045
    %v1047 = vpop.f32.mrb[0].mxu0
    %v1048 = vpop.f32.mrb[0].mxu0
    %v1049 = vadd.f32 %v953, %v1048
    %v1050 = vpop.f32.mrb[0].mxu0
    %1051 = vmatprep.mubr.bf16.mxu0 0
    %1052 = vmatmul.mubr.bf16.gmra.mrb[0].mxu0 %v926
    %v1053 = vpop.f32.mrb[0].mxu0
    %v1054 = vadd.f32 %v953, %v1053
    %v1055 = vpop.f32.mrb[0].mxu0
    %v1056 = vpop.f32.mrb[0].mxu0
    %v1057 = vadd.f32 %v953, %v1056
    %v1058 = vpop.f32.mrb[0].mxu0
    %1059 = vmatprep.mubr.bf16.mxu0 0
    %1060 = vmatmul.mubr.bf16.gmra.mrb[0].mxu0 %v927
    %v1061 = vpop.f32.mrb[0].mxu0
    %v1062 = vadd.f32 %v953, %v1061
    %v1063 = vpop.f32.mrb[0].mxu0
    %v1064 = vpop.f32.mrb[0].mxu0
    %v1065 = vadd.f32 %v953, %v1064
    %v1066 = vpop.f32.mrb[0].mxu0
    %1067 = vmatprep.mubr.bf16.mxu0 0
    %1068 = vmatmul.mubr.bf16.gmra.mrb[0].mxu0 %v928
    %v1069 = vpop.f32.mrb[0].mxu0
    %v1070 = vadd.f32 %v953, %v1069
    %v1071 = vpop.f32.mrb[0].mxu0
    %v1072 = vpop.f32.mrb[0].mxu0
    %v1073 = vadd.f32 %v953, %v1072
    %v1074 = vpop.f32.mrb[0].mxu0
    %1075 = vmatprep.mubr.bf16.mxu0 0
    %1076 = vmatmul.mubr.bf16.gmra.mrb[0].mxu0 %v929
    %v1077 = vpop.f32.mrb[0].mxu0
    %v1078 = vadd.f32 %v953, %v1077
    %v1079 = vpop.f32.mrb[0].mxu0
    %v1080 = vpop.f32.mrb[0].mxu0
    %v1081 = vadd.f32 %v953, %v1080
    %v1082 = vpop.f32.mrb[0].mxu0
    %1083 = vmatprep.mubr.bf16.mxu0 0
    %1084 = vmatmul.mubr.bf16.gmra.mrb[0].mxu0 %v930
    %v1085 = vpop.f32.mrb[0].mxu0
    %v1086 = vadd.f32 %v953, %v1085
    %v1087 = vpop.f32.mrb[0].mxu0
    %v1088 = vpop.f32.mrb[0].mxu0
    %v1089 = vadd.f32 %v953, %v1088
    %v1090 = vpop.f32.mrb[0].mxu0
    %1091 = vmatprep.mubr.bf16.mxu0 0
    %1092 = vmatmul.mubr.bf16.gmra.mrb[0].mxu0 %v931
    %v1093 = vpop.f32.mrb[0].mxu0
    %v1094 = vadd.f32 %v953, %v1093
    %v1095 = vpop.f32.mrb[0].mxu0
    %v1096 = vpop.f32.mrb[0].mxu0
    %v1097 = vadd.f32 %v953, %v1096
    %v1098 = vpop.f32.mrb[0].mxu0
    %1099 = vdwg.mxu0
    %1100 = vst [vmem:[#allocation24] sm:$0xff] %v1038
    %1101 = vst [vmem:[#allocation24 + $0x8] sm:$0xff] %v1041
    %1102 = vst [vmem:[#allocation24 + $0x10] sm:$0xff] %v1046
    %1103 = vst [vmem:[#allocation24 + $0x18] sm:$0xff] %v1049
    %1104 = vst [vmem:[#allocation24 + $0x20] sm:$0xff] %v1054
    %1105 = vst [vmem:[#allocation24 + $0x28] sm:$0xff] %v1057
    %1106 = vst [vmem:[#allocation24 + $0x30] sm:$0xff] %v1062
    %1107 = vst [vmem:[#allocation24 + $0x38] sm:$0xff] %v1065
    %1108 = vst [vmem:[#allocation24 + $0x40] sm:$0xff] %v1070
    %1109 = vst [vmem:[#allocation24 + $0x48] sm:$0xff] %v1073
    %1110 = vst [vmem:[#allocation24 + $0x50] sm:$0xff] %v1078
    %1111 = vst [vmem:[#allocation24 + $0x58] sm:$0xff] %v1081
    %1112 = vst [vmem:[#allocation24 + $0x60] sm:$0xff] %v1086
    %1113 = vst [vmem:[#allocation24 + $0x68] sm:$0xff] %v1089
    %1114 = vst [vmem:[#allocation24 + $0x70] sm:$0xff] %v1094
    %1115 = vst [vmem:[#allocation24 + $0x78] sm:$0xff] %v1097
    %v1116 = vld [vmem:[#allocation7] sm:$0xff]
    %v1117 = vld [vmem:[#allocation7 + $0x8] sm:$0xff]
    %v1118 = vld [vmem:[#allocation7 + $0x10] sm:$0xff]
    %v1119 = vld [vmem:[#allocation7 + $0x18] sm:$0xff]
    %v1120 = vld [vmem:[#allocation7 + $0x20] sm:$0xff]
    %v1121 = vld [vmem:[#allocation7 + $0x28] sm:$0xff]
    %v1122 = vld [vmem:[#allocation7 + $0x30] sm:$0xff]
    %v1123 = vld [vmem:[#allocation7 + $0x38] sm:$0xff]
    %v1124 = vld [vmem:[#allocation7 + $0x40] sm:$0xff]
    %v1125 = vld [vmem:[#allocation7 + $0x48] sm:$0xff]
    %v1126 = vld [vmem:[#allocation7 + $0x50] sm:$0xff]
    %v1127 = vld [vmem:[#allocation7 + $0x58] sm:$0xff]
    %v1128 = vld [vmem:[#allocation7 + $0x60] sm:$0xff]
    %v1129 = vld [vmem:[#allocation7 + $0x68] sm:$0xff]
    %v1130 = vld [vmem:[#allocation7 + $0x70] sm:$0xff]
    %v1131 = vld [vmem:[#allocation7 + $0x78] sm:$0xff]
    %v1132 = vpack.c.bf16 %v1117, %v1116
    %v1133 = vpack.c.bf16 %v1119, %v1118
    %v1134 = vpack.c.bf16 %v1121, %v1120
    %v1135 = vpack.c.bf16 %v1123, %v1122
    %v1136 = vpack.c.bf16 %v1125, %v1124
    %v1137 = vpack.c.bf16 %v1127, %v1126
    %v1138 = vpack.c.bf16 %v1129, %v1128
    %v1139 = vpack.c.bf16 %v1131, %v1130
    %v1140 = vld [vmem:[#allocation16] sm:$0xff]
    %v1141 = vld [vmem:[#allocation16 + $0x8] sm:$0xff]
    %v1142 = vld [vmem:[#allocation16 + $0x10] sm:$0xff]
    %v1143 = vld [vmem:[#allocation16 + $0x18] sm:$0xff]
    %v1144 = vld [vmem:[#allocation16 + $0x20] sm:$0xff]
    %v1145 = vld [vmem:[#allocation16 + $0x28] sm:$0xff]
    %v1146 = vld [vmem:[#allocation16 + $0x30] sm:$0xff]
    %v1147 = vld [vmem:[#allocation16 + $0x38] sm:$0xff]
    %v1148 = vld [vmem:[#allocation16 + $0x40] sm:$0xff]
    %v1149 = vld [vmem:[#allocation16 + $0x48] sm:$0xff]
    %v1150 = vld [vmem:[#allocation16 + $0x50] sm:$0xff]
    %v1151 = vld [vmem:[#allocation16 + $0x58] sm:$0xff]
    %v1152 = vld [vmem:[#allocation16 + $0x60] sm:$0xff]
    %v1153 = vld [vmem:[#allocation16 + $0x68] sm:$0xff]
    %v1154 = vld [vmem:[#allocation16 + $0x70] sm:$0xff]
    %v1155 = vld [vmem:[#allocation16 + $0x78] sm:$0xff]
    %v1156 = vld [vmem:[#allocation18] sm:$0x3]
    %v1158 = vlaneseq
    %v1159 = vshrl.u32 %v1158, 7
    %v1160 = vsub.s32 0, %v1159
    %v1161 = vrot.slane %v1156, %v1160
    %v1162 = vlaneseq
    %v1163 = vshrl.u32 %v1162, 7
    %v1164 = vsub.s32 1, %v1163
    %v1165 = vrot.slane %v1156, %v1164
    %v1184 = vunpack.c.l.b16 %v1140
    %v1185 = vunpack.c.h.b16 %v1140
    %v1186 = vunpack.c.l.b16 %v1141
    %v1187 = vunpack.c.h.b16 %v1141
    %v1188 = vunpack.c.l.b16 %v1142
    %v1189 = vunpack.c.h.b16 %v1142
    %v1190 = vunpack.c.l.b16 %v1143
    %v1191 = vunpack.c.h.b16 %v1143
    %v1192 = vunpack.c.l.b16 %v1144
    %v1193 = vunpack.c.h.b16 %v1144
    %v1194 = vunpack.c.l.b16 %v1145
    %v1195 = vunpack.c.h.b16 %v1145
    %v1196 = vunpack.c.l.b16 %v1146
    %v1197 = vunpack.c.h.b16 %v1146
    %v1198 = vunpack.c.l.b16 %v1147
    %v1199 = vunpack.c.h.b16 %v1147
    %v1200 = vunpack.c.l.b16 %v1148
    %v1201 = vunpack.c.h.b16 %v1148
    %v1202 = vunpack.c.l.b16 %v1149
    %v1203 = vunpack.c.h.b16 %v1149
    %v1204 = vunpack.c.l.b16 %v1150
    %v1205 = vunpack.c.h.b16 %v1150
    %v1206 = vunpack.c.l.b16 %v1151
    %v1207 = vunpack.c.h.b16 %v1151
    %v1208 = vunpack.c.l.b16 %v1152
    %v1209 = vunpack.c.h.b16 %v1152
    %v1210 = vunpack.c.l.b16 %v1153
    %v1211 = vunpack.c.h.b16 %v1153
    %v1212 = vunpack.c.l.b16 %v1154
    %v1213 = vunpack.c.h.b16 %v1154
    %v1214 = vunpack.c.l.b16 %v1155
    %v1215 = vunpack.c.h.b16 %v1155
    %v1216 = vpack.c.b16 %v1186, %v1184
    %v1217 = vpack.c.b16 %v1187, %v1185
    %v1218 = vpack.c.b16 %v1190, %v1188
    %v1219 = vpack.c.b16 %v1191, %v1189
    %v1220 = vpack.c.b16 %v1194, %v1192
    %v1221 = vpack.c.b16 %v1195, %v1193
    %v1222 = vpack.c.b16 %v1198, %v1196
    %v1223 = vpack.c.b16 %v1199, %v1197
    %v1224 = vpack.c.b16 %v1202, %v1200
    %v1225 = vpack.c.b16 %v1203, %v1201
    %v1226 = vpack.c.b16 %v1206, %v1204
    %v1227 = vpack.c.b16 %v1207, %v1205
    %v1228 = vpack.c.b16 %v1210, %v1208
    %v1229 = vpack.c.b16 %v1211, %v1209
    %v1230 = vpack.c.b16 %v1214, %v1212
    %v1231 = vpack.c.b16 %v1215, %v1213
    %1248 = vmatprep.subr.bf16.mxu0 %v1217
    %1249 = vmatpush1.bf16.msra.mxu0 %v1216
    %1250 = vmatprep.subr.bf16.mxu0 %v1219
    %1251 = vmatpush1.bf16.msra.mxu0 %v1218
    %1252 = vmatprep.subr.bf16.mxu0 %v1221
    %1253 = vmatpush1.bf16.msra.mxu0 %v1220
    %1254 = vmatprep.subr.bf16.mxu0 %v1223
    %1255 = vmatpush1.bf16.msra.mxu0 %v1222
    %1256 = vmatprep.subr.bf16.mxu0 %v1225
    %1257 = vmatpush1.bf16.msra.mxu0 %v1224
    %1258 = vmatprep.subr.bf16.mxu0 %v1227
    %1259 = vmatpush1.bf16.msra.mxu0 %v1226
    %1260 = vmatprep.subr.bf16.mxu0 %v1229
    %1261 = vmatpush1.bf16.msra.mxu0 %v1228
    %1262 = vmatprep.subr.bf16.mxu0 %v1231
    %1263 = vmatpush1.bf16.msra.mxu0 %v1230
    %1264 = vmatprep.subr.bf16.mxu0 0
    %1265 = vmatpush1.bf16.msra.mxu0 0
    %1266 = vmatprep.subr.bf16.mxu0 0
    %1267 = vmatpush1.bf16.msra.mxu0 0
    %1268 = vmatprep.subr.bf16.mxu0 0
    %1269 = vmatpush1.bf16.msra.mxu0 0
    %1270 = vmatprep.subr.bf16.mxu0 0
    %1271 = vmatpush1.bf16.msra.mxu0 0
    %1272 = vmatprep.subr.bf16.mxu0 0
    %1273 = vmatpush1.bf16.msra.mxu0 0
    %1274 = vmatprep.subr.bf16.mxu0 0
    %1275 = vmatpush1.bf16.msra.mxu0 0
    %1276 = vmatprep.subr.bf16.mxu0 0
    %1277 = vmatpush1.bf16.msra.mxu0 0
    %1278 = vmatprep.subr.bf16.mxu0 0
    %1279 = vmatpush1.bf16.msra.mxu0 0
    %1280 = vmatprep.mubr.bf16.mxu0 0
    %1281 = vmatmul.mubr.bf16.gmra.mrb[0].mxu0 %v1132
    %v1282 = vpop.f32.mrb[0].mxu0
    %v1283 = vadd.f32 %v1161, %v1282
    %v1284 = vpop.f32.mrb[0].mxu0
    %v1285 = vadd.f32 %v1165, %v1284
    %v1286 = vpop.f32.mrb[0].mxu0
    %v1287 = vadd.f32 %v1161, %v1286
    %v1288 = vpop.f32.mrb[0].mxu0
    %v1289 = vadd.f32 %v1165, %v1288
    %1290 = vmatprep.mubr.bf16.mxu0 0
    %1291 = vmatmul.mubr.bf16.gmra.mrb[0].mxu0 %v1133
    %v1292 = vpop.f32.mrb[0].mxu0
    %v1293 = vadd.f32 %v1161, %v1292
    %v1294 = vpop.f32.mrb[0].mxu0
    %v1295 = vadd.f32 %v1165, %v1294
    %v1296 = vpop.f32.mrb[0].mxu0
    %v1297 = vadd.f32 %v1161, %v1296
    %v1298 = vpop.f32.mrb[0].mxu0
    %v1299 = vadd.f32 %v1165, %v1298
    %1300 = vmatprep.mubr.bf16.mxu0 0
    %1301 = vmatmul.mubr.bf16.gmra.mrb[0].mxu0 %v1134
    %v1302 = vpop.f32.mrb[0].mxu0
    %v1303 = vadd.f32 %v1161, %v1302
    %v1304 = vpop.f32.mrb[0].mxu0
    %v1305 = vadd.f32 %v1165, %v1304
    %v1306 = vpop.f32.mrb[0].mxu0
    %v1307 = vadd.f32 %v1161, %v1306
    %v1308 = vpop.f32.mrb[0].mxu0
    %v1309 = vadd.f32 %v1165, %v1308
    %1310 = vmatprep.mubr.bf16.mxu0 0
    %1311 = vmatmul.mubr.bf16.gmra.mrb[0].mxu0 %v1135
    %v1312 = vpop.f32.mrb[0].mxu0
    %v1313 = vadd.f32 %v1161, %v1312
    %v1314 = vpop.f32.mrb[0].mxu0
    %v1315 = vadd.f32 %v1165, %v1314
    %v1316 = vpop.f32.mrb[0].mxu0
    %v1317 = vadd.f32 %v1161, %v1316
    %v1318 = vpop.f32.mrb[0].mxu0
    %v1319 = vadd.f32 %v1165, %v1318
    %1320 = vmatprep.mubr.bf16.mxu0 0
    %1321 = vmatmul.mubr.bf16.gmra.mrb[0].mxu0 %v1136
    %v1322 = vpop.f32.mrb[0].mxu0
    %v1323 = vadd.f32 %v1161, %v1322
    %v1324 = vpop.f32.mrb[0].mxu0
    %v1325 = vadd.f32 %v1165, %v1324
    %v1326 = vpop.f32.mrb[0].mxu0
    %v1327 = vadd.f32 %v1161, %v1326
    %v1328 = vpop.f32.mrb[0].mxu0
    %v1329 = vadd.f32 %v1165, %v1328
    %1330 = vmatprep.mubr.bf16.mxu0 0
    %1331 = vmatmul.mubr.bf16.gmra.mrb[0].mxu0 %v1137
    %v1332 = vpop.f32.mrb[0].mxu0
    %v1333 = vadd.f32 %v1161, %v1332
    %v1334 = vpop.f32.mrb[0].mxu0
    %v1335 = vadd.f32 %v1165, %v1334
    %v1336 = vpop.f32.mrb[0].mxu0
    %v1337 = vadd.f32 %v1161, %v1336
    %v1338 = vpop.f32.mrb[0].mxu0
    %v1339 = vadd.f32 %v1165, %v1338
    %1340 = vmatprep.mubr.bf16.mxu0 0
    %1341 = vmatmul.mubr.bf16.gmra.mrb[0].mxu0 %v1138
    %v1342 = vpop.f32.mrb[0].mxu0
    %v1343 = vadd.f32 %v1161, %v1342
    %v1344 = vpop.f32.mrb[0].mxu0
    %v1345 = vadd.f32 %v1165, %v1344
    %v1346 = vpop.f32.mrb[0].mxu0
    %v1347 = vadd.f32 %v1161, %v1346
    %v1348 = vpop.f32.mrb[0].mxu0
    %v1349 = vadd.f32 %v1165, %v1348
    %1350 = vmatprep.mubr.bf16.mxu0 0
    %1351 = vmatmul.mubr.bf16.gmra.mrb[0].mxu0 %v1139
    %v1352 = vpop.f32.mrb[0].mxu0
    %v1353 = vadd.f32 %v1161, %v1352
    %v1354 = vpop.f32.mrb[0].mxu0
    %v1355 = vadd.f32 %v1165, %v1354
    %v1356 = vpop.f32.mrb[0].mxu0
    %v1357 = vadd.f32 %v1161, %v1356
    %v1358 = vpop.f32.mrb[0].mxu0
    %v1359 = vadd.f32 %v1165, %v1358
    %1360 = vdwg.mxu0
    %1361 = vst [vmem:[#allocation3] sm:$0xff] 0.0
    %1362 = vst [vmem:[#allocation3 + $0x8] sm:$0xff] 0.0
    %1363 = vst [vmem:[#allocation3 + $0x10] sm:$0xff] 0.0
    %1364 = vst [vmem:[#allocation3 + $0x18] sm:$0xff] 0.0
    %1365 = vst [vmem:[#allocation3 + $0x140] sm:$0xff] 0.0
    %1366 = vst [vmem:[#allocation3 + $0x148] sm:$0xff] 0.0
    %1367 = vst [vmem:[#allocation3 + $0x150] sm:$0xff] 0.0
    %1368 = vst [vmem:[#allocation3 + $0x158] sm:$0xff] 0.0
    %s1369 = scalar_lea.vmem [#allocation3], 288
    %1370 = vst [vmem:[%s1369] sm:$0xff] 0.0
    %1371 = vst [vmem:[%s1369 + $0x8] sm:$0xff] 0.0
    %1372 = vst [vmem:[%s1369 + $0x10] sm:$0xff] 0.0
    %1373 = vst [vmem:[%s1369 + $0x18] sm:$0xff] 0.0
    %1374 = vst [vmem:[%s1369 + $0x140] sm:$0xff] 0.0
    %1375 = vst [vmem:[%s1369 + $0x148] sm:$0xff] 0.0
    %1376 = vst [vmem:[%s1369 + $0x150] sm:$0xff] 0.0
    %1377 = vst [vmem:[%s1369 + $0x158] sm:$0xff] 0.0
    %s1378 = scalar_lea.vmem [#allocation3], 32
    %v1379 = vlaneseq
    %vm1380 = vcmp.ge.s32.totalorder %v1379, 0
    %vm1381 = vcmp.lt.s32.totalorder %v1379, 256
    %vm1382 = vmand %vm1380, %vm1381
    %1383 = vst.msk [vmem:[%s1378] ss:$8 sm:$0x3] %vm1382, 0.0
    %1384 = vst.msk [vmem:[%s1378] ss:$8 sm:$0x0] %vm1382, 0.0
    %s1385 = scalar_lea.vmem %s1378, 32 [#allocation3]
    %1386 = vst.msk [vmem:[%s1385] ss:$8 sm:$0x3] %vm1382, 0.0
    %1387 = vst.msk [vmem:[%s1385] ss:$8 sm:$0x0] %vm1382, 0.0
    %s1388 = scalar_lea.vmem %s1378, 64 [#allocation3]
    %1389 = vst.msk [vmem:[%s1388] ss:$8 sm:$0x3] %vm1382, 0.0
    %1390 = vst.msk [vmem:[%s1388] ss:$8 sm:$0x0] %vm1382, 0.0
    %s1391 = scalar_lea.vmem %s1378, 96 [#allocation3]
    %1392 = vst.msk [vmem:[%s1391] ss:$8 sm:$0x3] %vm1382, 0.0
    %1393 = vst.msk [vmem:[%s1391] ss:$8 sm:$0x0] %vm1382, 0.0
    %s1394 = scalar_lea.vmem %s1378, 128 [#allocation3]
    %1395 = vst.msk [vmem:[%s1394] ss:$8 sm:$0x3] %vm1382, 0.0
    %1396 = vst.msk [vmem:[%s1394] ss:$8 sm:$0x0] %vm1382, 0.0
    %s1397 = scalar_lea.vmem %s1378, 160 [#allocation3]
    %1398 = vst.msk [vmem:[%s1397] ss:$8 sm:$0x3] %vm1382, 0.0
    %1399 = vst.msk [vmem:[%s1397] ss:$8 sm:$0x0] %vm1382, 0.0
    %s1400 = scalar_lea.vmem %s1378, 192 [#allocation3]
    %1401 = vst.msk [vmem:[%s1400] ss:$8 sm:$0x3] %vm1382, 0.0
    %1402 = vst.msk [vmem:[%s1400] ss:$8 sm:$0x0] %vm1382, 0.0
    %s1403 = scalar_lea.vmem %s1378, 224 [#allocation3]
    %1404 = vst.msk [vmem:[%s1403] ss:$8 sm:$0x3] %vm1382, 0.0
    %1405 = vst.msk [vmem:[%s1403] ss:$8 sm:$0x0] %vm1382, 0.0
    %s1406 = scalar_lea.vmem %s1378, 320 [#allocation3]
    %1407 = vst.msk [vmem:[%s1406] ss:$8 sm:$0x3] %vm1382, 0.0
    %1408 = vst.msk [vmem:[%s1406] ss:$8 sm:$0x0] %vm1382, 0.0
    %s1409 = scalar_lea.vmem %s1378, 352 [#allocation3]
    %1410 = vst.msk [vmem:[%s1409] ss:$8 sm:$0x3] %vm1382, 0.0
    %1411 = vst.msk [vmem:[%s1409] ss:$8 sm:$0x0] %vm1382, 0.0
    %s1412 = scalar_lea.vmem %s1378, 384 [#allocation3]
    %1413 = vst.msk [vmem:[%s1412] ss:$8 sm:$0x3] %vm1382, 0.0
    %1414 = vst.msk [vmem:[%s1412] ss:$8 sm:$0x0] %vm1382, 0.0
    %s1415 = scalar_lea.vmem %s1378, 416 [#allocation3]
    %1416 = vst.msk [vmem:[%s1415] ss:$8 sm:$0x3] %vm1382, 0.0
    %1417 = vst.msk [vmem:[%s1415] ss:$8 sm:$0x0] %vm1382, 0.0
    %s1418 = scalar_lea.vmem %s1378, 448 [#allocation3]
    %1419 = vst.msk [vmem:[%s1418] ss:$8 sm:$0x3] %vm1382, 0.0
    %1420 = vst.msk [vmem:[%s1418] ss:$8 sm:$0x0] %vm1382, 0.0
    %s1421 = scalar_lea.vmem %s1378, 480 [#allocation3]
    %1422 = vst.msk [vmem:[%s1421] ss:$8 sm:$0x3] %vm1382, 0.0
    %1423 = vst.msk [vmem:[%s1421] ss:$8 sm:$0x0] %vm1382, 0.0
    %s1424 = scalar_lea.vmem %s1378, 512 [#allocation3]
    %1425 = vst.msk [vmem:[%s1424] ss:$8 sm:$0x3] %vm1382, 0.0
    %1426 = vst.msk [vmem:[%s1424] ss:$8 sm:$0x0] %vm1382, 0.0
    %s1427 = scalar_lea.vmem %s1378, 544 [#allocation3]
    %1428 = vst.msk [vmem:[%s1427] ss:$8 sm:$0x3] %vm1382, 0.0
    %1429 = vst.msk [vmem:[%s1427] ss:$8 sm:$0x0] %vm1382, 0.0
    %s1430 = scalar_lea.vmem %s1378, 17 [#allocation3]
    %1431 = vst.msk [vmem:[%s1430] ss:$8 sm:$0x3] %vm1382, 0.0
    %1432 = vst.msk [vmem:[%s1430] ss:$8 sm:$0x0] %vm1382, 0.0
    %s1433 = scalar_lea.vmem %s1378, 49 [#allocation3]
    %1434 = vst.msk [vmem:[%s1433] ss:$8 sm:$0x3] %vm1382, 0.0
    %1435 = vst.msk [vmem:[%s1433] ss:$8 sm:$0x0] %vm1382, 0.0
    %s1436 = scalar_lea.vmem %s1378, 81 [#allocation3]
    %1437 = vst.msk [vmem:[%s1436] ss:$8 sm:$0x3] %vm1382, 0.0
    %1438 = vst.msk [vmem:[%s1436] ss:$8 sm:$0x0] %vm1382, 0.0
    %s1439 = scalar_lea.vmem %s1378, 113 [#allocation3]
    %1440 = vst.msk [vmem:[%s1439] ss:$8 sm:$0x3] %vm1382, 0.0
    %1441 = vst.msk [vmem:[%s1439] ss:$8 sm:$0x0] %vm1382, 0.0
    %s1442 = scalar_lea.vmem %s1378, 145 [#allocation3]
    %1443 = vst.msk [vmem:[%s1442] ss:$8 sm:$0x3] %vm1382, 0.0
    %1444 = vst.msk [vmem:[%s1442] ss:$8 sm:$0x0] %vm1382, 0.0
    %s1445 = scalar_lea.vmem %s1378, 177 [#allocation3]
    %1446 = vst.msk [vmem:[%s1445] ss:$8 sm:$0x3] %vm1382, 0.0
    %1447 = vst.msk [vmem:[%s1445] ss:$8 sm:$0x0] %vm1382, 0.0
    %s1448 = scalar_lea.vmem %s1378, 209 [#allocation3]
    %1449 = vst.msk [vmem:[%s1448] ss:$8 sm:$0x3] %vm1382, 0.0
    %1450 = vst.msk [vmem:[%s1448] ss:$8 sm:$0x0] %vm1382, 0.0
    %s1451 = scalar_lea.vmem %s1378, 241 [#allocation3]
    %1452 = vst.msk [vmem:[%s1451] ss:$8 sm:$0x3] %vm1382, 0.0
    %1453 = vst.msk [vmem:[%s1451] ss:$8 sm:$0x0] %vm1382, 0.0
    %s1454 = scalar_lea.vmem %s1378, 337 [#allocation3]
    %1455 = vst.msk [vmem:[%s1454] ss:$8 sm:$0x3] %vm1382, 0.0
    %1456 = vst.msk [vmem:[%s1454] ss:$8 sm:$0x0] %vm1382, 0.0
    %s1457 = scalar_lea.vmem %s1378, 369 [#allocation3]
    %1458 = vst.msk [vmem:[%s1457] ss:$8 sm:$0x3] %vm1382, 0.0
    %1459 = vst.msk [vmem:[%s1457] ss:$8 sm:$0x0] %vm1382, 0.0
    %s1460 = scalar_lea.vmem %s1378, 401 [#allocation3]
    %1461 = vst.msk [vmem:[%s1460] ss:$8 sm:$0x3] %vm1382, 0.0
    %1462 = vst.msk [vmem:[%s1460] ss:$8 sm:$0x0] %vm1382, 0.0
    %s1463 = scalar_lea.vmem %s1378, 433 [#allocation3]
    %1464 = vst.msk [vmem:[%s1463] ss:$8 sm:$0x3] %vm1382, 0.0
    %1465 = vst.msk [vmem:[%s1463] ss:$8 sm:$0x0] %vm1382, 0.0
    %s1466 = scalar_lea.vmem %s1378, 465 [#allocation3]
    %1467 = vst.msk [vmem:[%s1466] ss:$8 sm:$0x3] %vm1382, 0.0
    %1468 = vst.msk [vmem:[%s1466] ss:$8 sm:$0x0] %vm1382, 0.0
    %s1469 = scalar_lea.vmem %s1378, 497 [#allocation3]
    %1470 = vst.msk [vmem:[%s1469] ss:$8 sm:$0x3] %vm1382, 0.0
    %1471 = vst.msk [vmem:[%s1469] ss:$8 sm:$0x0] %vm1382, 0.0
    %s1472 = scalar_lea.vmem %s1378, 529 [#allocation3]
    %1473 = vst.msk [vmem:[%s1472] ss:$8 sm:$0x3] %vm1382, 0.0
    %1474 = vst.msk [vmem:[%s1472] ss:$8 sm:$0x0] %vm1382, 0.0
    %s1475 = scalar_lea.vmem %s1378, 561 [#allocation3]
    %1476 = vst.msk [vmem:[%s1475] ss:$8 sm:$0x3] %vm1382, 0.0
    %1477 = vst.msk [vmem:[%s1475] ss:$8 sm:$0x0] %vm1382, 0.0
    %v1510 = vrot.slane %v1283, 7
    %v1511 = vrot.slane %v1285, 7
    %v1512 = vrot.slane %v1287, 7
    %v1513 = vrot.slane %v1289, 7
    %v1514 = vrot.slane %v1293, 7
    %v1515 = vrot.slane %v1295, 7
    %v1516 = vrot.slane %v1297, 7
    %v1517 = vrot.slane %v1299, 7
    %v1518 = vrot.slane %v1303, 7
    %v1519 = vrot.slane %v1305, 7
    %v1520 = vrot.slane %v1307, 7
    %v1521 = vrot.slane %v1309, 7
    %v1522 = vrot.slane %v1313, 7
    %v1523 = vrot.slane %v1315, 7
    %v1524 = vrot.slane %v1317, 7
    %v1525 = vrot.slane %v1319, 7
    %v1526 = vrot.slane %v1323, 7
    %v1527 = vrot.slane %v1325, 7
    %v1528 = vrot.slane %v1327, 7
    %v1529 = vrot.slane %v1329, 7
    %v1530 = vrot.slane %v1333, 7
    %v1531 = vrot.slane %v1335, 7
    %v1532 = vrot.slane %v1337, 7
    %v1533 = vrot.slane %v1339, 7
    %v1534 = vrot.slane %v1343, 7
    %v1535 = vrot.slane %v1345, 7
    %v1536 = vrot.slane %v1347, 7
    %v1537 = vrot.slane %v1349, 7
    %v1538 = vrot.slane %v1353, 7
    %v1539 = vrot.slane %v1355, 7
    %v1540 = vrot.slane %v1357, 7
    %v1541 = vrot.slane %v1359, 7
    %1574 = vst [vmem:[%s1378] sm:$0xfe] %v1510
    %1575 = vst [vmem:[%s1378 + $0x8] sm:$0xfe] %v1511
    %1576 = vst [vmem:[%s1378 + $0x10] sm:$0x1] %v1510
    %1577 = vst [vmem:[%s1378 + $0x18] sm:$0x1] %v1511
    %1578 = vst [vmem:[%s1378 + $0x20] sm:$0xfe] %v1512
    %1579 = vst [vmem:[%s1378 + $0x28] sm:$0xfe] %v1513
    %1580 = vst [vmem:[%s1378 + $0x30] sm:$0x1] %v1512
    %1581 = vst [vmem:[%s1378 + $0x38] sm:$0x1] %v1513
    %1582 = vst [vmem:[%s1378 + $0x40] sm:$0xfe] %v1514
    %1583 = vst [vmem:[%s1378 + $0x48] sm:$0xfe] %v1515
    %1584 = vst [vmem:[%s1378 + $0x50] sm:$0x1] %v1514
    %1585 = vst [vmem:[%s1378 + $0x58] sm:$0x1] %v1515
    %1586 = vst [vmem:[%s1378 + $0x60] sm:$0xfe] %v1516
    %1587 = vst [vmem:[%s1378 + $0x68] sm:$0xfe] %v1517
    %1588 = vst [vmem:[%s1378 + $0x70] sm:$0x1] %v1516
    %1589 = vst [vmem:[%s1378 + $0x78] sm:$0x1] %v1517
    %1590 = vst [vmem:[%s1378 + $0x80] sm:$0xfe] %v1518
    %1591 = vst [vmem:[%s1378 + $0x88] sm:$0xfe] %v1519
    %1592 = vst [vmem:[%s1378 + $0x90] sm:$0x1] %v1518
    %1593 = vst [vmem:[%s1378 + $0x98] sm:$0x1] %v1519
    %1594 = vst [vmem:[%s1378 + $0xa0] sm:$0xfe] %v1520
    %1595 = vst [vmem:[%s1378 + $0xa8] sm:$0xfe] %v1521
    %1596 = vst [vmem:[%s1378 + $0xb0] sm:$0x1] %v1520
    %1597 = vst [vmem:[%s1378 + $0xb8] sm:$0x1] %v1521
    %1598 = vst [vmem:[%s1378 + $0xc0] sm:$0xfe] %v1522
    %1599 = vst [vmem:[%s1378 + $0xc8] sm:$0xfe] %v1523
    %1600 = vst [vmem:[%s1378 + $0xd0] sm:$0x1] %v1522
    %1601 = vst [vmem:[%s1378 + $0xd8] sm:$0x1] %v1523
    %1602 = vst [vmem:[%s1378 + $0xe0] sm:$0xfe] %v1524
    %1603 = vst [vmem:[%s1378 + $0xe8] sm:$0xfe] %v1525
    %1604 = vst [vmem:[%s1378 + $0xf0] sm:$0x1] %v1524
    %1605 = vst [vmem:[%s1378 + $0xf8] sm:$0x1] %v1525
    %1606 = vst [vmem:[%s1378 + $0x140] sm:$0xfe] %v1526
    %1607 = vst [vmem:[%s1378 + $0x148] sm:$0xfe] %v1527
    %1608 = vst [vmem:[%s1378 + $0x150] sm:$0x1] %v1526
    %1609 = vst [vmem:[%s1378 + $0x158] sm:$0x1] %v1527
    %1610 = vst [vmem:[%s1378 + $0x160] sm:$0xfe] %v1528
    %1611 = vst [vmem:[%s1378 + $0x168] sm:$0xfe] %v1529
    %1612 = vst [vmem:[%s1378 + $0x170] sm:$0x1] %v1528
    %1613 = vst [vmem:[%s1378 + $0x178] sm:$0x1] %v1529
    %1614 = vst [vmem:[%s1378 + $0x180] sm:$0xfe] %v1530
    %1615 = vst [vmem:[%s1378 + $0x188] sm:$0xfe] %v1531
    %1616 = vst [vmem:[%s1378 + $0x190] sm:$0x1] %v1530
    %1617 = vst [vmem:[%s1378 + $0x198] sm:$0x1] %v1531
    %1618 = vst [vmem:[%s1378 + $0x1a0] sm:$0xfe] %v1532
    %1619 = vst [vmem:[%s1378 + $0x1a8] sm:$0xfe] %v1533
    %1620 = vst [vmem:[%s1378 + $0x1b0] sm:$0x1] %v1532
    %1621 = vst [vmem:[%s1378 + $0x1b8] sm:$0x1] %v1533
    %1622 = vst [vmem:[%s1378 + $0x1c0] sm:$0xfe] %v1534
    %1623 = vst [vmem:[%s1378 + $0x1c8] sm:$0xfe] %v1535
    %1624 = vst [vmem:[%s1378 + $0x1d0] sm:$0x1] %v1534
    %1625 = vst [vmem:[%s1378 + $0x1d8] sm:$0x1] %v1535
    %1626 = vst [vmem:[%s1378 + $0x1e0] sm:$0xfe] %v1536
    %1627 = vst [vmem:[%s1378 + $0x1e8] sm:$0xfe] %v1537
    %1628 = vst [vmem:[%s1378 + $0x1f0] sm:$0x1] %v1536
    %1629 = vst [vmem:[%s1378 + $0x1f8] sm:$0x1] %v1537
    %1630 = vst [vmem:[%s1378 + $0x200] sm:$0xfe] %v1538
    %1631 = vst [vmem:[%s1378 + $0x208] sm:$0xfe] %v1539
    %1632 = vst [vmem:[%s1378 + $0x210] sm:$0x1] %v1538
    %1633 = vst [vmem:[%s1378 + $0x218] sm:$0x1] %v1539
    %1634 = vst [vmem:[%s1378 + $0x220] sm:$0xfe] %v1540
    %1635 = vst [vmem:[%s1378 + $0x228] sm:$0xfe] %v1541
    %1636 = vst [vmem:[%s1378 + $0x230] sm:$0x1] %v1540
    %1637 = vst [vmem:[%s1378 + $0x238] sm:$0x1] %v1541
    %v1638 = vld [vmem:[%s10] sm:$0xff]
    %v1639 = vld [vmem:[%s10 + $0x8] sm:$0xff]
    %v1640 = vld [vmem:[%s10 + $0x10] sm:$0x1]
    %v1641 = vld [vmem:[%s10 + $0x18] sm:$0x1]
    %v1642 = vld [vmem:[#allocation19] sm:$0x3]
    %v1644 = vlaneseq
    %v1645 = vshrl.u32 %v1644, 7
    %v1646 = vsub.s32 0, %v1645
    %v1647 = vrot.slane %v1642, %v1646
    %v1648 = vlaneseq
    %v1649 = vshrl.u32 %v1648, 7
    %v1650 = vsub.s32 1, %v1649
    %v1651 = vrot.slane %v1642, %v1650
    %v1654 = vld [vmem:[#allocation3] sm:$0xff]
    %v1655 = vld [vmem:[#allocation3 + $0x8] sm:$0xff]
    %v1656 = vld [vmem:[#allocation3 + $0x20] sm:$0xff]
    %v1657 = vld [vmem:[#allocation3 + $0x28] sm:$0xff]
    %v1658 = vld [vmem:[#allocation3 + $0x40] sm:$0xff]
    %v1659 = vld [vmem:[#allocation3 + $0x48] sm:$0xff]
    %v1660 = vld [vmem:[#allocation3 + $0x60] sm:$0xff]
    %v1661 = vld [vmem:[#allocation3 + $0x68] sm:$0xff]
    %v1662 = vld [vmem:[#allocation3 + $0x80] sm:$0xff]
    %v1663 = vld [vmem:[#allocation3 + $0x88] sm:$0xff]
    %v1664 = vld [vmem:[#allocation3 + $0xa0] sm:$0xff]
    %v1665 = vld [vmem:[#allocation3 + $0xa8] sm:$0xff]
    %v1666 = vld [vmem:[#allocation3 + $0xc0] sm:$0xff]
    %v1667 = vld [vmem:[#allocation3 + $0xc8] sm:$0xff]
    %v1668 = vld [vmem:[#allocation3 + $0xe0] sm:$0xff]
    %v1669 = vld [vmem:[#allocation3 + $0xe8] sm:$0xff]
    %v1670 = vld [vmem:[#allocation3 + $0x140] sm:$0xff]
    %v1671 = vld [vmem:[#allocation3 + $0x148] sm:$0xff]
    %v1672 = vld [vmem:[#allocation3 + $0x160] sm:$0xff]
    %v1673 = vld [vmem:[#allocation3 + $0x168] sm:$0xff]
    %v1674 = vld [vmem:[#allocation3 + $0x180] sm:$0xff]
    %v1675 = vld [vmem:[#allocation3 + $0x188] sm:$0xff]
    %v1676 = vld [vmem:[#allocation3 + $0x1a0] sm:$0xff]
    %v1677 = vld [vmem:[#allocation3 + $0x1a8] sm:$0xff]
    %v1678 = vld [vmem:[#allocation3 + $0x1c0] sm:$0xff]
    %v1679 = vld [vmem:[#allocation3 + $0x1c8] sm:$0xff]
    %v1680 = vld [vmem:[#allocation3 + $0x1e0] sm:$0xff]
    %v1681 = vld [vmem:[#allocation3 + $0x1e8] sm:$0xff]
    %v1682 = vld [vmem:[#allocation3 + $0x200] sm:$0xff]
    %v1683 = vld [vmem:[#allocation3 + $0x208] sm:$0xff]
    %v1684 = vld [vmem:[#allocation3 + $0x220] sm:$0xff]
    %v1685 = vld [vmem:[#allocation3 + $0x228] sm:$0xff]
    %v1686 = vlaneseq
    %v1687 = vshrl.u32 %v1686, 7
    %v1688 = vsub.s32 0, %v1687
    %v1689 = vrot.slane %v1638, %v1688
    %v1690 = vlaneseq
    %v1691 = vshrl.u32 %v1690, 7
    %v1692 = vsub.s32 0, %v1691
    %v1693 = vrot.slane %v1639, %v1692
    %v1694 = vmul.f32 %v1654, %v1689
    %v1695 = vmul.f32 %v1655, %v1693
    %v1696 = vmul.f32 %v1656, %v1689
    %v1697 = vmul.f32 %v1657, %v1693
    %v1698 = vmul.f32 %v1658, %v1689
    %v1699 = vmul.f32 %v1659, %v1693
    %v1700 = vmul.f32 %v1660, %v1689
    %v1701 = vmul.f32 %v1661, %v1693
    %v1702 = vmul.f32 %v1662, %v1689
    %v1703 = vmul.f32 %v1663, %v1693
    %v1704 = vmul.f32 %v1664, %v1689
    %v1705 = vmul.f32 %v1665, %v1693
    %v1706 = vmul.f32 %v1666, %v1689
    %v1707 = vmul.f32 %v1667, %v1693
    %v1708 = vmul.f32 %v1668, %v1689
    %v1709 = vmul.f32 %v1669, %v1693
    %v1710 = vmul.f32 %v1670, %v1689
    %v1711 = vmul.f32 %v1671, %v1693
    %v1712 = vmul.f32 %v1672, %v1689
    %v1713 = vmul.f32 %v1673, %v1693
    %v1714 = vmul.f32 %v1674, %v1689
    %v1715 = vmul.f32 %v1675, %v1693
    %v1716 = vmul.f32 %v1676, %v1689
    %v1717 = vmul.f32 %v1677, %v1693
    %v1718 = vmul.f32 %v1678, %v1689
    %v1719 = vmul.f32 %v1679, %v1693
    %v1720 = vmul.f32 %v1680, %v1689
    %v1721 = vmul.f32 %v1681, %v1693
    %v1722 = vmul.f32 %v1682, %v1689
    %v1723 = vmul.f32 %v1683, %v1693
    %v1724 = vmul.f32 %v1684, %v1689
    %v1725 = vmul.f32 %v1685, %v1693
    %v1726 = vadd.f32 %v1647, %v1694
    %v1727 = vadd.f32 %v1651, %v1695
    %v1728 = vadd.f32 %v1647, %v1696
    %v1729 = vadd.f32 %v1651, %v1697
    %v1730 = vadd.f32 %v1647, %v1698
    %v1731 = vadd.f32 %v1651, %v1699
    %v1732 = vadd.f32 %v1647, %v1700
    %v1733 = vadd.f32 %v1651, %v1701
    %v1734 = vadd.f32 %v1647, %v1702
    %v1735 = vadd.f32 %v1651, %v1703
    %v1736 = vadd.f32 %v1647, %v1704
    %v1737 = vadd.f32 %v1651, %v1705
    %v1738 = vadd.f32 %v1647, %v1706
    %v1739 = vadd.f32 %v1651, %v1707
    %v1740 = vadd.f32 %v1647, %v1708
    %v1741 = vadd.f32 %v1651, %v1709
    %v1742 = vadd.f32 %v1647, %v1710
    %v1743 = vadd.f32 %v1651, %v1711
    %v1744 = vadd.f32 %v1647, %v1712
    %v1745 = vadd.f32 %v1651, %v1713
    %v1746 = vadd.f32 %v1647, %v1714
    %v1747 = vadd.f32 %v1651, %v1715
    %v1748 = vadd.f32 %v1647, %v1716
    %v1749 = vadd.f32 %v1651, %v1717
    %v1750 = vadd.f32 %v1647, %v1718
    %v1751 = vadd.f32 %v1651, %v1719
    %v1752 = vadd.f32 %v1647, %v1720
    %v1753 = vadd.f32 %v1651, %v1721
    %v1754 = vadd.f32 %v1647, %v1722
    %v1755 = vadd.f32 %v1651, %v1723
    %v1756 = vadd.f32 %v1647, %v1724
    %v1757 = vadd.f32 %v1651, %v1725
    %v1758 = vld [vmem:[#allocation3] sm:$0xfe]
    %v1759 = vld [vmem:[#allocation3 + $0x8] sm:$0xfe]
    %v1760 = vld [vmem:[#allocation3 + $0x10] sm:$0x1]
    %v1761 = vld [vmem:[#allocation3 + $0x18] sm:$0x1]
    %v1762 = vld [vmem:[#allocation3 + $0x20] sm:$0xfe]
    %v1763 = vld [vmem:[#allocation3 + $0x28] sm:$0xfe]
    %v1764 = vld [vmem:[#allocation3 + $0x30] sm:$0x1]
    %v1765 = vld [vmem:[#allocation3 + $0x38] sm:$0x1]
    %v1766 = vld [vmem:[#allocation3 + $0x40] sm:$0xfe]
    %v1767 = vld [vmem:[#allocation3 + $0x48] sm:$0xfe]
    %v1768 = vld [vmem:[#allocation3 + $0x50] sm:$0x1]
    %v1769 = vld [vmem:[#allocation3 + $0x58] sm:$0x1]
    %v1770 = vld [vmem:[#allocation3 + $0x60] sm:$0xfe]
    %v1771 = vld [vmem:[#allocation3 + $0x68] sm:$0xfe]
    %v1772 = vld [vmem:[#allocation3 + $0x70] sm:$0x1]
    %v1773 = vld [vmem:[#allocation3 + $0x78] sm:$0x1]
    %v1774 = vld [vmem:[#allocation3 + $0x80] sm:$0xfe]
    %v1775 = vld [vmem:[#allocation3 + $0x88] sm:$0xfe]
    %v1776 = vld [vmem:[#allocation3 + $0x90] sm:$0x1]
    %v1777 = vld [vmem:[#allocation3 + $0x98] sm:$0x1]
    %v1778 = vld [vmem:[#allocation3 + $0xa0] sm:$0xfe]
    %v1779 = vld [vmem:[#allocation3 + $0xa8] sm:$0xfe]
    %v1780 = vld [vmem:[#allocation3 + $0xb0] sm:$0x1]
    %v1781 = vld [vmem:[#allocation3 + $0xb8] sm:$0x1]
    %v1782 = vld [vmem:[#allocation3 + $0xc0] sm:$0xfe]
    %v1783 = vld [vmem:[#allocation3 + $0xc8] sm:$0xfe]
    %v1784 = vld [vmem:[#allocation3 + $0xd0] sm:$0x1]
    %v1785 = vld [vmem:[#allocation3 + $0xd8] sm:$0x1]
    %v1786 = vld [vmem:[#allocation3 + $0xe0] sm:$0xfe]
    %v1787 = vld [vmem:[#allocation3 + $0xe8] sm:$0xfe]
    %v1788 = vld [vmem:[#allocation3 + $0xf0] sm:$0x1]
    %v1789 = vld [vmem:[#allocation3 + $0xf8] sm:$0x1]
    %v1790 = vld [vmem:[#allocation3 + $0x140] sm:$0xfe]
    %v1791 = vld [vmem:[#allocation3 + $0x148] sm:$0xfe]
    %v1792 = vld [vmem:[#allocation3 + $0x150] sm:$0x1]
    %v1793 = vld [vmem:[#allocation3 + $0x158] sm:$0x1]
    %v1794 = vld [vmem:[#allocation3 + $0x160] sm:$0xfe]
    %v1795 = vld [vmem:[#allocation3 + $0x168] sm:$0xfe]
    %v1796 = vld [vmem:[#allocation3 + $0x170] sm:$0x1]
    %v1797 = vld [vmem:[#allocation3 + $0x178] sm:$0x1]
    %v1798 = vld [vmem:[#allocation3 + $0x180] sm:$0xfe]
    %v1799 = vld [vmem:[#allocation3 + $0x188] sm:$0xfe]
    %v1800 = vld [vmem:[#allocation3 + $0x190] sm:$0x1]
    %v1801 = vld [vmem:[#allocation3 + $0x198] sm:$0x1]
    %v1802 = vld [vmem:[#allocation3 + $0x1a0] sm:$0xfe]
    %v1803 = vld [vmem:[#allocation3 + $0x1a8] sm:$0xfe]
    %v1804 = vld [vmem:[#allocation3 + $0x1b0] sm:$0x1]
    %v1805 = vld [vmem:[#allocation3 + $0x1b8] sm:$0x1]
    %v1806 = vld [vmem:[#allocation3 + $0x1c0] sm:$0xfe]
    %v1807 = vld [vmem:[#allocation3 + $0x1c8] sm:$0xfe]
    %v1808 = vld [vmem:[#allocation3 + $0x1d0] sm:$0x1]
    %v1809 = vld [vmem:[#allocation3 + $0x1d8] sm:$0x1]
    %v1810 = vld [vmem:[#allocation3 + $0x1e0] sm:$0xfe]
    %v1811 = vld [vmem:[#allocation3 + $0x1e8] sm:$0xfe]
    %v1812 = vld [vmem:[#allocation3 + $0x1f0] sm:$0x1]
    %v1813 = vld [vmem:[#allocation3 + $0x1f8] sm:$0x1]
    %v1814 = vld [vmem:[#allocation3 + $0x200] sm:$0xfe]
    %v1815 = vld [vmem:[#allocation3 + $0x208] sm:$0xfe]
    %v1816 = vld [vmem:[#allocation3 + $0x210] sm:$0x1]
    %v1817 = vld [vmem:[#allocation3 + $0x218] sm:$0x1]
    %v1818 = vld [vmem:[#allocation3 + $0x220] sm:$0xfe]
    %v1819 = vld [vmem:[#allocation3 + $0x228] sm:$0xfe]
    %v1820 = vld [vmem:[#allocation3 + $0x230] sm:$0x1]
    %v1821 = vld [vmem:[#allocation3 + $0x238] sm:$0x1]
    %v1822 = vlaneseq
    %v1823 = vshrl.u32 %v1822, 7
    %v1824 = vsub.s32 1, %v1823
    %v1825 = vrot.slane %v1638, %v1824
    %v1826 = vlaneseq
    %v1827 = vshrl.u32 %v1826, 7
    %v1828 = vsub.s32 1, %v1827
    %v1829 = vrot.slane %v1639, %v1828
    %v1830 = vmul.f32 %v1758, %v1825
    %v1831 = vmul.f32 %v1759, %v1829
    %v1832 = vmul.f32 %v1760, %v1825
    %v1833 = vmul.f32 %v1761, %v1829
    %v1834 = vmul.f32 %v1762, %v1825
    %v1835 = vmul.f32 %v1763, %v1829
    %v1836 = vmul.f32 %v1764, %v1825
    %v1837 = vmul.f32 %v1765, %v1829
    %v1838 = vmul.f32 %v1766, %v1825
    %v1839 = vmul.f32 %v1767, %v1829
    %v1840 = vmul.f32 %v1768, %v1825
    %v1841 = vmul.f32 %v1769, %v1829
    %v1842 = vmul.f32 %v1770, %v1825
    %v1843 = vmul.f32 %v1771, %v1829
    %v1844 = vmul.f32 %v1772, %v1825
    %v1845 = vmul.f32 %v1773, %v1829
    %v1846 = vmul.f32 %v1774, %v1825
    %v1847 = vmul.f32 %v1775, %v1829
    %v1848 = vmul.f32 %v1776, %v1825
    %v1849 = vmul.f32 %v1777, %v1829
    %v1850 = vmul.f32 %v1778, %v1825
    %v1851 = vmul.f32 %v1779, %v1829
    %v1852 = vmul.f32 %v1780, %v1825
    %v1853 = vmul.f32 %v1781, %v1829
    %v1854 = vmul.f32 %v1782, %v1825
    %v1855 = vmul.f32 %v1783, %v1829
    %v1856 = vmul.f32 %v1784, %v1825
    %v1857 = vmul.f32 %v1785, %v1829
    %v1858 = vmul.f32 %v1786, %v1825
    %v1859 = vmul.f32 %v1787, %v1829
    %v1860 = vmul.f32 %v1788, %v1825
    %v1861 = vmul.f32 %v1789, %v1829
    %v1862 = vmul.f32 %v1790, %v1825
    %v1863 = vmul.f32 %v1791, %v1829
    %v1864 = vmul.f32 %v1792, %v1825
    %v1865 = vmul.f32 %v1793, %v1829
    %v1866 = vmul.f32 %v1794, %v1825
    %v1867 = vmul.f32 %v1795, %v1829
    %v1868 = vmul.f32 %v1796, %v1825
    %v1869 = vmul.f32 %v1797, %v1829
    %v1870 = vmul.f32 %v1798, %v1825
    %v1871 = vmul.f32 %v1799, %v1829
    %v1872 = vmul.f32 %v1800, %v1825
    %v1873 = vmul.f32 %v1801, %v1829
    %v1874 = vmul.f32 %v1802, %v1825
    %v1875 = vmul.f32 %v1803, %v1829
    %v1876 = vmul.f32 %v1804, %v1825
    %v1877 = vmul.f32 %v1805, %v1829
    %v1878 = vmul.f32 %v1806, %v1825
    %v1879 = vmul.f32 %v1807, %v1829
    %v1880 = vmul.f32 %v1808, %v1825
    %v1881 = vmul.f32 %v1809, %v1829
    %v1882 = vmul.f32 %v1810, %v1825
    %v1883 = vmul.f32 %v1811, %v1829
    %v1884 = vmul.f32 %v1812, %v1825
    %v1885 = vmul.f32 %v1813, %v1829
    %v1886 = vmul.f32 %v1814, %v1825
    %v1887 = vmul.f32 %v1815, %v1829
    %v1888 = vmul.f32 %v1816, %v1825
    %v1889 = vmul.f32 %v1817, %v1829
    %v1890 = vmul.f32 %v1818, %v1825
    %v1891 = vmul.f32 %v1819, %v1829
    %v1892 = vmul.f32 %v1820, %v1825
    %v1893 = vmul.f32 %v1821, %v1829
    %vm1958 = vcmask 1046528
    %v1959 = vrot.slane %v1830, 1
    %v1960 = vrot.slane %v1832, 1
    %v1961 = vsel %vm1958, %v1959, %v1960
    %v1962 = vrot.slane %v1831, 1
    %v1963 = vrot.slane %v1833, 1
    %v1964 = vsel %vm1958, %v1962, %v1963
    %v1965 = vrot.slane %v1834, 1
    %v1966 = vrot.slane %v1836, 1
    %v1967 = vsel %vm1958, %v1965, %v1966
    %v1968 = vrot.slane %v1835, 1
    %v1969 = vrot.slane %v1837, 1
    %v1970 = vsel %vm1958, %v1968, %v1969
    %v1971 = vrot.slane %v1838, 1
    %v1972 = vrot.slane %v1840, 1
    %v1973 = vsel %vm1958, %v1971, %v1972
    %v1974 = vrot.slane %v1839, 1
    %v1975 = vrot.slane %v1841, 1
    %v1976 = vsel %vm1958, %v1974, %v1975
    %v1977 = vrot.slane %v1842, 1
    %v1978 = vrot.slane %v1844, 1
    %v1979 = vsel %vm1958, %v1977, %v1978
    %v1980 = vrot.slane %v1843, 1
    %v1981 = vrot.slane %v1845, 1
    %v1982 = vsel %vm1958, %v1980, %v1981
    %v1983 = vrot.slane %v1846, 1
    %v1984 = vrot.slane %v1848, 1
    %v1985 = vsel %vm1958, %v1983, %v1984
    %v1986 = vrot.slane %v1847, 1
    %v1987 = vrot.slane %v1849, 1
    %v1988 = vsel %vm1958, %v1986, %v1987
    %v1989 = vrot.slane %v1850, 1
    %v1990 = vrot.slane %v1852, 1
    %v1991 = vsel %vm1958, %v1989, %v1990
    %v1992 = vrot.slane %v1851, 1
    %v1993 = vrot.slane %v1853, 1
    %v1994 = vsel %vm1958, %v1992, %v1993
    %v1995 = vrot.slane %v1854, 1
    %v1996 = vrot.slane %v1856, 1
    %v1997 = vsel %vm1958, %v1995, %v1996
    %v1998 = vrot.slane %v1855, 1
    %v1999 = vrot.slane %v1857, 1
    %v2000 = vsel %vm1958, %v1998, %v1999
    %v2001 = vrot.slane %v1858, 1
    %v2002 = vrot.slane %v1860, 1
    %v2003 = vsel %vm1958, %v2001, %v2002
    %v2004 = vrot.slane %v1859, 1
    %v2005 = vrot.slane %v1861, 1
    %v2006 = vsel %vm1958, %v2004, %v2005
    %v2007 = vrot.slane %v1862, 1
    %v2008 = vrot.slane %v1864, 1
    %v2009 = vsel %vm1958, %v2007, %v2008
    %v2010 = vrot.slane %v1863, 1
    %v2011 = vrot.slane %v1865, 1
    %v2012 = vsel %vm1958, %v2010, %v2011
    %v2013 = vrot.slane %v1866, 1
    %v2014 = vrot.slane %v1868, 1
    %v2015 = vsel %vm1958, %v2013, %v2014
    %v2016 = vrot.slane %v1867, 1
    %v2017 = vrot.slane %v1869, 1
    %v2018 = vsel %vm1958, %v2016, %v2017
    %v2019 = vrot.slane %v1870, 1
    %v2020 = vrot.slane %v1872, 1
    %v2021 = vsel %vm1958, %v2019, %v2020
    %v2022 = vrot.slane %v1871, 1
    %v2023 = vrot.slane %v1873, 1
    %v2024 = vsel %vm1958, %v2022, %v2023
    %v2025 = vrot.slane %v1874, 1
    %v2026 = vrot.slane %v1876, 1
    %v2027 = vsel %vm1958, %v2025, %v2026
    %v2028 = vrot.slane %v1875, 1
    %v2029 = vrot.slane %v1877, 1
    %v2030 = vsel %vm1958, %v2028, %v2029
    %v2031 = vrot.slane %v1878, 1
    %v2032 = vrot.slane %v1880, 1
    %v2033 = vsel %vm1958, %v2031, %v2032
    %v2034 = vrot.slane %v1879, 1
    %v2035 = vrot.slane %v1881, 1
    %v2036 = vsel %vm1958, %v2034, %v2035
    %v2037 = vrot.slane %v1882, 1
    %v2038 = vrot.slane %v1884, 1
    %v2039 = vsel %vm1958, %v2037, %v2038
    %v2040 = vrot.slane %v1883, 1
    %v2041 = vrot.slane %v1885, 1
    %v2042 = vsel %vm1958, %v2040, %v2041
    %v2043 = vrot.slane %v1886, 1
    %v2044 = vrot.slane %v1888, 1
    %v2045 = vsel %vm1958, %v2043, %v2044
    %v2046 = vrot.slane %v1887, 1
    %v2047 = vrot.slane %v1889, 1
    %v2048 = vsel %vm1958, %v2046, %v2047
    %v2049 = vrot.slane %v1890, 1
    %v2050 = vrot.slane %v1892, 1
    %v2051 = vsel %vm1958, %v2049, %v2050
    %v2052 = vrot.slane %v1891, 1
    %v2053 = vrot.slane %v1893, 1
    %v2054 = vsel %vm1958, %v2052, %v2053
    %v2087 = vadd.f32 %v1726, %v1961
    %v2088 = vadd.f32 %v1727, %v1964
    %v2089 = vadd.f32 %v1728, %v1967
    %v2090 = vadd.f32 %v1729, %v1970
    %v2091 = vadd.f32 %v1730, %v1973
    %v2092 = vadd.f32 %v1731, %v1976
    %v2093 = vadd.f32 %v1732, %v1979
    %v2094 = vadd.f32 %v1733, %v1982
    %v2095 = vadd.f32 %v1734, %v1985
    %v2096 = vadd.f32 %v1735, %v1988
    %v2097 = vadd.f32 %v1736, %v1991
    %v2098 = vadd.f32 %v1737, %v1994
    %v2099 = vadd.f32 %v1738, %v1997
    %v2100 = vadd.f32 %v1739, %v2000
    %v2101 = vadd.f32 %v1740, %v2003
    %v2102 = vadd.f32 %v1741, %v2006
    %v2103 = vadd.f32 %v1742, %v2009
    %v2104 = vadd.f32 %v1743, %v2012
    %v2105 = vadd.f32 %v1744, %v2015
    %v2106 = vadd.f32 %v1745, %v2018
    %v2107 = vadd.f32 %v1746, %v2021
    %v2108 = vadd.f32 %v1747, %v2024
    %v2109 = vadd.f32 %v1748, %v2027
    %v2110 = vadd.f32 %v1749, %v2030
    %v2111 = vadd.f32 %v1750, %v2033
    %v2112 = vadd.f32 %v1751, %v2036
    %v2113 = vadd.f32 %v1752, %v2039
    %v2114 = vadd.f32 %v1753, %v2042
    %v2115 = vadd.f32 %v1754, %v2045
    %v2116 = vadd.f32 %v1755, %v2048
    %v2117 = vadd.f32 %v1756, %v2051
    %v2118 = vadd.f32 %v1757, %v2054
    %v2119 = vld [vmem:[#allocation3] sm:$0xfc]
    %v2120 = vld [vmem:[#allocation3 + $0x8] sm:$0xfc]
    %v2121 = vld [vmem:[#allocation3 + $0x10] sm:$0x3]
    %v2122 = vld [vmem:[#allocation3 + $0x18] sm:$0x3]
    %v2123 = vld [vmem:[#allocation3 + $0x20] sm:$0xfc]
    %v2124 = vld [vmem:[#allocation3 + $0x28] sm:$0xfc]
    %v2125 = vld [vmem:[#allocation3 + $0x30] sm:$0x3]
    %v2126 = vld [vmem:[#allocation3 + $0x38] sm:$0x3]
    %v2127 = vld [vmem:[#allocation3 + $0x40] sm:$0xfc]
    %v2128 = vld [vmem:[#allocation3 + $0x48] sm:$0xfc]
    %v2129 = vld [vmem:[#allocation3 + $0x50] sm:$0x3]
    %v2130 = vld [vmem:[#allocation3 + $0x58] sm:$0x3]
    %v2131 = vld [vmem:[#allocation3 + $0x60] sm:$0xfc]
    %v2132 = vld [vmem:[#allocation3 + $0x68] sm:$0xfc]
    %v2133 = vld [vmem:[#allocation3 + $0x70] sm:$0x3]
    %v2134 = vld [vmem:[#allocation3 + $0x78] sm:$0x3]
    %v2135 = vld [vmem:[#allocation3 + $0x80] sm:$0xfc]
    %v2136 = vld [vmem:[#allocation3 + $0x88] sm:$0xfc]
    %v2137 = vld [vmem:[#allocation3 + $0x90] sm:$0x3]
    %v2138 = vld [vmem:[#allocation3 + $0x98] sm:$0x3]
    %v2139 = vld [vmem:[#allocation3 + $0xa0] sm:$0xfc]
    %v2140 = vld [vmem:[#allocation3 + $0xa8] sm:$0xfc]
    %v2141 = vld [vmem:[#allocation3 + $0xb0] sm:$0x3]
    %v2142 = vld [vmem:[#allocation3 + $0xb8] sm:$0x3]
    %v2143 = vld [vmem:[#allocation3 + $0xc0] sm:$0xfc]
    %v2144 = vld [vmem:[#allocation3 + $0xc8] sm:$0xfc]
    %v2145 = vld [vmem:[#allocation3 + $0xd0] sm:$0x3]
    %v2146 = vld [vmem:[#allocation3 + $0xd8] sm:$0x3]
    %v2147 = vld [vmem:[#allocation3 + $0xe0] sm:$0xfc]
    %v2148 = vld [vmem:[#allocation3 + $0xe8] sm:$0xfc]
    %v2149 = vld [vmem:[#allocation3 + $0xf0] sm:$0x3]
    %v2150 = vld [vmem:[#allocation3 + $0xf8] sm:$0x3]
    %v2151 = vld [vmem:[#allocation3 + $0x140] sm:$0xfc]
    %v2152 = vld [vmem:[#allocation3 + $0x148] sm:$0xfc]
    %v2153 = vld [vmem:[#allocation3 + $0x150] sm:$0x3]
    %v2154 = vld [vmem:[#allocation3 + $0x158] sm:$0x3]
    %v2155 = vld [vmem:[#allocation3 + $0x160] sm:$0xfc]
    %v2156 = vld [vmem:[#allocation3 + $0x168] sm:$0xfc]
    %v2157 = vld [vmem:[#allocation3 + $0x170] sm:$0x3]
    %v2158 = vld [vmem:[#allocation3 + $0x178] sm:$0x3]
    %v2159 = vld [vmem:[#allocation3 + $0x180] sm:$0xfc]
    %v2160 = vld [vmem:[#allocation3 + $0x188] sm:$0xfc]
    %v2161 = vld [vmem:[#allocation3 + $0x190] sm:$0x3]
    %v2162 = vld [vmem:[#allocation3 + $0x198] sm:$0x3]
    %v2163 = vld [vmem:[#allocation3 + $0x1a0] sm:$0xfc]
    %v2164 = vld [vmem:[#allocation3 + $0x1a8] sm:$0xfc]
    %v2165 = vld [vmem:[#allocation3 + $0x1b0] sm:$0x3]
    %v2166 = vld [vmem:[#allocation3 + $0x1b8] sm:$0x3]
    %v2167 = vld [vmem:[#allocation3 + $0x1c0] sm:$0xfc]
    %v2168 = vld [vmem:[#allocation3 + $0x1c8] sm:$0xfc]
    %v2169 = vld [vmem:[#allocation3 + $0x1d0] sm:$0x3]
    %v2170 = vld [vmem:[#allocation3 + $0x1d8] sm:$0x3]
    %v2171 = vld [vmem:[#allocation3 + $0x1e0] sm:$0xfc]
    %v2172 = vld [vmem:[#allocation3 + $0x1e8] sm:$0xfc]
    %v2173 = vld [vmem:[#allocation3 + $0x1f0] sm:$0x3]
    %v2174 = vld [vmem:[#allocation3 + $0x1f8] sm:$0x3]
    %v2175 = vld [vmem:[#allocation3 + $0x200] sm:$0xfc]
    %v2176 = vld [vmem:[#allocation3 + $0x208] sm:$0xfc]
    %v2177 = vld [vmem:[#allocation3 + $0x210] sm:$0x3]
    %v2178 = vld [vmem:[#allocation3 + $0x218] sm:$0x3]
    %v2179 = vld [vmem:[#allocation3 + $0x220] sm:$0xfc]
    %v2180 = vld [vmem:[#allocation3 + $0x228] sm:$0xfc]
    %v2181 = vld [vmem:[#allocation3 + $0x230] sm:$0x3]
    %v2182 = vld [vmem:[#allocation3 + $0x238] sm:$0x3]
    %v2183 = vlaneseq
    %v2184 = vshrl.u32 %v2183, 7
    %v2185 = vsub.s32 2, %v2184
    %v2186 = vrot.slane %v1638, %v2185
    %v2187 = vlaneseq
    %v2188 = vshrl.u32 %v2187, 7
    %v2189 = vsub.s32 2, %v2188
    %v2190 = vrot.slane %v1639, %v2189
    %v2191 = vmul.f32 %v2119, %v2186
    %v2192 = vmul.f32 %v2120, %v2190
    %v2193 = vmul.f32 %v2121, %v2186
    %v2194 = vmul.f32 %v2122, %v2190
    %v2195 = vmul.f32 %v2123, %v2186
    %v2196 = vmul.f32 %v2124, %v2190
    %v2197 = vmul.f32 %v2125, %v2186
    %v2198 = vmul.f32 %v2126, %v2190
    %v2199 = vmul.f32 %v2127, %v2186
    %v2200 = vmul.f32 %v2128, %v2190
    %v2201 = vmul.f32 %v2129, %v2186
    %v2202 = vmul.f32 %v2130, %v2190
    %v2203 = vmul.f32 %v2131, %v2186
    %v2204 = vmul.f32 %v2132, %v2190
    %v2205 = vmul.f32 %v2133, %v2186
    %v2206 = vmul.f32 %v2134, %v2190
    %v2207 = vmul.f32 %v2135, %v2186
    %v2208 = vmul.f32 %v2136, %v2190
    %v2209 = vmul.f32 %v2137, %v2186
    %v2210 = vmul.f32 %v2138, %v2190
    %v2211 = vmul.f32 %v2139, %v2186
    %v2212 = vmul.f32 %v2140, %v2190
    %v2213 = vmul.f32 %v2141, %v2186
    %v2214 = vmul.f32 %v2142, %v2190
    %v2215 = vmul.f32 %v2143, %v2186
    %v2216 = vmul.f32 %v2144, %v2190
    %v2217 = vmul.f32 %v2145, %v2186
    %v2218 = vmul.f32 %v2146, %v2190
    %v2219 = vmul.f32 %v2147, %v2186
    %v2220 = vmul.f32 %v2148, %v2190
    %v2221 = vmul.f32 %v2149, %v2186
    %v2222 = vmul.f32 %v2150, %v2190
    %v2223 = vmul.f32 %v2151, %v2186
    %v2224 = vmul.f32 %v2152, %v2190
    %v2225 = vmul.f32 %v2153, %v2186
    %v2226 = vmul.f32 %v2154, %v2190
    %v2227 = vmul.f32 %v2155, %v2186
    %v2228 = vmul.f32 %v2156, %v2190
    %v2229 = vmul.f32 %v2157, %v2186
    %v2230 = vmul.f32 %v2158, %v2190
    %v2231 = vmul.f32 %v2159, %v2186
    %v2232 = vmul.f32 %v2160, %v2190
    %v2233 = vmul.f32 %v2161, %v2186
    %v2234 = vmul.f32 %v2162, %v2190
    %v2235 = vmul.f32 %v2163, %v2186
    %v2236 = vmul.f32 %v2164, %v2190
    %v2237 = vmul.f32 %v2165, %v2186
    %v2238 = vmul.f32 %v2166, %v2190
    %v2239 = vmul.f32 %v2167, %v2186
    %v2240 = vmul.f32 %v2168, %v2190
    %v2241 = vmul.f32 %v2169, %v2186
    %v2242 = vmul.f32 %v2170, %v2190
    %v2243 = vmul.f32 %v2171, %v2186
    %v2244 = vmul.f32 %v2172, %v2190
    %v2245 = vmul.f32 %v2173, %v2186
    %v2246 = vmul.f32 %v2174, %v2190
    %v2247 = vmul.f32 %v2175, %v2186
    %v2248 = vmul.f32 %v2176, %v2190
    %v2249 = vmul.f32 %v2177, %v2186
    %v2250 = vmul.f32 %v2178, %v2190
    %v2251 = vmul.f32 %v2179, %v2186
    %v2252 = vmul.f32 %v2180, %v2190
    %v2253 = vmul.f32 %v2181, %v2186
    %v2254 = vmul.f32 %v2182, %v2190
    %vm2319 = vcmask 1045504
    %v2320 = vrot.slane %v2191, 2
    %v2321 = vrot.slane %v2193, 2
    %v2322 = vsel %vm2319, %v2320, %v2321
    %v2323 = vrot.slane %v2192, 2
    %v2324 = vrot.slane %v2194, 2
    %v2325 = vsel %vm2319, %v2323, %v2324
    %v2326 = vrot.slane %v2195, 2
    %v2327 = vrot.slane %v2197, 2
    %v2328 = vsel %vm2319, %v2326, %v2327
    %v2329 = vrot.slane %v2196, 2
    %v2330 = vrot.slane %v2198, 2
    %v2331 = vsel %vm2319, %v2329, %v2330
    %v2332 = vrot.slane %v2199, 2
    %v2333 = vrot.slane %v2201, 2
    %v2334 = vsel %vm2319, %v2332, %v2333
    %v2335 = vrot.slane %v2200, 2
    %v2336 = vrot.slane %v2202, 2
    %v2337 = vsel %vm2319, %v2335, %v2336
    %v2338 = vrot.slane %v2203, 2
    %v2339 = vrot.slane %v2205, 2
    %v2340 = vsel %vm2319, %v2338, %v2339
    %v2341 = vrot.slane %v2204, 2
    %v2342 = vrot.slane %v2206, 2
    %v2343 = vsel %vm2319, %v2341, %v2342
    %v2344 = vrot.slane %v2207, 2
    %v2345 = vrot.slane %v2209, 2
    %v2346 = vsel %vm2319, %v2344, %v2345
    %v2347 = vrot.slane %v2208, 2
    %v2348 = vrot.slane %v2210, 2
    %v2349 = vsel %vm2319, %v2347, %v2348
    %v2350 = vrot.slane %v2211, 2
    %v2351 = vrot.slane %v2213, 2
    %v2352 = vsel %vm2319, %v2350, %v2351
    %v2353 = vrot.slane %v2212, 2
    %v2354 = vrot.slane %v2214, 2
    %v2355 = vsel %vm2319, %v2353, %v2354
    %v2356 = vrot.slane %v2215, 2
    %v2357 = vrot.slane %v2217, 2
    %v2358 = vsel %vm2319, %v2356, %v2357
    %v2359 = vrot.slane %v2216, 2
    %v2360 = vrot.slane %v2218, 2
    %v2361 = vsel %vm2319, %v2359, %v2360
    %v2362 = vrot.slane %v2219, 2
    %v2363 = vrot.slane %v2221, 2
    %v2364 = vsel %vm2319, %v2362, %v2363
    %v2365 = vrot.slane %v2220, 2
    %v2366 = vrot.slane %v2222, 2
    %v2367 = vsel %vm2319, %v2365, %v2366
    %v2368 = vrot.slane %v2223, 2
    %v2369 = vrot.slane %v2225, 2
    %v2370 = vsel %vm2319, %v2368, %v2369
    %v2371 = vrot.slane %v2224, 2
    %v2372 = vrot.slane %v2226, 2
    %v2373 = vsel %vm2319, %v2371, %v2372
    %v2374 = vrot.slane %v2227, 2
    %v2375 = vrot.slane %v2229, 2
    %v2376 = vsel %vm2319, %v2374, %v2375
    %v2377 = vrot.slane %v2228, 2
    %v2378 = vrot.slane %v2230, 2
    %v2379 = vsel %vm2319, %v2377, %v2378
    %v2380 = vrot.slane %v2231, 2
    %v2381 = vrot.slane %v2233, 2
    %v2382 = vsel %vm2319, %v2380, %v2381
    %v2383 = vrot.slane %v2232, 2
    %v2384 = vrot.slane %v2234, 2
    %v2385 = vsel %vm2319, %v2383, %v2384
    %v2386 = vrot.slane %v2235, 2
    %v2387 = vrot.slane %v2237, 2
    %v2388 = vsel %vm2319, %v2386, %v2387
    %v2389 = vrot.slane %v2236, 2
    %v2390 = vrot.slane %v2238, 2
    %v2391 = vsel %vm2319, %v2389, %v2390
    %v2392 = vrot.slane %v2239, 2
    %v2393 = vrot.slane %v2241, 2
    %v2394 = vsel %vm2319, %v2392, %v2393
    %v2395 = vrot.slane %v2240, 2
    %v2396 = vrot.slane %v2242, 2
    %v2397 = vsel %vm2319, %v2395, %v2396
    %v2398 = vrot.slane %v2243, 2
    %v2399 = vrot.slane %v2245, 2
    %v2400 = vsel %vm2319, %v2398, %v2399
    %v2401 = vrot.slane %v2244, 2
    %v2402 = vrot.slane %v2246, 2
    %v2403 = vsel %vm2319, %v2401, %v2402
    %v2404 = vrot.slane %v2247, 2
    %v2405 = vrot.slane %v2249, 2
    %v2406 = vsel %vm2319, %v2404, %v2405
    %v2407 = vrot.slane %v2248, 2
    %v2408 = vrot.slane %v2250, 2
    %v2409 = vsel %vm2319, %v2407, %v2408
    %v2410 = vrot.slane %v2251, 2
    %v2411 = vrot.slane %v2253, 2
    %v2412 = vsel %vm2319, %v2410, %v2411
    %v2413 = vrot.slane %v2252, 2
    %v2414 = vrot.slane %v2254, 2
    %v2415 = vsel %vm2319, %v2413, %v2414
    %v2448 = vadd.f32 %v2087, %v2322
    %v2449 = vadd.f32 %v2088, %v2325
    %v2450 = vadd.f32 %v2089, %v2328
    %v2451 = vadd.f32 %v2090, %v2331
    %v2452 = vadd.f32 %v2091, %v2334
    %v2453 = vadd.f32 %v2092, %v2337
    %v2454 = vadd.f32 %v2093, %v2340
    %v2455 = vadd.f32 %v2094, %v2343
    %v2456 = vadd.f32 %v2095, %v2346
    %v2457 = vadd.f32 %v2096, %v2349
    %v2458 = vadd.f32 %v2097, %v2352
    %v2459 = vadd.f32 %v2098, %v2355
    %v2460 = vadd.f32 %v2099, %v2358
    %v2461 = vadd.f32 %v2100, %v2361
    %v2462 = vadd.f32 %v2101, %v2364
    %v2463 = vadd.f32 %v2102, %v2367
    %v2464 = vadd.f32 %v2103, %v2370
    %v2465 = vadd.f32 %v2104, %v2373
    %v2466 = vadd.f32 %v2105, %v2376
    %v2467 = vadd.f32 %v2106, %v2379
    %v2468 = vadd.f32 %v2107, %v2382
    %v2469 = vadd.f32 %v2108, %v2385
    %v2470 = vadd.f32 %v2109, %v2388
    %v2471 = vadd.f32 %v2110, %v2391
    %v2472 = vadd.f32 %v2111, %v2394
    %v2473 = vadd.f32 %v2112, %v2397
    %v2474 = vadd.f32 %v2113, %v2400
    %v2475 = vadd.f32 %v2114, %v2403
    %v2476 = vadd.f32 %v2115, %v2406
    %v2477 = vadd.f32 %v2116, %v2409
    %v2478 = vadd.f32 %v2117, %v2412
    %v2479 = vadd.f32 %v2118, %v2415
    %v2480 = vld [vmem:[%s1378] sm:$0xff]
    %v2481 = vld [vmem:[%s1378 + $0x8] sm:$0xff]
    %v2482 = vld [vmem:[%s1378 + $0x20] sm:$0xff]
    %v2483 = vld [vmem:[%s1378 + $0x28] sm:$0xff]
    %v2484 = vld [vmem:[%s1378 + $0x40] sm:$0xff]
    %v2485 = vld [vmem:[%s1378 + $0x48] sm:$0xff]
    %v2486 = vld [vmem:[%s1378 + $0x60] sm:$0xff]
    %v2487 = vld [vmem:[%s1378 + $0x68] sm:$0xff]
    %v2488 = vld [vmem:[%s1378 + $0x80] sm:$0xff]
    %v2489 = vld [vmem:[%s1378 + $0x88] sm:$0xff]
    %v2490 = vld [vmem:[%s1378 + $0xa0] sm:$0xff]
    %v2491 = vld [vmem:[%s1378 + $0xa8] sm:$0xff]
    %v2492 = vld [vmem:[%s1378 + $0xc0] sm:$0xff]
    %v2493 = vld [vmem:[%s1378 + $0xc8] sm:$0xff]
    %v2494 = vld [vmem:[%s1378 + $0xe0] sm:$0xff]
    %v2495 = vld [vmem:[%s1378 + $0xe8] sm:$0xff]
    %v2496 = vld [vmem:[%s1378 + $0x140] sm:$0xff]
    %v2497 = vld [vmem:[%s1378 + $0x148] sm:$0xff]
    %v2498 = vld [vmem:[%s1378 + $0x160] sm:$0xff]
    %v2499 = vld [vmem:[%s1378 + $0x168] sm:$0xff]
    %v2500 = vld [vmem:[%s1378 + $0x180] sm:$0xff]
    %v2501 = vld [vmem:[%s1378 + $0x188] sm:$0xff]
    %v2502 = vld [vmem:[%s1378 + $0x1a0] sm:$0xff]
    %v2503 = vld [vmem:[%s1378 + $0x1a8] sm:$0xff]
    %v2504 = vld [vmem:[%s1378 + $0x1c0] sm:$0xff]
    %v2505 = vld [vmem:[%s1378 + $0x1c8] sm:$0xff]
    %v2506 = vld [vmem:[%s1378 + $0x1e0] sm:$0xff]
    %v2507 = vld [vmem:[%s1378 + $0x1e8] sm:$0xff]
    %v2508 = vld [vmem:[%s1378 + $0x200] sm:$0xff]
    %v2509 = vld [vmem:[%s1378 + $0x208] sm:$0xff]
    %v2510 = vld [vmem:[%s1378 + $0x220] sm:$0xff]
    %v2511 = vld [vmem:[%s1378 + $0x228] sm:$0xff]
    %v2512 = vlaneseq
    %v2513 = vshrl.u32 %v2512, 7
    %v2514 = vsub.s32 3, %v2513
    %v2515 = vrot.slane %v1638, %v2514
    %v2516 = vlaneseq
    %v2517 = vshrl.u32 %v2516, 7
    %v2518 = vsub.s32 3, %v2517
    %v2519 = vrot.slane %v1639, %v2518
    %v2520 = vmul.f32 %v2480, %v2515
    %v2521 = vmul.f32 %v2481, %v2519
    %v2522 = vmul.f32 %v2482, %v2515
    %v2523 = vmul.f32 %v2483, %v2519
    %v2524 = vmul.f32 %v2484, %v2515
    %v2525 = vmul.f32 %v2485, %v2519
    %v2526 = vmul.f32 %v2486, %v2515
    %v2527 = vmul.f32 %v2487, %v2519
    %v2528 = vmul.f32 %v2488, %v2515
    %v2529 = vmul.f32 %v2489, %v2519
    %v2530 = vmul.f32 %v2490, %v2515
    %v2531 = vmul.f32 %v2491, %v2519
    %v2532 = vmul.f32 %v2492, %v2515
    %v2533 = vmul.f32 %v2493, %v2519
    %v2534 = vmul.f32 %v2494, %v2515
    %v2535 = vmul.f32 %v2495, %v2519
    %v2536 = vmul.f32 %v2496, %v2515
    %v2537 = vmul.f32 %v2497, %v2519
    %v2538 = vmul.f32 %v2498, %v2515
    %v2539 = vmul.f32 %v2499, %v2519
    %v2540 = vmul.f32 %v2500, %v2515
    %v2541 = vmul.f32 %v2501, %v2519
    %v2542 = vmul.f32 %v2502, %v2515
    %v2543 = vmul.f32 %v2503, %v2519
    %v2544 = vmul.f32 %v2504, %v2515
    %v2545 = vmul.f32 %v2505, %v2519
    %v2546 = vmul.f32 %v2506, %v2515
    %v2547 = vmul.f32 %v2507, %v2519
    %v2548 = vmul.f32 %v2508, %v2515
    %v2549 = vmul.f32 %v2509, %v2519
    %v2550 = vmul.f32 %v2510, %v2515
    %v2551 = vmul.f32 %v2511, %v2519
    %v2552 = vadd.f32 %v2448, %v2520
    %v2553 = vadd.f32 %v2449, %v2521
    %v2554 = vadd.f32 %v2450, %v2522
    %v2555 = vadd.f32 %v2451, %v2523
    %v2556 = vadd.f32 %v2452, %v2524
    %v2557 = vadd.f32 %v2453, %v2525
    %v2558 = vadd.f32 %v2454, %v2526
    %v2559 = vadd.f32 %v2455, %v2527
    %v2560 = vadd.f32 %v2456, %v2528
    %v2561 = vadd.f32 %v2457, %v2529
    %v2562 = vadd.f32 %v2458, %v2530
    %v2563 = vadd.f32 %v2459, %v2531
    %v2564 = vadd.f32 %v2460, %v2532
    %v2565 = vadd.f32 %v2461, %v2533
    %v2566 = vadd.f32 %v2462, %v2534
    %v2567 = vadd.f32 %v2463, %v2535
    %v2568 = vadd.f32 %v2464, %v2536
    %v2569 = vadd.f32 %v2465, %v2537
    %v2570 = vadd.f32 %v2466, %v2538
    %v2571 = vadd.f32 %v2467, %v2539
    %v2572 = vadd.f32 %v2468, %v2540
    %v2573 = vadd.f32 %v2469, %v2541
    %v2574 = vadd.f32 %v2470, %v2542
    %v2575 = vadd.f32 %v2471, %v2543
    %v2576 = vadd.f32 %v2472, %v2544
    %v2577 = vadd.f32 %v2473, %v2545
    %v2578 = vadd.f32 %v2474, %v2546
    %v2579 = vadd.f32 %v2475, %v2547
    %v2580 = vadd.f32 %v2476, %v2548
    %v2581 = vadd.f32 %v2477, %v2549
    %v2582 = vadd.f32 %v2478, %v2550
    %v2583 = vadd.f32 %v2479, %v2551
    %v2584 = vld [vmem:[%s1378] sm:$0xfe]
    %v2585 = vld [vmem:[%s1378 + $0x8] sm:$0xfe]
    %v2586 = vld [vmem:[%s1378 + $0x10] sm:$0x1]
    %v2587 = vld [vmem:[%s1378 + $0x18] sm:$0x1]
    %v2588 = vld [vmem:[%s1378 + $0x20] sm:$0xfe]
    %v2589 = vld [vmem:[%s1378 + $0x28] sm:$0xfe]
    %v2590 = vld [vmem:[%s1378 + $0x30] sm:$0x1]
    %v2591 = vld [vmem:[%s1378 + $0x38] sm:$0x1]
    %v2592 = vld [vmem:[%s1378 + $0x40] sm:$0xfe]
    %v2593 = vld [vmem:[%s1378 + $0x48] sm:$0xfe]
    %v2594 = vld [vmem:[%s1378 + $0x50] sm:$0x1]
    %v2595 = vld [vmem:[%s1378 + $0x58] sm:$0x1]
    %v2596 = vld [vmem:[%s1378 + $0x60] sm:$0xfe]
    %v2597 = vld [vmem:[%s1378 + $0x68] sm:$0xfe]
    %v2598 = vld [vmem:[%s1378 + $0x70] sm:$0x1]
    %v2599 = vld [vmem:[%s1378 + $0x78] sm:$0x1]
    %v2600 = vld [vmem:[%s1378 + $0x80] sm:$0xfe]
    %v2601 = vld [vmem:[%s1378 + $0x88] sm:$0xfe]
    %v2602 = vld [vmem:[%s1378 + $0x90] sm:$0x1]
    %v2603 = vld [vmem:[%s1378 + $0x98] sm:$0x1]
    %v2604 = vld [vmem:[%s1378 + $0xa0] sm:$0xfe]
    %v2605 = vld [vmem:[%s1378 + $0xa8] sm:$0xfe]
    %v2606 = vld [vmem:[%s1378 + $0xb0] sm:$0x1]
    %v2607 = vld [vmem:[%s1378 + $0xb8] sm:$0x1]
    %v2608 = vld [vmem:[%s1378 + $0xc0] sm:$0xfe]
    %v2609 = vld [vmem:[%s1378 + $0xc8] sm:$0xfe]
    %v2610 = vld [vmem:[%s1378 + $0xd0] sm:$0x1]
    %v2611 = vld [vmem:[%s1378 + $0xd8] sm:$0x1]
    %v2612 = vld [vmem:[%s1378 + $0xe0] sm:$0xfe]
    %v2613 = vld [vmem:[%s1378 + $0xe8] sm:$0xfe]
    %v2614 = vld [vmem:[%s1378 + $0xf0] sm:$0x1]
    %v2615 = vld [vmem:[%s1378 + $0xf8] sm:$0x1]
    %v2616 = vld [vmem:[%s1378 + $0x140] sm:$0xfe]
    %v2617 = vld [vmem:[%s1378 + $0x148] sm:$0xfe]
    %v2618 = vld [vmem:[%s1378 + $0x150] sm:$0x1]
    %v2619 = vld [vmem:[%s1378 + $0x158] sm:$0x1]
    %v2620 = vld [vmem:[%s1378 + $0x160] sm:$0xfe]
    %v2621 = vld [vmem:[%s1378 + $0x168] sm:$0xfe]
    %v2622 = vld [vmem:[%s1378 + $0x170] sm:$0x1]
    %v2623 = vld [vmem:[%s1378 + $0x178] sm:$0x1]
    %v2624 = vld [vmem:[%s1378 + $0x180] sm:$0xfe]
    %v2625 = vld [vmem:[%s1378 + $0x188] sm:$0xfe]
    %v2626 = vld [vmem:[%s1378 + $0x190] sm:$0x1]
    %v2627 = vld [vmem:[%s1378 + $0x198] sm:$0x1]
    %v2628 = vld [vmem:[%s1378 + $0x1a0] sm:$0xfe]
    %v2629 = vld [vmem:[%s1378 + $0x1a8] sm:$0xfe]
    %v2630 = vld [vmem:[%s1378 + $0x1b0] sm:$0x1]
    %v2631 = vld [vmem:[%s1378 + $0x1b8] sm:$0x1]
    %v2632 = vld [vmem:[%s1378 + $0x1c0] sm:$0xfe]
    %v2633 = vld [vmem:[%s1378 + $0x1c8] sm:$0xfe]
    %v2634 = vld [vmem:[%s1378 + $0x1d0] sm:$0x1]
    %v2635 = vld [vmem:[%s1378 + $0x1d8] sm:$0x1]
    %v2636 = vld [vmem:[%s1378 + $0x1e0] sm:$0xfe]
    %v2637 = vld [vmem:[%s1378 + $0x1e8] sm:$0xfe]
    %v2638 = vld [vmem:[%s1378 + $0x1f0] sm:$0x1]
    %v2639 = vld [vmem:[%s1378 + $0x1f8] sm:$0x1]
    %v2640 = vld [vmem:[%s1378 + $0x200] sm:$0xfe]
    %v2641 = vld [vmem:[%s1378 + $0x208] sm:$0xfe]
    %v2642 = vld [vmem:[%s1378 + $0x210] sm:$0x1]
    %v2643 = vld [vmem:[%s1378 + $0x218] sm:$0x1]
    %v2644 = vld [vmem:[%s1378 + $0x220] sm:$0xfe]
    %v2645 = vld [vmem:[%s1378 + $0x228] sm:$0xfe]
    %v2646 = vld [vmem:[%s1378 + $0x230] sm:$0x1]
    %v2647 = vld [vmem:[%s1378 + $0x238] sm:$0x1]
    %v2648 = vlaneseq
    %v2649 = vshrl.u32 %v2648, 7
    %v2650 = vsub.s32 4, %v2649
    %v2651 = vrot.slane %v1638, %v2650
    %v2652 = vlaneseq
    %v2653 = vshrl.u32 %v2652, 7
    %v2654 = vsub.s32 4, %v2653
    %v2655 = vrot.slane %v1639, %v2654
    %v2656 = vmul.f32 %v2584, %v2651
    %v2657 = vmul.f32 %v2585, %v2655
    %v2658 = vmul.f32 %v2586, %v2651
    %v2659 = vmul.f32 %v2587, %v2655
    %v2660 = vmul.f32 %v2588, %v2651
    %v2661 = vmul.f32 %v2589, %v2655
    %v2662 = vmul.f32 %v2590, %v2651
    %v2663 = vmul.f32 %v2591, %v2655
    %v2664 = vmul.f32 %v2592, %v2651
    %v2665 = vmul.f32 %v2593, %v2655
    %v2666 = vmul.f32 %v2594, %v2651
    %v2667 = vmul.f32 %v2595, %v2655
    %v2668 = vmul.f32 %v2596, %v2651
    %v2669 = vmul.f32 %v2597, %v2655
    %v2670 = vmul.f32 %v2598, %v2651
    %v2671 = vmul.f32 %v2599, %v2655
    %v2672 = vmul.f32 %v2600, %v2651
    %v2673 = vmul.f32 %v2601, %v2655
    %v2674 = vmul.f32 %v2602, %v2651
    %v2675 = vmul.f32 %v2603, %v2655
    %v2676 = vmul.f32 %v2604, %v2651
    %v2677 = vmul.f32 %v2605, %v2655
    %v2678 = vmul.f32 %v2606, %v2651
    %v2679 = vmul.f32 %v2607, %v2655
    %v2680 = vmul.f32 %v2608, %v2651
    %v2681 = vmul.f32 %v2609, %v2655
    %v2682 = vmul.f32 %v2610, %v2651
    %v2683 = vmul.f32 %v2611, %v2655
    %v2684 = vmul.f32 %v2612, %v2651
    %v2685 = vmul.f32 %v2613, %v2655
    %v2686 = vmul.f32 %v2614, %v2651
    %v2687 = vmul.f32 %v2615, %v2655
    %v2688 = vmul.f32 %v2616, %v2651
    %v2689 = vmul.f32 %v2617, %v2655
    %v2690 = vmul.f32 %v2618, %v2651
    %v2691 = vmul.f32 %v2619, %v2655
    %v2692 = vmul.f32 %v2620, %v2651
    %v2693 = vmul.f32 %v2621, %v2655
    %v2694 = vmul.f32 %v2622, %v2651
    %v2695 = vmul.f32 %v2623, %v2655
    %v2696 = vmul.f32 %v2624, %v2651
    %v2697 = vmul.f32 %v2625, %v2655
    %v2698 = vmul.f32 %v2626, %v2651
    %v2699 = vmul.f32 %v2627, %v2655
    %v2700 = vmul.f32 %v2628, %v2651
    %v2701 = vmul.f32 %v2629, %v2655
    %v2702 = vmul.f32 %v2630, %v2651
    %v2703 = vmul.f32 %v2631, %v2655
    %v2704 = vmul.f32 %v2632, %v2651
    %v2705 = vmul.f32 %v2633, %v2655
    %v2706 = vmul.f32 %v2634, %v2651
    %v2707 = vmul.f32 %v2635, %v2655
    %v2708 = vmul.f32 %v2636, %v2651
    %v2709 = vmul.f32 %v2637, %v2655
    %v2710 = vmul.f32 %v2638, %v2651
    %v2711 = vmul.f32 %v2639, %v2655
    %v2712 = vmul.f32 %v2640, %v2651
    %v2713 = vmul.f32 %v2641, %v2655
    %v2714 = vmul.f32 %v2642, %v2651
    %v2715 = vmul.f32 %v2643, %v2655
    %v2716 = vmul.f32 %v2644, %v2651
    %v2717 = vmul.f32 %v2645, %v2655
    %v2718 = vmul.f32 %v2646, %v2651
    %v2719 = vmul.f32 %v2647, %v2655
    %v2784 = vrot.slane %v2656, 1
    %v2785 = vrot.slane %v2658, 1
    %v2786 = vsel %vm1958, %v2784, %v2785
    %v2787 = vrot.slane %v2657, 1
    %v2788 = vrot.slane %v2659, 1
    %v2789 = vsel %vm1958, %v2787, %v2788
    %v2790 = vrot.slane %v2660, 1
    %v2791 = vrot.slane %v2662, 1
    %v2792 = vsel %vm1958, %v2790, %v2791
    %v2793 = vrot.slane %v2661, 1
    %v2794 = vrot.slane %v2663, 1
    %v2795 = vsel %vm1958, %v2793, %v2794
    %v2796 = vrot.slane %v2664, 1
    %v2797 = vrot.slane %v2666, 1
    %v2798 = vsel %vm1958, %v2796, %v2797
    %v2799 = vrot.slane %v2665, 1
    %v2800 = vrot.slane %v2667, 1
    %v2801 = vsel %vm1958, %v2799, %v2800
    %v2802 = vrot.slane %v2668, 1
    %v2803 = vrot.slane %v2670, 1
    %v2804 = vsel %vm1958, %v2802, %v2803
    %v2805 = vrot.slane %v2669, 1
    %v2806 = vrot.slane %v2671, 1
    %v2807 = vsel %vm1958, %v2805, %v2806
    %v2808 = vrot.slane %v2672, 1
    %v2809 = vrot.slane %v2674, 1
    %v2810 = vsel %vm1958, %v2808, %v2809
    %v2811 = vrot.slane %v2673, 1
    %v2812 = vrot.slane %v2675, 1
    %v2813 = vsel %vm1958, %v2811, %v2812
    %v2814 = vrot.slane %v2676, 1
    %v2815 = vrot.slane %v2678, 1
    %v2816 = vsel %vm1958, %v2814, %v2815
    %v2817 = vrot.slane %v2677, 1
    %v2818 = vrot.slane %v2679, 1
    %v2819 = vsel %vm1958, %v2817, %v2818
    %v2820 = vrot.slane %v2680, 1
    %v2821 = vrot.slane %v2682, 1
    %v2822 = vsel %vm1958, %v2820, %v2821
    %v2823 = vrot.slane %v2681, 1
    %v2824 = vrot.slane %v2683, 1
    %v2825 = vsel %vm1958, %v2823, %v2824
    %v2826 = vrot.slane %v2684, 1
    %v2827 = vrot.slane %v2686, 1
    %v2828 = vsel %vm1958, %v2826, %v2827
    %v2829 = vrot.slane %v2685, 1
    %v2830 = vrot.slane %v2687, 1
    %v2831 = vsel %vm1958, %v2829, %v2830
    %v2832 = vrot.slane %v2688, 1
    %v2833 = vrot.slane %v2690, 1
    %v2834 = vsel %vm1958, %v2832, %v2833
    %v2835 = vrot.slane %v2689, 1
    %v2836 = vrot.slane %v2691, 1
    %v2837 = vsel %vm1958, %v2835, %v2836
    %v2838 = vrot.slane %v2692, 1
    %v2839 = vrot.slane %v2694, 1
    %v2840 = vsel %vm1958, %v2838, %v2839
    %v2841 = vrot.slane %v2693, 1
    %v2842 = vrot.slane %v2695, 1
    %v2843 = vsel %vm1958, %v2841, %v2842
    %v2844 = vrot.slane %v2696, 1
    %v2845 = vrot.slane %v2698, 1
    %v2846 = vsel %vm1958, %v2844, %v2845
    %v2847 = vrot.slane %v2697, 1
    %v2848 = vrot.slane %v2699, 1
    %v2849 = vsel %vm1958, %v2847, %v2848
    %v2850 = vrot.slane %v2700, 1
    %v2851 = vrot.slane %v2702, 1
    %v2852 = vsel %vm1958, %v2850, %v2851
    %v2853 = vrot.slane %v2701, 1
    %v2854 = vrot.slane %v2703, 1
    %v2855 = vsel %vm1958, %v2853, %v2854
    %v2856 = vrot.slane %v2704, 1
    %v2857 = vrot.slane %v2706, 1
    %v2858 = vsel %vm1958, %v2856, %v2857
    %v2859 = vrot.slane %v2705, 1
    %v2860 = vrot.slane %v2707, 1
    %v2861 = vsel %vm1958, %v2859, %v2860
    %v2862 = vrot.slane %v2708, 1
    %v2863 = vrot.slane %v2710, 1
    %v2864 = vsel %vm1958, %v2862, %v2863
    %v2865 = vrot.slane %v2709, 1
    %v2866 = vrot.slane %v2711, 1
    %v2867 = vsel %vm1958, %v2865, %v2866
    %v2868 = vrot.slane %v2712, 1
    %v2869 = vrot.slane %v2714, 1
    %v2870 = vsel %vm1958, %v2868, %v2869
    %v2871 = vrot.slane %v2713, 1
    %v2872 = vrot.slane %v2715, 1
    %v2873 = vsel %vm1958, %v2871, %v2872
    %v2874 = vrot.slane %v2716, 1
    %v2875 = vrot.slane %v2718, 1
    %v2876 = vsel %vm1958, %v2874, %v2875
    %v2877 = vrot.slane %v2717, 1
    %v2878 = vrot.slane %v2719, 1
    %v2879 = vsel %vm1958, %v2877, %v2878
    %v2912 = vadd.f32 %v2552, %v2786
    %v2913 = vadd.f32 %v2553, %v2789
    %v2914 = vadd.f32 %v2554, %v2792
    %v2915 = vadd.f32 %v2555, %v2795
    %v2916 = vadd.f32 %v2556, %v2798
    %v2917 = vadd.f32 %v2557, %v2801
    %v2918 = vadd.f32 %v2558, %v2804
    %v2919 = vadd.f32 %v2559, %v2807
    %v2920 = vadd.f32 %v2560, %v2810
    %v2921 = vadd.f32 %v2561, %v2813
    %v2922 = vadd.f32 %v2562, %v2816
    %v2923 = vadd.f32 %v2563, %v2819
    %v2924 = vadd.f32 %v2564, %v2822
    %v2925 = vadd.f32 %v2565, %v2825
    %v2926 = vadd.f32 %v2566, %v2828
    %v2927 = vadd.f32 %v2567, %v2831
    %v2928 = vadd.f32 %v2568, %v2834
    %v2929 = vadd.f32 %v2569, %v2837
    %v2930 = vadd.f32 %v2570, %v2840
    %v2931 = vadd.f32 %v2571, %v2843
    %v2932 = vadd.f32 %v2572, %v2846
    %v2933 = vadd.f32 %v2573, %v2849
    %v2934 = vadd.f32 %v2574, %v2852
    %v2935 = vadd.f32 %v2575, %v2855
    %v2936 = vadd.f32 %v2576, %v2858
    %v2937 = vadd.f32 %v2577, %v2861
    %v2938 = vadd.f32 %v2578, %v2864
    %v2939 = vadd.f32 %v2579, %v2867
    %v2940 = vadd.f32 %v2580, %v2870
    %v2941 = vadd.f32 %v2581, %v2873
    %v2942 = vadd.f32 %v2582, %v2876
    %v2943 = vadd.f32 %v2583, %v2879
    %v2944 = vld [vmem:[%s1378] sm:$0xfc]
    %v2945 = vld [vmem:[%s1378 + $0x8] sm:$0xfc]
    %v2946 = vld [vmem:[%s1378 + $0x10] sm:$0x3]
    %v2947 = vld [vmem:[%s1378 + $0x18] sm:$0x3]
    %v2948 = vld [vmem:[%s1378 + $0x20] sm:$0xfc]
    %v2949 = vld [vmem:[%s1378 + $0x28] sm:$0xfc]
    %v2950 = vld [vmem:[%s1378 + $0x30] sm:$0x3]
    %v2951 = vld [vmem:[%s1378 + $0x38] sm:$0x3]
    %v2952 = vld [vmem:[%s1378 + $0x40] sm:$0xfc]
    %v2953 = vld [vmem:[%s1378 + $0x48] sm:$0xfc]
    %v2954 = vld [vmem:[%s1378 + $0x50] sm:$0x3]
    %v2955 = vld [vmem:[%s1378 + $0x58] sm:$0x3]
    %v2956 = vld [vmem:[%s1378 + $0x60] sm:$0xfc]
    %v2957 = vld [vmem:[%s1378 + $0x68] sm:$0xfc]
    %v2958 = vld [vmem:[%s1378 + $0x70] sm:$0x3]
    %v2959 = vld [vmem:[%s1378 + $0x78] sm:$0x3]
    %v2960 = vld [vmem:[%s1378 + $0x80] sm:$0xfc]
    %v2961 = vld [vmem:[%s1378 + $0x88] sm:$0xfc]
    %v2962 = vld [vmem:[%s1378 + $0x90] sm:$0x3]
    %v2963 = vld [vmem:[%s1378 + $0x98] sm:$0x3]
    %v2964 = vld [vmem:[%s1378 + $0xa0] sm:$0xfc]
    %v2965 = vld [vmem:[%s1378 + $0xa8] sm:$0xfc]
    %v2966 = vld [vmem:[%s1378 + $0xb0] sm:$0x3]
    %v2967 = vld [vmem:[%s1378 + $0xb8] sm:$0x3]
    %v2968 = vld [vmem:[%s1378 + $0xc0] sm:$0xfc]
    %v2969 = vld [vmem:[%s1378 + $0xc8] sm:$0xfc]
    %v2970 = vld [vmem:[%s1378 + $0xd0] sm:$0x3]
    %v2971 = vld [vmem:[%s1378 + $0xd8] sm:$0x3]
    %v2972 = vld [vmem:[%s1378 + $0xe0] sm:$0xfc]
    %v2973 = vld [vmem:[%s1378 + $0xe8] sm:$0xfc]
    %v2974 = vld [vmem:[%s1378 + $0xf0] sm:$0x3]
    %v2975 = vld [vmem:[%s1378 + $0xf8] sm:$0x3]
    %v2976 = vld [vmem:[%s1378 + $0x140] sm:$0xfc]
    %v2977 = vld [vmem:[%s1378 + $0x148] sm:$0xfc]
    %v2978 = vld [vmem:[%s1378 + $0x150] sm:$0x3]
    %v2979 = vld [vmem:[%s1378 + $0x158] sm:$0x3]
    %v2980 = vld [vmem:[%s1378 + $0x160] sm:$0xfc]
    %v2981 = vld [vmem:[%s1378 + $0x168] sm:$0xfc]
    %v2982 = vld [vmem:[%s1378 + $0x170] sm:$0x3]
    %v2983 = vld [vmem:[%s1378 + $0x178] sm:$0x3]
    %v2984 = vld [vmem:[%s1378 + $0x180] sm:$0xfc]
    %v2985 = vld [vmem:[%s1378 + $0x188] sm:$0xfc]
    %v2986 = vld [vmem:[%s1378 + $0x190] sm:$0x3]
    %v2987 = vld [vmem:[%s1378 + $0x198] sm:$0x3]
    %v2988 = vld [vmem:[%s1378 + $0x1a0] sm:$0xfc]
    %v2989 = vld [vmem:[%s1378 + $0x1a8] sm:$0xfc]
    %v2990 = vld [vmem:[%s1378 + $0x1b0] sm:$0x3]
    %v2991 = vld [vmem:[%s1378 + $0x1b8] sm:$0x3]
    %v2992 = vld [vmem:[%s1378 + $0x1c0] sm:$0xfc]
    %v2993 = vld [vmem:[%s1378 + $0x1c8] sm:$0xfc]
    %v2994 = vld [vmem:[%s1378 + $0x1d0] sm:$0x3]
    %v2995 = vld [vmem:[%s1378 + $0x1d8] sm:$0x3]
    %v2996 = vld [vmem:[%s1378 + $0x1e0] sm:$0xfc]
    %v2997 = vld [vmem:[%s1378 + $0x1e8] sm:$0xfc]
    %v2998 = vld [vmem:[%s1378 + $0x1f0] sm:$0x3]
    %v2999 = vld [vmem:[%s1378 + $0x1f8] sm:$0x3]
    %v3000 = vld [vmem:[%s1378 + $0x200] sm:$0xfc]
    %v3001 = vld [vmem:[%s1378 + $0x208] sm:$0xfc]
    %v3002 = vld [vmem:[%s1378 + $0x210] sm:$0x3]
    %v3003 = vld [vmem:[%s1378 + $0x218] sm:$0x3]
    %v3004 = vld [vmem:[%s1378 + $0x220] sm:$0xfc]
    %v3005 = vld [vmem:[%s1378 + $0x228] sm:$0xfc]
    %v3006 = vld [vmem:[%s1378 + $0x230] sm:$0x3]
    %v3007 = vld [vmem:[%s1378 + $0x238] sm:$0x3]
    %v3008 = vlaneseq
    %v3009 = vshrl.u32 %v3008, 7
    %v3010 = vsub.s32 5, %v3009
    %v3011 = vrot.slane %v1638, %v3010
    %v3012 = vlaneseq
    %v3013 = vshrl.u32 %v3012, 7
    %v3014 = vsub.s32 5, %v3013
    %v3015 = vrot.slane %v1639, %v3014
    %v3016 = vmul.f32 %v2944, %v3011
    %v3017 = vmul.f32 %v2945, %v3015
    %v3018 = vmul.f32 %v2946, %v3011
    %v3019 = vmul.f32 %v2947, %v3015
    %v3020 = vmul.f32 %v2948, %v3011
    %v3021 = vmul.f32 %v2949, %v3015
    %v3022 = vmul.f32 %v2950, %v3011
    %v3023 = vmul.f32 %v2951, %v3015
    %v3024 = vmul.f32 %v2952, %v3011
    %v3025 = vmul.f32 %v2953, %v3015
    %v3026 = vmul.f32 %v2954, %v3011
    %v3027 = vmul.f32 %v2955, %v3015
    %v3028 = vmul.f32 %v2956, %v3011
    %v3029 = vmul.f32 %v2957, %v3015
    %v3030 = vmul.f32 %v2958, %v3011
    %v3031 = vmul.f32 %v2959, %v3015
    %v3032 = vmul.f32 %v2960, %v3011
    %v3033 = vmul.f32 %v2961, %v3015
    %v3034 = vmul.f32 %v2962, %v3011
    %v3035 = vmul.f32 %v2963, %v3015
    %v3036 = vmul.f32 %v2964, %v3011
    %v3037 = vmul.f32 %v2965, %v3015
    %v3038 = vmul.f32 %v2966, %v3011
    %v3039 = vmul.f32 %v2967, %v3015
    %v3040 = vmul.f32 %v2968, %v3011
    %v3041 = vmul.f32 %v2969, %v3015
    %v3042 = vmul.f32 %v2970, %v3011
    %v3043 = vmul.f32 %v2971, %v3015
    %v3044 = vmul.f32 %v2972, %v3011
    %v3045 = vmul.f32 %v2973, %v3015
    %v3046 = vmul.f32 %v2974, %v3011
    %v3047 = vmul.f32 %v2975, %v3015
    %v3048 = vmul.f32 %v2976, %v3011
    %v3049 = vmul.f32 %v2977, %v3015
    %v3050 = vmul.f32 %v2978, %v3011
    %v3051 = vmul.f32 %v2979, %v3015
    %v3052 = vmul.f32 %v2980, %v3011
    %v3053 = vmul.f32 %v2981, %v3015
    %v3054 = vmul.f32 %v2982, %v3011
    %v3055 = vmul.f32 %v2983, %v3015
    %v3056 = vmul.f32 %v2984, %v3011
    %v3057 = vmul.f32 %v2985, %v3015
    %v3058 = vmul.f32 %v2986, %v3011
    %v3059 = vmul.f32 %v2987, %v3015
    %v3060 = vmul.f32 %v2988, %v3011
    %v3061 = vmul.f32 %v2989, %v3015
    %v3062 = vmul.f32 %v2990, %v3011
    %v3063 = vmul.f32 %v2991, %v3015
    %v3064 = vmul.f32 %v2992, %v3011
    %v3065 = vmul.f32 %v2993, %v3015
    %v3066 = vmul.f32 %v2994, %v3011
    %v3067 = vmul.f32 %v2995, %v3015
    %v3068 = vmul.f32 %v2996, %v3011
    %v3069 = vmul.f32 %v2997, %v3015
    %v3070 = vmul.f32 %v2998, %v3011
    %v3071 = vmul.f32 %v2999, %v3015
    %v3072 = vmul.f32 %v3000, %v3011
    %v3073 = vmul.f32 %v3001, %v3015
    %v3074 = vmul.f32 %v3002, %v3011
    %v3075 = vmul.f32 %v3003, %v3015
    %v3076 = vmul.f32 %v3004, %v3011
    %v3077 = vmul.f32 %v3005, %v3015
    %v3078 = vmul.f32 %v3006, %v3011
    %v3079 = vmul.f32 %v3007, %v3015
    %v3144 = vrot.slane %v3016, 2
    %v3145 = vrot.slane %v3018, 2
    %v3146 = vsel %vm2319, %v3144, %v3145
    %v3147 = vrot.slane %v3017, 2
    %v3148 = vrot.slane %v3019, 2
    %v3149 = vsel %vm2319, %v3147, %v3148
    %v3150 = vrot.slane %v3020, 2
    %v3151 = vrot.slane %v3022, 2
    %v3152 = vsel %vm2319, %v3150, %v3151
    %v3153 = vrot.slane %v3021, 2
    %v3154 = vrot.slane %v3023, 2
    %v3155 = vsel %vm2319, %v3153, %v3154
    %v3156 = vrot.slane %v3024, 2
    %v3157 = vrot.slane %v3026, 2
    %v3158 = vsel %vm2319, %v3156, %v3157
    %v3159 = vrot.slane %v3025, 2
    %v3160 = vrot.slane %v3027, 2
    %v3161 = vsel %vm2319, %v3159, %v3160
    %v3162 = vrot.slane %v3028, 2
    %v3163 = vrot.slane %v3030, 2
    %v3164 = vsel %vm2319, %v3162, %v3163
    %v3165 = vrot.slane %v3029, 2
    %v3166 = vrot.slane %v3031, 2
    %v3167 = vsel %vm2319, %v3165, %v3166
    %v3168 = vrot.slane %v3032, 2
    %v3169 = vrot.slane %v3034, 2
    %v3170 = vsel %vm2319, %v3168, %v3169
    %v3171 = vrot.slane %v3033, 2
    %v3172 = vrot.slane %v3035, 2
    %v3173 = vsel %vm2319, %v3171, %v3172
    %v3174 = vrot.slane %v3036, 2
    %v3175 = vrot.slane %v3038, 2
    %v3176 = vsel %vm2319, %v3174, %v3175
    %v3177 = vrot.slane %v3037, 2
    %v3178 = vrot.slane %v3039, 2
    %v3179 = vsel %vm2319, %v3177, %v3178
    %v3180 = vrot.slane %v3040, 2
    %v3181 = vrot.slane %v3042, 2
    %v3182 = vsel %vm2319, %v3180, %v3181
    %v3183 = vrot.slane %v3041, 2
    %v3184 = vrot.slane %v3043, 2
    %v3185 = vsel %vm2319, %v3183, %v3184
    %v3186 = vrot.slane %v3044, 2
    %v3187 = vrot.slane %v3046, 2
    %v3188 = vsel %vm2319, %v3186, %v3187
    %v3189 = vrot.slane %v3045, 2
    %v3190 = vrot.slane %v3047, 2
    %v3191 = vsel %vm2319, %v3189, %v3190
    %v3192 = vrot.slane %v3048, 2
    %v3193 = vrot.slane %v3050, 2
    %v3194 = vsel %vm2319, %v3192, %v3193
    %v3195 = vrot.slane %v3049, 2
    %v3196 = vrot.slane %v3051, 2
    %v3197 = vsel %vm2319, %v3195, %v3196
    %v3198 = vrot.slane %v3052, 2
    %v3199 = vrot.slane %v3054, 2
    %v3200 = vsel %vm2319, %v3198, %v3199
    %v3201 = vrot.slane %v3053, 2
    %v3202 = vrot.slane %v3055, 2
    %v3203 = vsel %vm2319, %v3201, %v3202
    %v3204 = vrot.slane %v3056, 2
    %v3205 = vrot.slane %v3058, 2
    %v3206 = vsel %vm2319, %v3204, %v3205
    %v3207 = vrot.slane %v3057, 2
    %v3208 = vrot.slane %v3059, 2
    %v3209 = vsel %vm2319, %v3207, %v3208
    %v3210 = vrot.slane %v3060, 2
    %v3211 = vrot.slane %v3062, 2
    %v3212 = vsel %vm2319, %v3210, %v3211
    %v3213 = vrot.slane %v3061, 2
    %v3214 = vrot.slane %v3063, 2
    %v3215 = vsel %vm2319, %v3213, %v3214
    %v3216 = vrot.slane %v3064, 2
    %v3217 = vrot.slane %v3066, 2
    %v3218 = vsel %vm2319, %v3216, %v3217
    %v3219 = vrot.slane %v3065, 2
    %v3220 = vrot.slane %v3067, 2
    %v3221 = vsel %vm2319, %v3219, %v3220
    %v3222 = vrot.slane %v3068, 2
    %v3223 = vrot.slane %v3070, 2
    %v3224 = vsel %vm2319, %v3222, %v3223
    %v3225 = vrot.slane %v3069, 2
    %v3226 = vrot.slane %v3071, 2
    %v3227 = vsel %vm2319, %v3225, %v3226
    %v3228 = vrot.slane %v3072, 2
    %v3229 = vrot.slane %v3074, 2
    %v3230 = vsel %vm2319, %v3228, %v3229
    %v3231 = vrot.slane %v3073, 2
    %v3232 = vrot.slane %v3075, 2
    %v3233 = vsel %vm2319, %v3231, %v3232
    %v3234 = vrot.slane %v3076, 2
    %v3235 = vrot.slane %v3078, 2
    %v3236 = vsel %vm2319, %v3234, %v3235
    %v3237 = vrot.slane %v3077, 2
    %v3238 = vrot.slane %v3079, 2
    %v3239 = vsel %vm2319, %v3237, %v3238
    %v3272 = vadd.f32 %v2912, %v3146
    %v3273 = vadd.f32 %v2913, %v3149
    %v3274 = vadd.f32 %v2914, %v3152
    %v3275 = vadd.f32 %v2915, %v3155
    %v3276 = vadd.f32 %v2916, %v3158
    %v3277 = vadd.f32 %v2917, %v3161
    %v3278 = vadd.f32 %v2918, %v3164
    %v3279 = vadd.f32 %v2919, %v3167
    %v3280 = vadd.f32 %v2920, %v3170
    %v3281 = vadd.f32 %v2921, %v3173
    %v3282 = vadd.f32 %v2922, %v3176
    %v3283 = vadd.f32 %v2923, %v3179
    %v3284 = vadd.f32 %v2924, %v3182
    %v3285 = vadd.f32 %v2925, %v3185
    %v3286 = vadd.f32 %v2926, %v3188
    %v3287 = vadd.f32 %v2927, %v3191
    %v3288 = vadd.f32 %v2928, %v3194
    %v3289 = vadd.f32 %v2929, %v3197
    %v3290 = vadd.f32 %v2930, %v3200
    %v3291 = vadd.f32 %v2931, %v3203
    %v3292 = vadd.f32 %v2932, %v3206
    %v3293 = vadd.f32 %v2933, %v3209
    %v3294 = vadd.f32 %v2934, %v3212
    %v3295 = vadd.f32 %v2935, %v3215
    %v3296 = vadd.f32 %v2936, %v3218
    %v3297 = vadd.f32 %v2937, %v3221
    %v3298 = vadd.f32 %v2938, %v3224
    %v3299 = vadd.f32 %v2939, %v3227
    %v3300 = vadd.f32 %v2940, %v3230
    %v3301 = vadd.f32 %v2941, %v3233
    %v3302 = vadd.f32 %v2942, %v3236
    %v3303 = vadd.f32 %v2943, %v3239
    %s3304 = scalar_lea.vmem [#allocation3], 64
    %v3305 = vld [vmem:[%s3304] sm:$0xff]
    %v3306 = vld [vmem:[%s3304 + $0x8] sm:$0xff]
    %v3307 = vld [vmem:[%s3304 + $0x20] sm:$0xff]
    %v3308 = vld [vmem:[%s3304 + $0x28] sm:$0xff]
    %v3309 = vld [vmem:[%s3304 + $0x40] sm:$0xff]
    %v3310 = vld [vmem:[%s3304 + $0x48] sm:$0xff]
    %v3311 = vld [vmem:[%s3304 + $0x60] sm:$0xff]
    %v3312 = vld [vmem:[%s3304 + $0x68] sm:$0xff]
    %v3313 = vld [vmem:[%s3304 + $0x80] sm:$0xff]
    %v3314 = vld [vmem:[%s3304 + $0x88] sm:$0xff]
    %v3315 = vld [vmem:[%s3304 + $0xa0] sm:$0xff]
    %v3316 = vld [vmem:[%s3304 + $0xa8] sm:$0xff]
    %v3317 = vld [vmem:[%s3304 + $0xc0] sm:$0xff]
    %v3318 = vld [vmem:[%s3304 + $0xc8] sm:$0xff]
    %v3319 = vld [vmem:[%s3304 + $0xe0] sm:$0xff]
    %v3320 = vld [vmem:[%s3304 + $0xe8] sm:$0xff]
    %v3321 = vld [vmem:[%s3304 + $0x140] sm:$0xff]
    %v3322 = vld [vmem:[%s3304 + $0x148] sm:$0xff]
    %v3323 = vld [vmem:[%s3304 + $0x160] sm:$0xff]
    %v3324 = vld [vmem:[%s3304 + $0x168] sm:$0xff]
    %v3325 = vld [vmem:[%s3304 + $0x180] sm:$0xff]
    %v3326 = vld [vmem:[%s3304 + $0x188] sm:$0xff]
    %v3327 = vld [vmem:[%s3304 + $0x1a0] sm:$0xff]
    %v3328 = vld [vmem:[%s3304 + $0x1a8] sm:$0xff]
    %v3329 = vld [vmem:[%s3304 + $0x1c0] sm:$0xff]
    %v3330 = vld [vmem:[%s3304 + $0x1c8] sm:$0xff]
    %v3331 = vld [vmem:[%s3304 + $0x1e0] sm:$0xff]
    %v3332 = vld [vmem:[%s3304 + $0x1e8] sm:$0xff]
    %v3333 = vld [vmem:[%s3304 + $0x200] sm:$0xff]
    %v3334 = vld [vmem:[%s3304 + $0x208] sm:$0xff]
    %v3335 = vld [vmem:[%s3304 + $0x220] sm:$0xff]
    %v3336 = vld [vmem:[%s3304 + $0x228] sm:$0xff]
    %v3337 = vlaneseq
    %v3338 = vshrl.u32 %v3337, 7
    %v3339 = vsub.s32 6, %v3338
    %v3340 = vrot.slane %v1638, %v3339
    %v3341 = vlaneseq
    %v3342 = vshrl.u32 %v3341, 7
    %v3343 = vsub.s32 6, %v3342
    %v3344 = vrot.slane %v1639, %v3343
    %v3345 = vmul.f32 %v3305, %v3340
    %v3346 = vmul.f32 %v3306, %v3344
    %v3347 = vmul.f32 %v3307, %v3340
    %v3348 = vmul.f32 %v3308, %v3344
    %v3349 = vmul.f32 %v3309, %v3340
    %v3350 = vmul.f32 %v3310, %v3344
    %v3351 = vmul.f32 %v3311, %v3340
    %v3352 = vmul.f32 %v3312, %v3344
    %v3353 = vmul.f32 %v3313, %v3340
    %v3354 = vmul.f32 %v3314, %v3344
    %v3355 = vmul.f32 %v3315, %v3340
    %v3356 = vmul.f32 %v3316, %v3344
    %v3357 = vmul.f32 %v3317, %v3340
    %v3358 = vmul.f32 %v3318, %v3344
    %v3359 = vmul.f32 %v3319, %v3340
    %v3360 = vmul.f32 %v3320, %v3344
    %v3361 = vmul.f32 %v3321, %v3340
    %v3362 = vmul.f32 %v3322, %v3344
    %v3363 = vmul.f32 %v3323, %v3340
    %v3364 = vmul.f32 %v3324, %v3344
    %v3365 = vmul.f32 %v3325, %v3340
    %v3366 = vmul.f32 %v3326, %v3344
    %v3367 = vmul.f32 %v3327, %v3340
    %v3368 = vmul.f32 %v3328, %v3344
    %v3369 = vmul.f32 %v3329, %v3340
    %v3370 = vmul.f32 %v3330, %v3344
    %v3371 = vmul.f32 %v3331, %v3340
    %v3372 = vmul.f32 %v3332, %v3344
    %v3373 = vmul.f32 %v3333, %v3340
    %v3374 = vmul.f32 %v3334, %v3344
    %v3375 = vmul.f32 %v3335, %v3340
    %v3376 = vmul.f32 %v3336, %v3344
    %v3377 = vadd.f32 %v3272, %v3345
    %v3378 = vadd.f32 %v3273, %v3346
    %v3379 = vadd.f32 %v3274, %v3347
    %v3380 = vadd.f32 %v3275, %v3348
    %v3381 = vadd.f32 %v3276, %v3349
    %v3382 = vadd.f32 %v3277, %v3350
    %v3383 = vadd.f32 %v3278, %v3351
    %v3384 = vadd.f32 %v3279, %v3352
    %v3385 = vadd.f32 %v3280, %v3353
    %v3386 = vadd.f32 %v3281, %v3354
    %v3387 = vadd.f32 %v3282, %v3355
    %v3388 = vadd.f32 %v3283, %v3356
    %v3389 = vadd.f32 %v3284, %v3357
    %v3390 = vadd.f32 %v3285, %v3358
    %v3391 = vadd.f32 %v3286, %v3359
    %v3392 = vadd.f32 %v3287, %v3360
    %v3393 = vadd.f32 %v3288, %v3361
    %v3394 = vadd.f32 %v3289, %v3362
    %v3395 = vadd.f32 %v3290, %v3363
    %v3396 = vadd.f32 %v3291, %v3364
    %v3397 = vadd.f32 %v3292, %v3365
    %v3398 = vadd.f32 %v3293, %v3366
    %v3399 = vadd.f32 %v3294, %v3367
    %v3400 = vadd.f32 %v3295, %v3368
    %v3401 = vadd.f32 %v3296, %v3369
    %v3402 = vadd.f32 %v3297, %v3370
    %v3403 = vadd.f32 %v3298, %v3371
    %v3404 = vadd.f32 %v3299, %v3372
    %v3405 = vadd.f32 %v3300, %v3373
    %v3406 = vadd.f32 %v3301, %v3374
    %v3407 = vadd.f32 %v3302, %v3375
    %v3408 = vadd.f32 %v3303, %v3376
    %v3409 = vld [vmem:[%s3304] sm:$0xfe]
    %v3410 = vld [vmem:[%s3304 + $0x8] sm:$0xfe]
    %v3411 = vld [vmem:[%s3304 + $0x10] sm:$0x1]
    %v3412 = vld [vmem:[%s3304 + $0x18] sm:$0x1]
    %v3413 = vld [vmem:[%s3304 + $0x20] sm:$0xfe]
    %v3414 = vld [vmem:[%s3304 + $0x28] sm:$0xfe]
    %v3415 = vld [vmem:[%s3304 + $0x30] sm:$0x1]
    %v3416 = vld [vmem:[%s3304 + $0x38] sm:$0x1]
    %v3417 = vld [vmem:[%s3304 + $0x40] sm:$0xfe]
    %v3418 = vld [vmem:[%s3304 + $0x48] sm:$0xfe]
    %v3419 = vld [vmem:[%s3304 + $0x50] sm:$0x1]
    %v3420 = vld [vmem:[%s3304 + $0x58] sm:$0x1]
    %v3421 = vld [vmem:[%s3304 + $0x60] sm:$0xfe]
    %v3422 = vld [vmem:[%s3304 + $0x68] sm:$0xfe]
    %v3423 = vld [vmem:[%s3304 + $0x70] sm:$0x1]
    %v3424 = vld [vmem:[%s3304 + $0x78] sm:$0x1]
    %v3425 = vld [vmem:[%s3304 + $0x80] sm:$0xfe]
    %v3426 = vld [vmem:[%s3304 + $0x88] sm:$0xfe]
    %v3427 = vld [vmem:[%s3304 + $0x90] sm:$0x1]
    %v3428 = vld [vmem:[%s3304 + $0x98] sm:$0x1]
    %v3429 = vld [vmem:[%s3304 + $0xa0] sm:$0xfe]
    %v3430 = vld [vmem:[%s3304 + $0xa8] sm:$0xfe]
    %v3431 = vld [vmem:[%s3304 + $0xb0] sm:$0x1]
    %v3432 = vld [vmem:[%s3304 + $0xb8] sm:$0x1]
    %v3433 = vld [vmem:[%s3304 + $0xc0] sm:$0xfe]
    %v3434 = vld [vmem:[%s3304 + $0xc8] sm:$0xfe]
    %v3435 = vld [vmem:[%s3304 + $0xd0] sm:$0x1]
    %v3436 = vld [vmem:[%s3304 + $0xd8] sm:$0x1]
    %v3437 = vld [vmem:[%s3304 + $0xe0] sm:$0xfe]
    %v3438 = vld [vmem:[%s3304 + $0xe8] sm:$0xfe]
    %v3439 = vld [vmem:[%s3304 + $0xf0] sm:$0x1]
    %v3440 = vld [vmem:[%s3304 + $0xf8] sm:$0x1]
    %v3441 = vld [vmem:[%s3304 + $0x140] sm:$0xfe]
    %v3442 = vld [vmem:[%s3304 + $0x148] sm:$0xfe]
    %v3443 = vld [vmem:[%s3304 + $0x150] sm:$0x1]
    %v3444 = vld [vmem:[%s3304 + $0x158] sm:$0x1]
    %v3445 = vld [vmem:[%s3304 + $0x160] sm:$0xfe]
    %v3446 = vld [vmem:[%s3304 + $0x168] sm:$0xfe]
    %v3447 = vld [vmem:[%s3304 + $0x170] sm:$0x1]
    %v3448 = vld [vmem:[%s3304 + $0x178] sm:$0x1]
    %v3449 = vld [vmem:[%s3304 + $0x180] sm:$0xfe]
    %v3450 = vld [vmem:[%s3304 + $0x188] sm:$0xfe]
    %v3451 = vld [vmem:[%s3304 + $0x190] sm:$0x1]
    %v3452 = vld [vmem:[%s3304 + $0x198] sm:$0x1]
    %v3453 = vld [vmem:[%s3304 + $0x1a0] sm:$0xfe]
    %v3454 = vld [vmem:[%s3304 + $0x1a8] sm:$0xfe]
    %v3455 = vld [vmem:[%s3304 + $0x1b0] sm:$0x1]
    %v3456 = vld [vmem:[%s3304 + $0x1b8] sm:$0x1]
    %v3457 = vld [vmem:[%s3304 + $0x1c0] sm:$0xfe]
    %v3458 = vld [vmem:[%s3304 + $0x1c8] sm:$0xfe]
    %v3459 = vld [vmem:[%s3304 + $0x1d0] sm:$0x1]
    %v3460 = vld [vmem:[%s3304 + $0x1d8] sm:$0x1]
    %v3461 = vld [vmem:[%s3304 + $0x1e0] sm:$0xfe]
    %v3462 = vld [vmem:[%s3304 + $0x1e8] sm:$0xfe]
    %v3463 = vld [vmem:[%s3304 + $0x1f0] sm:$0x1]
    %v3464 = vld [vmem:[%s3304 + $0x1f8] sm:$0x1]
    %v3465 = vld [vmem:[%s3304 + $0x200] sm:$0xfe]
    %v3466 = vld [vmem:[%s3304 + $0x208] sm:$0xfe]
    %v3467 = vld [vmem:[%s3304 + $0x210] sm:$0x1]
    %v3468 = vld [vmem:[%s3304 + $0x218] sm:$0x1]
    %v3469 = vld [vmem:[%s3304 + $0x220] sm:$0xfe]
    %v3470 = vld [vmem:[%s3304 + $0x228] sm:$0xfe]
    %v3471 = vld [vmem:[%s3304 + $0x230] sm:$0x1]
    %v3472 = vld [vmem:[%s3304 + $0x238] sm:$0x1]
    %v3473 = vlaneseq
    %v3474 = vshrl.u32 %v3473, 7
    %v3475 = vsub.s32 7, %v3474
    %v3476 = vrot.slane %v1638, %v3475
    %v3477 = vlaneseq
    %v3478 = vshrl.u32 %v3477, 7
    %v3479 = vsub.s32 7, %v3478
    %v3480 = vrot.slane %v1639, %v3479
    %v3481 = vmul.f32 %v3409, %v3476
    %v3482 = vmul.f32 %v3410, %v3480
    %v3483 = vmul.f32 %v3411, %v3476
    %v3484 = vmul.f32 %v3412, %v3480
    %v3485 = vmul.f32 %v3413, %v3476
    %v3486 = vmul.f32 %v3414, %v3480
    %v3487 = vmul.f32 %v3415, %v3476
    %v3488 = vmul.f32 %v3416, %v3480
    %v3489 = vmul.f32 %v3417, %v3476
    %v3490 = vmul.f32 %v3418, %v3480
    %v3491 = vmul.f32 %v3419, %v3476
    %v3492 = vmul.f32 %v3420, %v3480
    %v3493 = vmul.f32 %v3421, %v3476
    %v3494 = vmul.f32 %v3422, %v3480
    %v3495 = vmul.f32 %v3423, %v3476
    %v3496 = vmul.f32 %v3424, %v3480
    %v3497 = vmul.f32 %v3425, %v3476
    %v3498 = vmul.f32 %v3426, %v3480
    %v3499 = vmul.f32 %v3427, %v3476
    %v3500 = vmul.f32 %v3428, %v3480
    %v3501 = vmul.f32 %v3429, %v3476
    %v3502 = vmul.f32 %v3430, %v3480
    %v3503 = vmul.f32 %v3431, %v3476
    %v3504 = vmul.f32 %v3432, %v3480
    %v3505 = vmul.f32 %v3433, %v3476
    %v3506 = vmul.f32 %v3434, %v3480
    %v3507 = vmul.f32 %v3435, %v3476
    %v3508 = vmul.f32 %v3436, %v3480
    %v3509 = vmul.f32 %v3437, %v3476
    %v3510 = vmul.f32 %v3438, %v3480
    %v3511 = vmul.f32 %v3439, %v3476
    %v3512 = vmul.f32 %v3440, %v3480
    %v3513 = vmul.f32 %v3441, %v3476
    %v3514 = vmul.f32 %v3442, %v3480
    %v3515 = vmul.f32 %v3443, %v3476
    %v3516 = vmul.f32 %v3444, %v3480
    %v3517 = vmul.f32 %v3445, %v3476
    %v3518 = vmul.f32 %v3446, %v3480
    %v3519 = vmul.f32 %v3447, %v3476
    %v3520 = vmul.f32 %v3448, %v3480
    %v3521 = vmul.f32 %v3449, %v3476
    %v3522 = vmul.f32 %v3450, %v3480
    %v3523 = vmul.f32 %v3451, %v3476
    %v3524 = vmul.f32 %v3452, %v3480
    %v3525 = vmul.f32 %v3453, %v3476
    %v3526 = vmul.f32 %v3454, %v3480
    %v3527 = vmul.f32 %v3455, %v3476
    %v3528 = vmul.f32 %v3456, %v3480
    %v3529 = vmul.f32 %v3457, %v3476
    %v3530 = vmul.f32 %v3458, %v3480
    %v3531 = vmul.f32 %v3459, %v3476
    %v3532 = vmul.f32 %v3460, %v3480
    %v3533 = vmul.f32 %v3461, %v3476
    %v3534 = vmul.f32 %v3462, %v3480
    %v3535 = vmul.f32 %v3463, %v3476
    %v3536 = vmul.f32 %v3464, %v3480
    %v3537 = vmul.f32 %v3465, %v3476
    %v3538 = vmul.f32 %v3466, %v3480
    %v3539 = vmul.f32 %v3467, %v3476
    %v3540 = vmul.f32 %v3468, %v3480
    %v3541 = vmul.f32 %v3469, %v3476
    %v3542 = vmul.f32 %v3470, %v3480
    %v3543 = vmul.f32 %v3471, %v3476
    %v3544 = vmul.f32 %v3472, %v3480
    %v3609 = vrot.slane %v3481, 1
    %v3610 = vrot.slane %v3483, 1
    %v3611 = vsel %vm1958, %v3609, %v3610
    %v3612 = vrot.slane %v3482, 1
    %v3613 = vrot.slane %v3484, 1
    %v3614 = vsel %vm1958, %v3612, %v3613
    %v3615 = vrot.slane %v3485, 1
    %v3616 = vrot.slane %v3487, 1
    %v3617 = vsel %vm1958, %v3615, %v3616
    %v3618 = vrot.slane %v3486, 1
    %v3619 = vrot.slane %v3488, 1
    %v3620 = vsel %vm1958, %v3618, %v3619
    %v3621 = vrot.slane %v3489, 1
    %v3622 = vrot.slane %v3491, 1
    %v3623 = vsel %vm1958, %v3621, %v3622
    %v3624 = vrot.slane %v3490, 1
    %v3625 = vrot.slane %v3492, 1
    %v3626 = vsel %vm1958, %v3624, %v3625
    %v3627 = vrot.slane %v3493, 1
    %v3628 = vrot.slane %v3495, 1
    %v3629 = vsel %vm1958, %v3627, %v3628
    %v3630 = vrot.slane %v3494, 1
    %v3631 = vrot.slane %v3496, 1
    %v3632 = vsel %vm1958, %v3630, %v3631
    %v3633 = vrot.slane %v3497, 1
    %v3634 = vrot.slane %v3499, 1
    %v3635 = vsel %vm1958, %v3633, %v3634
    %v3636 = vrot.slane %v3498, 1
    %v3637 = vrot.slane %v3500, 1
    %v3638 = vsel %vm1958, %v3636, %v3637
    %v3639 = vrot.slane %v3501, 1
    %v3640 = vrot.slane %v3503, 1
    %v3641 = vsel %vm1958, %v3639, %v3640
    %v3642 = vrot.slane %v3502, 1
    %v3643 = vrot.slane %v3504, 1
    %v3644 = vsel %vm1958, %v3642, %v3643
    %v3645 = vrot.slane %v3505, 1
    %v3646 = vrot.slane %v3507, 1
    %v3647 = vsel %vm1958, %v3645, %v3646
    %v3648 = vrot.slane %v3506, 1
    %v3649 = vrot.slane %v3508, 1
    %v3650 = vsel %vm1958, %v3648, %v3649
    %v3651 = vrot.slane %v3509, 1
    %v3652 = vrot.slane %v3511, 1
    %v3653 = vsel %vm1958, %v3651, %v3652
    %v3654 = vrot.slane %v3510, 1
    %v3655 = vrot.slane %v3512, 1
    %v3656 = vsel %vm1958, %v3654, %v3655
    %v3657 = vrot.slane %v3513, 1
    %v3658 = vrot.slane %v3515, 1
    %v3659 = vsel %vm1958, %v3657, %v3658
    %v3660 = vrot.slane %v3514, 1
    %v3661 = vrot.slane %v3516, 1
    %v3662 = vsel %vm1958, %v3660, %v3661
    %v3663 = vrot.slane %v3517, 1
    %v3664 = vrot.slane %v3519, 1
    %v3665 = vsel %vm1958, %v3663, %v3664
    %v3666 = vrot.slane %v3518, 1
    %v3667 = vrot.slane %v3520, 1
    %v3668 = vsel %vm1958, %v3666, %v3667
    %v3669 = vrot.slane %v3521, 1
    %v3670 = vrot.slane %v3523, 1
    %v3671 = vsel %vm1958, %v3669, %v3670
    %v3672 = vrot.slane %v3522, 1
    %v3673 = vrot.slane %v3524, 1
    %v3674 = vsel %vm1958, %v3672, %v3673
    %v3675 = vrot.slane %v3525, 1
    %v3676 = vrot.slane %v3527, 1
    %v3677 = vsel %vm1958, %v3675, %v3676
    %v3678 = vrot.slane %v3526, 1
    %v3679 = vrot.slane %v3528, 1
    %v3680 = vsel %vm1958, %v3678, %v3679
    %v3681 = vrot.slane %v3529, 1
    %v3682 = vrot.slane %v3531, 1
    %v3683 = vsel %vm1958, %v3681, %v3682
    %v3684 = vrot.slane %v3530, 1
    %v3685 = vrot.slane %v3532, 1
    %v3686 = vsel %vm1958, %v3684, %v3685
    %v3687 = vrot.slane %v3533, 1
    %v3688 = vrot.slane %v3535, 1
    %v3689 = vsel %vm1958, %v3687, %v3688
    %v3690 = vrot.slane %v3534, 1
    %v3691 = vrot.slane %v3536, 1
    %v3692 = vsel %vm1958, %v3690, %v3691
    %v3693 = vrot.slane %v3537, 1
    %v3694 = vrot.slane %v3539, 1
    %v3695 = vsel %vm1958, %v3693, %v3694
    %v3696 = vrot.slane %v3538, 1
    %v3697 = vrot.slane %v3540, 1
    %v3698 = vsel %vm1958, %v3696, %v3697
    %v3699 = vrot.slane %v3541, 1
    %v3700 = vrot.slane %v3543, 1
    %v3701 = vsel %vm1958, %v3699, %v3700
    %v3702 = vrot.slane %v3542, 1
    %v3703 = vrot.slane %v3544, 1
    %v3704 = vsel %vm1958, %v3702, %v3703
    %v3737 = vadd.f32 %v3377, %v3611
    %v3738 = vadd.f32 %v3378, %v3614
    %v3739 = vadd.f32 %v3379, %v3617
    %v3740 = vadd.f32 %v3380, %v3620
    %v3741 = vadd.f32 %v3381, %v3623
    %v3742 = vadd.f32 %v3382, %v3626
    %v3743 = vadd.f32 %v3383, %v3629
    %v3744 = vadd.f32 %v3384, %v3632
    %v3745 = vadd.f32 %v3385, %v3635
    %v3746 = vadd.f32 %v3386, %v3638
    %v3747 = vadd.f32 %v3387, %v3641
    %v3748 = vadd.f32 %v3388, %v3644
    %v3749 = vadd.f32 %v3389, %v3647
    %v3750 = vadd.f32 %v3390, %v3650
    %v3751 = vadd.f32 %v3391, %v3653
    %v3752 = vadd.f32 %v3392, %v3656
    %v3753 = vadd.f32 %v3393, %v3659
    %v3754 = vadd.f32 %v3394, %v3662
    %v3755 = vadd.f32 %v3395, %v3665
    %v3756 = vadd.f32 %v3396, %v3668
    %v3757 = vadd.f32 %v3397, %v3671
    %v3758 = vadd.f32 %v3398, %v3674
    %v3759 = vadd.f32 %v3399, %v3677
    %v3760 = vadd.f32 %v3400, %v3680
    %v3761 = vadd.f32 %v3401, %v3683
    %v3762 = vadd.f32 %v3402, %v3686
    %v3763 = vadd.f32 %v3403, %v3689
    %v3764 = vadd.f32 %v3404, %v3692
    %v3765 = vadd.f32 %v3405, %v3695
    %v3766 = vadd.f32 %v3406, %v3698
    %v3767 = vadd.f32 %v3407, %v3701
    %v3768 = vadd.f32 %v3408, %v3704
    %v3769 = vld [vmem:[%s3304] sm:$0xfc]
    %v3770 = vld [vmem:[%s3304 + $0x8] sm:$0xfc]
    %v3771 = vld [vmem:[%s3304 + $0x10] sm:$0x3]
    %v3772 = vld [vmem:[%s3304 + $0x18] sm:$0x3]
    %v3773 = vld [vmem:[%s3304 + $0x20] sm:$0xfc]
    %v3774 = vld [vmem:[%s3304 + $0x28] sm:$0xfc]
    %v3775 = vld [vmem:[%s3304 + $0x30] sm:$0x3]
    %v3776 = vld [vmem:[%s3304 + $0x38] sm:$0x3]
    %v3777 = vld [vmem:[%s3304 + $0x40] sm:$0xfc]
    %v3778 = vld [vmem:[%s3304 + $0x48] sm:$0xfc]
    %v3779 = vld [vmem:[%s3304 + $0x50] sm:$0x3]
    %v3780 = vld [vmem:[%s3304 + $0x58] sm:$0x3]
    %v3781 = vld [vmem:[%s3304 + $0x60] sm:$0xfc]
    %v3782 = vld [vmem:[%s3304 + $0x68] sm:$0xfc]
    %v3783 = vld [vmem:[%s3304 + $0x70] sm:$0x3]
    %v3784 = vld [vmem:[%s3304 + $0x78] sm:$0x3]
    %v3785 = vld [vmem:[%s3304 + $0x80] sm:$0xfc]
    %v3786 = vld [vmem:[%s3304 + $0x88] sm:$0xfc]
    %v3787 = vld [vmem:[%s3304 + $0x90] sm:$0x3]
    %v3788 = vld [vmem:[%s3304 + $0x98] sm:$0x3]
    %v3789 = vld [vmem:[%s3304 + $0xa0] sm:$0xfc]
    %v3790 = vld [vmem:[%s3304 + $0xa8] sm:$0xfc]
    %v3791 = vld [vmem:[%s3304 + $0xb0] sm:$0x3]
    %v3792 = vld [vmem:[%s3304 + $0xb8] sm:$0x3]
    %v3793 = vld [vmem:[%s3304 + $0xc0] sm:$0xfc]
    %v3794 = vld [vmem:[%s3304 + $0xc8] sm:$0xfc]
    %v3795 = vld [vmem:[%s3304 + $0xd0] sm:$0x3]
    %v3796 = vld [vmem:[%s3304 + $0xd8] sm:$0x3]
    %v3797 = vld [vmem:[%s3304 + $0xe0] sm:$0xfc]
    %v3798 = vld [vmem:[%s3304 + $0xe8] sm:$0xfc]
    %v3799 = vld [vmem:[%s3304 + $0xf0] sm:$0x3]
    %v3800 = vld [vmem:[%s3304 + $0xf8] sm:$0x3]
    %v3801 = vld [vmem:[%s3304 + $0x140] sm:$0xfc]
    %v3802 = vld [vmem:[%s3304 + $0x148] sm:$0xfc]
    %v3803 = vld [vmem:[%s3304 + $0x150] sm:$0x3]
    %v3804 = vld [vmem:[%s3304 + $0x158] sm:$0x3]
    %v3805 = vld [vmem:[%s3304 + $0x160] sm:$0xfc]
    %v3806 = vld [vmem:[%s3304 + $0x168] sm:$0xfc]
    %v3807 = vld [vmem:[%s3304 + $0x170] sm:$0x3]
    %v3808 = vld [vmem:[%s3304 + $0x178] sm:$0x3]
    %v3809 = vld [vmem:[%s3304 + $0x180] sm:$0xfc]
    %v3810 = vld [vmem:[%s3304 + $0x188] sm:$0xfc]
    %v3811 = vld [vmem:[%s3304 + $0x190] sm:$0x3]
    %v3812 = vld [vmem:[%s3304 + $0x198] sm:$0x3]
    %v3813 = vld [vmem:[%s3304 + $0x1a0] sm:$0xfc]
    %v3814 = vld [vmem:[%s3304 + $0x1a8] sm:$0xfc]
    %v3815 = vld [vmem:[%s3304 + $0x1b0] sm:$0x3]
    %v3816 = vld [vmem:[%s3304 + $0x1b8] sm:$0x3]
    %v3817 = vld [vmem:[%s3304 + $0x1c0] sm:$0xfc]
    %v3818 = vld [vmem:[%s3304 + $0x1c8] sm:$0xfc]
    %v3819 = vld [vmem:[%s3304 + $0x1d0] sm:$0x3]
    %v3820 = vld [vmem:[%s3304 + $0x1d8] sm:$0x3]
    %v3821 = vld [vmem:[%s3304 + $0x1e0] sm:$0xfc]
    %v3822 = vld [vmem:[%s3304 + $0x1e8] sm:$0xfc]
    %v3823 = vld [vmem:[%s3304 + $0x1f0] sm:$0x3]
    %v3824 = vld [vmem:[%s3304 + $0x1f8] sm:$0x3]
    %v3825 = vld [vmem:[%s3304 + $0x200] sm:$0xfc]
    %v3826 = vld [vmem:[%s3304 + $0x208] sm:$0xfc]
    %v3827 = vld [vmem:[%s3304 + $0x210] sm:$0x3]
    %v3828 = vld [vmem:[%s3304 + $0x218] sm:$0x3]
    %v3829 = vld [vmem:[%s3304 + $0x220] sm:$0xfc]
    %v3830 = vld [vmem:[%s3304 + $0x228] sm:$0xfc]
    %v3831 = vld [vmem:[%s3304 + $0x230] sm:$0x3]
    %v3832 = vld [vmem:[%s3304 + $0x238] sm:$0x3]
    %v3833 = vlaneseq
    %v3834 = vshrl.u32 %v3833, 7
    %v3835 = vsub.s32 0, %v3834
    %v3836 = vrot.slane %v1640, %v3835
    %v3837 = vlaneseq
    %v3838 = vshrl.u32 %v3837, 7
    %v3839 = vsub.s32 0, %v3838
    %v3840 = vrot.slane %v1641, %v3839
    %v3841 = vmul.f32 %v3769, %v3836
    %v3842 = vmul.f32 %v3770, %v3840
    %v3843 = vmul.f32 %v3771, %v3836
    %v3844 = vmul.f32 %v3772, %v3840
    %v3845 = vmul.f32 %v3773, %v3836
    %v3846 = vmul.f32 %v3774, %v3840
    %v3847 = vmul.f32 %v3775, %v3836
    %v3848 = vmul.f32 %v3776, %v3840
    %v3849 = vmul.f32 %v3777, %v3836
    %v3850 = vmul.f32 %v3778, %v3840
    %v3851 = vmul.f32 %v3779, %v3836
    %v3852 = vmul.f32 %v3780, %v3840
    %v3853 = vmul.f32 %v3781, %v3836
    %v3854 = vmul.f32 %v3782, %v3840
    %v3855 = vmul.f32 %v3783, %v3836
    %v3856 = vmul.f32 %v3784, %v3840
    %v3857 = vmul.f32 %v3785, %v3836
    %v3858 = vmul.f32 %v3786, %v3840
    %v3859 = vmul.f32 %v3787, %v3836
    %v3860 = vmul.f32 %v3788, %v3840
    %v3861 = vmul.f32 %v3789, %v3836
    %v3862 = vmul.f32 %v3790, %v3840
    %v3863 = vmul.f32 %v3791, %v3836
    %v3864 = vmul.f32 %v3792, %v3840
    %v3865 = vmul.f32 %v3793, %v3836
    %v3866 = vmul.f32 %v3794, %v3840
    %v3867 = vmul.f32 %v3795, %v3836
    %v3868 = vmul.f32 %v3796, %v3840
    %v3869 = vmul.f32 %v3797, %v3836
    %v3870 = vmul.f32 %v3798, %v3840
    %v3871 = vmul.f32 %v3799, %v3836
    %v3872 = vmul.f32 %v3800, %v3840
    %v3873 = vmul.f32 %v3801, %v3836
    %v3874 = vmul.f32 %v3802, %v3840
    %v3875 = vmul.f32 %v3803, %v3836
    %v3876 = vmul.f32 %v3804, %v3840
    %v3877 = vmul.f32 %v3805, %v3836
    %v3878 = vmul.f32 %v3806, %v3840
    %v3879 = vmul.f32 %v3807, %v3836
    %v3880 = vmul.f32 %v3808, %v3840
    %v3881 = vmul.f32 %v3809, %v3836
    %v3882 = vmul.f32 %v3810, %v3840
    %v3883 = vmul.f32 %v3811, %v3836
    %v3884 = vmul.f32 %v3812, %v3840
    %v3885 = vmul.f32 %v3813, %v3836
    %v3886 = vmul.f32 %v3814, %v3840
    %v3887 = vmul.f32 %v3815, %v3836
    %v3888 = vmul.f32 %v3816, %v3840
    %v3889 = vmul.f32 %v3817, %v3836
    %v3890 = vmul.f32 %v3818, %v3840
    %v3891 = vmul.f32 %v3819, %v3836
    %v3892 = vmul.f32 %v3820, %v3840
    %v3893 = vmul.f32 %v3821, %v3836
    %v3894 = vmul.f32 %v3822, %v3840
    %v3895 = vmul.f32 %v3823, %v3836
    %v3896 = vmul.f32 %v3824, %v3840
    %v3897 = vmul.f32 %v3825, %v3836
    %v3898 = vmul.f32 %v3826, %v3840
    %v3899 = vmul.f32 %v3827, %v3836
    %v3900 = vmul.f32 %v3828, %v3840
    %v3901 = vmul.f32 %v3829, %v3836
    %v3902 = vmul.f32 %v3830, %v3840
    %v3903 = vmul.f32 %v3831, %v3836
    %v3904 = vmul.f32 %v3832, %v3840
    %v3969 = vrot.slane %v3841, 2
    %v3970 = vrot.slane %v3843, 2
    %v3971 = vsel %vm2319, %v3969, %v3970
    %v3972 = vrot.slane %v3842, 2
    %v3973 = vrot.slane %v3844, 2
    %v3974 = vsel %vm2319, %v3972, %v3973
    %v3975 = vrot.slane %v3845, 2
    %v3976 = vrot.slane %v3847, 2
    %v3977 = vsel %vm2319, %v3975, %v3976
    %v3978 = vrot.slane %v3846, 2
    %v3979 = vrot.slane %v3848, 2
    %v3980 = vsel %vm2319, %v3978, %v3979
    %v3981 = vrot.slane %v3849, 2
    %v3982 = vrot.slane %v3851, 2
    %v3983 = vsel %vm2319, %v3981, %v3982
    %v3984 = vrot.slane %v3850, 2
    %v3985 = vrot.slane %v3852, 2
    %v3986 = vsel %vm2319, %v3984, %v3985
    %v3987 = vrot.slane %v3853, 2
    %v3988 = vrot.slane %v3855, 2
    %v3989 = vsel %vm2319, %v3987, %v3988
    %v3990 = vrot.slane %v3854, 2
    %v3991 = vrot.slane %v3856, 2
    %v3992 = vsel %vm2319, %v3990, %v3991
    %v3993 = vrot.slane %v3857, 2
    %v3994 = vrot.slane %v3859, 2
    %v3995 = vsel %vm2319, %v3993, %v3994
    %v3996 = vrot.slane %v3858, 2
    %v3997 = vrot.slane %v3860, 2
    %v3998 = vsel %vm2319, %v3996, %v3997
    %v3999 = vrot.slane %v3861, 2
    %v4000 = vrot.slane %v3863, 2
    %v4001 = vsel %vm2319, %v3999, %v4000
    %v4002 = vrot.slane %v3862, 2
    %v4003 = vrot.slane %v3864, 2
    %v4004 = vsel %vm2319, %v4002, %v4003
    %v4005 = vrot.slane %v3865, 2
    %v4006 = vrot.slane %v3867, 2
    %v4007 = vsel %vm2319, %v4005, %v4006
    %v4008 = vrot.slane %v3866, 2
    %v4009 = vrot.slane %v3868, 2
    %v4010 = vsel %vm2319, %v4008, %v4009
    %v4011 = vrot.slane %v3869, 2
    %v4012 = vrot.slane %v3871, 2
    %v4013 = vsel %vm2319, %v4011, %v4012
    %v4014 = vrot.slane %v3870, 2
    %v4015 = vrot.slane %v3872, 2
    %v4016 = vsel %vm2319, %v4014, %v4015
    %v4017 = vrot.slane %v3873, 2
    %v4018 = vrot.slane %v3875, 2
    %v4019 = vsel %vm2319, %v4017, %v4018
    %v4020 = vrot.slane %v3874, 2
    %v4021 = vrot.slane %v3876, 2
    %v4022 = vsel %vm2319, %v4020, %v4021
    %v4023 = vrot.slane %v3877, 2
    %v4024 = vrot.slane %v3879, 2
    %v4025 = vsel %vm2319, %v4023, %v4024
    %v4026 = vrot.slane %v3878, 2
    %v4027 = vrot.slane %v3880, 2
    %v4028 = vsel %vm2319, %v4026, %v4027
    %v4029 = vrot.slane %v3881, 2
    %v4030 = vrot.slane %v3883, 2
    %v4031 = vsel %vm2319, %v4029, %v4030
    %v4032 = vrot.slane %v3882, 2
    %v4033 = vrot.slane %v3884, 2
    %v4034 = vsel %vm2319, %v4032, %v4033
    %v4035 = vrot.slane %v3885, 2
    %v4036 = vrot.slane %v3887, 2
    %v4037 = vsel %vm2319, %v4035, %v4036
    %v4038 = vrot.slane %v3886, 2
    %v4039 = vrot.slane %v3888, 2
    %v4040 = vsel %vm2319, %v4038, %v4039
    %v4041 = vrot.slane %v3889, 2
    %v4042 = vrot.slane %v3891, 2
    %v4043 = vsel %vm2319, %v4041, %v4042
    %v4044 = vrot.slane %v3890, 2
    %v4045 = vrot.slane %v3892, 2
    %v4046 = vsel %vm2319, %v4044, %v4045
    %v4047 = vrot.slane %v3893, 2
    %v4048 = vrot.slane %v3895, 2
    %v4049 = vsel %vm2319, %v4047, %v4048
    %v4050 = vrot.slane %v3894, 2
    %v4051 = vrot.slane %v3896, 2
    %v4052 = vsel %vm2319, %v4050, %v4051
    %v4053 = vrot.slane %v3897, 2
    %v4054 = vrot.slane %v3899, 2
    %v4055 = vsel %vm2319, %v4053, %v4054
    %v4056 = vrot.slane %v3898, 2
    %v4057 = vrot.slane %v3900, 2
    %v4058 = vsel %vm2319, %v4056, %v4057
    %v4059 = vrot.slane %v3901, 2
    %v4060 = vrot.slane %v3903, 2
    %v4061 = vsel %vm2319, %v4059, %v4060
    %v4062 = vrot.slane %v3902, 2
    %v4063 = vrot.slane %v3904, 2
    %v4064 = vsel %vm2319, %v4062, %v4063
    %v4097 = vadd.f32 %v3737, %v3971
    %v4098 = vadd.f32 %v3738, %v3974
    %v4099 = vadd.f32 %v3739, %v3977
    %v4100 = vadd.f32 %v3740, %v3980
    %v4101 = vadd.f32 %v3741, %v3983
    %v4102 = vadd.f32 %v3742, %v3986
    %v4103 = vadd.f32 %v3743, %v3989
    %v4104 = vadd.f32 %v3744, %v3992
    %v4105 = vadd.f32 %v3745, %v3995
    %v4106 = vadd.f32 %v3746, %v3998
    %v4107 = vadd.f32 %v3747, %v4001
    %v4108 = vadd.f32 %v3748, %v4004
    %v4109 = vadd.f32 %v3749, %v4007
    %v4110 = vadd.f32 %v3750, %v4010
    %v4111 = vadd.f32 %v3751, %v4013
    %v4112 = vadd.f32 %v3752, %v4016
    %v4113 = vadd.f32 %v3753, %v4019
    %v4114 = vadd.f32 %v3754, %v4022
    %v4115 = vadd.f32 %v3755, %v4025
    %v4116 = vadd.f32 %v3756, %v4028
    %v4117 = vadd.f32 %v3757, %v4031
    %v4118 = vadd.f32 %v3758, %v4034
    %v4119 = vadd.f32 %v3759, %v4037
    %v4120 = vadd.f32 %v3760, %v4040
    %v4121 = vadd.f32 %v3761, %v4043
    %v4122 = vadd.f32 %v3762, %v4046
    %v4123 = vadd.f32 %v3763, %v4049
    %v4124 = vadd.f32 %v3764, %v4052
    %v4125 = vadd.f32 %v3765, %v4055
    %v4126 = vadd.f32 %v3766, %v4058
    %v4127 = vadd.f32 %v3767, %v4061
    %v4128 = vadd.f32 %v3768, %v4064
    %v4129 = vpack.c.bf16 %v4099, %v4097
    %v4130 = vpack.c.bf16 %v4100, %v4098
    %v4131 = vpack.c.bf16 %v4103, %v4101
    %v4132 = vpack.c.bf16 %v4104, %v4102
    %v4133 = vpack.c.bf16 %v4107, %v4105
    %v4134 = vpack.c.bf16 %v4108, %v4106
    %v4135 = vpack.c.bf16 %v4111, %v4109
    %v4136 = vpack.c.bf16 %v4112, %v4110
    %v4137 = vpack.c.bf16 %v4115, %v4113
    %v4138 = vpack.c.bf16 %v4116, %v4114
    %v4139 = vpack.c.bf16 %v4119, %v4117
    %v4140 = vpack.c.bf16 %v4120, %v4118
    %v4141 = vpack.c.bf16 %v4123, %v4121
    %v4142 = vpack.c.bf16 %v4124, %v4122
    %v4143 = vpack.c.bf16 %v4127, %v4125
    %v4144 = vpack.c.bf16 %v4128, %v4126
    %v4145 = vld [vmem:[#allocation21] sm:$0xff]
    %v4146 = vld [vmem:[#allocation21 + $0x8] sm:$0xff]
    %v4147 = vld [vmem:[#allocation21 + $0x10] sm:$0xff]
    %v4148 = vld [vmem:[#allocation21 + $0x18] sm:$0xff]
    %v4149 = vld [vmem:[#allocation21 + $0x20] sm:$0xff]
    %v4150 = vld [vmem:[#allocation21 + $0x28] sm:$0xff]
    %v4151 = vld [vmem:[#allocation21 + $0x30] sm:$0xff]
    %v4152 = vld [vmem:[#allocation21 + $0x38] sm:$0xff]
    %v4153 = vld [vmem:[#allocation21 + $0x40] sm:$0xff]
    %v4154 = vld [vmem:[#allocation21 + $0x48] sm:$0xff]
    %v4155 = vld [vmem:[#allocation21 + $0x50] sm:$0xff]
    %v4156 = vld [vmem:[#allocation21 + $0x58] sm:$0xff]
    %v4157 = vld [vmem:[#allocation21 + $0x60] sm:$0xff]
    %v4158 = vld [vmem:[#allocation21 + $0x68] sm:$0xff]
    %v4159 = vld [vmem:[#allocation21 + $0x70] sm:$0xff]
    %v4160 = vld [vmem:[#allocation21 + $0x78] sm:$0xff]
    %v4161 = vld [vmem:[#allocation21 + $0x80] sm:$0xff]
    %v4162 = vld [vmem:[#allocation21 + $0x88] sm:$0xff]
    %v4163 = vld [vmem:[#allocation21 + $0x90] sm:$0xff]
    %v4164 = vld [vmem:[#allocation21 + $0x98] sm:$0xff]
    %v4165 = vld [vmem:[#allocation21 + $0xa0] sm:$0xff]
    %v4166 = vld [vmem:[#allocation21 + $0xa8] sm:$0xff]
    %v4167 = vld [vmem:[#allocation21 + $0xb0] sm:$0xff]
    %v4168 = vld [vmem:[#allocation21 + $0xb8] sm:$0xff]
    %v4169 = vld [vmem:[#allocation21 + $0xc0] sm:$0xff]
    %v4170 = vld [vmem:[#allocation21 + $0xc8] sm:$0xff]
    %v4171 = vld [vmem:[#allocation21 + $0xd0] sm:$0xff]
    %v4172 = vld [vmem:[#allocation21 + $0xd8] sm:$0xff]
    %v4173 = vld [vmem:[#allocation21 + $0xe0] sm:$0xff]
    %v4174 = vld [vmem:[#allocation21 + $0xe8] sm:$0xff]
    %v4175 = vld [vmem:[#allocation21 + $0xf0] sm:$0xff]
    %v4176 = vld [vmem:[#allocation21 + $0xf8] sm:$0xff]
    %v4177 = vld [vmem:[#allocation22] sm:$0x3]
    %v4179 = vlaneseq
    %v4180 = vshrl.u32 %v4179, 7
    %v4181 = vsub.s32 0, %v4180
    %v4182 = vrot.slane %v4177, %v4181
    %v4183 = vlaneseq
    %v4184 = vshrl.u32 %v4183, 7
    %v4185 = vsub.s32 1, %v4184
    %v4186 = vrot.slane %v4177, %v4185
    %v4221 = vunpack.c.l.b16 %v4145
    %v4222 = vunpack.c.h.b16 %v4145
    %v4223 = vunpack.c.l.b16 %v4146
    %v4224 = vunpack.c.h.b16 %v4146
    %v4225 = vunpack.c.l.b16 %v4147
    %v4226 = vunpack.c.h.b16 %v4147
    %v4227 = vunpack.c.l.b16 %v4148
    %v4228 = vunpack.c.h.b16 %v4148
    %v4229 = vunpack.c.l.b16 %v4149
    %v4230 = vunpack.c.h.b16 %v4149
    %v4231 = vunpack.c.l.b16 %v4150
    %v4232 = vunpack.c.h.b16 %v4150
    %v4233 = vunpack.c.l.b16 %v4151
    %v4234 = vunpack.c.h.b16 %v4151
    %v4235 = vunpack.c.l.b16 %v4152
    %v4236 = vunpack.c.h.b16 %v4152
    %v4237 = vunpack.c.l.b16 %v4153
    %v4238 = vunpack.c.h.b16 %v4153
    %v4239 = vunpack.c.l.b16 %v4154
    %v4240 = vunpack.c.h.b16 %v4154
    %v4241 = vunpack.c.l.b16 %v4155
    %v4242 = vunpack.c.h.b16 %v4155
    %v4243 = vunpack.c.l.b16 %v4156
    %v4244 = vunpack.c.h.b16 %v4156
    %v4245 = vunpack.c.l.b16 %v4157
    %v4246 = vunpack.c.h.b16 %v4157
    %v4247 = vunpack.c.l.b16 %v4158
    %v4248 = vunpack.c.h.b16 %v4158
    %v4249 = vunpack.c.l.b16 %v4159
    %v4250 = vunpack.c.h.b16 %v4159
    %v4251 = vunpack.c.l.b16 %v4160
    %v4252 = vunpack.c.h.b16 %v4160
    %v4253 = vunpack.c.l.b16 %v4161
    %v4254 = vunpack.c.h.b16 %v4161
    %v4255 = vunpack.c.l.b16 %v4162
    %v4256 = vunpack.c.h.b16 %v4162
    %v4257 = vunpack.c.l.b16 %v4163
    %v4258 = vunpack.c.h.b16 %v4163
    %v4259 = vunpack.c.l.b16 %v4164
    %v4260 = vunpack.c.h.b16 %v4164
    %v4261 = vunpack.c.l.b16 %v4165
    %v4262 = vunpack.c.h.b16 %v4165
    %v4263 = vunpack.c.l.b16 %v4166
    %v4264 = vunpack.c.h.b16 %v4166
    %v4265 = vunpack.c.l.b16 %v4167
    %v4266 = vunpack.c.h.b16 %v4167
    %v4267 = vunpack.c.l.b16 %v4168
    %v4268 = vunpack.c.h.b16 %v4168
    %v4269 = vunpack.c.l.b16 %v4169
    %v4270 = vunpack.c.h.b16 %v4169
    %v4271 = vunpack.c.l.b16 %v4170
    %v4272 = vunpack.c.h.b16 %v4170
    %v4273 = vunpack.c.l.b16 %v4171
    %v4274 = vunpack.c.h.b16 %v4171
    %v4275 = vunpack.c.l.b16 %v4172
    %v4276 = vunpack.c.h.b16 %v4172
    %v4277 = vunpack.c.l.b16 %v4173
    %v4278 = vunpack.c.h.b16 %v4173
    %v4279 = vunpack.c.l.b16 %v4174
    %v4280 = vunpack.c.h.b16 %v4174
    %v4281 = vunpack.c.l.b16 %v4175
    %v4282 = vunpack.c.h.b16 %v4175
    %v4283 = vunpack.c.l.b16 %v4176
    %v4284 = vunpack.c.h.b16 %v4176
    %v4285 = vpack.c.b16 %v4223, %v4221
    %v4286 = vpack.c.b16 %v4224, %v4222
    %v4287 = vpack.c.b16 %v4227, %v4225
    %v4288 = vpack.c.b16 %v4228, %v4226
    %v4289 = vpack.c.b16 %v4231, %v4229
    %v4290 = vpack.c.b16 %v4232, %v4230
    %v4291 = vpack.c.b16 %v4235, %v4233
    %v4292 = vpack.c.b16 %v4236, %v4234
    %v4293 = vpack.c.b16 %v4239, %v4237
    %v4294 = vpack.c.b16 %v4240, %v4238
    %v4295 = vpack.c.b16 %v4243, %v4241
    %v4296 = vpack.c.b16 %v4244, %v4242
    %v4297 = vpack.c.b16 %v4247, %v4245
    %v4298 = vpack.c.b16 %v4248, %v4246
    %v4299 = vpack.c.b16 %v4251, %v4249
    %v4300 = vpack.c.b16 %v4252, %v4250
    %v4301 = vpack.c.b16 %v4255, %v4253
    %v4302 = vpack.c.b16 %v4256, %v4254
    %v4303 = vpack.c.b16 %v4259, %v4257
    %v4304 = vpack.c.b16 %v4260, %v4258
    %v4305 = vpack.c.b16 %v4263, %v4261
    %v4306 = vpack.c.b16 %v4264, %v4262
    %v4307 = vpack.c.b16 %v4267, %v4265
    %v4308 = vpack.c.b16 %v4268, %v4266
    %v4309 = vpack.c.b16 %v4271, %v4269
    %v4310 = vpack.c.b16 %v4272, %v4270
    %v4311 = vpack.c.b16 %v4275, %v4273
    %v4312 = vpack.c.b16 %v4276, %v4274
    %v4313 = vpack.c.b16 %v4279, %v4277
    %v4314 = vpack.c.b16 %v4280, %v4278
    %v4315 = vpack.c.b16 %v4283, %v4281
    %v4316 = vpack.c.b16 %v4284, %v4282
    %4349 = vmatprep.subr.bf16.mxu0 %v4286
    %4350 = vmatpush1.bf16.msra.mxu0 %v4285
    %4351 = vmatprep.subr.bf16.mxu0 %v4288
    %4352 = vmatpush1.bf16.msra.mxu0 %v4287
    %4353 = vmatprep.subr.bf16.mxu0 %v4290
    %4354 = vmatpush1.bf16.msra.mxu0 %v4289
    %4355 = vmatprep.subr.bf16.mxu0 %v4292
    %4356 = vmatpush1.bf16.msra.mxu0 %v4291
    %4357 = vmatprep.subr.bf16.mxu0 %v4294
    %4358 = vmatpush1.bf16.msra.mxu0 %v4293
    %4359 = vmatprep.subr.bf16.mxu0 %v4296
    %4360 = vmatpush1.bf16.msra.mxu0 %v4295
    %4361 = vmatprep.subr.bf16.mxu0 %v4298
    %4362 = vmatpush1.bf16.msra.mxu0 %v4297
    %4363 = vmatprep.subr.bf16.mxu0 %v4300
    %4364 = vmatpush1.bf16.msra.mxu0 %v4299
    %4365 = vmatprep.subr.bf16.mxu0 %v4302
    %4366 = vmatpush1.bf16.msra.mxu0 %v4301
    %4367 = vmatprep.subr.bf16.mxu0 %v4304
    %4368 = vmatpush1.bf16.msra.mxu0 %v4303
    %4369 = vmatprep.subr.bf16.mxu0 %v4306
    %4370 = vmatpush1.bf16.msra.mxu0 %v4305
    %4371 = vmatprep.subr.bf16.mxu0 %v4308
    %4372 = vmatpush1.bf16.msra.mxu0 %v4307
    %4373 = vmatprep.subr.bf16.mxu0 %v4310
    %4374 = vmatpush1.bf16.msra.mxu0 %v4309
    %4375 = vmatprep.subr.bf16.mxu0 %v4312
    %4376 = vmatpush1.bf16.msra.mxu0 %v4311
    %4377 = vmatprep.subr.bf16.mxu0 %v4314
    %4378 = vmatpush1.bf16.msra.mxu0 %v4313
    %4379 = vmatprep.subr.bf16.mxu0 %v4316
    %4380 = vmatpush1.bf16.msra.mxu0 %v4315
    %4381 = vmatprep.mubr.bf16.mxu0 %v4130
    %4382 = vmatmul.mubr.bf16.gmra.mrb[0].mxu0 %v4129
    %v4383 = vpop.f32.mrb[0].mxu0
    %v4384 = vadd.f32 %v4182, %v4383
    %v4385 = vpop.f32.mrb[0].mxu0
    %v4386 = vadd.f32 %v4186, %v4385
    %v4387 = vpop.f32.mrb[0].mxu0
    %v4388 = vadd.f32 %v4182, %v4387
    %v4389 = vpop.f32.mrb[0].mxu0
    %v4390 = vadd.f32 %v4186, %v4389
    %4391 = vmatprep.mubr.bf16.mxu0 %v4132
    %4392 = vmatmul.mubr.bf16.gmra.mrb[0].mxu0 %v4131
    %v4393 = vpop.f32.mrb[0].mxu0
    %v4394 = vadd.f32 %v4182, %v4393
    %v4395 = vpop.f32.mrb[0].mxu0
    %v4396 = vadd.f32 %v4186, %v4395
    %v4397 = vpop.f32.mrb[0].mxu0
    %v4398 = vadd.f32 %v4182, %v4397
    %v4399 = vpop.f32.mrb[0].mxu0
    %v4400 = vadd.f32 %v4186, %v4399
    %4401 = vmatprep.mubr.bf16.mxu0 %v4134
    %4402 = vmatmul.mubr.bf16.gmra.mrb[0].mxu0 %v4133
    %v4403 = vpop.f32.mrb[0].mxu0
    %v4404 = vadd.f32 %v4182, %v4403
    %v4405 = vpop.f32.mrb[0].mxu0
    %v4406 = vadd.f32 %v4186, %v4405
    %v4407 = vpop.f32.mrb[0].mxu0
    %v4408 = vadd.f32 %v4182, %v4407
    %v4409 = vpop.f32.mrb[0].mxu0
    %v4410 = vadd.f32 %v4186, %v4409
    %4411 = vmatprep.mubr.bf16.mxu0 %v4136
    %4412 = vmatmul.mubr.bf16.gmra.mrb[0].mxu0 %v4135
    %v4413 = vpop.f32.mrb[0].mxu0
    %v4414 = vadd.f32 %v4182, %v4413
    %v4415 = vpop.f32.mrb[0].mxu0
    %v4416 = vadd.f32 %v4186, %v4415
    %v4417 = vpop.f32.mrb[0].mxu0
    %v4418 = vadd.f32 %v4182, %v4417
    %v4419 = vpop.f32.mrb[0].mxu0
    %v4420 = vadd.f32 %v4186, %v4419
    %4421 = vmatprep.mubr.bf16.mxu0 %v4138
    %4422 = vmatmul.mubr.bf16.gmra.mrb[0].mxu0 %v4137
    %v4423 = vpop.f32.mrb[0].mxu0
    %v4424 = vadd.f32 %v4182, %v4423
    %v4425 = vpop.f32.mrb[0].mxu0
    %v4426 = vadd.f32 %v4186, %v4425
    %v4427 = vpop.f32.mrb[0].mxu0
    %v4428 = vadd.f32 %v4182, %v4427
    %v4429 = vpop.f32.mrb[0].mxu0
    %v4430 = vadd.f32 %v4186, %v4429
    %4431 = vmatprep.mubr.bf16.mxu0 %v4140
    %4432 = vmatmul.mubr.bf16.gmra.mrb[0].mxu0 %v4139
    %v4433 = vpop.f32.mrb[0].mxu0
    %v4434 = vadd.f32 %v4182, %v4433
    %v4435 = vpop.f32.mrb[0].mxu0
    %v4436 = vadd.f32 %v4186, %v4435
    %v4437 = vpop.f32.mrb[0].mxu0
    %v4438 = vadd.f32 %v4182, %v4437
    %v4439 = vpop.f32.mrb[0].mxu0
    %v4440 = vadd.f32 %v4186, %v4439
    %4441 = vmatprep.mubr.bf16.mxu0 %v4142
    %4442 = vmatmul.mubr.bf16.gmra.mrb[0].mxu0 %v4141
    %v4443 = vpop.f32.mrb[0].mxu0
    %v4444 = vadd.f32 %v4182, %v4443
    %v4445 = vpop.f32.mrb[0].mxu0
    %v4446 = vadd.f32 %v4186, %v4445
    %v4447 = vpop.f32.mrb[0].mxu0
    %v4448 = vadd.f32 %v4182, %v4447
    %v4449 = vpop.f32.mrb[0].mxu0
    %v4450 = vadd.f32 %v4186, %v4449
    %4451 = vmatprep.mubr.bf16.mxu0 %v4144
    %4452 = vmatmul.mubr.bf16.gmra.mrb[0].mxu0 %v4143
    %v4453 = vpop.f32.mrb[0].mxu0
    %v4454 = vadd.f32 %v4182, %v4453
    %v4455 = vpop.f32.mrb[0].mxu0
    %v4456 = vadd.f32 %v4186, %v4455
    %v4457 = vpop.f32.mrb[0].mxu0
    %v4458 = vadd.f32 %v4182, %v4457
    %v4459 = vpop.f32.mrb[0].mxu0
    %v4460 = vadd.f32 %v4186, %v4459
    %4461 = vdwg.mxu0
    %4462 = vst [vmem:[#allocation25] sm:$0xff] %v4384
    %4463 = vst [vmem:[#allocation25 + $0x8] sm:$0xff] %v4386
    %4464 = vst [vmem:[#allocation25 + $0x10] sm:$0xff] %v4388
    %4465 = vst [vmem:[#allocation25 + $0x18] sm:$0xff] %v4390
    %4466 = vst [vmem:[#allocation25 + $0x20] sm:$0xff] %v4394
    %4467 = vst [vmem:[#allocation25 + $0x28] sm:$0xff] %v4396
    %4468 = vst [vmem:[#allocation25 + $0x30] sm:$0xff] %v4398
    %4469 = vst [vmem:[#allocation25 + $0x38] sm:$0xff] %v4400
    %4470 = vst [vmem:[#allocation25 + $0x40] sm:$0xff] %v4404
    %4471 = vst [vmem:[#allocation25 + $0x48] sm:$0xff] %v4406
    %4472 = vst [vmem:[#allocation25 + $0x50] sm:$0xff] %v4408
    %4473 = vst [vmem:[#allocation25 + $0x58] sm:$0xff] %v4410
    %4474 = vst [vmem:[#allocation25 + $0x60] sm:$0xff] %v4414
    %4475 = vst [vmem:[#allocation25 + $0x68] sm:$0xff] %v4416
    %4476 = vst [vmem:[#allocation25 + $0x70] sm:$0xff] %v4418
    %4477 = vst [vmem:[#allocation25 + $0x78] sm:$0xff] %v4420
    %4478 = vst [vmem:[#allocation25 + $0x80] sm:$0xff] %v4424
    %4479 = vst [vmem:[#allocation25 + $0x88] sm:$0xff] %v4426
    %4480 = vst [vmem:[#allocation25 + $0x90] sm:$0xff] %v4428
    %4481 = vst [vmem:[#allocation25 + $0x98] sm:$0xff] %v4430
    %4482 = vst [vmem:[#allocation25 + $0xa0] sm:$0xff] %v4434
    %4483 = vst [vmem:[#allocation25 + $0xa8] sm:$0xff] %v4436
    %4484 = vst [vmem:[#allocation25 + $0xb0] sm:$0xff] %v4438
    %4485 = vst [vmem:[#allocation25 + $0xb8] sm:$0xff] %v4440
    %4486 = vst [vmem:[#allocation25 + $0xc0] sm:$0xff] %v4444
    %4487 = vst [vmem:[#allocation25 + $0xc8] sm:$0xff] %v4446
    %4488 = vst [vmem:[#allocation25 + $0xd0] sm:$0xff] %v4448
    %4489 = vst [vmem:[#allocation25 + $0xd8] sm:$0xff] %v4450
    %4490 = vst [vmem:[#allocation25 + $0xe0] sm:$0xff] %v4454
    %4491 = vst [vmem:[#allocation25 + $0xe8] sm:$0xff] %v4456
    %4492 = vst [vmem:[#allocation25 + $0xf0] sm:$0xff] %v4458
    %4493 = vst [vmem:[#allocation25 + $0xf8] sm:$0xff] %v4460
    // Predicated region
    $region106: #{feature_extractor_forward.1} parent=1 // pred_check
      _
    $region107: #{feature_extractor_forward.1} parent=1 // pred_check_branch
      %4495 = sbr.rel (0) target = $region109
    $region108: #{feature_extractor_forward.1} parent=1 // pred_region
      %s4497 = ssub.s32 2048, 2048
      %4498 = vsyncadd [#allocation6], %s4497
      %s4499 = sshll.u32 [#allocation24], 4
      %s4500 = int_to_ptr.vmem [resolvable:$true] %s4499
      %4505 = dma.vmem_to_hbm [thread:$0]  %s4500, 2048, %s14, [#allocation6], 128, 128, 8
    $region109: #{feature_extractor_forward.1} parent=1 // pred_fallthru
      _
    // Predicated region
    $region110: #{feature_extractor_forward.1} parent=1 // pred_check
      _
    $region111: #{feature_extractor_forward.1} parent=1 // pred_check_branch
      %4507 = sbr.rel (0) target = $region113
    $region112: #{feature_extractor_forward.1} parent=1 // pred_region
      %s4509 = ssub.s32 4096, 4096
      %4510 = vsyncadd [#allocation26], %s4509
      %s4511 = sshll.u32 [#allocation25], 4
      %s4512 = int_to_ptr.vmem [resolvable:$true] %s4511
      %4517 = dma.vmem_to_hbm [thread:$0]  %s4512, 4096, %s15, [#allocation26], 256, 256, 16
    $region113: #{feature_extractor_forward.1} parent=1 // pred_fallthru
      _
    // Predicated region
    $region114: #{feature_extractor_forward.1} parent=1 // pred_check
      _
    $region115: #{feature_extractor_forward.1} parent=1 // pred_check_branch
      %4519 = sbr.rel (0) target = $region117
    $region116: #{feature_extractor_forward.1} parent=1 // pred_region
      %4520 = dma.done [#allocation6], 2048
    $region117: #{feature_extractor_forward.1} parent=1 // pred_fallthru
      _
    // Predicated region
    $region118: #{feature_extractor_forward.1} parent=1 // pred_check
      _
    $region119: #{feature_extractor_forward.1} parent=1 // pred_check_branch
      %4522 = sbr.rel (0) target = $region121
    $region120: #{feature_extractor_forward.1} parent=1 // pred_region
      %4523 = dma.done [#allocation26], 4096
    $region121: #{feature_extractor_forward.1} parent=1 // pred_fallthru
      _
    %4524 = vsyncpa [#allocation5], 1
    %4525 = vsyncpa [#allocation8], 1
    %4526 = vsyncpa [#allocation11], 1
    %4527 = vsyncpa [#allocation14], 1
    %4528 = vsyncpa [#allocation17], 1
    %4529 = vsyncpa [#allocation20], 1
    %4530 = vsyncpa [#allocation23], 1
    %4531 = vsyncpa [#allocation6], 1
    %4532 = vsyncpa [#allocation26], 1

// kernel: feature_extractor_forward.1
$region0: #{feature_extractor_forward.1}
  #allocation0 [shape = 'u32[]', space=smem, size = 0x4, offset = 0x4, fixed_abs, tag = 'smem constant byte address 0x4 - core index']
  #allocation1 [shape = 'u32[144,128]{1,0:T(1,128)}', space=vmem, size = 0x12000, scoped, tag = 'internal scratch']
  #allocation2 [shape = 'f32[2,10,16,128]{3,2,1,0:T(8,128)}', space=vmem, size = 0x28000, scoped, tag = 'scratch operand']
  #allocation3 [shape = 'f32[2,10,16,256]{3,2,1,0:T(8,128)}', space=vmem, size = 0x50000, scoped, tag = 'scratch operand']
  %s0 = inlined_call_operand.hbm [shape: f32[2,8,8,64], index: 0, kind: input, shape index: {}]
  %s1 = inlined_call_operand.hbm [shape: f32[2,8,8,128], index: 1, kind: input, shape index: {}]
  %s2 = inlined_call_operand.vmem [shape: bf16[64,128], index: 2, kind: input, shape index: {}]
  %s3 = inlined_call_operand.hbm [shape: f32[1,128], index: 3, kind: input, shape index: {}]
  %s4 = inlined_call_operand.hbm [shape: f32[9,128], index: 4, kind: input, shape index: {}]
  %s5 = inlined_call_operand.hbm [shape: f32[1,128], index: 5, kind: input, shape index: {}]
  %s6 = inlined_call_operand.hbm [shape: bf16[128,128], index: 6, kind: input, shape index: {}]
  %s7 = inlined_call_operand.hbm [shape: f32[1,128], index: 7, kind: input, shape index: {}]
  %s8 = inlined_call_operand.hbm [shape: bf16[128,256], index: 8, kind: input, shape index: {}]
  %s9 = inlined_call_operand.hbm [shape: f32[1,256], index: 9, kind: input, shape index: {}]
  %s10 = inlined_call_operand.vmem [shape: f32[9,256], index: 10, kind: input, shape index: {}]
  %s11 = inlined_call_operand.hbm [shape: f32[1,256], index: 11, kind: input, shape index: {}]
  %s12 = inlined_call_operand.hbm [shape: bf16[256,256], index: 12, kind: input, shape index: {}]
  %s13 = inlined_call_operand.hbm [shape: f32[1,256], index: 13, kind: input, shape index: {}]
  %s14 = inlined_call_operand.hbm [shape: f32[2,8,8,128], index: 14, kind: output, shape index: {0}]
  %s15 = inlined_call_operand.hbm [shape: f32[2,8,8,256], index: 15, kind: output, shape index: {1}]
  %16 = xla_tuple %s14, %s15
  %s17 = sld [smem:[#allocation0]]
  $region122: #{feature_extractor_forward.1} parent=0
    _
  %s19 = ssub.s32 1, %s17
  %s20 = scalar_select 0, %s19, %s17
  $region1: #{feature_extractor_forward.1} parent=0
    #allocation4 [shape = 'u8[65536]{0}', space=vmem, size = 0x10000, scoped, tag = 'input window, operand 0, single buffered']
    #allocation5 [shape = 's32[1]{0}', space=sflag, size = 0x4, scoped, tag = 'scoped memory for feature_extractor_forward.1']
    #allocation6 [shape = 's32[1]{0}', space=sflag, size = 0x4, scoped, tag = 'scoped memory for feature_extractor_forward.1']
    #allocation7 [shape = 'u8[65536]{0}', space=vmem, size = 0x10000, scoped, tag = 'input window, operand 1, single buffered']
    #allocation8 [shape = 's32[1]{0}', space=sflag, size = 0x4, scoped, tag = 'scoped memory for feature_extractor_forward.1']
    #allocation9 [shape = 'u8[512]{0}', space=vmem, size = 0x400, scoped, tag = 'input window, operand 3, single buffered']
    #allocation10 [shape = 'u8[8192]{0}', space=vmem, size = 0x2000, scoped, tag = 'input window, operand 4, single buffered']
    #allocation11 [shape = 's32[1]{0}', space=sflag, size = 0x4, scoped, tag = 'scoped memory for feature_extractor_forward.1']
    #allocation12 [shape = 'u8[512]{0}', space=vmem, size = 0x400, scoped, tag = 'input window, operand 5, single buffered']
    #allocation13 [shape = 'u8[32768]{0}', space=vmem, size = 0x8000, scoped, tag = 'input window, operand 6, single buffered']
    #allocation14 [shape = 's32[1]{0}', space=sflag, size = 0x4, scoped, tag = 'scoped memory for feature_extractor_forward.1']
    #allocation15 [shape = 'u8[512]{0}', space=vmem, size = 0x400, scoped, tag = 'input window, operand 7, single buffered']
    #allocation16 [shape = 'u8[65536]{0}', space=vmem, size = 0x10000, scoped, tag = 'input window, operand 8, single buffered']
    #allocation17 [shape = 's32[1]{0}', space=sflag, size = 0x4, scoped, tag = 'scoped memory for feature_extractor_forward.1']
    #allocation18 [shape = 'u8[1024]{0}', space=vmem, size = 0x400, scoped, tag = 'input window, operand 9, single buffered']
    #allocation19 [shape = 'u8[1024]{0}', space=vmem, size = 0x400, scoped, tag = 'input window, operand 11, single buffered']
    #allocation20 [shape = 's32[1]{0}', space=sflag, size = 0x4, scoped, tag = 'scoped memory for feature_extractor_forward.1']
    #allocation21 [shape = 'u8[131072]{0}', space=vmem, size = 0x20000, scoped, tag = 'input window, operand 12, single buffered']
    #allocation22 [shape = 'u8[1024]{0}', space=vmem, size = 0x400, scoped, tag = 'input window, operand 13, single buffered']
    #allocation23 [shape = 's32[1]{0}', space=sflag, size = 0x4, scoped, tag = 'scoped memory for feature_extractor_forward.1']
    #allocation24 [shape = 'u8[65536]{0}', space=vmem, size = 0x10000, scoped, tag = 'output window, operand 0, single buffered']
    #allocation25 [shape = 'u8[131072]{0}', space=vmem, size = 0x20000, scoped, tag = 'output window, operand 1, single buffered']
    #allocation26 [shape = 's32[1]{0}', space=sflag, size = 0x4, scoped, tag = 'scoped memory for feature_extractor_forward.1']
    %21 = vsyncpa [#allocation5], 0
    %22 = vsyncpa [#allocation8], 0
    %23 = vsyncpa [#allocation11], 0
    %24 = vsyncpa [#allocation14], 0
    %25 = vsyncpa [#allocation17], 0
    %26 = vsyncpa [#allocation20], 0
    %27 = vsyncpa [#allocation23], 0
    %28 = vsyncpa [#allocation6], 0
    %29 = vsyncpa [#allocation26], 0
    // Predicated region
    $region2: #{feature_extractor_forward.1} parent=1 // pred_check
      _
    $region3: #{feature_extractor_forward.1} parent=1 // pred_check_branch
      %31 = sbr.rel (0) target = $region5
    $region4: #{feature_extractor_forward.1} parent=1 // pred_region
      %s33 = ssub.s32 2048, 2048
      %34 = vsyncadd [#allocation5], %s33
      %s35 = sshll.u32 [#allocation4], 4
      %s36 = int_to_ptr.vmem [resolvable:$true] %s35
      %41 = dma.hbm_to_vmem [thread:$0]  %s0, 2048, %s36, [#allocation5], 128, 128, 8
    $region5: #{feature_extractor_forward.1} parent=1 // pred_fallthru
      _
    // Predicated region
    $region6: #{feature_extractor_forward.1} parent=1 // pred_check
      _
    $region7: #{feature_extractor_forward.1} parent=1 // pred_check_branch
      %43 = sbr.rel (0) target = $region9
    $region8: #{feature_extractor_forward.1} parent=1 // pred_region
      %s45 = ssub.s32 2048, 2048
      %46 = vsyncadd [#allocation8], %s45
      %s47 = sshll.u32 [#allocation7], 4
      %s48 = int_to_ptr.vmem [resolvable:$true] %s47
      %53 = dma.hbm_to_vmem [thread:$0]  %s1, 2048, %s48, [#allocation8], 128, 128, 8
    $region9: #{feature_extractor_forward.1} parent=1 // pred_fallthru
      _
    // Predicated region
    $region10: #{feature_extractor_forward.1} parent=1 // pred_check
      _
    $region11: #{feature_extractor_forward.1} parent=1 // pred_check_branch
      %55 = sbr.rel (0) target = $region13
    $region12: #{feature_extractor_forward.1} parent=1 // pred_region
      _
    $region13: #{feature_extractor_forward.1} parent=1 // pred_fallthru
      _
    // Predicated region
    $region14: #{feature_extractor_forward.1} parent=1 // pred_check
      _
    $region15: #{feature_extractor_forward.1} parent=1 // pred_check_branch
      %57 = sbr.rel (0) target = $region17
    $region16: #{feature_extractor_forward.1} parent=1 // pred_region
      %s59 = ssub.s32 16, 16
      %60 = vsyncadd [#allocation8], %s59
      %s62 = sshll.u32 [#allocation9], 4
      %s63 = int_to_ptr.vmem [resolvable:$true] %s62
      %65 = dma.hbm_to_vmem [thread:$0]  %s3, 16, %s63, [#allocation8]
    $region17: #{feature_extractor_forward.1} parent=1 // pred_fallthru
      _
    // Predicated region
    $region18: #{feature_extractor_forward.1} parent=1 // pred_check
      _
    $region19: #{feature_extractor_forward.1} parent=1 // pred_check_branch
      %67 = sbr.rel (0) target = $region21
    $region20: #{feature_extractor_forward.1} parent=1 // pred_region
      %s69 = ssub.s32 256, 256
      %70 = vsyncadd [#allocation11], %s69
      %s71 = sshll.u32 [#allocation10], 4
      %s72 = int_to_ptr.vmem [resolvable:$true] %s71
      %77 = dma.hbm_to_vmem [thread:$0]  %s4, 256, %s72, [#allocation11], 128, 128, 8
    $region21: #{feature_extractor_forward.1} parent=1 // pred_fallthru
      _
    // Predicated region
    $region22: #{feature_extractor_forward.1} parent=1 // pred_check
      _
    $region23: #{feature_extractor_forward.1} parent=1 // pred_check_branch
      %79 = sbr.rel (0) target = $region25
    $region24: #{feature_extractor_forward.1} parent=1 // pred_region
      %s81 = ssub.s32 16, 16
      %82 = vsyncadd [#allocation11], %s81
      %s84 = sshll.u32 [#allocation12], 4
      %s85 = int_to_ptr.vmem [resolvable:$true] %s84
      %87 = dma.hbm_to_vmem [thread:$0]  %s5, 16, %s85, [#allocation11]
    $region25: #{feature_extractor_forward.1} parent=1 // pred_fallthru
      _
    // Predicated region
    $region26: #{feature_extractor_forward.1} parent=1 // pred_check
      _
    $region27: #{feature_extractor_forward.1} parent=1 // pred_check_branch
      %89 = sbr.rel (0) target = $region29
    $region28: #{feature_extractor_forward.1} parent=1 // pred_region
      %s91 = ssub.s32 1024, 1024
      %92 = vsyncadd [#allocation14], %s91
      %s93 = sshll.u32 [#allocation13], 4
      %s94 = int_to_ptr.vmem [resolvable:$true] %s93
      %99 = dma.hbm_to_vmem [thread:$0]  %s6, 1024, %s94, [#allocation14], 64, 64, 4
    $region29: #{feature_extractor_forward.1} parent=1 // pred_fallthru
      _
    // Predicated region
    $region30: #{feature_extractor_forward.1} parent=1 // pred_check
      _
    $region31: #{feature_extractor_forward.1} parent=1 // pred_check_branch
      %101 = sbr.rel (0) target = $region33
    $region32: #{feature_extractor_forward.1} parent=1 // pred_region
      %s103 = ssub.s32 16, 16
      %104 = vsyncadd [#allocation14], %s103
      %s106 = sshll.u32 [#allocation15], 4
      %s107 = int_to_ptr.vmem [resolvable:$true] %s106
      %109 = dma.hbm_to_vmem [thread:$0]  %s7, 16, %s107, [#allocation14]
    $region33: #{feature_extractor_forward.1} parent=1 // pred_fallthru
      _
    // Predicated region
    $region34: #{feature_extractor_forward.1} parent=1 // pred_check
      _
    $region35: #{feature_extractor_forward.1} parent=1 // pred_check_branch
      %111 = sbr.rel (0) target = $region37
    $region36: #{feature_extractor_forward.1} parent=1 // pred_region
      %s113 = ssub.s32 2048, 2048
      %114 = vsyncadd [#allocation17], %s113
      %s115 = sshll.u32 [#allocation16], 4
      %s116 = int_to_ptr.vmem [resolvable:$true] %s115
      %121 = dma.hbm_to_vmem [thread:$0]  %s8, 2048, %s116, [#allocation17], 128, 128, 8
    $region37: #{feature_extractor_forward.1} parent=1 // pred_fallthru
      _
    // Predicated region
    $region38: #{feature_extractor_forward.1} parent=1 // pred_check
      _
    $region39: #{feature_extractor_forward.1} parent=1 // pred_check_branch
      %123 = sbr.rel (0) target = $region41
    $region40: #{feature_extractor_forward.1} parent=1 // pred_region
      %s125 = ssub.s32 32, 32
      %126 = vsyncadd [#allocation17], %s125
      %s128 = sshll.u32 [#allocation18], 4
      %s129 = int_to_ptr.vmem [resolvable:$true] %s128
      %131 = dma.hbm_to_vmem [thread:$0]  %s9, 32, %s129, [#allocation17]
    $region41: #{feature_extractor_forward.1} parent=1 // pred_fallthru
      _
    // Predicated region
    $region42: #{feature_extractor_forward.1} parent=1 // pred_check
      _
    $region43: #{feature_extractor_forward.1} parent=1 // pred_check_branch
      %133 = sbr.rel (0) target = $region45
    $region44: #{feature_extractor_forward.1} parent=1 // pred_region
      _
    $region45: #{feature_extractor_forward.1} parent=1 // pred_fallthru
      _
    // Predicated region
    $region46: #{feature_extractor_forward.1} parent=1 // pred_check
      _
    $region47: #{feature_extractor_forward.1} parent=1 // pred_check_branch
      %135 = sbr.rel (0) target = $region49
    $region48: #{feature_extractor_forward.1} parent=1 // pred_region
      %s137 = ssub.s32 32, 32
      %138 = vsyncadd [#allocation20], %s137
      %s140 = sshll.u32 [#allocation19], 4
      %s141 = int_to_ptr.vmem [resolvable:$true] %s140
      %143 = dma.hbm_to_vmem [thread:$0]  %s11, 32, %s141, [#allocation20]
    $region49: #{feature_extractor_forward.1} parent=1 // pred_fallthru
      _
    // Predicated region
    $region50: #{feature_extractor_forward.1} parent=1 // pred_check
      _
    $region51: #{feature_extractor_forward.1} parent=1 // pred_check_branch
      %145 = sbr.rel (0) target = $region53
    $region52: #{feature_extractor_forward.1} parent=1 // pred_region
      %s147 = ssub.s32 4096, 4096
      %148 = vsyncadd [#allocation20], %s147
      %s149 = sshll.u32 [#allocation21], 4
      %s150 = int_to_ptr.vmem [resolvable:$true] %s149
      %155 = dma.hbm_to_vmem [thread:$0]  %s12, 4096, %s150, [#allocation20], 128, 128, 8
    $region53: #{feature_extractor_forward.1} parent=1 // pred_fallthru
      _
    // Predicated region
    $region54: #{feature_extractor_forward.1} parent=1 // pred_check
      _
    $region55: #{feature_extractor_forward.1} parent=1 // pred_check_branch
      %157 = sbr.rel (0) target = $region57
    $region56: #{feature_extractor_forward.1} parent=1 // pred_region
      %s159 = ssub.s32 32, 32
      %160 = vsyncadd [#allocation23], %s159
      %s162 = sshll.u32 [#allocation22], 4
      %s163 = int_to_ptr.vmem [resolvable:$true] %s162
      %165 = dma.hbm_to_vmem [thread:$0]  %s13, 32, %s163, [#allocation23]
    $region57: #{feature_extractor_forward.1} parent=1 // pred_fallthru
      _
    // Predicated region
    $region58: #{feature_extractor_forward.1} parent=1 // pred_check
      _
    $region59: #{feature_extractor_forward.1} parent=1 // pred_check_branch
      %167 = sbr.rel (0) target = $region61
    $region60: #{feature_extractor_forward.1} parent=1 // pred_region
      %168 = dma.done [#allocation5], 2048
    $region61: #{feature_extractor_forward.1} parent=1 // pred_fallthru
      _
    // Predicated region
    $region62: #{feature_extractor_forward.1} parent=1 // pred_check
      _
    $region63: #{feature_extractor_forward.1} parent=1 // pred_check_branch
      %170 = sbr.rel (0) target = $region65
    $region64: #{feature_extractor_forward.1} parent=1 // pred_region
      %171 = dma.done [#allocation8], 2048
    $region65: #{feature_extractor_forward.1} parent=1 // pred_fallthru
      _
    // Predicated region
    $region66: #{feature_extractor_forward.1} parent=1 // pred_check
      _
    $region67: #{feature_extractor_forward.1} parent=1 // pred_check_branch
      %173 = sbr.rel (0) target = $region69
    $region68: #{feature_extractor_forward.1} parent=1 // pred_region
      %174 = dma.done [#allocation8], 16
    $region69: #{feature_extractor_forward.1} parent=1 // pred_fallthru
      _
    // Predicated region
    $region70: #{feature_extractor_forward.1} parent=1 // pred_check
      _
    $region71: #{feature_extractor_forward.1} parent=1 // pred_check_branch
      %176 = sbr.rel (0) target = $region73
    $region72: #{feature_extractor_forward.1} parent=1 // pred_region
      %177 = dma.done [#allocation11], 256
    $region73: #{feature_extractor_forward.1} parent=1 // pred_fallthru
      _
    // Predicated region
    $region74: #{feature_extractor_forward.1} parent=1 // pred_check
      _
    $region75: #{feature_extractor_forward.1} parent=1 // pred_check_branch
      %179 = sbr.rel (0) target = $region77
    $region76: #{feature_extractor_forward.1} parent=1 // pred_region
      %180 = dma.done [#allocation11], 16
    $region77: #{feature_extractor_forward.1} parent=1 // pred_fallthru
      _
    // Predicated region
    $region78: #{feature_extractor_forward.1} parent=1 // pred_check
      _
    $region79: #{feature_extractor_forward.1} parent=1 // pred_check_branch
      %182 = sbr.rel (0) target = $region81
    $region80: #{feature_extractor_forward.1} parent=1 // pred_region
      %183 = dma.done [#allocation14], 1024
    $region81: #{feature_extractor_forward.1} parent=1 // pred_fallthru
      _
    // Predicated region
    $region82: #{feature_extractor_forward.1} parent=1 // pred_check
      _
    $region83: #{feature_extractor_forward.1} parent=1 // pred_check_branch
      %185 = sbr.rel (0) target = $region85
    $region84: #{feature_extractor_forward.1} parent=1 // pred_region
      %186 = dma.done [#allocation14], 16
    $region85: #{feature_extractor_forward.1} parent=1 // pred_fallthru
      _
    // Predicated region
    $region86: #{feature_extractor_forward.1} parent=1 // pred_check
      _
    $region87: #{feature_extractor_forward.1} parent=1 // pred_check_branch
      %188 = sbr.rel (0) target = $region89
    $region88: #{feature_extractor_forward.1} parent=1 // pred_region
      %189 = dma.done [#allocation17], 2048
    $region89: #{feature_extractor_forward.1} parent=1 // pred_fallthru
      _
    // Predicated region
    $region90: #{feature_extractor_forward.1} parent=1 // pred_check
      _
    $region91: #{feature_extractor_forward.1} parent=1 // pred_check_branch
      %191 = sbr.rel (0) target = $region93
    $region92: #{feature_extractor_forward.1} parent=1 // pred_region
      %192 = dma.done [#allocation17], 32
    $region93: #{feature_extractor_forward.1} parent=1 // pred_fallthru
      _
    // Predicated region
    $region94: #{feature_extractor_forward.1} parent=1 // pred_check
      _
    $region95: #{feature_extractor_forward.1} parent=1 // pred_check_branch
      %194 = sbr.rel (0) target = $region97
    $region96: #{feature_extractor_forward.1} parent=1 // pred_region
      %195 = dma.done [#allocation20], 32
    $region97: #{feature_extractor_forward.1} parent=1 // pred_fallthru
      _
    // Predicated region
    $region98: #{feature_extractor_forward.1} parent=1 // pred_check
      _
    $region99: #{feature_extractor_forward.1} parent=1 // pred_check_branch
      %197 = sbr.rel (0) target = $region101
    $region100: #{feature_extractor_forward.1} parent=1 // pred_region
      %198 = dma.done [#allocation20], 4096
    $region101: #{feature_extractor_forward.1} parent=1 // pred_fallthru
      _
    // Predicated region
    $region102: #{feature_extractor_forward.1} parent=1 // pred_check
      _
    $region103: #{feature_extractor_forward.1} parent=1 // pred_check_branch
      %200 = sbr.rel (0) target = $region105
    $region104: #{feature_extractor_forward.1} parent=1 // pred_region
      %201 = dma.done [#allocation23], 32
    $region105: #{feature_extractor_forward.1} parent=1 // pred_fallthru
      _
    %v203 = vld [vmem:[#allocation4] sm:$0xff]
    %v204 = vld [vmem:[#allocation4 + $0x8] sm:$0xff]
    %v205 = vld [vmem:[#allocation4 + $0x10] sm:$0xff]
    %v206 = vld [vmem:[#allocation4 + $0x18] sm:$0xff]
    %v207 = vld [vmem:[#allocation4 + $0x20] sm:$0xff]
    %v208 = vld [vmem:[#allocation4 + $0x28] sm:$0xff]
    %v209 = vld [vmem:[#allocation4 + $0x30] sm:$0xff]
    %v210 = vld [vmem:[#allocation4 + $0x38] sm:$0xff]
    %v211 = vld [vmem:[#allocation4 + $0x40] sm:$0xff]
    %v212 = vld [vmem:[#allocation4 + $0x48] sm:$0xff]
    %v213 = vld [vmem:[#allocation4 + $0x50] sm:$0xff]
    %v214 = vld [vmem:[#allocation4 + $0x58] sm:$0xff]
    %v215 = vld [vmem:[#allocation4 + $0x60] sm:$0xff]
    %v216 = vld [vmem:[#allocation4 + $0x68] sm:$0xff]
    %v217 = vld [vmem:[#allocation4 + $0x70] sm:$0xff]
    %v218 = vld [vmem:[#allocation4 + $0x78] sm:$0xff]
    %v219 = vpack.c.bf16 %v204, %v203
    %v220 = vpack.c.bf16 %v206, %v205
    %v221 = vpack.c.bf16 %v208, %v207
    %v222 = vpack.c.bf16 %v210, %v209
    %v223 = vpack.c.bf16 %v212, %v211
    %v224 = vpack.c.bf16 %v214, %v213
    %v225 = vpack.c.bf16 %v216, %v215
    %v226 = vpack.c.bf16 %v218, %v217
    %v227 = vld [vmem:[%s2] sm:$0xf]
    %v228 = vld [vmem:[%s2 + $0x4] sm:$0xf]
    %v229 = vld [vmem:[%s2 + $0x8] sm:$0xf]
    %v230 = vld [vmem:[%s2 + $0xc] sm:$0xf]
    %v231 = vld [vmem:[%s2 + $0x10] sm:$0xf]
    %v232 = vld [vmem:[%s2 + $0x14] sm:$0xf]
    %v233 = vld [vmem:[%s2 + $0x18] sm:$0xf]
    %v234 = vld [vmem:[%s2 + $0x1c] sm:$0xf]
    %v235 = vld [vmem:[#allocation9] sm:$0x1]
    %v237 = vlaneseq
    %v238 = vshrl.u32 %v237, 7
    %v239 = vsub.s32 0, %v238
    %v240 = vrot.slane %v235, %v239
    %v250 = vunpack.c.l.b16 %v227
    %v251 = vunpack.c.l.b16 %v228
    %v252 = vunpack.c.l.b16 %v229
    %v253 = vunpack.c.l.b16 %v230
    %v254 = vunpack.c.l.b16 %v231
    %v255 = vunpack.c.l.b16 %v232
    %v256 = vunpack.c.l.b16 %v233
    %v257 = vunpack.c.l.b16 %v234
    %v258 = vpack.c.b16 %v251, %v250
    %v259 = vpack.c.b16 %v253, %v252
    %v260 = vpack.c.b16 %v255, %v254
    %v261 = vpack.c.b16 %v257, %v256
    %vm266 = vcmask 523264
    %v268 = vsel %vm266, %v219, 0
    %v271 = vsel %vm266, %v220, 0
    %v274 = vsel %vm266, %v221, 0
    %v277 = vsel %vm266, %v222, 0
    %v280 = vsel %vm266, %v223, 0
    %v283 = vsel %vm266, %v224, 0
    %v286 = vsel %vm266, %v225, 0
    %v289 = vsel %vm266, %v226, 0
    %291 = vmatprep.subr.bf16.mxu0 0
    %292 = vmatpush1.bf16.msra.mxu0 %v258
    %293 = vmatprep.subr.bf16.mxu0 0
    %294 = vmatpush1.bf16.msra.mxu0 %v259
    %295 = vmatprep.subr.bf16.mxu0 0
    %296 = vmatpush1.bf16.msra.mxu0 %v260
    %297 = vmatprep.subr.bf16.mxu0 0
    %298 = vmatpush1.bf16.msra.mxu0 %v261
    %299 = vmatprep.subr.bf16.mxu0 0
    %300 = vmatpush1.bf16.msra.mxu0 0
    %301 = vmatprep.subr.bf16.mxu0 0
    %302 = vmatpush1.bf16.msra.mxu0 0
    %303 = vmatprep.subr.bf16.mxu0 0
    %304 = vmatpush1.bf16.msra.mxu0 0
    %305 = vmatprep.subr.bf16.mxu0 0
    %306 = vmatpush1.bf16.msra.mxu0 0
    %307 = vmatprep.subr.bf16.mxu0 0
    %308 = vmatpush1.bf16.msra.mxu0 0
    %309 = vmatprep.subr.bf16.mxu0 0
    %310 = vmatpush1.bf16.msra.mxu0 0
    %311 = vmatprep.subr.bf16.mxu0 0
    %312 = vmatpush1.bf16.msra.mxu0 0
    %313 = vmatprep.subr.bf16.mxu0 0
    %314 = vmatpush1.bf16.msra.mxu0 0
    %315 = vmatprep.subr.bf16.mxu0 0
    %316 = vmatpush1.bf16.msra.mxu0 0
    %317 = vmatprep.subr.bf16.mxu0 0
    %318 = vmatpush1.bf16.msra.mxu0 0
    %319 = vmatprep.subr.bf16.mxu0 0
    %320 = vmatpush1.bf16.msra.mxu0 0
    %321 = vmatprep.subr.bf16.mxu0 0
    %322 = vmatpush1.bf16.msra.mxu0 0
    %323 = vmatprep.mubr.bf16.mxu0 0
    %324 = vmatmul.mubr.bf16.gmra.mrb[0].mxu0 %v268
    %v325 = vpop.f32.mrb[0].mxu0
    %v326 = vadd.f32 %v240, %v325
    %v327 = vpop.f32.mrb[0].mxu0
    %v328 = vpop.f32.mrb[0].mxu0
    %v329 = vadd.f32 %v240, %v328
    %v330 = vpop.f32.mrb[0].mxu0
    %331 = vmatprep.mubr.bf16.mxu0 0
    %332 = vmatmul.mubr.bf16.gmra.mrb[0].mxu0 %v271
    %v333 = vpop.f32.mrb[0].mxu0
    %v334 = vadd.f32 %v240, %v333
    %v335 = vpop.f32.mrb[0].mxu0
    %v336 = vpop.f32.mrb[0].mxu0
    %v337 = vadd.f32 %v240, %v336
    %v338 = vpop.f32.mrb[0].mxu0
    %339 = vmatprep.mubr.bf16.mxu0 0
    %340 = vmatmul.mubr.bf16.gmra.mrb[0].mxu0 %v274
    %v341 = vpop.f32.mrb[0].mxu0
    %v342 = vadd.f32 %v240, %v341
    %v343 = vpop.f32.mrb[0].mxu0
    %v344 = vpop.f32.mrb[0].mxu0
    %v345 = vadd.f32 %v240, %v344
    %v346 = vpop.f32.mrb[0].mxu0
    %347 = vmatprep.mubr.bf16.mxu0 0
    %348 = vmatmul.mubr.bf16.gmra.mrb[0].mxu0 %v277
    %v349 = vpop.f32.mrb[0].mxu0
    %v350 = vadd.f32 %v240, %v349
    %v351 = vpop.f32.mrb[0].mxu0
    %v352 = vpop.f32.mrb[0].mxu0
    %v353 = vadd.f32 %v240, %v352
    %v354 = vpop.f32.mrb[0].mxu0
    %355 = vmatprep.mubr.bf16.mxu0 0
    %356 = vmatmul.mubr.bf16.gmra.mrb[0].mxu0 %v280
    %v357 = vpop.f32.mrb[0].mxu0
    %v358 = vadd.f32 %v240, %v357
    %v359 = vpop.f32.mrb[0].mxu0
    %v360 = vpop.f32.mrb[0].mxu0
    %v361 = vadd.f32 %v240, %v360
    %v362 = vpop.f32.mrb[0].mxu0
    %363 = vmatprep.mubr.bf16.mxu0 0
    %364 = vmatmul.mubr.bf16.gmra.mrb[0].mxu0 %v283
    %v365 = vpop.f32.mrb[0].mxu0
    %v366 = vadd.f32 %v240, %v365
    %v367 = vpop.f32.mrb[0].mxu0
    %v368 = vpop.f32.mrb[0].mxu0
    %v369 = vadd.f32 %v240, %v368
    %v370 = vpop.f32.mrb[0].mxu0
    %371 = vmatprep.mubr.bf16.mxu0 0
    %372 = vmatmul.mubr.bf16.gmra.mrb[0].mxu0 %v286
    %v373 = vpop.f32.mrb[0].mxu0
    %v374 = vadd.f32 %v240, %v373
    %v375 = vpop.f32.mrb[0].mxu0
    %v376 = vpop.f32.mrb[0].mxu0
    %v377 = vadd.f32 %v240, %v376
    %v378 = vpop.f32.mrb[0].mxu0
    %379 = vmatprep.mubr.bf16.mxu0 0
    %380 = vmatmul.mubr.bf16.gmra.mrb[0].mxu0 %v289
    %v381 = vpop.f32.mrb[0].mxu0
    %v382 = vadd.f32 %v240, %v381
    %v383 = vpop.f32.mrb[0].mxu0
    %v384 = vpop.f32.mrb[0].mxu0
    %v385 = vadd.f32 %v240, %v384
    %v386 = vpop.f32.mrb[0].mxu0
    %387 = vdwg.mxu0
    %388 = vst [vmem:[#allocation2] sm:$0xff] 0.0
    %389 = vst [vmem:[#allocation2 + $0x8] sm:$0xff] 0.0
    %390 = vst [vmem:[#allocation2 + $0xa0] sm:$0xff] 0.0
    %391 = vst [vmem:[#allocation2 + $0xa8] sm:$0xff] 0.0
    %s392 = scalar_lea.vmem [#allocation2], 144
    %393 = vst [vmem:[%s392] sm:$0xff] 0.0
    %394 = vst [vmem:[%s392 + $0x8] sm:$0xff] 0.0
    %395 = vst [vmem:[%s392 + $0xa0] sm:$0xff] 0.0
    %396 = vst [vmem:[%s392 + $0xa8] sm:$0xff] 0.0
    %s397 = scalar_lea.vmem [#allocation2], 16
    %398 = vst [vmem:[%s397] sm:$0x1] 0.0
    %399 = vst [vmem:[%s397 + $0x10] sm:$0x1] 0.0
    %400 = vst [vmem:[%s397 + $0x20] sm:$0x1] 0.0
    %401 = vst [vmem:[%s397 + $0x30] sm:$0x1] 0.0
    %402 = vst [vmem:[%s397 + $0x40] sm:$0x1] 0.0
    %403 = vst [vmem:[%s397 + $0x50] sm:$0x1] 0.0
    %404 = vst [vmem:[%s397 + $0x60] sm:$0x1] 0.0
    %405 = vst [vmem:[%s397 + $0x70] sm:$0x1] 0.0
    %406 = vst [vmem:[%s397 + $0xa0] sm:$0x1] 0.0
    %407 = vst [vmem:[%s397 + $0xb0] sm:$0x1] 0.0
    %408 = vst [vmem:[%s397 + $0xc0] sm:$0x1] 0.0
    %409 = vst [vmem:[%s397 + $0xd0] sm:$0x1] 0.0
    %410 = vst [vmem:[%s397 + $0xe0] sm:$0x1] 0.0
    %411 = vst [vmem:[%s397 + $0xf0] sm:$0x1] 0.0
    %412 = vst [vmem:[%s397 + $0x100] sm:$0x1] 0.0
    %413 = vst [vmem:[%s397 + $0x110] sm:$0x1] 0.0
    %414 = vst [vmem:[%s397 + $0x9] sm:$0x1] 0.0
    %415 = vst [vmem:[%s397 + $0x19] sm:$0x1] 0.0
    %416 = vst [vmem:[%s397 + $0x29] sm:$0x1] 0.0
    %417 = vst [vmem:[%s397 + $0x39] sm:$0x1] 0.0
    %418 = vst [vmem:[%s397 + $0x49] sm:$0x1] 0.0
    %419 = vst [vmem:[%s397 + $0x59] sm:$0x1] 0.0
    %420 = vst [vmem:[%s397 + $0x69] sm:$0x1] 0.0
    %421 = vst [vmem:[%s397 + $0x79] sm:$0x1] 0.0
    %422 = vst [vmem:[%s397 + $0xa9] sm:$0x1] 0.0
    %423 = vst [vmem:[%s397 + $0xb9] sm:$0x1] 0.0
    %424 = vst [vmem:[%s397 + $0xc9] sm:$0x1] 0.0
    %425 = vst [vmem:[%s397 + $0xd9] sm:$0x1] 0.0
    %426 = vst [vmem:[%s397 + $0xe9] sm:$0x1] 0.0
    %427 = vst [vmem:[%s397 + $0xf9] sm:$0x1] 0.0
    %428 = vst [vmem:[%s397 + $0x109] sm:$0x1] 0.0
    %429 = vst [vmem:[%s397 + $0x119] sm:$0x1] 0.0
    %430 = vst [vmem:[%s397 + $0x1] sm:$0xff] %v326
    %431 = vst [vmem:[%s397 + $0x11] sm:$0xff] %v329
    %432 = vst [vmem:[%s397 + $0x21] sm:$0xff] %v334
    %433 = vst [vmem:[%s397 + $0x31] sm:$0xff] %v337
    %434 = vst [vmem:[%s397 + $0x41] sm:$0xff] %v342
    %435 = vst [vmem:[%s397 + $0x51] sm:$0xff] %v345
    %436 = vst [vmem:[%s397 + $0x61] sm:$0xff] %v350
    %437 = vst [vmem:[%s397 + $0x71] sm:$0xff] %v353
    %438 = vst [vmem:[%s397 + $0xa1] sm:$0xff] %v358
    %439 = vst [vmem:[%s397 + $0xb1] sm:$0xff] %v361
    %440 = vst [vmem:[%s397 + $0xc1] sm:$0xff] %v366
    %441 = vst [vmem:[%s397 + $0xd1] sm:$0xff] %v369
    %442 = vst [vmem:[%s397 + $0xe1] sm:$0xff] %v374
    %443 = vst [vmem:[%s397 + $0xf1] sm:$0xff] %v377
    %444 = vst [vmem:[%s397 + $0x101] sm:$0xff] %v382
    %445 = vst [vmem:[%s397 + $0x111] sm:$0xff] %v385
    %v446 = vld [vmem:[#allocation10] sm:$0xff]
    %v447 = vld [vmem:[#allocation10 + $0x8] sm:$0x1]
    %v448 = vld [vmem:[#allocation12] sm:$0x1]
    %v450 = vlaneseq
    %v451 = vshrl.u32 %v450, 7
    %v452 = vsub.s32 0, %v451
    %v453 = vrot.slane %v448, %v452
    %v455 = vld [vmem:[#allocation2] sm:$0xff]
    %v456 = vld [vmem:[#allocation2 + $0x10] sm:$0xff]
    %v457 = vld [vmem:[#allocation2 + $0x20] sm:$0xff]
    %v458 = vld [vmem:[#allocation2 + $0x30] sm:$0xff]
    %v459 = vld [vmem:[#allocation2 + $0x40] sm:$0xff]
    %v460 = vld [vmem:[#allocation2 + $0x50] sm:$0xff]
    %v461 = vld [vmem:[#allocation2 + $0x60] sm:$0xff]
    %v462 = vld [vmem:[#allocation2 + $0x70] sm:$0xff]
    %v463 = vld [vmem:[#allocation2 + $0xa0] sm:$0xff]
    %v464 = vld [vmem:[#allocation2 + $0xb0] sm:$0xff]
    %v465 = vld [vmem:[#allocation2 + $0xc0] sm:$0xff]
    %v466 = vld [vmem:[#allocation2 + $0xd0] sm:$0xff]
    %v467 = vld [vmem:[#allocation2 + $0xe0] sm:$0xff]
    %v468 = vld [vmem:[#allocation2 + $0xf0] sm:$0xff]
    %v469 = vld [vmem:[#allocation2 + $0x100] sm:$0xff]
    %v470 = vld [vmem:[#allocation2 + $0x110] sm:$0xff]
    %v471 = vlaneseq
    %v472 = vshrl.u32 %v471, 7
    %v473 = vsub.s32 0, %v472
    %v474 = vrot.slane %v446, %v473
    %v475 = vmul.f32 %v455, %v474
    %v476 = vmul.f32 %v456, %v474
    %v477 = vmul.f32 %v457, %v474
    %v478 = vmul.f32 %v458, %v474
    %v479 = vmul.f32 %v459, %v474
    %v480 = vmul.f32 %v460, %v474
    %v481 = vmul.f32 %v461, %v474
    %v482 = vmul.f32 %v462, %v474
    %v483 = vmul.f32 %v463, %v474
    %v484 = vmul.f32 %v464, %v474
    %v485 = vmul.f32 %v465, %v474
    %v486 = vmul.f32 %v466, %v474
    %v487 = vmul.f32 %v467, %v474
    %v488 = vmul.f32 %v468, %v474
    %v489 = vmul.f32 %v469, %v474
    %v490 = vmul.f32 %v470, %v474
    %v491 = vadd.f32 %v453, %v475
    %v492 = vadd.f32 %v453, %v476
    %v493 = vadd.f32 %v453, %v477
    %v494 = vadd.f32 %v453, %v478
    %v495 = vadd.f32 %v453, %v479
    %v496 = vadd.f32 %v453, %v480
    %v497 = vadd.f32 %v453, %v481
    %v498 = vadd.f32 %v453, %v482
    %v499 = vadd.f32 %v453, %v483
    %v500 = vadd.f32 %v453, %v484
    %v501 = vadd.f32 %v453, %v485
    %v502 = vadd.f32 %v453, %v486
    %v503 = vadd.f32 %v453, %v487
    %v504 = vadd.f32 %v453, %v488
    %v505 = vadd.f32 %v453, %v489
    %v506 = vadd.f32 %v453, %v490
    %v507 = vld [vmem:[#allocation2 + $0x1] sm:$0xff]
    %v508 = vld [vmem:[#allocation2 + $0x11] sm:$0xff]
    %v509 = vld [vmem:[#allocation2 + $0x21] sm:$0xff]
    %v510 = vld [vmem:[#allocation2 + $0x31] sm:$0xff]
    %v511 = vld [vmem:[#allocation2 + $0x41] sm:$0xff]
    %v512 = vld [vmem:[#allocation2 + $0x51] sm:$0xff]
    %v513 = vld [vmem:[#allocation2 + $0x61] sm:$0xff]
    %v514 = vld [vmem:[#allocation2 + $0x71] sm:$0xff]
    %v515 = vld [vmem:[#allocation2 + $0xa1] sm:$0xff]
    %v516 = vld [vmem:[#allocation2 + $0xb1] sm:$0xff]
    %v517 = vld [vmem:[#allocation2 + $0xc1] sm:$0xff]
    %v518 = vld [vmem:[#allocation2 + $0xd1] sm:$0xff]
    %v519 = vld [vmem:[#allocation2 + $0xe1] sm:$0xff]
    %v520 = vld [vmem:[#allocation2 + $0xf1] sm:$0xff]
    %v521 = vld [vmem:[#allocation2 + $0x101] sm:$0xff]
    %v522 = vld [vmem:[#allocation2 + $0x111] sm:$0xff]
    %v523 = vlaneseq
    %v524 = vshrl.u32 %v523, 7
    %v525 = vsub.s32 1, %v524
    %v526 = vrot.slane %v446, %v525
    %v527 = vmul.f32 %v507, %v526
    %v528 = vmul.f32 %v508, %v526
    %v529 = vmul.f32 %v509, %v526
    %v530 = vmul.f32 %v510, %v526
    %v531 = vmul.f32 %v511, %v526
    %v532 = vmul.f32 %v512, %v526
    %v533 = vmul.f32 %v513, %v526
    %v534 = vmul.f32 %v514, %v526
    %v535 = vmul.f32 %v515, %v526
    %v536 = vmul.f32 %v516, %v526
    %v537 = vmul.f32 %v517, %v526
    %v538 = vmul.f32 %v518, %v526
    %v539 = vmul.f32 %v519, %v526
    %v540 = vmul.f32 %v520, %v526
    %v541 = vmul.f32 %v521, %v526
    %v542 = vmul.f32 %v522, %v526
    %v543 = vadd.f32 %v491, %v527
    %v544 = vadd.f32 %v492, %v528
    %v545 = vadd.f32 %v493, %v529
    %v546 = vadd.f32 %v494, %v530
    %v547 = vadd.f32 %v495, %v531
    %v548 = vadd.f32 %v496, %v532
    %v549 = vadd.f32 %v497, %v533
    %v550 = vadd.f32 %v498, %v534
    %v551 = vadd.f32 %v499, %v535
    %v552 = vadd.f32 %v500, %v536
    %v553 = vadd.f32 %v501, %v537
    %v554 = vadd.f32 %v502, %v538
    %v555 = vadd.f32 %v503, %v539
    %v556 = vadd.f32 %v504, %v540
    %v557 = vadd.f32 %v505, %v541
    %v558 = vadd.f32 %v506, %v542
    %v559 = vld [vmem:[#allocation2 + $0x2] sm:$0xff]
    %v560 = vld [vmem:[#allocation2 + $0x12] sm:$0xff]
    %v561 = vld [vmem:[#allocation2 + $0x22] sm:$0xff]
    %v562 = vld [vmem:[#allocation2 + $0x32] sm:$0xff]
    %v563 = vld [vmem:[#allocation2 + $0x42] sm:$0xff]
    %v564 = vld [vmem:[#allocation2 + $0x52] sm:$0xff]
    %v565 = vld [vmem:[#allocation2 + $0x62] sm:$0xff]
    %v566 = vld [vmem:[#allocation2 + $0x72] sm:$0xff]
    %v567 = vld [vmem:[#allocation2 + $0xa2] sm:$0xff]
    %v568 = vld [vmem:[#allocation2 + $0xb2] sm:$0xff]
    %v569 = vld [vmem:[#allocation2 + $0xc2] sm:$0xff]
    %v570 = vld [vmem:[#allocation2 + $0xd2] sm:$0xff]
    %v571 = vld [vmem:[#allocation2 + $0xe2] sm:$0xff]
    %v572 = vld [vmem:[#allocation2 + $0xf2] sm:$0xff]
    %v573 = vld [vmem:[#allocation2 + $0x102] sm:$0xff]
    %v574 = vld [vmem:[#allocation2 + $0x112] sm:$0xff]
    %v575 = vlaneseq
    %v576 = vshrl.u32 %v575, 7
    %v577 = vsub.s32 2, %v576
    %v578 = vrot.slane %v446, %v577
    %v579 = vmul.f32 %v559, %v578
    %v580 = vmul.f32 %v560, %v578
    %v581 = vmul.f32 %v561, %v578
    %v582 = vmul.f32 %v562, %v578
    %v583 = vmul.f32 %v563, %v578
    %v584 = vmul.f32 %v564, %v578
    %v585 = vmul.f32 %v565, %v578
    %v586 = vmul.f32 %v566, %v578
    %v587 = vmul.f32 %v567, %v578
    %v588 = vmul.f32 %v568, %v578
    %v589 = vmul.f32 %v569, %v578
    %v590 = vmul.f32 %v570, %v578
    %v591 = vmul.f32 %v571, %v578
    %v592 = vmul.f32 %v572, %v578
    %v593 = vmul.f32 %v573, %v578
    %v594 = vmul.f32 %v574, %v578
    %v595 = vadd.f32 %v543, %v579
    %v596 = vadd.f32 %v544, %v580
    %v597 = vadd.f32 %v545, %v581
    %v598 = vadd.f32 %v546, %v582
    %v599 = vadd.f32 %v547, %v583
    %v600 = vadd.f32 %v548, %v584
    %v601 = vadd.f32 %v549, %v585
    %v602 = vadd.f32 %v550, %v586
    %v603 = vadd.f32 %v551, %v587
    %v604 = vadd.f32 %v552, %v588
    %v605 = vadd.f32 %v553, %v589
    %v606 = vadd.f32 %v554, %v590
    %v607 = vadd.f32 %v555, %v591
    %v608 = vadd.f32 %v556, %v592
    %v609 = vadd.f32 %v557, %v593
    %v610 = vadd.f32 %v558, %v594
    %v611 = vld [vmem:[%s397] sm:$0xff]
    %v612 = vld [vmem:[%s397 + $0x10] sm:$0xff]
    %v613 = vld [vmem:[%s397 + $0x20] sm:$0xff]
    %v614 = vld [vmem:[%s397 + $0x30] sm:$0xff]
    %v615 = vld [vmem:[%s397 + $0x40] sm:$0xff]
    %v616 = vld [vmem:[%s397 + $0x50] sm:$0xff]
    %v617 = vld [vmem:[%s397 + $0x60] sm:$0xff]
    %v618 = vld [vmem:[%s397 + $0x70] sm:$0xff]
    %v619 = vld [vmem:[%s397 + $0xa0] sm:$0xff]
    %v620 = vld [vmem:[%s397 + $0xb0] sm:$0xff]
    %v621 = vld [vmem:[%s397 + $0xc0] sm:$0xff]
    %v622 = vld [vmem:[%s397 + $0xd0] sm:$0xff]
    %v623 = vld [vmem:[%s397 + $0xe0] sm:$0xff]
    %v624 = vld [vmem:[%s397 + $0xf0] sm:$0xff]
    %v625 = vld [vmem:[%s397 + $0x100] sm:$0xff]
    %v626 = vld [vmem:[%s397 + $0x110] sm:$0xff]
    %v627 = vlaneseq
    %v628 = vshrl.u32 %v627, 7
    %v629 = vsub.s32 3, %v628
    %v630 = vrot.slane %v446, %v629
    %v631 = vmul.f32 %v611, %v630
    %v632 = vmul.f32 %v612, %v630
    %v633 = vmul.f32 %v613, %v630
    %v634 = vmul.f32 %v614, %v630
    %v635 = vmul.f32 %v615, %v630
    %v636 = vmul.f32 %v616, %v630
    %v637 = vmul.f32 %v617, %v630
    %v638 = vmul.f32 %v618, %v630
    %v639 = vmul.f32 %v619, %v630
    %v640 = vmul.f32 %v620, %v630
    %v641 = vmul.f32 %v621, %v630
    %v642 = vmul.f32 %v622, %v630
    %v643 = vmul.f32 %v623, %v630
    %v644 = vmul.f32 %v624, %v630
    %v645 = vmul.f32 %v625, %v630
    %v646 = vmul.f32 %v626, %v630
    %v647 = vadd.f32 %v595, %v631
    %v648 = vadd.f32 %v596, %v632
    %v649 = vadd.f32 %v597, %v633
    %v650 = vadd.f32 %v598, %v634
    %v651 = vadd.f32 %v599, %v635
    %v652 = vadd.f32 %v600, %v636
    %v653 = vadd.f32 %v601, %v637
    %v654 = vadd.f32 %v602, %v638
    %v655 = vadd.f32 %v603, %v639
    %v656 = vadd.f32 %v604, %v640
    %v657 = vadd.f32 %v605, %v641
    %v658 = vadd.f32 %v606, %v642
    %v659 = vadd.f32 %v607, %v643
    %v660 = vadd.f32 %v608, %v644
    %v661 = vadd.f32 %v609, %v645
    %v662 = vadd.f32 %v610, %v646
    %v663 = vld [vmem:[%s397 + $0x1] sm:$0xff]
    %v664 = vld [vmem:[%s397 + $0x11] sm:$0xff]
    %v665 = vld [vmem:[%s397 + $0x21] sm:$0xff]
    %v666 = vld [vmem:[%s397 + $0x31] sm:$0xff]
    %v667 = vld [vmem:[%s397 + $0x41] sm:$0xff]
    %v668 = vld [vmem:[%s397 + $0x51] sm:$0xff]
    %v669 = vld [vmem:[%s397 + $0x61] sm:$0xff]
    %v670 = vld [vmem:[%s397 + $0x71] sm:$0xff]
    %v671 = vld [vmem:[%s397 + $0xa1] sm:$0xff]
    %v672 = vld [vmem:[%s397 + $0xb1] sm:$0xff]
    %v673 = vld [vmem:[%s397 + $0xc1] sm:$0xff]
    %v674 = vld [vmem:[%s397 + $0xd1] sm:$0xff]
    %v675 = vld [vmem:[%s397 + $0xe1] sm:$0xff]
    %v676 = vld [vmem:[%s397 + $0xf1] sm:$0xff]
    %v677 = vld [vmem:[%s397 + $0x101] sm:$0xff]
    %v678 = vld [vmem:[%s397 + $0x111] sm:$0xff]
    %v679 = vlaneseq
    %v680 = vshrl.u32 %v679, 7
    %v681 = vsub.s32 4, %v680
    %v682 = vrot.slane %v446, %v681
    %v683 = vmul.f32 %v663, %v682
    %v684 = vmul.f32 %v664, %v682
    %v685 = vmul.f32 %v665, %v682
    %v686 = vmul.f32 %v666, %v682
    %v687 = vmul.f32 %v667, %v682
    %v688 = vmul.f32 %v668, %v682
    %v689 = vmul.f32 %v669, %v682
    %v690 = vmul.f32 %v670, %v682
    %v691 = vmul.f32 %v671, %v682
    %v692 = vmul.f32 %v672, %v682
    %v693 = vmul.f32 %v673, %v682
    %v694 = vmul.f32 %v674, %v682
    %v695 = vmul.f32 %v675, %v682
    %v696 = vmul.f32 %v676, %v682
    %v697 = vmul.f32 %v677, %v682
    %v698 = vmul.f32 %v678, %v682
    %v699 = vadd.f32 %v647, %v683
    %v700 = vadd.f32 %v648, %v684
    %v701 = vadd.f32 %v649, %v685
    %v702 = vadd.f32 %v650, %v686
    %v703 = vadd.f32 %v651, %v687
    %v704 = vadd.f32 %v652, %v688
    %v705 = vadd.f32 %v653, %v689
    %v706 = vadd.f32 %v654, %v690
    %v707 = vadd.f32 %v655, %v691
    %v708 = vadd.f32 %v656, %v692
    %v709 = vadd.f32 %v657, %v693
    %v710 = vadd.f32 %v658, %v694
    %v711 = vadd.f32 %v659, %v695
    %v712 = vadd.f32 %v660, %v696
    %v713 = vadd.f32 %v661, %v697
    %v714 = vadd.f32 %v662, %v698
    %v715 = vld [vmem:[%s397 + $0x2] sm:$0xff]
    %v716 = vld [vmem:[%s397 + $0x12] sm:$0xff]
    %v717 = vld [vmem:[%s397 + $0x22] sm:$0xff]
    %v718 = vld [vmem:[%s397 + $0x32] sm:$0xff]
    %v719 = vld [vmem:[%s397 + $0x42] sm:$0xff]
    %v720 = vld [vmem:[%s397 + $0x52] sm:$0xff]
    %v721 = vld [vmem:[%s397 + $0x62] sm:$0xff]
    %v722 = vld [vmem:[%s397 + $0x72] sm:$0xff]
    %v723 = vld [vmem:[%s397 + $0xa2] sm:$0xff]
    %v724 = vld [vmem:[%s397 + $0xb2] sm:$0xff]
    %v725 = vld [vmem:[%s397 + $0xc2] sm:$0xff]
    %v726 = vld [vmem:[%s397 + $0xd2] sm:$0xff]
    %v727 = vld [vmem:[%s397 + $0xe2] sm:$0xff]
    %v728 = vld [vmem:[%s397 + $0xf2] sm:$0xff]
    %v729 = vld [vmem:[%s397 + $0x102] sm:$0xff]
    %v730 = vld [vmem:[%s397 + $0x112] sm:$0xff]
    %v731 = vlaneseq
    %v732 = vshrl.u32 %v731, 7
    %v733 = vsub.s32 5, %v732
    %v734 = vrot.slane %v446, %v733
    %v735 = vmul.f32 %v715, %v734
    %v736 = vmul.f32 %v716, %v734
    %v737 = vmul.f32 %v717, %v734
    %v738 = vmul.f32 %v718, %v734
    %v739 = vmul.f32 %v719, %v734
    %v740 = vmul.f32 %v720, %v734
    %v741 = vmul.f32 %v721, %v734
    %v742 = vmul.f32 %v722, %v734
    %v743 = vmul.f32 %v723, %v734
    %v744 = vmul.f32 %v724, %v734
    %v745 = vmul.f32 %v725, %v734
    %v746 = vmul.f32 %v726, %v734
    %v747 = vmul.f32 %v727, %v734
    %v748 = vmul.f32 %v728, %v734
    %v749 = vmul.f32 %v729, %v734
    %v750 = vmul.f32 %v730, %v734
    %v751 = vadd.f32 %v699, %v735
    %v752 = vadd.f32 %v700, %v736
    %v753 = vadd.f32 %v701, %v737
    %v754 = vadd.f32 %v702, %v738
    %v755 = vadd.f32 %v703, %v739
    %v756 = vadd.f32 %v704, %v740
    %v757 = vadd.f32 %v705, %v741
    %v758 = vadd.f32 %v706, %v742
    %v759 = vadd.f32 %v707, %v743
    %v760 = vadd.f32 %v708, %v744
    %v761 = vadd.f32 %v709, %v745
    %v762 = vadd.f32 %v710, %v746
    %v763 = vadd.f32 %v711, %v747
    %v764 = vadd.f32 %v712, %v748
    %v765 = vadd.f32 %v713, %v749
    %v766 = vadd.f32 %v714, %v750
    %s767 = scalar_lea.vmem [#allocation2], 32
    %v768 = vld [vmem:[%s767] sm:$0xff]
    %v769 = vld [vmem:[%s767 + $0x10] sm:$0xff]
    %v770 = vld [vmem:[%s767 + $0x20] sm:$0xff]
    %v771 = vld [vmem:[%s767 + $0x30] sm:$0xff]
    %v772 = vld [vmem:[%s767 + $0x40] sm:$0xff]
    %v773 = vld [vmem:[%s767 + $0x50] sm:$0xff]
    %v774 = vld [vmem:[%s767 + $0x60] sm:$0xff]
    %v775 = vld [vmem:[%s767 + $0x70] sm:$0xff]
    %v776 = vld [vmem:[%s767 + $0xa0] sm:$0xff]
    %v777 = vld [vmem:[%s767 + $0xb0] sm:$0xff]
    %v778 = vld [vmem:[%s767 + $0xc0] sm:$0xff]
    %v779 = vld [vmem:[%s767 + $0xd0] sm:$0xff]
    %v780 = vld [vmem:[%s767 + $0xe0] sm:$0xff]
    %v781 = vld [vmem:[%s767 + $0xf0] sm:$0xff]
    %v782 = vld [vmem:[%s767 + $0x100] sm:$0xff]
    %v783 = vld [vmem:[%s767 + $0x110] sm:$0xff]
    %v784 = vlaneseq
    %v785 = vshrl.u32 %v784, 7
    %v786 = vsub.s32 6, %v785
    %v787 = vrot.slane %v446, %v786
    %v788 = vmul.f32 %v768, %v787
    %v789 = vmul.f32 %v769, %v787
    %v790 = vmul.f32 %v770, %v787
    %v791 = vmul.f32 %v771, %v787
    %v792 = vmul.f32 %v772, %v787
    %v793 = vmul.f32 %v773, %v787
    %v794 = vmul.f32 %v774, %v787
    %v795 = vmul.f32 %v775, %v787
    %v796 = vmul.f32 %v776, %v787
    %v797 = vmul.f32 %v777, %v787
    %v798 = vmul.f32 %v778, %v787
    %v799 = vmul.f32 %v779, %v787
    %v800 = vmul.f32 %v780, %v787
    %v801 = vmul.f32 %v781, %v787
    %v802 = vmul.f32 %v782, %v787
    %v803 = vmul.f32 %v783, %v787
    %v804 = vadd.f32 %v751, %v788
    %v805 = vadd.f32 %v752, %v789
    %v806 = vadd.f32 %v753, %v790
    %v807 = vadd.f32 %v754, %v791
    %v808 = vadd.f32 %v755, %v792
    %v809 = vadd.f32 %v756, %v793
    %v810 = vadd.f32 %v757, %v794
    %v811 = vadd.f32 %v758, %v795
    %v812 = vadd.f32 %v759, %v796
    %v813 = vadd.f32 %v760, %v797
    %v814 = vadd.f32 %v761, %v798
    %v815 = vadd.f32 %v762, %v799
    %v816 = vadd.f32 %v763, %v800
    %v817 = vadd.f32 %v764, %v801
    %v818 = vadd.f32 %v765, %v802
    %v819 = vadd.f32 %v766, %v803
    %v820 = vld [vmem:[%s767 + $0x1] sm:$0xff]
    %v821 = vld [vmem:[%s767 + $0x11] sm:$0xff]
    %v822 = vld [vmem:[%s767 + $0x21] sm:$0xff]
    %v823 = vld [vmem:[%s767 + $0x31] sm:$0xff]
    %v824 = vld [vmem:[%s767 + $0x41] sm:$0xff]
    %v825 = vld [vmem:[%s767 + $0x51] sm:$0xff]
    %v826 = vld [vmem:[%s767 + $0x61] sm:$0xff]
    %v827 = vld [vmem:[%s767 + $0x71] sm:$0xff]
    %v828 = vld [vmem:[%s767 + $0xa1] sm:$0xff]
    %v829 = vld [vmem:[%s767 + $0xb1] sm:$0xff]
    %v830 = vld [vmem:[%s767 + $0xc1] sm:$0xff]
    %v831 = vld [vmem:[%s767 + $0xd1] sm:$0xff]
    %v832 = vld [vmem:[%s767 + $0xe1] sm:$0xff]
    %v833 = vld [vmem:[%s767 + $0xf1] sm:$0xff]
    %v834 = vld [vmem:[%s767 + $0x101] sm:$0xff]
    %v835 = vld [vmem:[%s767 + $0x111] sm:$0xff]
    %v836 = vlaneseq
    %v837 = vshrl.u32 %v836, 7
    %v838 = vsub.s32 7, %v837
    %v839 = vrot.slane %v446, %v838
    %v840 = vmul.f32 %v820, %v839
    %v841 = vmul.f32 %v821, %v839
    %v842 = vmul.f32 %v822, %v839
    %v843 = vmul.f32 %v823, %v839
    %v844 = vmul.f32 %v824, %v839
    %v845 = vmul.f32 %v825, %v839
    %v846 = vmul.f32 %v826, %v839
    %v847 = vmul.f32 %v827, %v839
    %v848 = vmul.f32 %v828, %v839
    %v849 = vmul.f32 %v829, %v839
    %v850 = vmul.f32 %v830, %v839
    %v851 = vmul.f32 %v831, %v839
    %v852 = vmul.f32 %v832, %v839
    %v853 = vmul.f32 %v833, %v839
    %v854 = vmul.f32 %v834, %v839
    %v855 = vmul.f32 %v835, %v839
    %v856 = vadd.f32 %v804, %v840
    %v857 = vadd.f32 %v805, %v841
    %v858 = vadd.f32 %v806, %v842
    %v859 = vadd.f32 %v807, %v843
    %v860 = vadd.f32 %v808, %v844
    %v861 = vadd.f32 %v809, %v845
    %v862 = vadd.f32 %v810, %v846
    %v863 = vadd.f32 %v811, %v847
    %v864 = vadd.f32 %v812, %v848
    %v865 = vadd.f32 %v813, %v849
    %v866 = vadd.f32 %v814, %v850
    %v867 = vadd.f32 %v815, %v851
    %v868 = vadd.f32 %v816, %v852
    %v869 = vadd.f32 %v817, %v853
    %v870 = vadd.f32 %v818, %v854
    %v871 = vadd.f32 %v819, %v855
    %v872 = vld [vmem:[%s767 + $0x2] sm:$0xff]
    %v873 = vld [vmem:[%s767 + $0x12] sm:$0xff]
    %v874 = vld [vmem:[%s767 + $0x22] sm:$0xff]
    %v875 = vld [vmem:[%s767 + $0x32] sm:$0xff]
    %v876 = vld [vmem:[%s767 + $0x42] sm:$0xff]
    %v877 = vld [vmem:[%s767 + $0x52] sm:$0xff]
    %v878 = vld [vmem:[%s767 + $0x62] sm:$0xff]
    %v879 = vld [vmem:[%s767 + $0x72] sm:$0xff]
    %v880 = vld [vmem:[%s767 + $0xa2] sm:$0xff]
    %v881 = vld [vmem:[%s767 + $0xb2] sm:$0xff]
    %v882 = vld [vmem:[%s767 + $0xc2] sm:$0xff]
    %v883 = vld [vmem:[%s767 + $0xd2] sm:$0xff]
    %v884 = vld [vmem:[%s767 + $0xe2] sm:$0xff]
    %v885 = vld [vmem:[%s767 + $0xf2] sm:$0xff]
    %v886 = vld [vmem:[%s767 + $0x102] sm:$0xff]
    %v887 = vld [vmem:[%s767 + $0x112] sm:$0xff]
    %v888 = vlaneseq
    %v889 = vshrl.u32 %v888, 7
    %v890 = vsub.s32 0, %v889
    %v891 = vrot.slane %v447, %v890
    %v892 = vmul.f32 %v872, %v891
    %v893 = vmul.f32 %v873, %v891
    %v894 = vmul.f32 %v874, %v891
    %v895 = vmul.f32 %v875, %v891
    %v896 = vmul.f32 %v876, %v891
    %v897 = vmul.f32 %v877, %v891
    %v898 = vmul.f32 %v878, %v891
    %v899 = vmul.f32 %v879, %v891
    %v900 = vmul.f32 %v880, %v891
    %v901 = vmul.f32 %v881, %v891
    %v902 = vmul.f32 %v882, %v891
    %v903 = vmul.f32 %v883, %v891
    %v904 = vmul.f32 %v884, %v891
    %v905 = vmul.f32 %v885, %v891
    %v906 = vmul.f32 %v886, %v891
    %v907 = vmul.f32 %v887, %v891
    %v908 = vadd.f32 %v856, %v892
    %v909 = vadd.f32 %v857, %v893
    %v910 = vadd.f32 %v858, %v894
    %v911 = vadd.f32 %v859, %v895
    %v912 = vadd.f32 %v860, %v896
    %v913 = vadd.f32 %v861, %v897
    %v914 = vadd.f32 %v862, %v898
    %v915 = vadd.f32 %v863, %v899
    %v916 = vadd.f32 %v864, %v900
    %v917 = vadd.f32 %v865, %v901
    %v918 = vadd.f32 %v866, %v902
    %v919 = vadd.f32 %v867, %v903
    %v920 = vadd.f32 %v868, %v904
    %v921 = vadd.f32 %v869, %v905
    %v922 = vadd.f32 %v870, %v906
    %v923 = vadd.f32 %v871, %v907
    %v924 = vpack.c.bf16 %v909, %v908
    %v925 = vpack.c.bf16 %v911, %v910
    %v926 = vpack.c.bf16 %v913, %v912
    %v927 = vpack.c.bf16 %v915, %v914
    %v928 = vpack.c.bf16 %v917, %v916
    %v929 = vpack.c.bf16 %v919, %v918
    %v930 = vpack.c.bf16 %v921, %v920
    %v931 = vpack.c.bf16 %v923, %v922
    %v932 = vld [vmem:[#allocation13] sm:$0xf]
    %v933 = vld [vmem:[#allocation13 + $0x4] sm:$0xf]
    %v934 = vld [vmem:[#allocation13 + $0x8] sm:$0xf]
    %v935 = vld [vmem:[#allocation13 + $0xc] sm:$0xf]
    %v936 = vld [vmem:[#allocation13 + $0x10] sm:$0xf]
    %v937 = vld [vmem:[#allocation13 + $0x14] sm:$0xf]
    %v938 = vld [vmem:[#allocation13 + $0x18] sm:$0xf]
    %v939 = vld [vmem:[#allocation13 + $0x1c] sm:$0xf]
    %v940 = vld [vmem:[#allocation13 + $0x20] sm:$0xf]
    %v941 = vld [vmem:[#allocation13 + $0x24] sm:$0xf]
    %v942 = vld [vmem:[#allocation13 + $0x28] sm:$0xf]
    %v943 = vld [vmem:[#allocation13 + $0x2c] sm:$0xf]
    %v944 = vld [vmem:[#allocation13 + $0x30] sm:$0xf]
    %v945 = vld [vmem:[#allocation13 + $0x34] sm:$0xf]
    %v946 = vld [vmem:[#allocation13 + $0x38] sm:$0xf]
    %v947 = vld [vmem:[#allocation13 + $0x3c] sm:$0xf]
    %v948 = vld [vmem:[#allocation15] sm:$0x1]
    %v950 = vlaneseq
    %v951 = vshrl.u32 %v950, 7
    %v952 = vsub.s32 0, %v951
    %v953 = vrot.slane %v948, %v952
    %v971 = vunpack.c.l.b16 %v932
    %v972 = vunpack.c.l.b16 %v933
    %v973 = vunpack.c.l.b16 %v934
    %v974 = vunpack.c.l.b16 %v935
    %v975 = vunpack.c.l.b16 %v936
    %v976 = vunpack.c.l.b16 %v937
    %v977 = vunpack.c.l.b16 %v938
    %v978 = vunpack.c.l.b16 %v939
    %v979 = vunpack.c.l.b16 %v940
    %v980 = vunpack.c.l.b16 %v941
    %v981 = vunpack.c.l.b16 %v942
    %v982 = vunpack.c.l.b16 %v943
    %v983 = vunpack.c.l.b16 %v944
    %v984 = vunpack.c.l.b16 %v945
    %v985 = vunpack.c.l.b16 %v946
    %v986 = vunpack.c.l.b16 %v947
    %v987 = vpack.c.b16 %v972, %v971
    %v988 = vpack.c.b16 %v974, %v973
    %v989 = vpack.c.b16 %v976, %v975
    %v990 = vpack.c.b16 %v978, %v977
    %v991 = vpack.c.b16 %v980, %v979
    %v992 = vpack.c.b16 %v982, %v981
    %v993 = vpack.c.b16 %v984, %v983
    %v994 = vpack.c.b16 %v986, %v985
    %1003 = vmatprep.subr.bf16.mxu0 0
    %1004 = vmatpush1.bf16.msra.mxu0 %v987
    %1005 = vmatprep.subr.bf16.mxu0 0
    %1006 = vmatpush1.bf16.msra.mxu0 %v988
    %1007 = vmatprep.subr.bf16.mxu0 0
    %1008 = vmatpush1.bf16.msra.mxu0 %v989
    %1009 = vmatprep.subr.bf16.mxu0 0
    %1010 = vmatpush1.bf16.msra.mxu0 %v990
    %1011 = vmatprep.subr.bf16.mxu0 0
    %1012 = vmatpush1.bf16.msra.mxu0 %v991
    %1013 = vmatprep.subr.bf16.mxu0 0
    %1014 = vmatpush1.bf16.msra.mxu0 %v992
    %1015 = vmatprep.subr.bf16.mxu0 0
    %1016 = vmatpush1.bf16.msra.mxu0 %v993
    %1017 = vmatprep.subr.bf16.mxu0 0
    %1018 = vmatpush1.bf16.msra.mxu0 %v994
    %1019 = vmatprep.subr.bf16.mxu0 0
    %1020 = vmatpush1.bf16.msra.mxu0 0
    %1021 = vmatprep.subr.bf16.mxu0 0
    %1022 = vmatpush1.bf16.msra.mxu0 0
    %1023 = vmatprep.subr.bf16.mxu0 0
    %1024 = vmatpush1.bf16.msra.mxu0 0
    %1025 = vmatprep.subr.bf16.mxu0 0
    %1026 = vmatpush1.bf16.msra.mxu0 0
    %1027 = vmatprep.subr.bf16.mxu0 0
    %1028 = vmatpush1.bf16.msra.mxu0 0
    %1029 = vmatprep.subr.bf16.mxu0 0
    %1030 = vmatpush1.bf16.msra.mxu0 0
    %1031 = vmatprep.subr.bf16.mxu0 0
    %1032 = vmatpush1.bf16.msra.mxu0 0
    %1033 = vmatprep.subr.bf16.mxu0 0
    %1034 = vmatpush1.bf16.msra.mxu0 0
    %1035 = vmatprep.mubr.bf16.mxu0 0
    %1036 = vmatmul.mubr.bf16.gmra.mrb[0].mxu0 %v924
    %v1037 = vpop.f32.mrb[0].mxu0
    %v1038 = vadd.f32 %v953, %v1037
    %v1039 = vpop.f32.mrb[0].mxu0
    %v1040 = vpop.f32.mrb[0].mxu0
    %v1041 = vadd.f32 %v953, %v1040
    %v1042 = vpop.f32.mrb[0].mxu0
    %1043 = vmatprep.mubr.bf16.mxu0 0
    %1044 = vmatmul.mubr.bf16.gmra.mrb[0].mxu0 %v925
    %v1045 = vpop.f32.mrb[0].mxu0
    %v1046 = vadd.f32 %v953, %v1045
    %v1047 = vpop.f32.mrb[0].mxu0
    %v1048 = vpop.f32.mrb[0].mxu0
    %v1049 = vadd.f32 %v953, %v1048
    %v1050 = vpop.f32.mrb[0].mxu0
    %1051 = vmatprep.mubr.bf16.mxu0 0
    %1052 = vmatmul.mubr.bf16.gmra.mrb[0].mxu0 %v926
    %v1053 = vpop.f32.mrb[0].mxu0
    %v1054 = vadd.f32 %v953, %v1053
    %v1055 = vpop.f32.mrb[0].mxu0
    %v1056 = vpop.f32.mrb[0].mxu0
    %v1057 = vadd.f32 %v953, %v1056
    %v1058 = vpop.f32.mrb[0].mxu0
    %1059 = vmatprep.mubr.bf16.mxu0 0
    %1060 = vmatmul.mubr.bf16.gmra.mrb[0].mxu0 %v927
    %v1061 = vpop.f32.mrb[0].mxu0
    %v1062 = vadd.f32 %v953, %v1061
    %v1063 = vpop.f32.mrb[0].mxu0
    %v1064 = vpop.f32.mrb[0].mxu0
    %v1065 = vadd.f32 %v953, %v1064
    %v1066 = vpop.f32.mrb[0].mxu0
    %1067 = vmatprep.mubr.bf16.mxu0 0
    %1068 = vmatmul.mubr.bf16.gmra.mrb[0].mxu0 %v928
    %v1069 = vpop.f32.mrb[0].mxu0
    %v1070 = vadd.f32 %v953, %v1069
    %v1071 = vpop.f32.mrb[0].mxu0
    %v1072 = vpop.f32.mrb[0].mxu0
    %v1073 = vadd.f32 %v953, %v1072
    %v1074 = vpop.f32.mrb[0].mxu0
    %1075 = vmatprep.mubr.bf16.mxu0 0
    %1076 = vmatmul.mubr.bf16.gmra.mrb[0].mxu0 %v929
    %v1077 = vpop.f32.mrb[0].mxu0
    %v1078 = vadd.f32 %v953, %v1077
    %v1079 = vpop.f32.mrb[0].mxu0
    %v1080 = vpop.f32.mrb[0].mxu0
    %v1081 = vadd.f32 %v953, %v1080
    %v1082 = vpop.f32.mrb[0].mxu0
    %1083 = vmatprep.mubr.bf16.mxu0 0
    %1084 = vmatmul.mubr.bf16.gmra.mrb[0].mxu0 %v930
    %v1085 = vpop.f32.mrb[0].mxu0
    %v1086 = vadd.f32 %v953, %v1085
    %v1087 = vpop.f32.mrb[0].mxu0
    %v1088 = vpop.f32.mrb[0].mxu0
    %v1089 = vadd.f32 %v953, %v1088
    %v1090 = vpop.f32.mrb[0].mxu0
    %1091 = vmatprep.mubr.bf16.mxu0 0
    %1092 = vmatmul.mubr.bf16.gmra.mrb[0].mxu0 %v931
    %v1093 = vpop.f32.mrb[0].mxu0
    %v1094 = vadd.f32 %v953, %v1093
    %v1095 = vpop.f32.mrb[0].mxu0
    %v1096 = vpop.f32.mrb[0].mxu0
    %v1097 = vadd.f32 %v953, %v1096
    %v1098 = vpop.f32.mrb[0].mxu0
    %1099 = vdwg.mxu0
    %1100 = vst [vmem:[#allocation24] sm:$0xff] %v1038
    %1101 = vst [vmem:[#allocation24 + $0x8] sm:$0xff] %v1041
    %1102 = vst [vmem:[#allocation24 + $0x10] sm:$0xff] %v1046
    %1103 = vst [vmem:[#allocation24 + $0x18] sm:$0xff] %v1049
    %1104 = vst [vmem:[#allocation24 + $0x20] sm:$0xff] %v1054
    %1105 = vst [vmem:[#allocation24 + $0x28] sm:$0xff] %v1057
    %1106 = vst [vmem:[#allocation24 + $0x30] sm:$0xff] %v1062
    %1107 = vst [vmem:[#allocation24 + $0x38] sm:$0xff] %v1065
    %1108 = vst [vmem:[#allocation24 + $0x40] sm:$0xff] %v1070
    %1109 = vst [vmem:[#allocation24 + $0x48] sm:$0xff] %v1073
    %1110 = vst [vmem:[#allocation24 + $0x50] sm:$0xff] %v1078
    %1111 = vst [vmem:[#allocation24 + $0x58] sm:$0xff] %v1081
    %1112 = vst [vmem:[#allocation24 + $0x60] sm:$0xff] %v1086
    %1113 = vst [vmem:[#allocation24 + $0x68] sm:$0xff] %v1089
    %1114 = vst [vmem:[#allocation24 + $0x70] sm:$0xff] %v1094
    %1115 = vst [vmem:[#allocation24 + $0x78] sm:$0xff] %v1097
    %v1116 = vld [vmem:[#allocation7] sm:$0xff]
    %v1117 = vld [vmem:[#allocation7 + $0x8] sm:$0xff]
    %v1118 = vld [vmem:[#allocation7 + $0x10] sm:$0xff]
    %v1119 = vld [vmem:[#allocation7 + $0x18] sm:$0xff]
    %v1120 = vld [vmem:[#allocation7 + $0x20] sm:$0xff]
    %v1121 = vld [vmem:[#allocation7 + $0x28] sm:$0xff]
    %v1122 = vld [vmem:[#allocation7 + $0x30] sm:$0xff]
    %v1123 = vld [vmem:[#allocation7 + $0x38] sm:$0xff]
    %v1124 = vld [vmem:[#allocation7 + $0x40] sm:$0xff]
    %v1125 = vld [vmem:[#allocation7 + $0x48] sm:$0xff]
    %v1126 = vld [vmem:[#allocation7 + $0x50] sm:$0xff]
    %v1127 = vld [vmem:[#allocation7 + $0x58] sm:$0xff]
    %v1128 = vld [vmem:[#allocation7 + $0x60] sm:$0xff]
    %v1129 = vld [vmem:[#allocation7 + $0x68] sm:$0xff]
    %v1130 = vld [vmem:[#allocation7 + $0x70] sm:$0xff]
    %v1131 = vld [vmem:[#allocation7 + $0x78] sm:$0xff]
    %v1132 = vpack.c.bf16 %v1117, %v1116
    %v1133 = vpack.c.bf16 %v1119, %v1118
    %v1134 = vpack.c.bf16 %v1121, %v1120
    %v1135 = vpack.c.bf16 %v1123, %v1122
    %v1136 = vpack.c.bf16 %v1125, %v1124
    %v1137 = vpack.c.bf16 %v1127, %v1126
    %v1138 = vpack.c.bf16 %v1129, %v1128
    %v1139 = vpack.c.bf16 %v1131, %v1130
    %v1140 = vld [vmem:[#allocation16] sm:$0xff]
    %v1141 = vld [vmem:[#allocation16 + $0x8] sm:$0xff]
    %v1142 = vld [vmem:[#allocation16 + $0x10] sm:$0xff]
    %v1143 = vld [vmem:[#allocation16 + $0x18] sm:$0xff]
    %v1144 = vld [vmem:[#allocation16 + $0x20] sm:$0xff]
    %v1145 = vld [vmem:[#allocation16 + $0x28] sm:$0xff]
    %v1146 = vld [vmem:[#allocation16 + $0x30] sm:$0xff]
    %v1147 = vld [vmem:[#allocation16 + $0x38] sm:$0xff]
    %v1148 = vld [vmem:[#allocation16 + $0x40] sm:$0xff]
    %v1149 = vld [vmem:[#allocation16 + $0x48] sm:$0xff]
    %v1150 = vld [vmem:[#allocation16 + $0x50] sm:$0xff]
    %v1151 = vld [vmem:[#allocation16 + $0x58] sm:$0xff]
    %v1152 = vld [vmem:[#allocation16 + $0x60] sm:$0xff]
    %v1153 = vld [vmem:[#allocation16 + $0x68] sm:$0xff]
    %v1154 = vld [vmem:[#allocation16 + $0x70] sm:$0xff]
    %v1155 = vld [vmem:[#allocation16 + $0x78] sm:$0xff]
    %v1156 = vld [vmem:[#allocation18] sm:$0x3]
    %v1158 = vlaneseq
    %v1159 = vshrl.u32 %v1158, 7
    %v1160 = vsub.s32 0, %v1159
    %v1161 = vrot.slane %v1156, %v1160
    %v1162 = vlaneseq
    %v1163 = vshrl.u32 %v1162, 7
    %v1164 = vsub.s32 1, %v1163
    %v1165 = vrot.slane %v1156, %v1164
    %v1184 = vunpack.c.l.b16 %v1140
    %v1185 = vunpack.c.h.b16 %v1140
    %v1186 = vunpack.c.l.b16 %v1141
    %v1187 = vunpack.c.h.b16 %v1141
    %v1188 = vunpack.c.l.b16 %v1142
    %v1189 = vunpack.c.h.b16 %v1142
    %v1190 = vunpack.c.l.b16 %v1143
    %v1191 = vunpack.c.h.b16 %v1143
    %v1192 = vunpack.c.l.b16 %v1144
    %v1193 = vunpack.c.h.b16 %v1144
    %v1194 = vunpack.c.l.b16 %v1145
    %v1195 = vunpack.c.h.b16 %v1145
    %v1196 = vunpack.c.l.b16 %v1146
    %v1197 = vunpack.c.h.b16 %v1146
    %v1198 = vunpack.c.l.b16 %v1147
    %v1199 = vunpack.c.h.b16 %v1147
    %v1200 = vunpack.c.l.b16 %v1148
    %v1201 = vunpack.c.h.b16 %v1148
    %v1202 = vunpack.c.l.b16 %v1149
    %v1203 = vunpack.c.h.b16 %v1149
    %v1204 = vunpack.c.l.b16 %v1150
    %v1205 = vunpack.c.h.b16 %v1150
    %v1206 = vunpack.c.l.b16 %v1151
    %v1207 = vunpack.c.h.b16 %v1151
    %v1208 = vunpack.c.l.b16 %v1152
    %v1209 = vunpack.c.h.b16 %v1152
    %v1210 = vunpack.c.l.b16 %v1153
    %v1211 = vunpack.c.h.b16 %v1153
    %v1212 = vunpack.c.l.b16 %v1154
    %v1213 = vunpack.c.h.b16 %v1154
    %v1214 = vunpack.c.l.b16 %v1155
    %v1215 = vunpack.c.h.b16 %v1155
    %v1216 = vpack.c.b16 %v1186, %v1184
    %v1217 = vpack.c.b16 %v1187, %v1185
    %v1218 = vpack.c.b16 %v1190, %v1188
    %v1219 = vpack.c.b16 %v1191, %v1189
    %v1220 = vpack.c.b16 %v1194, %v1192
    %v1221 = vpack.c.b16 %v1195, %v1193
    %v1222 = vpack.c.b16 %v1198, %v1196
    %v1223 = vpack.c.b16 %v1199, %v1197
    %v1224 = vpack.c.b16 %v1202, %v1200
    %v1225 = vpack.c.b16 %v1203, %v1201
    %v1226 = vpack.c.b16 %v1206, %v1204
    %v1227 = vpack.c.b16 %v1207, %v1205
    %v1228 = vpack.c.b16 %v1210, %v1208
    %v1229 = vpack.c.b16 %v1211, %v1209
    %v1230 = vpack.c.b16 %v1214, %v1212
    %v1231 = vpack.c.b16 %v1215, %v1213
    %1248 = vmatprep.subr.bf16.mxu0 %v1217
    %1249 = vmatpush1.bf16.msra.mxu0 %v1216
    %1250 = vmatprep.subr.bf16.mxu0 %v1219
    %1251 = vmatpush1.bf16.msra.mxu0 %v1218
    %1252 = vmatprep.subr.bf16.mxu0 %v1221
    %1253 = vmatpush1.bf16.msra.mxu0 %v1220
    %1254 = vmatprep.subr.bf16.mxu0 %v1223
    %1255 = vmatpush1.bf16.msra.mxu0 %v1222
    %1256 = vmatprep.subr.bf16.mxu0 %v1225
    %1257 = vmatpush1.bf16.msra.mxu0 %v1224
    %1258 = vmatprep.subr.bf16.mxu0 %v1227
    %1259 = vmatpush1.bf16.msra.mxu0 %v1226
    %1260 = vmatprep.subr.bf16.mxu0 %v1229
    %1261 = vmatpush1.bf16.msra.mxu0 %v1228
    %1262 = vmatprep.subr.bf16.mxu0 %v1231
    %1263 = vmatpush1.bf16.msra.mxu0 %v1230
    %1264 = vmatprep.subr.bf16.mxu0 0
    %1265 = vmatpush1.bf16.msra.mxu0 0
    %1266 = vmatprep.subr.bf16.mxu0 0
    %1267 = vmatpush1.bf16.msra.mxu0 0
    %1268 = vmatprep.subr.bf16.mxu0 0
    %1269 = vmatpush1.bf16.msra.mxu0 0
    %1270 = vmatprep.subr.bf16.mxu0 0
    %1271 = vmatpush1.bf16.msra.mxu0 0
    %1272 = vmatprep.subr.bf16.mxu0 0
    %1273 = vmatpush1.bf16.msra.mxu0 0
    %1274 = vmatprep.subr.bf16.mxu0 0
    %1275 = vmatpush1.bf16.msra.mxu0 0
    %1276 = vmatprep.subr.bf16.mxu0 0
    %1277 = vmatpush1.bf16.msra.mxu0 0
    %1278 = vmatprep.subr.bf16.mxu0 0
    %1279 = vmatpush1.bf16.msra.mxu0 0
    %1280 = vmatprep.mubr.bf16.mxu0 0
    %1281 = vmatmul.mubr.bf16.gmra.mrb[0].mxu0 %v1132
    %v1282 = vpop.f32.mrb[0].mxu0
    %v1283 = vadd.f32 %v1161, %v1282
    %v1284 = vpop.f32.mrb[0].mxu0
    %v1285 = vadd.f32 %v1165, %v1284
    %v1286 = vpop.f32.mrb[0].mxu0
    %v1287 = vadd.f32 %v1161, %v1286
    %v1288 = vpop.f32.mrb[0].mxu0
    %v1289 = vadd.f32 %v1165, %v1288
    %1290 = vmatprep.mubr.bf16.mxu0 0
    %1291 = vmatmul.mubr.bf16.gmra.mrb[0].mxu0 %v1133
    %v1292 = vpop.f32.mrb[0].mxu0
    %v1293 = vadd.f32 %v1161, %v1292
    %v1294 = vpop.f32.mrb[0].mxu0
    %v1295 = vadd.f32 %v1165, %v1294
    %v1296 = vpop.f32.mrb[0].mxu0
    %v1297 = vadd.f32 %v1161, %v1296
    %v1298 = vpop.f32.mrb[0].mxu0
    %v1299 = vadd.f32 %v1165, %v1298
    %1300 = vmatprep.mubr.bf16.mxu0 0
    %1301 = vmatmul.mubr.bf16.gmra.mrb[0].mxu0 %v1134
    %v1302 = vpop.f32.mrb[0].mxu0
    %v1303 = vadd.f32 %v1161, %v1302
    %v1304 = vpop.f32.mrb[0].mxu0
    %v1305 = vadd.f32 %v1165, %v1304
    %v1306 = vpop.f32.mrb[0].mxu0
    %v1307 = vadd.f32 %v1161, %v1306
    %v1308 = vpop.f32.mrb[0].mxu0
    %v1309 = vadd.f32 %v1165, %v1308
    %1310 = vmatprep.mubr.bf16.mxu0 0
    %1311 = vmatmul.mubr.bf16.gmra.mrb[0].mxu0 %v1135
    %v1312 = vpop.f32.mrb[0].mxu0
    %v1313 = vadd.f32 %v1161, %v1312
    %v1314 = vpop.f32.mrb[0].mxu0
    %v1315 = vadd.f32 %v1165, %v1314
    %v1316 = vpop.f32.mrb[0].mxu0
    %v1317 = vadd.f32 %v1161, %v1316
    %v1318 = vpop.f32.mrb[0].mxu0
    %v1319 = vadd.f32 %v1165, %v1318
    %1320 = vmatprep.mubr.bf16.mxu0 0
    %1321 = vmatmul.mubr.bf16.gmra.mrb[0].mxu0 %v1136
    %v1322 = vpop.f32.mrb[0].mxu0
    %v1323 = vadd.f32 %v1161, %v1322
    %v1324 = vpop.f32.mrb[0].mxu0
    %v1325 = vadd.f32 %v1165, %v1324
    %v1326 = vpop.f32.mrb[0].mxu0
    %v1327 = vadd.f32 %v1161, %v1326
    %v1328 = vpop.f32.mrb[0].mxu0
    %v1329 = vadd.f32 %v1165, %v1328
    %1330 = vmatprep.mubr.bf16.mxu0 0
    %1331 = vmatmul.mubr.bf16.gmra.mrb[0].mxu0 %v1137
    %v1332 = vpop.f32.mrb[0].mxu0
    %v1333 = vadd.f32 %v1161, %v1332
    %v1334 = vpop.f32.mrb[0].mxu0
    %v1335 = vadd.f32 %v1165, %v1334
    %v1336 = vpop.f32.mrb[0].mxu0
    %v1337 = vadd.f32 %v1161, %v1336
    %v1338 = vpop.f32.mrb[0].mxu0
    %v1339 = vadd.f32 %v1165, %v1338
    %1340 = vmatprep.mubr.bf16.mxu0 0
    %1341 = vmatmul.mubr.bf16.gmra.mrb[0].mxu0 %v1138
    %v1342 = vpop.f32.mrb[0].mxu0
    %v1343 = vadd.f32 %v1161, %v1342
    %v1344 = vpop.f32.mrb[0].mxu0
    %v1345 = vadd.f32 %v1165, %v1344
    %v1346 = vpop.f32.mrb[0].mxu0
    %v1347 = vadd.f32 %v1161, %v1346
    %v1348 = vpop.f32.mrb[0].mxu0
    %v1349 = vadd.f32 %v1165, %v1348
    %1350 = vmatprep.mubr.bf16.mxu0 0
    %1351 = vmatmul.mubr.bf16.gmra.mrb[0].mxu0 %v1139
    %v1352 = vpop.f32.mrb[0].mxu0
    %v1353 = vadd.f32 %v1161, %v1352
    %v1354 = vpop.f32.mrb[0].mxu0
    %v1355 = vadd.f32 %v1165, %v1354
    %v1356 = vpop.f32.mrb[0].mxu0
    %v1357 = vadd.f32 %v1161, %v1356
    %v1358 = vpop.f32.mrb[0].mxu0
    %v1359 = vadd.f32 %v1165, %v1358
    %1360 = vdwg.mxu0
    %1361 = vst [vmem:[#allocation3] sm:$0xff] 0.0
    %1362 = vst [vmem:[#allocation3 + $0x8] sm:$0xff] 0.0
    %1363 = vst [vmem:[#allocation3 + $0x10] sm:$0xff] 0.0
    %1364 = vst [vmem:[#allocation3 + $0x18] sm:$0xff] 0.0
    %1365 = vst [vmem:[#allocation3 + $0x140] sm:$0xff] 0.0
    %1366 = vst [vmem:[#allocation3 + $0x148] sm:$0xff] 0.0
    %1367 = vst [vmem:[#allocation3 + $0x150] sm:$0xff] 0.0
    %1368 = vst [vmem:[#allocation3 + $0x158] sm:$0xff] 0.0
    %s1369 = scalar_lea.vmem [#allocation3], 288
    %1370 = vst [vmem:[%s1369] sm:$0xff] 0.0
    %1371 = vst [vmem:[%s1369 + $0x8] sm:$0xff] 0.0
    %1372 = vst [vmem:[%s1369 + $0x10] sm:$0xff] 0.0
    %1373 = vst [vmem:[%s1369 + $0x18] sm:$0xff] 0.0
    %1374 = vst [vmem:[%s1369 + $0x140] sm:$0xff] 0.0
    %1375 = vst [vmem:[%s1369 + $0x148] sm:$0xff] 0.0
    %1376 = vst [vmem:[%s1369 + $0x150] sm:$0xff] 0.0
    %1377 = vst [vmem:[%s1369 + $0x158] sm:$0xff] 0.0
    %s1378 = scalar_lea.vmem [#allocation3], 32
    %v1379 = vlaneseq
    %vm1380 = vcmp.ge.s32.totalorder %v1379, 0
    %vm1381 = vcmp.lt.s32.totalorder %v1379, 256
    %vm1382 = vmand %vm1380, %vm1381
    %1383 = vst.msk [vmem:[%s1378] ss:$8 sm:$0x3] %vm1382, 0.0
    %1384 = vst.msk [vmem:[%s1378] ss:$8 sm:$0x0] %vm1382, 0.0
    %s1385 = scalar_lea.vmem %s1378, 32 [#allocation3]
    %1386 = vst.msk [vmem:[%s1385] ss:$8 sm:$0x3] %vm1382, 0.0
    %1387 = vst.msk [vmem:[%s1385] ss:$8 sm:$0x0] %vm1382, 0.0
    %s1388 = scalar_lea.vmem %s1378, 64 [#allocation3]
    %1389 = vst.msk [vmem:[%s1388] ss:$8 sm:$0x3] %vm1382, 0.0
    %1390 = vst.msk [vmem:[%s1388] ss:$8 sm:$0x0] %vm1382, 0.0
    %s1391 = scalar_lea.vmem %s1378, 96 [#allocation3]
    %1392 = vst.msk [vmem:[%s1391] ss:$8 sm:$0x3] %vm1382, 0.0
    %1393 = vst.msk [vmem:[%s1391] ss:$8 sm:$0x0] %vm1382, 0.0
    %s1394 = scalar_lea.vmem %s1378, 128 [#allocation3]
    %1395 = vst.msk [vmem:[%s1394] ss:$8 sm:$0x3] %vm1382, 0.0
    %1396 = vst.msk [vmem:[%s1394] ss:$8 sm:$0x0] %vm1382, 0.0
    %s1397 = scalar_lea.vmem %s1378, 160 [#allocation3]
    %1398 = vst.msk [vmem:[%s1397] ss:$8 sm:$0x3] %vm1382, 0.0
    %1399 = vst.msk [vmem:[%s1397] ss:$8 sm:$0x0] %vm1382, 0.0
    %s1400 = scalar_lea.vmem %s1378, 192 [#allocation3]
    %1401 = vst.msk [vmem:[%s1400] ss:$8 sm:$0x3] %vm1382, 0.0
    %1402 = vst.msk [vmem:[%s1400] ss:$8 sm:$0x0] %vm1382, 0.0
    %s1403 = scalar_lea.vmem %s1378, 224 [#allocation3]
    %1404 = vst.msk [vmem:[%s1403] ss:$8 sm:$0x3] %vm1382, 0.0
    %1405 = vst.msk [vmem:[%s1403] ss:$8 sm:$0x0] %vm1382, 0.0
    %s1406 = scalar_lea.vmem %s1378, 320 [#allocation3]
    %1407 = vst.msk [vmem:[%s1406] ss:$8 sm:$0x3] %vm1382, 0.0
    %1408 = vst.msk [vmem:[%s1406] ss:$8 sm:$0x0] %vm1382, 0.0
    %s1409 = scalar_lea.vmem %s1378, 352 [#allocation3]
    %1410 = vst.msk [vmem:[%s1409] ss:$8 sm:$0x3] %vm1382, 0.0
    %1411 = vst.msk [vmem:[%s1409] ss:$8 sm:$0x0] %vm1382, 0.0
    %s1412 = scalar_lea.vmem %s1378, 384 [#allocation3]
    %1413 = vst.msk [vmem:[%s1412] ss:$8 sm:$0x3] %vm1382, 0.0
    %1414 = vst.msk [vmem:[%s1412] ss:$8 sm:$0x0] %vm1382, 0.0
    %s1415 = scalar_lea.vmem %s1378, 416 [#allocation3]
    %1416 = vst.msk [vmem:[%s1415] ss:$8 sm:$0x3] %vm1382, 0.0
    %1417 = vst.msk [vmem:[%s1415] ss:$8 sm:$0x0] %vm1382, 0.0
    %s1418 = scalar_lea.vmem %s1378, 448 [#allocation3]
    %1419 = vst.msk [vmem:[%s1418] ss:$8 sm:$0x3] %vm1382, 0.0
    %1420 = vst.msk [vmem:[%s1418] ss:$8 sm:$0x0] %vm1382, 0.0
    %s1421 = scalar_lea.vmem %s1378, 480 [#allocation3]
    %1422 = vst.msk [vmem:[%s1421] ss:$8 sm:$0x3] %vm1382, 0.0
    %1423 = vst.msk [vmem:[%s1421] ss:$8 sm:$0x0] %vm1382, 0.0
    %s1424 = scalar_lea.vmem %s1378, 512 [#allocation3]
    %1425 = vst.msk [vmem:[%s1424] ss:$8 sm:$0x3] %vm1382, 0.0
    %1426 = vst.msk [vmem:[%s1424] ss:$8 sm:$0x0] %vm1382, 0.0
    %s1427 = scalar_lea.vmem %s1378, 544 [#allocation3]
    %1428 = vst.msk [vmem:[%s1427] ss:$8 sm:$0x3] %vm1382, 0.0
    %1429 = vst.msk [vmem:[%s1427] ss:$8 sm:$0x0] %vm1382, 0.0
    %s1430 = scalar_lea.vmem %s1378, 17 [#allocation3]
    %1431 = vst.msk [vmem:[%s1430] ss:$8 sm:$0x3] %vm1382, 0.0
    %1432 = vst.msk [vmem:[%s1430] ss:$8 sm:$0x0] %vm1382, 0.0
    %s1433 = scalar_lea.vmem %s1378, 49 [#allocation3]
    %1434 = vst.msk [vmem:[%s1433] ss:$8 sm:$0x3] %vm1382, 0.0
    %1435 = vst.msk [vmem:[%s1433] ss:$8 sm:$0x0] %vm1382, 0.0
    %s1436 = scalar_lea.vmem %s1378, 81 [#allocation3]
    %1437 = vst.msk [vmem:[%s1436] ss:$8 sm:$0x3] %vm1382, 0.0
    %1438 = vst.msk [vmem:[%s1436] ss:$8 sm:$0x0] %vm1382, 0.0
    %s1439 = scalar_lea.vmem %s1378, 113 [#allocation3]
    %1440 = vst.msk [vmem:[%s1439] ss:$8 sm:$0x3] %vm1382, 0.0
    %1441 = vst.msk [vmem:[%s1439] ss:$8 sm:$0x0] %vm1382, 0.0
    %s1442 = scalar_lea.vmem %s1378, 145 [#allocation3]
    %1443 = vst.msk [vmem:[%s1442] ss:$8 sm:$0x3] %vm1382, 0.0
    %1444 = vst.msk [vmem:[%s1442] ss:$8 sm:$0x0] %vm1382, 0.0
    %s1445 = scalar_lea.vmem %s1378, 177 [#allocation3]
    %1446 = vst.msk [vmem:[%s1445] ss:$8 sm:$0x3] %vm1382, 0.0
    %1447 = vst.msk [vmem:[%s1445] ss:$8 sm:$0x0] %vm1382, 0.0
    %s1448 = scalar_lea.vmem %s1378, 209 [#allocation3]
    %1449 = vst.msk [vmem:[%s1448] ss:$8 sm:$0x3] %vm1382, 0.0
    %1450 = vst.msk [vmem:[%s1448] ss:$8 sm:$0x0] %vm1382, 0.0
    %s1451 = scalar_lea.vmem %s1378, 241 [#allocation3]
    %1452 = vst.msk [vmem:[%s1451] ss:$8 sm:$0x3] %vm1382, 0.0
    %1453 = vst.msk [vmem:[%s1451] ss:$8 sm:$0x0] %vm1382, 0.0
    %s1454 = scalar_lea.vmem %s1378, 337 [#allocation3]
    %1455 = vst.msk [vmem:[%s1454] ss:$8 sm:$0x3] %vm1382, 0.0
    %1456 = vst.msk [vmem:[%s1454] ss:$8 sm:$0x0] %vm1382, 0.0
    %s1457 = scalar_lea.vmem %s1378, 369 [#allocation3]
    %1458 = vst.msk [vmem:[%s1457] ss:$8 sm:$0x3] %vm1382, 0.0
    %1459 = vst.msk [vmem:[%s1457] ss:$8 sm:$0x0] %vm1382, 0.0
    %s1460 = scalar_lea.vmem %s1378, 401 [#allocation3]
    %1461 = vst.msk [vmem:[%s1460] ss:$8 sm:$0x3] %vm1382, 0.0
    %1462 = vst.msk [vmem:[%s1460] ss:$8 sm:$0x0] %vm1382, 0.0
    %s1463 = scalar_lea.vmem %s1378, 433 [#allocation3]
    %1464 = vst.msk [vmem:[%s1463] ss:$8 sm:$0x3] %vm1382, 0.0
    %1465 = vst.msk [vmem:[%s1463] ss:$8 sm:$0x0] %vm1382, 0.0
    %s1466 = scalar_lea.vmem %s1378, 465 [#allocation3]
    %1467 = vst.msk [vmem:[%s1466] ss:$8 sm:$0x3] %vm1382, 0.0
    %1468 = vst.msk [vmem:[%s1466] ss:$8 sm:$0x0] %vm1382, 0.0
    %s1469 = scalar_lea.vmem %s1378, 497 [#allocation3]
    %1470 = vst.msk [vmem:[%s1469] ss:$8 sm:$0x3] %vm1382, 0.0
    %1471 = vst.msk [vmem:[%s1469] ss:$8 sm:$0x0] %vm1382, 0.0
    %s1472 = scalar_lea.vmem %s1378, 529 [#allocation3]
    %1473 = vst.msk [vmem:[%s1472] ss:$8 sm:$0x3] %vm1382, 0.0
    %1474 = vst.msk [vmem:[%s1472] ss:$8 sm:$0x0] %vm1382, 0.0
    %s1475 = scalar_lea.vmem %s1378, 561 [#allocation3]
    %1476 = vst.msk [vmem:[%s1475] ss:$8 sm:$0x3] %vm1382, 0.0
    %1477 = vst.msk [vmem:[%s1475] ss:$8 sm:$0x0] %vm1382, 0.0
    %v1510 = vrot.slane %v1283, 7
    %v1511 = vrot.slane %v1285, 7
    %v1512 = vrot.slane %v1287, 7
    %v1513 = vrot.slane %v1289, 7
    %v1514 = vrot.slane %v1293, 7
    %v1515 = vrot.slane %v1295, 7
    %v1516 = vrot.slane %v1297, 7
    %v1517 = vrot.slane %v1299, 7
    %v1518 = vrot.slane %v1303, 7
    %v1519 = vrot.slane %v1305, 7
    %v1520 = vrot.slane %v1307, 7
    %v1521 = vrot.slane %v1309, 7
    %v1522 = vrot.slane %v1313, 7
    %v1523 = vrot.slane %v1315, 7
    %v1524 = vrot.slane %v1317, 7
    %v1525 = vrot.slane %v1319, 7
    %v1526 = vrot.slane %v1323, 7
    %v1527 = vrot.slane %v1325, 7
    %v1528 = vrot.slane %v1327, 7
    %v1529 = vrot.slane %v1329, 7
    %v1530 = vrot.slane %v1333, 7
    %v1531 = vrot.slane %v1335, 7
    %v1532 = vrot.slane %v1337, 7
    %v1533 = vrot.slane %v1339, 7
    %v1534 = vrot.slane %v1343, 7
    %v1535 = vrot.slane %v1345, 7
    %v1536 = vrot.slane %v1347, 7
    %v1537 = vrot.slane %v1349, 7
    %v1538 = vrot.slane %v1353, 7
    %v1539 = vrot.slane %v1355, 7
    %v1540 = vrot.slane %v1357, 7
    %v1541 = vrot.slane %v1359, 7
    %1574 = vst [vmem:[%s1378] sm:$0xfe] %v1510
    %1575 = vst [vmem:[%s1378 + $0x8] sm:$0xfe] %v1511
    %1576 = vst [vmem:[%s1378 + $0x10] sm:$0x1] %v1510
    %1577 = vst [vmem:[%s1378 + $0x18] sm:$0x1] %v1511
    %1578 = vst [vmem:[%s1378 + $0x20] sm:$0xfe] %v1512
    %1579 = vst [vmem:[%s1378 + $0x28] sm:$0xfe] %v1513
    %1580 = vst [vmem:[%s1378 + $0x30] sm:$0x1] %v1512
    %1581 = vst [vmem:[%s1378 + $0x38] sm:$0x1] %v1513
    %1582 = vst [vmem:[%s1378 + $0x40] sm:$0xfe] %v1514
    %1583 = vst [vmem:[%s1378 + $0x48] sm:$0xfe] %v1515
    %1584 = vst [vmem:[%s1378 + $0x50] sm:$0x1] %v1514
    %1585 = vst [vmem:[%s1378 + $0x58] sm:$0x1] %v1515
    %1586 = vst [vmem:[%s1378 + $0x60] sm:$0xfe] %v1516
    %1587 = vst [vmem:[%s1378 + $0x68] sm:$0xfe] %v1517
    %1588 = vst [vmem:[%s1378 + $0x70] sm:$0x1] %v1516
    %1589 = vst [vmem:[%s1378 + $0x78] sm:$0x1] %v1517
    %1590 = vst [vmem:[%s1378 + $0x80] sm:$0xfe] %v1518
    %1591 = vst [vmem:[%s1378 + $0x88] sm:$0xfe] %v1519
    %1592 = vst [vmem:[%s1378 + $0x90] sm:$0x1] %v1518
    %1593 = vst [vmem:[%s1378 + $0x98] sm:$0x1] %v1519
    %1594 = vst [vmem:[%s1378 + $0xa0] sm:$0xfe] %v1520
    %1595 = vst [vmem:[%s1378 + $0xa8] sm:$0xfe] %v1521
    %1596 = vst [vmem:[%s1378 + $0xb0] sm:$0x1] %v1520
    %1597 = vst [vmem:[%s1378 + $0xb8] sm:$0x1] %v1521
    %1598 = vst [vmem:[%s1378 + $0xc0] sm:$0xfe] %v1522
    %1599 = vst [vmem:[%s1378 + $0xc8] sm:$0xfe] %v1523
    %1600 = vst [vmem:[%s1378 + $0xd0] sm:$0x1] %v1522
    %1601 = vst [vmem:[%s1378 + $0xd8] sm:$0x1] %v1523
    %1602 = vst [vmem:[%s1378 + $0xe0] sm:$0xfe] %v1524
    %1603 = vst [vmem:[%s1378 + $0xe8] sm:$0xfe] %v1525
    %1604 = vst [vmem:[%s1378 + $0xf0] sm:$0x1] %v1524
    %1605 = vst [vmem:[%s1378 + $0xf8] sm:$0x1] %v1525
    %1606 = vst [vmem:[%s1378 + $0x140] sm:$0xfe] %v1526
    %1607 = vst [vmem:[%s1378 + $0x148] sm:$0xfe] %v1527
    %1608 = vst [vmem:[%s1378 + $0x150] sm:$0x1] %v1526
    %1609 = vst [vmem:[%s1378 + $0x158] sm:$0x1] %v1527
    %1610 = vst [vmem:[%s1378 + $0x160] sm:$0xfe] %v1528
    %1611 = vst [vmem:[%s1378 + $0x168] sm:$0xfe] %v1529
    %1612 = vst [vmem:[%s1378 + $0x170] sm:$0x1] %v1528
    %1613 = vst [vmem:[%s1378 + $0x178] sm:$0x1] %v1529
    %1614 = vst [vmem:[%s1378 + $0x180] sm:$0xfe] %v1530
    %1615 = vst [vmem:[%s1378 + $0x188] sm:$0xfe] %v1531
    %1616 = vst [vmem:[%s1378 + $0x190] sm:$0x1] %v1530
    %1617 = vst [vmem:[%s1378 + $0x198] sm:$0x1] %v1531
    %1618 = vst [vmem:[%s1378 + $0x1a0] sm:$0xfe] %v1532
    %1619 = vst [vmem:[%s1378 + $0x1a8] sm:$0xfe] %v1533
    %1620 = vst [vmem:[%s1378 + $0x1b0] sm:$0x1] %v1532
    %1621 = vst [vmem:[%s1378 + $0x1b8] sm:$0x1] %v1533
    %1622 = vst [vmem:[%s1378 + $0x1c0] sm:$0xfe] %v1534
    %1623 = vst [vmem:[%s1378 + $0x1c8] sm:$0xfe] %v1535
    %1624 = vst [vmem:[%s1378 + $0x1d0] sm:$0x1] %v1534
    %1625 = vst [vmem:[%s1378 + $0x1d8] sm:$0x1] %v1535
    %1626 = vst [vmem:[%s1378 + $0x1e0] sm:$0xfe] %v1536
    %1627 = vst [vmem:[%s1378 + $0x1e8] sm:$0xfe] %v1537
    %1628 = vst [vmem:[%s1378 + $0x1f0] sm:$0x1] %v1536
    %1629 = vst [vmem:[%s1378 + $0x1f8] sm:$0x1] %v1537
    %1630 = vst [vmem:[%s1378 + $0x200] sm:$0xfe] %v1538
    %1631 = vst [vmem:[%s1378 + $0x208] sm:$0xfe] %v1539
    %1632 = vst [vmem:[%s1378 + $0x210] sm:$0x1] %v1538
    %1633 = vst [vmem:[%s1378 + $0x218] sm:$0x1] %v1539
    %1634 = vst [vmem:[%s1378 + $0x220] sm:$0xfe] %v1540
    %1635 = vst [vmem:[%s1378 + $0x228] sm:$0xfe] %v1541
    %1636 = vst [vmem:[%s1378 + $0x230] sm:$0x1] %v1540
    %1637 = vst [vmem:[%s1378 + $0x238] sm:$0x1] %v1541
    %v1638 = vld [vmem:[%s10] sm:$0xff]
    %v1639 = vld [vmem:[%s10 + $0x8] sm:$0xff]
    %v1640 = vld [vmem:[%s10 + $0x10] sm:$0x1]
    %v1641 = vld [vmem:[%s10 + $0x18] sm:$0x1]
    %v1642 = vld [vmem:[#allocation19] sm:$0x3]
    %v1644 = vlaneseq
    %v1645 = vshrl.u32 %v1644, 7
    %v1646 = vsub.s32 0, %v1645
    %v1647 = vrot.slane %v1642, %v1646
    %v1648 = vlaneseq
    %v1649 = vshrl.u32 %v1648, 7
    %v1650 = vsub.s32 1, %v1649
    %v1651 = vrot.slane %v1642, %v1650
    %v1654 = vld [vmem:[#allocation3] sm:$0xff]
    %v1655 = vld [vmem:[#allocation3 + $0x8] sm:$0xff]
    %v1656 = vld [vmem:[#allocation3 + $0x20] sm:$0xff]
    %v1657 = vld [vmem:[#allocation3 + $0x28] sm:$0xff]
    %v1658 = vld [vmem:[#allocation3 + $0x40] sm:$0xff]
    %v1659 = vld [vmem:[#allocation3 + $0x48] sm:$0xff]
    %v1660 = vld [vmem:[#allocation3 + $0x60] sm:$0xff]
    %v1661 = vld [vmem:[#allocation3 + $0x68] sm:$0xff]
    %v1662 = vld [vmem:[#allocation3 + $0x80] sm:$0xff]
    %v1663 = vld [vmem:[#allocation3 + $0x88] sm:$0xff]
    %v1664 = vld [vmem:[#allocation3 + $0xa0] sm:$0xff]
    %v1665 = vld [vmem:[#allocation3 + $0xa8] sm:$0xff]
    %v1666 = vld [vmem:[#allocation3 + $0xc0] sm:$0xff]
    %v1667 = vld [vmem:[#allocation3 + $0xc8] sm:$0xff]
    %v1668 = vld [vmem:[#allocation3 + $0xe0] sm:$0xff]
    %v1669 = vld [vmem:[#allocation3 + $0xe8] sm:$0xff]
    %v1670 = vld [vmem:[#allocation3 + $0x140] sm:$0xff]
    %v1671 = vld [vmem:[#allocation3 + $0x148] sm:$0xff]
    %v1672 = vld [vmem:[#allocation3 + $0x160] sm:$0xff]
    %v1673 = vld [vmem:[#allocation3 + $0x168] sm:$0xff]
    %v1674 = vld [vmem:[#allocation3 + $0x180] sm:$0xff]
    %v1675 = vld [vmem:[#allocation3 + $0x188] sm:$0xff]
    %v1676 = vld [vmem:[#allocation3 + $0x1a0] sm:$0xff]
    %v1677 = vld [vmem:[#allocation3 + $0x1a8] sm:$0xff]
    %v1678 = vld [vmem:[#allocation3 + $0x1c0] sm:$0xff]
    %v1679 = vld [vmem:[#allocation3 + $0x1c8] sm:$0xff]
    %v1680 = vld [vmem:[#allocation3 + $0x1e0] sm:$0xff]
    %v1681 = vld [vmem:[#allocation3 + $0x1e8] sm:$0xff]
    %v1682 = vld [vmem:[#allocation3 + $0x200] sm:$0xff]
    %v1683 = vld [vmem:[#allocation3 + $0x208] sm:$0xff]
    %v1684 = vld [vmem:[#allocation3 + $0x220] sm:$0xff]
    %v1685 = vld [vmem:[#allocation3 + $0x228] sm:$0xff]
    %v1686 = vlaneseq
    %v1687 = vshrl.u32 %v1686, 7
    %v1688 = vsub.s32 0, %v1687
    %v1689 = vrot.slane %v1638, %v1688
    %v1690 = vlaneseq
    %v1691 = vshrl.u32 %v1690, 7
    %v1692 = vsub.s32 0, %v1691
    %v1693 = vrot.slane %v1639, %v1692
    %v1694 = vmul.f32 %v1654, %v1689
    %v1695 = vmul.f32 %v1655, %v1693
    %v1696 = vmul.f32 %v1656, %v1689
    %v1697 = vmul.f32 %v1657, %v1693
    %v1698 = vmul.f32 %v1658, %v1689
    %v1699 = vmul.f32 %v1659, %v1693
    %v1700 = vmul.f32 %v1660, %v1689
    %v1701 = vmul.f32 %v1661, %v1693
    %v1702 = vmul.f32 %v1662, %v1689
    %v1703 = vmul.f32 %v1663, %v1693
    %v1704 = vmul.f32 %v1664, %v1689
    %v1705 = vmul.f32 %v1665, %v1693
    %v1706 = vmul.f32 %v1666, %v1689
    %v1707 = vmul.f32 %v1667, %v1693
    %v1708 = vmul.f32 %v1668, %v1689
    %v1709 = vmul.f32 %v1669, %v1693
    %v1710 = vmul.f32 %v1670, %v1689
    %v1711 = vmul.f32 %v1671, %v1693
    %v1712 = vmul.f32 %v1672, %v1689
    %v1713 = vmul.f32 %v1673, %v1693
    %v1714 = vmul.f32 %v1674, %v1689
    %v1715 = vmul.f32 %v1675, %v1693
    %v1716 = vmul.f32 %v1676, %v1689
    %v1717 = vmul.f32 %v1677, %v1693
    %v1718 = vmul.f32 %v1678, %v1689
    %v1719 = vmul.f32 %v1679, %v1693
    %v1720 = vmul.f32 %v1680, %v1689
    %v1721 = vmul.f32 %v1681, %v1693
    %v1722 = vmul.f32 %v1682, %v1689
    %v1723 = vmul.f32 %v1683, %v1693
    %v1724 = vmul.f32 %v1684, %v1689
    %v1725 = vmul.f32 %v1685, %v1693
    %v1726 = vadd.f32 %v1647, %v1694
    %v1727 = vadd.f32 %v1651, %v1695
    %v1728 = vadd.f32 %v1647, %v1696
    %v1729 = vadd.f32 %v1651, %v1697
    %v1730 = vadd.f32 %v1647, %v1698
    %v1731 = vadd.f32 %v1651, %v1699
    %v1732 = vadd.f32 %v1647, %v1700
    %v1733 = vadd.f32 %v1651, %v1701
    %v1734 = vadd.f32 %v1647, %v1702
    %v1735 = vadd.f32 %v1651, %v1703
    %v1736 = vadd.f32 %v1647, %v1704
    %v1737 = vadd.f32 %v1651, %v1705
    %v1738 = vadd.f32 %v1647, %v1706
    %v1739 = vadd.f32 %v1651, %v1707
    %v1740 = vadd.f32 %v1647, %v1708
    %v1741 = vadd.f32 %v1651, %v1709
    %v1742 = vadd.f32 %v1647, %v1710
    %v1743 = vadd.f32 %v1651, %v1711
    %v1744 = vadd.f32 %v1647, %v1712
    %v1745 = vadd.f32 %v1651, %v1713
    %v1746 = vadd.f32 %v1647, %v1714
    %v1747 = vadd.f32 %v1651, %v1715
    %v1748 = vadd.f32 %v1647, %v1716
    %v1749 = vadd.f32 %v1651, %v1717
    %v1750 = vadd.f32 %v1647, %v1718
    %v1751 = vadd.f32 %v1651, %v1719
    %v1752 = vadd.f32 %v1647, %v1720
    %v1753 = vadd.f32 %v1651, %v1721
    %v1754 = vadd.f32 %v1647, %v1722
    %v1755 = vadd.f32 %v1651, %v1723
    %v1756 = vadd.f32 %v1647, %v1724
    %v1757 = vadd.f32 %v1651, %v1725
    %v1758 = vld [vmem:[#allocation3] sm:$0xfe]
    %v1759 = vld [vmem:[#allocation3 + $0x8] sm:$0xfe]
    %v1760 = vld [vmem:[#allocation3 + $0x10] sm:$0x1]
    %v1761 = vld [vmem:[#allocation3 + $0x18] sm:$0x1]
    %v1762 = vld [vmem:[#allocation3 + $0x20] sm:$0xfe]
    %v1763 = vld [vmem:[#allocation3 + $0x28] sm:$0xfe]
    %v1764 = vld [vmem:[#allocation3 + $0x30] sm:$0x1]
    %v1765 = vld [vmem:[#allocation3 + $0x38] sm:$0x1]
    %v1766 = vld [vmem:[#allocation3 + $0x40] sm:$0xfe]
    %v1767 = vld [vmem:[#allocation3 + $0x48] sm:$0xfe]
    %v1768 = vld [vmem:[#allocation3 + $0x50] sm:$0x1]
    %v1769 = vld [vmem:[#allocation3 + $0x58] sm:$0x1]
    %v1770 = vld [vmem:[#allocation3 + $0x60] sm:$0xfe]
    %v1771 = vld [vmem:[#allocation3 + $0x68] sm:$0xfe]
    %v1772 = vld [vmem:[#allocation3 + $0x70] sm:$0x1]
    %v1773 = vld [vmem:[#allocation3 + $0x78] sm:$0x1]
    %v1774 = vld [vmem:[#allocation3 + $0x80] sm:$0xfe]
    %v1775 = vld [vmem:[#allocation3 + $0x88] sm:$0xfe]
    %v1776 = vld [vmem:[#allocation3 + $0x90] sm:$0x1]
    %v1777 = vld [vmem:[#allocation3 + $0x98] sm:$0x1]
    %v1778 = vld [vmem:[#allocation3 + $0xa0] sm:$0xfe]
    %v1779 = vld [vmem:[#allocation3 + $0xa8] sm:$0xfe]
    %v1780 = vld [vmem:[#allocation3 + $0xb0] sm:$0x1]
    %v1781 = vld [vmem:[#allocation3 + $0xb8] sm:$0x1]
    %v1782 = vld [vmem:[#allocation3 + $0xc0] sm:$0xfe]
    %v1783 = vld [vmem:[#allocation3 + $0xc8] sm:$0xfe]
    %v1784 = vld [vmem:[#allocation3 + $0xd0] sm:$0x1]
    %v1785 = vld [vmem:[#allocation3 + $0xd8] sm:$0x1]
    %v1786 = vld [vmem:[#allocation3 + $0xe0] sm:$0xfe]
    %v1787 = vld [vmem:[#allocation3 + $0xe8] sm:$0xfe]
    %v1788 = vld [vmem:[#allocation3 + $0xf0] sm:$0x1]
    %v1789 = vld [vmem:[#allocation3 + $0xf8] sm:$0x1]
    %v1790 = vld [vmem:[#allocation3 + $0x140] sm:$0xfe]
    %v1791 = vld [vmem:[#allocation3 + $0x148] sm:$0xfe]
    %v1792 = vld [vmem:[#allocation3 + $0x150] sm:$0x1]
    %v1793 = vld [vmem:[#allocation3 + $0x158] sm:$0x1]
    %v1794 = vld [vmem:[#allocation3 + $0x160] sm:$0xfe]
    %v1795 = vld [vmem:[#allocation3 + $0x168] sm:$0xfe]
    %v1796 = vld [vmem:[#allocation3 + $0x170] sm:$0x1]
    %v1797 = vld [vmem:[#allocation3 + $0x178] sm:$0x1]
    %v1798 = vld [vmem:[#allocation3 + $0x180] sm:$0xfe]
    %v1799 = vld [vmem:[#allocation3 + $0x188] sm:$0xfe]
    %v1800 = vld [vmem:[#allocation3 + $0x190] sm:$0x1]
    %v1801 = vld [vmem:[#allocation3 + $0x198] sm:$0x1]
    %v1802 = vld [vmem:[#allocation3 + $0x1a0] sm:$0xfe]
    %v1803 = vld [vmem:[#allocation3 + $0x1a8] sm:$0xfe]
    %v1804 = vld [vmem:[#allocation3 + $0x1b0] sm:$0x1]
    %v1805 = vld [vmem:[#allocation3 + $0x1b8] sm:$0x1]
    %v1806 = vld [vmem:[#allocation3 + $0x1c0] sm:$0xfe]
    %v1807 = vld [vmem:[#allocation3 + $0x1c8] sm:$0xfe]
    %v1808 = vld [vmem:[#allocation3 + $0x1d0] sm:$0x1]
    %v1809 = vld [vmem:[#allocation3 + $0x1d8] sm:$0x1]
    %v1810 = vld [vmem:[#allocation3 + $0x1e0] sm:$0xfe]
    %v1811 = vld [vmem:[#allocation3 + $0x1e8] sm:$0xfe]
    %v1812 = vld [vmem:[#allocation3 + $0x1f0] sm:$0x1]
    %v1813 = vld [vmem:[#allocation3 + $0x1f8] sm:$0x1]
    %v1814 = vld [vmem:[#allocation3 + $0x200] sm:$0xfe]
    %v1815 = vld [vmem:[#allocation3 + $0x208] sm:$0xfe]
    %v1816 = vld [vmem:[#allocation3 + $0x210] sm:$0x1]
    %v1817 = vld [vmem:[#allocation3 + $0x218] sm:$0x1]
    %v1818 = vld [vmem:[#allocation3 + $0x220] sm:$0xfe]
    %v1819 = vld [vmem:[#allocation3 + $0x228] sm:$0xfe]
    %v1820 = vld [vmem:[#allocation3 + $0x230] sm:$0x1]
    %v1821 = vld [vmem:[#allocation3 + $0x238] sm:$0x1]
    %v1822 = vlaneseq
    %v1823 = vshrl.u32 %v1822, 7
    %v1824 = vsub.s32 1, %v1823
    %v1825 = vrot.slane %v1638, %v1824
    %v1826 = vlaneseq
    %v1827 = vshrl.u32 %v1826, 7
    %v1828 = vsub.s32 1, %v1827
    %v1829 = vrot.slane %v1639, %v1828
    %v1830 = vmul.f32 %v1758, %v1825
    %v1831 = vmul.f32 %v1759, %v1829
    %v1832 = vmul.f32 %v1760, %v1825
    %v1833 = vmul.f32 %v1761, %v1829
    %v1834 = vmul.f32 %v1762, %v1825
    %v1835 = vmul.f32 %v1763, %v1829
    %v1836 = vmul.f32 %v1764, %v1825
    %v1837 = vmul.f32 %v1765, %v1829
    %v1838 = vmul.f32 %v1766, %v1825
    %v1839 = vmul.f32 %v1767, %v1829
    %v1840 = vmul.f32 %v1768, %v1825
    %v1841 = vmul.f32 %v1769, %v1829
    %v1842 = vmul.f32 %v1770, %v1825
    %v1843 = vmul.f32 %v1771, %v1829
    %v1844 = vmul.f32 %v1772, %v1825
    %v1845 = vmul.f32 %v1773, %v1829
    %v1846 = vmul.f32 %v1774, %v1825
    %v1847 = vmul.f32 %v1775, %v1829
    %v1848 = vmul.f32 %v1776, %v1825
    %v1849 = vmul.f32 %v1777, %v1829
    %v1850 = vmul.f32 %v1778, %v1825
    %v1851 = vmul.f32 %v1779, %v1829
    %v1852 = vmul.f32 %v1780, %v1825
    %v1853 = vmul.f32 %v1781, %v1829
    %v1854 = vmul.f32 %v1782, %v1825
    %v1855 = vmul.f32 %v1783, %v1829
    %v1856 = vmul.f32 %v1784, %v1825
    %v1857 = vmul.f32 %v1785, %v1829
    %v1858 = vmul.f32 %v1786, %v1825
    %v1859 = vmul.f32 %v1787, %v1829
    %v1860 = vmul.f32 %v1788, %v1825
    %v1861 = vmul.f32 %v1789, %v1829
    %v1862 = vmul.f32 %v1790, %v1825
    %v1863 = vmul.f32 %v1791, %v1829
    %v1864 = vmul.f32 %v1792, %v1825
    %v1865 = vmul.f32 %v1793, %v1829
    %v1866 = vmul.f32 %v1794, %v1825
    %v1867 = vmul.f32 %v1795, %v1829
    %v1868 = vmul.f32 %v1796, %v1825
    %v1869 = vmul.f32 %v1797, %v1829
    %v1870 = vmul.f32 %v1798, %v1825
    %v1871 = vmul.f32 %v1799, %v1829
    %v1872 = vmul.f32 %v1800, %v1825
    %v1873 = vmul.f32 %v1801, %v1829
    %v1874 = vmul.f32 %v1802, %v1825
    %v1875 = vmul.f32 %v1803, %v1829
    %v1876 = vmul.f32 %v1804, %v1825
    %v1877 = vmul.f32 %v1805, %v1829
    %v1878 = vmul.f32 %v1806, %v1825
    %v1879 = vmul.f32 %v1807, %v1829
    %v1880 = vmul.f32 %v1808, %v1825
    %v1881 = vmul.f32 %v1809, %v1829
    %v1882 = vmul.f32 %v1810, %v1825
    %v1883 = vmul.f32 %v1811, %v1829
    %v1884 = vmul.f32 %v1812, %v1825
    %v1885 = vmul.f32 %v1813, %v1829
    %v1886 = vmul.f32 %v1814, %v1825
    %v1887 = vmul.f32 %v1815, %v1829
    %v1888 = vmul.f32 %v1816, %v1825
    %v1889 = vmul.f32 %v1817, %v1829
    %v1890 = vmul.f32 %v1818, %v1825
    %v1891 = vmul.f32 %v1819, %v1829
    %v1892 = vmul.f32 %v1820, %v1825
    %v1893 = vmul.f32 %v1821, %v1829
    %vm1958 = vcmask 1046528
    %v1959 = vrot.slane %v1830, 1
    %v1960 = vrot.slane %v1832, 1
    %v1961 = vsel %vm1958, %v1959, %v1960
    %v1962 = vrot.slane %v1831, 1
    %v1963 = vrot.slane %v1833, 1
    %v1964 = vsel %vm1958, %v1962, %v1963
    %v1965 = vrot.slane %v1834, 1
    %v1966 = vrot.slane %v1836, 1
    %v1967 = vsel %vm1958, %v1965, %v1966
    %v1968 = vrot.slane %v1835, 1
    %v1969 = vrot.slane %v1837, 1
    %v1970 = vsel %vm1958, %v1968, %v1969
    %v1971 = vrot.slane %v1838, 1
    %v1972 = vrot.slane %v1840, 1
    %v1973 = vsel %vm1958, %v1971, %v1972
    %v1974 = vrot.slane %v1839, 1
    %v1975 = vrot.slane %v1841, 1
    %v1976 = vsel %vm1958, %v1974, %v1975
    %v1977 = vrot.slane %v1842, 1
    %v1978 = vrot.slane %v1844, 1
    %v1979 = vsel %vm1958, %v1977, %v1978
    %v1980 = vrot.slane %v1843, 1
    %v1981 = vrot.slane %v1845, 1
    %v1982 = vsel %vm1958, %v1980, %v1981
    %v1983 = vrot.slane %v1846, 1
    %v1984 = vrot.slane %v1848, 1
    %v1985 = vsel %vm1958, %v1983, %v1984
    %v1986 = vrot.slane %v1847, 1
    %v1987 = vrot.slane %v1849, 1
    %v1988 = vsel %vm1958, %v1986, %v1987
    %v1989 = vrot.slane %v1850, 1
    %v1990 = vrot.slane %v1852, 1
    %v1991 = vsel %vm1958, %v1989, %v1990
    %v1992 = vrot.slane %v1851, 1
    %v1993 = vrot.slane %v1853, 1
    %v1994 = vsel %vm1958, %v1992, %v1993
    %v1995 = vrot.slane %v1854, 1
    %v1996 = vrot.slane %v1856, 1
    %v1997 = vsel %vm1958, %v1995, %v1996
    %v1998 = vrot.slane %v1855, 1
    %v1999 = vrot.slane %v1857, 1
    %v2000 = vsel %vm1958, %v1998, %v1999
    %v2001 = vrot.slane %v1858, 1
    %v2002 = vrot.slane %v1860, 1
    %v2003 = vsel %vm1958, %v2001, %v2002
    %v2004 = vrot.slane %v1859, 1
    %v2005 = vrot.slane %v1861, 1
    %v2006 = vsel %vm1958, %v2004, %v2005
    %v2007 = vrot.slane %v1862, 1
    %v2008 = vrot.slane %v1864, 1
    %v2009 = vsel %vm1958, %v2007, %v2008
    %v2010 = vrot.slane %v1863, 1
    %v2011 = vrot.slane %v1865, 1
    %v2012 = vsel %vm1958, %v2010, %v2011
    %v2013 = vrot.slane %v1866, 1
    %v2014 = vrot.slane %v1868, 1
    %v2015 = vsel %vm1958, %v2013, %v2014
    %v2016 = vrot.slane %v1867, 1
    %v2017 = vrot.slane %v1869, 1
    %v2018 = vsel %vm1958, %v2016, %v2017
    %v2019 = vrot.slane %v1870, 1
    %v2020 = vrot.slane %v1872, 1
    %v2021 = vsel %vm1958, %v2019, %v2020
    %v2022 = vrot.slane %v1871, 1
    %v2023 = vrot.slane %v1873, 1
    %v2024 = vsel %vm1958, %v2022, %v2023
    %v2025 = vrot.slane %v1874, 1
    %v2026 = vrot.slane %v1876, 1
    %v2027 = vsel %vm1958, %v2025, %v2026
    %v2028 = vrot.slane %v1875, 1
    %v2029 = vrot.slane %v1877, 1
    %v2030 = vsel %vm1958, %v2028, %v2029
    %v2031 = vrot.slane %v1878, 1
    %v2032 = vrot.slane %v1880, 1
    %v2033 = vsel %vm1958, %v2031, %v2032
    %v2034 = vrot.slane %v1879, 1
    %v2035 = vrot.slane %v1881, 1
    %v2036 = vsel %vm1958, %v2034, %v2035
    %v2037 = vrot.slane %v1882, 1
    %v2038 = vrot.slane %v1884, 1
    %v2039 = vsel %vm1958, %v2037, %v2038
    %v2040 = vrot.slane %v1883, 1
    %v2041 = vrot.slane %v1885, 1
    %v2042 = vsel %vm1958, %v2040, %v2041
    %v2043 = vrot.slane %v1886, 1
    %v2044 = vrot.slane %v1888, 1
    %v2045 = vsel %vm1958, %v2043, %v2044
    %v2046 = vrot.slane %v1887, 1
    %v2047 = vrot.slane %v1889, 1
    %v2048 = vsel %vm1958, %v2046, %v2047
    %v2049 = vrot.slane %v1890, 1
    %v2050 = vrot.slane %v1892, 1
    %v2051 = vsel %vm1958, %v2049, %v2050
    %v2052 = vrot.slane %v1891, 1
    %v2053 = vrot.slane %v1893, 1
    %v2054 = vsel %vm1958, %v2052, %v2053
    %v2087 = vadd.f32 %v1726, %v1961
    %v2088 = vadd.f32 %v1727, %v1964
    %v2089 = vadd.f32 %v1728, %v1967
    %v2090 = vadd.f32 %v1729, %v1970
    %v2091 = vadd.f32 %v1730, %v1973
    %v2092 = vadd.f32 %v1731, %v1976
    %v2093 = vadd.f32 %v1732, %v1979
    %v2094 = vadd.f32 %v1733, %v1982
    %v2095 = vadd.f32 %v1734, %v1985
    %v2096 = vadd.f32 %v1735, %v1988
    %v2097 = vadd.f32 %v1736, %v1991
    %v2098 = vadd.f32 %v1737, %v1994
    %v2099 = vadd.f32 %v1738, %v1997
    %v2100 = vadd.f32 %v1739, %v2000
    %v2101 = vadd.f32 %v1740, %v2003
    %v2102 = vadd.f32 %v1741, %v2006
    %v2103 = vadd.f32 %v1742, %v2009
    %v2104 = vadd.f32 %v1743, %v2012
    %v2105 = vadd.f32 %v1744, %v2015
    %v2106 = vadd.f32 %v1745, %v2018
    %v2107 = vadd.f32 %v1746, %v2021
    %v2108 = vadd.f32 %v1747, %v2024
    %v2109 = vadd.f32 %v1748, %v2027
    %v2110 = vadd.f32 %v1749, %v2030
    %v2111 = vadd.f32 %v1750, %v2033
    %v2112 = vadd.f32 %v1751, %v2036
    %v2113 = vadd.f32 %v1752, %v2039
    %v2114 = vadd.f32 %v1753, %v2042
    %v2115 = vadd.f32 %v1754, %v2045
    %v2116 = vadd.f32 %v1755, %v2048
    %v2117 = vadd.f32 %v1756, %v2051
    %v2118 = vadd.f32 %v1757, %v2054
    %v2119 = vld [vmem:[#allocation3] sm:$0xfc]
    %v2120 = vld [vmem:[#allocation3 + $0x8] sm:$0xfc]
    %v2121 = vld [vmem:[#allocation3 + $0x10] sm:$0x3]
    %v2122 = vld [vmem:[#allocation3 + $0x18] sm:$0x3]
    %v2123 = vld [vmem:[#allocation3 + $0x20] sm:$0xfc]
    %v2124 = vld [vmem:[#allocation3 + $0x28] sm:$0xfc]
    %v2125 = vld [vmem:[#allocation3 + $0x30] sm:$0x3]
    %v2126 = vld [vmem:[#allocation3 + $0x38] sm:$0x3]
    %v2127 = vld [vmem:[#allocation3 + $0x40] sm:$0xfc]
    %v2128 = vld [vmem:[#allocation3 + $0x48] sm:$0xfc]
    %v2129 = vld [vmem:[#allocation3 + $0x50] sm:$0x3]
    %v2130 = vld [vmem:[#allocation3 + $0x58] sm:$0x3]
    %v2131 = vld [vmem:[#allocation3 + $0x60] sm:$0xfc]
    %v2132 = vld [vmem:[#allocation3 + $0x68] sm:$0xfc]
    %v2133 = vld [vmem:[#allocation3 + $0x70] sm:$0x3]
    %v2134 = vld [vmem:[#allocation3 + $0x78] sm:$0x3]
    %v2135 = vld [vmem:[#allocation3 + $0x80] sm:$0xfc]
    %v2136 = vld [vmem:[#allocation3 + $0x88] sm:$0xfc]
    %v2137 = vld [vmem:[#allocation3 + $0x90] sm:$0x3]
    %v2138 = vld [vmem:[#allocation3 + $0x98] sm:$0x3]
    %v2139 = vld [vmem:[#allocation3 + $0xa0] sm:$0xfc]
    %v2140 = vld [vmem:[#allocation3 + $0xa8] sm:$0xfc]
    %v2141 = vld [vmem:[#allocation3 + $0xb0] sm:$0x3]
    %v2142 = vld [vmem:[#allocation3 + $0xb8] sm:$0x3]
    %v2143 = vld [vmem:[#allocation3 + $0xc0] sm:$0xfc]
    %v2144 = vld [vmem:[#allocation3 + $0xc8] sm:$0xfc]
    %v2145 = vld [vmem:[#allocation3 + $0xd0] sm:$0x3]
    %v2146 = vld [vmem:[#allocation3 + $0xd8] sm:$0x3]
    %v2147 = vld [vmem:[#allocation3 + $0xe0] sm:$0xfc]
    %v2148 = vld [vmem:[#allocation3 + $0xe8] sm:$0xfc]
    %v2149 = vld [vmem:[#allocation3 + $0xf0] sm:$0x3]
    %v2150 = vld [vmem:[#allocation3 + $0xf8] sm:$0x3]
    %v2151 = vld [vmem:[#allocation3 + $0x140] sm:$0xfc]
    %v2152 = vld [vmem:[#allocation3 + $0x148] sm:$0xfc]
    %v2153 = vld [vmem:[#allocation3 + $0x150] sm:$0x3]
    %v2154 = vld [vmem:[#allocation3 + $0x158] sm:$0x3]
    %v2155 = vld [vmem:[#allocation3 + $0x160] sm:$0xfc]
    %v2156 = vld [vmem:[#allocation3 + $0x168] sm:$0xfc]
    %v2157 = vld [vmem:[#allocation3 + $0x170] sm:$0x3]
    %v2158 = vld [vmem:[#allocation3 + $0x178] sm:$0x3]
    %v2159 = vld [vmem:[#allocation3 + $0x180] sm:$0xfc]
    %v2160 = vld [vmem:[#allocation3 + $0x188] sm:$0xfc]
    %v2161 = vld [vmem:[#allocation3 + $0x190] sm:$0x3]
    %v2162 = vld [vmem:[#allocation3 + $0x198] sm:$0x3]
    %v2163 = vld [vmem:[#allocation3 + $0x1a0] sm:$0xfc]
    %v2164 = vld [vmem:[#allocation3 + $0x1a8] sm:$0xfc]
    %v2165 = vld [vmem:[#allocation3 + $0x1b0] sm:$0x3]
    %v2166 = vld [vmem:[#allocation3 + $0x1b8] sm:$0x3]
    %v2167 = vld [vmem:[#allocation3 + $0x1c0] sm:$0xfc]
    %v2168 = vld [vmem:[#allocation3 + $0x1c8] sm:$0xfc]
    %v2169 = vld [vmem:[#allocation3 + $0x1d0] sm:$0x3]
    %v2170 = vld [vmem:[#allocation3 + $0x1d8] sm:$0x3]
    %v2171 = vld [vmem:[#allocation3 + $0x1e0] sm:$0xfc]
    %v2172 = vld [vmem:[#allocation3 + $0x1e8] sm:$0xfc]
    %v2173 = vld [vmem:[#allocation3 + $0x1f0] sm:$0x3]
    %v2174 = vld [vmem:[#allocation3 + $0x1f8] sm:$0x3]
    %v2175 = vld [vmem:[#allocation3 + $0x200] sm:$0xfc]
    %v2176 = vld [vmem:[#allocation3 + $0x208] sm:$0xfc]
    %v2177 = vld [vmem:[#allocation3 + $0x210] sm:$0x3]
    %v2178 = vld [vmem:[#allocation3 + $0x218] sm:$0x3]
    %v2179 = vld [vmem:[#allocation3 + $0x220] sm:$0xfc]
    %v2180 = vld [vmem:[#allocation3 + $0x228] sm:$0xfc]
    %v2181 = vld [vmem:[#allocation3 + $0x230] sm:$0x3]
    %v2182 = vld [vmem:[#allocation3 + $0x238] sm:$0x3]
    %v2183 = vlaneseq
    %v2184 = vshrl.u32 %v2183, 7
    %v2185 = vsub.s32 2, %v2184
    %v2186 = vrot.slane %v1638, %v2185
    %v2187 = vlaneseq
    %v2188 = vshrl.u32 %v2187, 7
    %v2189 = vsub.s32 2, %v2188
    %v2190 = vrot.slane %v1639, %v2189
    %v2191 = vmul.f32 %v2119, %v2186
    %v2192 = vmul.f32 %v2120, %v2190
    %v2193 = vmul.f32 %v2121, %v2186
    %v2194 = vmul.f32 %v2122, %v2190
    %v2195 = vmul.f32 %v2123, %v2186
    %v2196 = vmul.f32 %v2124, %v2190
    %v2197 = vmul.f32 %v2125, %v2186
    %v2198 = vmul.f32 %v2126, %v2190
    %v2199 = vmul.f32 %v2127, %v2186
    %v2200 = vmul.f32 %v2128, %v2190
    %v2201 = vmul.f32 %v2129, %v2186
    %v2202 = vmul.f32 %v2130, %v2190
    %v2203 = vmul.f32 %v2131, %v2186
    %v2204 = vmul.f32 %v2132, %v2190
    %v2205 = vmul.f32 %v2133, %v2186
    %v2206 = vmul.f32 %v2134, %v2190
    %v2207 = vmul.f32 %v2135, %v2186
    %v2208 = vmul.f32 %v2136, %v2190
    %v2209 = vmul.f32 %v2137, %v2186
    %v2210 = vmul.f32 %v2138, %v2190
    %v2211 = vmul.f32 %v2139, %v2186
    %v2212 = vmul.f32 %v2140, %v2190
    %v2213 = vmul.f32 %v2141, %v2186
    %v2214 = vmul.f32 %v2142, %v2190
    %v2215 = vmul.f32 %v2143, %v2186
    %v2216 = vmul.f32 %v2144, %v2190
    %v2217 = vmul.f32 %v2145, %v2186
    %v2218 = vmul.f32 %v2146, %v2190
    %v2219 = vmul.f32 %v2147, %v2186
    %v2220 = vmul.f32 %v2148, %v2190
    %v2221 = vmul.f32 %v2149, %v2186
    %v2222 = vmul.f32 %v2150, %v2190
    %v2223 = vmul.f32 %v2151, %v2186
    %v2224 = vmul.f32 %v2152, %v2190
    %v2225 = vmul.f32 %v2153, %v2186
    %v2226 = vmul.f32 %v2154, %v2190
    %v2227 = vmul.f32 %v2155, %v2186
    %v2228 = vmul.f32 %v2156, %v2190
    %v2229 = vmul.f32 %v2157, %v2186
    %v2230 = vmul.f32 %v2158, %v2190
    %v2231 = vmul.f32 %v2159, %v2186
    %v2232 = vmul.f32 %v2160, %v2190
    %v2233 = vmul.f32 %v2161, %v2186
    %v2234 = vmul.f32 %v2162, %v2190
    %v2235 = vmul.f32 %v2163, %v2186
    %v2236 = vmul.f32 %v2164, %v2190
    %v2237 = vmul.f32 %v2165, %v2186
    %v2238 = vmul.f32 %v2166, %v2190
    %v2239 = vmul.f32 %v2167, %v2186
    %v2240 = vmul.f32 %v2168, %v2190
    %v2241 = vmul.f32 %v2169, %v2186
    %v2242 = vmul.f32 %v2170, %v2190
    %v2243 = vmul.f32 %v2171, %v2186
    %v2244 = vmul.f32 %v2172, %v2190
    %v2245 = vmul.f32 %v2173, %v2186
    %v2246 = vmul.f32 %v2174, %v2190
    %v2247 = vmul.f32 %v2175, %v2186
    %v2248 = vmul.f32 %v2176, %v2190
    %v2249 = vmul.f32 %v2177, %v2186
    %v2250 = vmul.f32 %v2178, %v2190
    %v2251 = vmul.f32 %v2179, %v2186
    %v2252 = vmul.f32 %v2180, %v2190
    %v2253 = vmul.f32 %v2181, %v2186
    %v2254 = vmul.f32 %v2182, %v2190
    %vm2319 = vcmask 1045504
    %v2320 = vrot.slane %v2191, 2
    %v2321 = vrot.slane %v2193, 2
    %v2322 = vsel %vm2319, %v2320, %v2321
    %v2323 = vrot.slane %v2192, 2
    %v2324 = vrot.slane %v2194, 2
    %v2325 = vsel %vm2319, %v2323, %v2324
    %v2326 = vrot.slane %v2195, 2
    %v2327 = vrot.slane %v2197, 2
    %v2328 = vsel %vm2319, %v2326, %v2327
    %v2329 = vrot.slane %v2196, 2
    %v2330 = vrot.slane %v2198, 2
    %v2331 = vsel %vm2319, %v2329, %v2330
    %v2332 = vrot.slane %v2199, 2
    %v2333 = vrot.slane %v2201, 2
    %v2334 = vsel %vm2319, %v2332, %v2333
    %v2335 = vrot.slane %v2200, 2
    %v2336 = vrot.slane %v2202, 2
    %v2337 = vsel %vm2319, %v2335, %v2336
    %v2338 = vrot.slane %v2203, 2
    %v2339 = vrot.slane %v2205, 2
    %v2340 = vsel %vm2319, %v2338, %v2339
    %v2341 = vrot.slane %v2204, 2
    %v2342 = vrot.slane %v2206, 2
    %v2343 = vsel %vm2319, %v2341, %v2342
    %v2344 = vrot.slane %v2207, 2
    %v2345 = vrot.slane %v2209, 2
    %v2346 = vsel %vm2319, %v2344, %v2345
    %v2347 = vrot.slane %v2208, 2
    %v2348 = vrot.slane %v2210, 2
    %v2349 = vsel %vm2319, %v2347, %v2348
    %v2350 = vrot.slane %v2211, 2
    %v2351 = vrot.slane %v2213, 2
    %v2352 = vsel %vm2319, %v2350, %v2351
    %v2353 = vrot.slane %v2212, 2
    %v2354 = vrot.slane %v2214, 2
    %v2355 = vsel %vm2319, %v2353, %v2354
    %v2356 = vrot.slane %v2215, 2
    %v2357 = vrot.slane %v2217, 2
    %v2358 = vsel %vm2319, %v2356, %v2357
    %v2359 = vrot.slane %v2216, 2
    %v2360 = vrot.slane %v2218, 2
    %v2361 = vsel %vm2319, %v2359, %v2360
    %v2362 = vrot.slane %v2219, 2
    %v2363 = vrot.slane %v2221, 2
    %v2364 = vsel %vm2319, %v2362, %v2363
    %v2365 = vrot.slane %v2220, 2
    %v2366 = vrot.slane %v2222, 2
    %v2367 = vsel %vm2319, %v2365, %v2366
    %v2368 = vrot.slane %v2223, 2
    %v2369 = vrot.slane %v2225, 2
    %v2370 = vsel %vm2319, %v2368, %v2369
    %v2371 = vrot.slane %v2224, 2
    %v2372 = vrot.slane %v2226, 2
    %v2373 = vsel %vm2319, %v2371, %v2372
    %v2374 = vrot.slane %v2227, 2
    %v2375 = vrot.slane %v2229, 2
    %v2376 = vsel %vm2319, %v2374, %v2375
    %v2377 = vrot.slane %v2228, 2
    %v2378 = vrot.slane %v2230, 2
    %v2379 = vsel %vm2319, %v2377, %v2378
    %v2380 = vrot.slane %v2231, 2
    %v2381 = vrot.slane %v2233, 2
    %v2382 = vsel %vm2319, %v2380, %v2381
    %v2383 = vrot.slane %v2232, 2
    %v2384 = vrot.slane %v2234, 2
    %v2385 = vsel %vm2319, %v2383, %v2384
    %v2386 = vrot.slane %v2235, 2
    %v2387 = vrot.slane %v2237, 2
    %v2388 = vsel %vm2319, %v2386, %v2387
    %v2389 = vrot.slane %v2236, 2
    %v2390 = vrot.slane %v2238, 2
    %v2391 = vsel %vm2319, %v2389, %v2390
    %v2392 = vrot.slane %v2239, 2
    %v2393 = vrot.slane %v2241, 2
    %v2394 = vsel %vm2319, %v2392, %v2393
    %v2395 = vrot.slane %v2240, 2
    %v2396 = vrot.slane %v2242, 2
    %v2397 = vsel %vm2319, %v2395, %v2396
    %v2398 = vrot.slane %v2243, 2
    %v2399 = vrot.slane %v2245, 2
    %v2400 = vsel %vm2319, %v2398, %v2399
    %v2401 = vrot.slane %v2244, 2
    %v2402 = vrot.slane %v2246, 2
    %v2403 = vsel %vm2319, %v2401, %v2402
    %v2404 = vrot.slane %v2247, 2
    %v2405 = vrot.slane %v2249, 2
    %v2406 = vsel %vm2319, %v2404, %v2405
    %v2407 = vrot.slane %v2248, 2
    %v2408 = vrot.slane %v2250, 2
    %v2409 = vsel %vm2319, %v2407, %v2408
    %v2410 = vrot.slane %v2251, 2
    %v2411 = vrot.slane %v2253, 2
    %v2412 = vsel %vm2319, %v2410, %v2411
    %v2413 = vrot.slane %v2252, 2
    %v2414 = vrot.slane %v2254, 2
    %v2415 = vsel %vm2319, %v2413, %v2414
    %v2448 = vadd.f32 %v2087, %v2322
    %v2449 = vadd.f32 %v2088, %v2325
    %v2450 = vadd.f32 %v2089, %v2328
    %v2451 = vadd.f32 %v2090, %v2331
    %v2452 = vadd.f32 %v2091, %v2334
    %v2453 = vadd.f32 %v2092, %v2337
    %v2454 = vadd.f32 %v2093, %v2340
    %v2455 = vadd.f32 %v2094, %v2343
    %v2456 = vadd.f32 %v2095, %v2346
    %v2457 = vadd.f32 %v2096, %v2349
    %v2458 = vadd.f32 %v2097, %v2352
    %v2459 = vadd.f32 %v2098, %v2355
    %v2460 = vadd.f32 %v2099, %v2358
    %v2461 = vadd.f32 %v2100, %v2361
    %v2462 = vadd.f32 %v2101, %v2364
    %v2463 = vadd.f32 %v2102, %v2367
    %v2464 = vadd.f32 %v2103, %v2370
    %v2465 = vadd.f32 %v2104, %v2373
    %v2466 = vadd.f32 %v2105, %v2376
    %v2467 = vadd.f32 %v2106, %v2379
    %v2468 = vadd.f32 %v2107, %v2382
    %v2469 = vadd.f32 %v2108, %v2385
    %v2470 = vadd.f32 %v2109, %v2388
    %v2471 = vadd.f32 %v2110, %v2391
    %v2472 = vadd.f32 %v2111, %v2394
    %v2473 = vadd.f32 %v2112, %v2397
    %v2474 = vadd.f32 %v2113, %v2400
    %v2475 = vadd.f32 %v2114, %v2403
    %v2476 = vadd.f32 %v2115, %v2406
    %v2477 = vadd.f32 %v2116, %v2409
    %v2478 = vadd.f32 %v2117, %v2412
    %v2479 = vadd.f32 %v2118, %v2415
    %v2480 = vld [vmem:[%s1378] sm:$0xff]
    %v2481 = vld [vmem:[%s1378 + $0x8] sm:$0xff]
    %v2482 = vld [vmem:[%s1378 + $0x20] sm:$0xff]
    %v2483 = vld [vmem:[%s1378 + $0x28] sm:$0xff]
    %v2484 = vld [vmem:[%s1378 + $0x40] sm:$0xff]
    %v2485 = vld [vmem:[%s1378 + $0x48] sm:$0xff]
    %v2486 = vld [vmem:[%s1378 + $0x60] sm:$0xff]
    %v2487 = vld [vmem:[%s1378 + $0x68] sm:$0xff]
    %v2488 = vld [vmem:[%s1378 + $0x80] sm:$0xff]
    %v2489 = vld [vmem:[%s1378 + $0x88] sm:$0xff]
    %v2490 = vld [vmem:[%s1378 + $0xa0] sm:$0xff]
    %v2491 = vld [vmem:[%s1378 + $0xa8] sm:$0xff]
    %v2492 = vld [vmem:[%s1378 + $0xc0] sm:$0xff]
    %v2493 = vld [vmem:[%s1378 + $0xc8] sm:$0xff]
    %v2494 = vld [vmem:[%s1378 + $0xe0] sm:$0xff]
    %v2495 = vld [vmem:[%s1378 + $0xe8] sm:$0xff]
    %v2496 = vld [vmem:[%s1378 + $0x140] sm:$0xff]
    %v2497 = vld [vmem:[%s1378 + $0x148] sm:$0xff]
    %v2498 = vld [vmem:[%s1378 + $0x160] sm:$0xff]
    %v2499 = vld [vmem:[%s1378 + $0x168] sm:$0xff]
    %v2500 = vld [vmem:[%s1378 + $0x180] sm:$0xff]
    %v2501 = vld [vmem:[%s1378 + $0x188] sm:$0xff]
    %v2502 = vld [vmem:[%s1378 + $0x1a0] sm:$0xff]
    %v2503 = vld [vmem:[%s1378 + $0x1a8] sm:$0xff]
    %v2504 = vld [vmem:[%s1378 + $0x1c0] sm:$0xff]
    %v2505 = vld [vmem:[%s1378 + $0x1c8] sm:$0xff]
    %v2506 = vld [vmem:[%s1378 + $0x1e0] sm:$0xff]
    %v2507 = vld [vmem:[%s1378 + $0x1e8] sm:$0xff]
    %v2508 = vld [vmem:[%s1378 + $0x200] sm:$0xff]
    %v2509 = vld [vmem:[%s1378 + $0x208] sm:$0xff]
    %v2510 = vld [vmem:[%s1378 + $0x220] sm:$0xff]
    %v2511 = vld [vmem:[%s1378 + $0x228] sm:$0xff]
    %v2512 = vlaneseq
    %v2513 = vshrl.u32 %v2512, 7
    %v2514 = vsub.s32 3, %v2513
    %v2515 = vrot.slane %v1638, %v2514
    %v2516 = vlaneseq
    %v2517 = vshrl.u32 %v2516, 7
    %v2518 = vsub.s32 3, %v2517
    %v2519 = vrot.slane %v1639, %v2518
    %v2520 = vmul.f32 %v2480, %v2515
    %v2521 = vmul.f32 %v2481, %v2519
    %v2522 = vmul.f32 %v2482, %v2515
    %v2523 = vmul.f32 %v2483, %v2519
    %v2524 = vmul.f32 %v2484, %v2515
    %v2525 = vmul.f32 %v2485, %v2519
    %v2526 = vmul.f32 %v2486, %v2515
    %v2527 = vmul.f32 %v2487, %v2519
    %v2528 = vmul.f32 %v2488, %v2515
    %v2529 = vmul.f32 %v2489, %v2519
    %v2530 = vmul.f32 %v2490, %v2515
    %v2531 = vmul.f32 %v2491, %v2519
    %v2532 = vmul.f32 %v2492, %v2515
    %v2533 = vmul.f32 %v2493, %v2519
    %v2534 = vmul.f32 %v2494, %v2515
    %v2535 = vmul.f32 %v2495, %v2519
    %v2536 = vmul.f32 %v2496, %v2515
    %v2537 = vmul.f32 %v2497, %v2519
    %v2538 = vmul.f32 %v2498, %v2515
    %v2539 = vmul.f32 %v2499, %v2519
    %v2540 = vmul.f32 %v2500, %v2515
    %v2541 = vmul.f32 %v2501, %v2519
    %v2542 = vmul.f32 %v2502, %v2515
    %v2543 = vmul.f32 %v2503, %v2519
    %v2544 = vmul.f32 %v2504, %v2515
    %v2545 = vmul.f32 %v2505, %v2519
    %v2546 = vmul.f32 %v2506, %v2515
    %v2547 = vmul.f32 %v2507, %v2519
    %v2548 = vmul.f32 %v2508, %v2515
    %v2549 = vmul.f32 %v2509, %v2519
    %v2550 = vmul.f32 %v2510, %v2515
    %v2551 = vmul.f32 %v2511, %v2519
    %v2552 = vadd.f32 %v2448, %v2520
    %v2553 = vadd.f32 %v2449, %v2521
    %v2554 = vadd.f32 %v2450, %v2522
    %v2555 = vadd.f32 %v2451, %v2523
    %v2556 = vadd.f32 %v2452, %v2524
    %v2557 = vadd.f32 %v2453, %v2525
    %v2558 = vadd.f32 %v2454, %v2526
    %v2559 = vadd.f32 %v2455, %v2527
    %v2560 = vadd.f32 %v2456, %v2528
    %v2561 = vadd.f32 %v2457, %v2529
    %v2562 = vadd.f32 %v2458, %v2530
    %v2563 = vadd.f32 %v2459, %v2531
    %v2564 = vadd.f32 %v2460, %v2532
    %v2565 = vadd.f32 %v2461, %v2533
    %v2566 = vadd.f32 %v2462, %v2534
    %v2567 = vadd.f32 %v2463, %v2535
    %v2568 = vadd.f32 %v2464, %v2536
    %v2569 = vadd.f32 %v2465, %v2537
    %v2570 = vadd.f32 %v2466, %v2538
    %v2571 = vadd.f32 %v2467, %v2539
    %v2572 = vadd.f32 %v2468, %v2540
    %v2573 = vadd.f32 %v2469, %v2541
    %v2574 = vadd.f32 %v2470, %v2542
    %v2575 = vadd.f32 %v2471, %v2543
    %v2576 = vadd.f32 %v2472, %v2544
    %v2577 = vadd.f32 %v2473, %v2545
    %v2578 = vadd.f32 %v2474, %v2546
    %v2579 = vadd.f32 %v2475, %v2547
    %v2580 = vadd.f32 %v2476, %v2548
    %v2581 = vadd.f32 %v2477, %v2549
    %v2582 = vadd.f32 %v2478, %v2550
    %v2583 = vadd.f32 %v2479, %v2551
    %v2584 = vld [vmem:[%s1378] sm:$0xfe]
    %v2585 = vld [vmem:[%s1378 + $0x8] sm:$0xfe]
    %v2586 = vld [vmem:[%s1378 + $0x10] sm:$0x1]
    %v2587 = vld [vmem:[%s1378 + $0x18] sm:$0x1]
    %v2588 = vld [vmem:[%s1378 + $0x20] sm:$0xfe]
    %v2589 = vld [vmem:[%s1378 + $0x28] sm:$0xfe]
    %v2590 = vld [vmem:[%s1378 + $0x30] sm:$0x1]
    %v2591 = vld [vmem:[%s1378 + $0x38] sm:$0x1]
    %v2592 = vld [vmem:[%s1378 + $0x40] sm:$0xfe]
    %v2593 = vld [vmem:[%s1378 + $0x48] sm:$0xfe]
    %v2594 = vld [vmem:[%s1378 + $0x50] sm:$0x1]
    %v2595 = vld [vmem:[%s1378 + $0x58] sm:$0x1]
    %v2596 = vld [vmem:[%s1378 + $0x60] sm:$0xfe]
    %v2597 = vld [vmem:[%s1378 + $0x68] sm:$0xfe]
    %v2598 = vld [vmem:[%s1378 + $0x70] sm:$0x1]
    %v2599 = vld [vmem:[%s1378 + $0x78] sm:$0x1]
    %v2600 = vld [vmem:[%s1378 + $0x80] sm:$0xfe]
    %v2601 = vld [vmem:[%s1378 + $0x88] sm:$0xfe]
    %v2602 = vld [vmem:[%s1378 + $0x90] sm:$0x1]
    %v2603 = vld [vmem:[%s1378 + $0x98] sm:$0x1]
    %v2604 = vld [vmem:[%s1378 + $0xa0] sm:$0xfe]
    %v2605 = vld [vmem:[%s1378 + $0xa8] sm:$0xfe]
    %v2606 = vld [vmem:[%s1378 + $0xb0] sm:$0x1]
    %v2607 = vld [vmem:[%s1378 + $0xb8] sm:$0x1]
    %v2608 = vld [vmem:[%s1378 + $0xc0] sm:$0xfe]
    %v2609 = vld [vmem:[%s1378 + $0xc8] sm:$0xfe]
    %v2610 = vld [vmem:[%s1378 + $0xd0] sm:$0x1]
    %v2611 = vld [vmem:[%s1378 + $0xd8] sm:$0x1]
    %v2612 = vld [vmem:[%s1378 + $0xe0] sm:$0xfe]
    %v2613 = vld [vmem:[%s1378 + $0xe8] sm:$0xfe]
    %v2614 = vld [vmem:[%s1378 + $0xf0] sm:$0x1]
    %v2615 = vld [vmem:[%s1378 + $0xf8] sm:$0x1]
    %v2616 = vld [vmem:[%s1378 + $0x140] sm:$0xfe]
    %v2617 = vld [vmem:[%s1378 + $0x148] sm:$0xfe]
    %v2618 = vld [vmem:[%s1378 + $0x150] sm:$0x1]
    %v2619 = vld [vmem:[%s1378 + $0x158] sm:$0x1]
    %v2620 = vld [vmem:[%s1378 + $0x160] sm:$0xfe]
    %v2621 = vld [vmem:[%s1378 + $0x168] sm:$0xfe]
    %v2622 = vld [vmem:[%s1378 + $0x170] sm:$0x1]
    %v2623 = vld [vmem:[%s1378 + $0x178] sm:$0x1]
    %v2624 = vld [vmem:[%s1378 + $0x180] sm:$0xfe]
    %v2625 = vld [vmem:[%s1378 + $0x188] sm:$0xfe]
    %v2626 = vld [vmem:[%s1378 + $0x190] sm:$0x1]
    %v2627 = vld [vmem:[%s1378 + $0x198] sm:$0x1]
    %v2628 = vld [vmem:[%s1378 + $0x1a0] sm:$0xfe]
    %v2629 = vld [vmem:[%s1378 + $0x1a8] sm:$0xfe]
    %v2630 = vld [vmem:[%s1378 + $0x1b0] sm:$0x1]
    %v2631 = vld [vmem:[%s1378 + $0x1b8] sm:$0x1]
    %v2632 = vld [vmem:[%s1378 + $0x1c0] sm:$0xfe]
    %v2633 = vld [vmem:[%s1378 + $0x1c8] sm:$0xfe]
    %v2634 = vld [vmem:[%s1378 + $0x1d0] sm:$0x1]
    %v2635 = vld [vmem:[%s1378 + $0x1d8] sm:$0x1]
    %v2636 = vld [vmem:[%s1378 + $0x1e0] sm:$0xfe]
    %v2637 = vld [vmem:[%s1378 + $0x1e8] sm:$0xfe]
    %v2638 = vld [vmem:[%s1378 + $0x1f0] sm:$0x1]
    %v2639 = vld [vmem:[%s1378 + $0x1f8] sm:$0x1]
    %v2640 = vld [vmem:[%s1378 + $0x200] sm:$0xfe]
    %v2641 = vld [vmem:[%s1378 + $0x208] sm:$0xfe]
    %v2642 = vld [vmem:[%s1378 + $0x210] sm:$0x1]
    %v2643 = vld [vmem:[%s1378 + $0x218] sm:$0x1]
    %v2644 = vld [vmem:[%s1378 + $0x220] sm:$0xfe]
    %v2645 = vld [vmem:[%s1378 + $0x228] sm:$0xfe]
    %v2646 = vld [vmem:[%s1378 + $0x230] sm:$0x1]
    %v2647 = vld [vmem:[%s1378 + $0x238] sm:$0x1]
    %v2648 = vlaneseq
    %v2649 = vshrl.u32 %v2648, 7
    %v2650 = vsub.s32 4, %v2649
    %v2651 = vrot.slane %v1638, %v2650
    %v2652 = vlaneseq
    %v2653 = vshrl.u32 %v2652, 7
    %v2654 = vsub.s32 4, %v2653
    %v2655 = vrot.slane %v1639, %v2654
    %v2656 = vmul.f32 %v2584, %v2651
    %v2657 = vmul.f32 %v2585, %v2655
    %v2658 = vmul.f32 %v2586, %v2651
    %v2659 = vmul.f32 %v2587, %v2655
    %v2660 = vmul.f32 %v2588, %v2651
    %v2661 = vmul.f32 %v2589, %v2655
    %v2662 = vmul.f32 %v2590, %v2651
    %v2663 = vmul.f32 %v2591, %v2655
    %v2664 = vmul.f32 %v2592, %v2651
    %v2665 = vmul.f32 %v2593, %v2655
    %v2666 = vmul.f32 %v2594, %v2651
    %v2667 = vmul.f32 %v2595, %v2655
    %v2668 = vmul.f32 %v2596, %v2651
    %v2669 = vmul.f32 %v2597, %v2655
    %v2670 = vmul.f32 %v2598, %v2651
    %v2671 = vmul.f32 %v2599, %v2655
    %v2672 = vmul.f32 %v2600, %v2651
    %v2673 = vmul.f32 %v2601, %v2655
    %v2674 = vmul.f32 %v2602, %v2651
    %v2675 = vmul.f32 %v2603, %v2655
    %v2676 = vmul.f32 %v2604, %v2651
    %v2677 = vmul.f32 %v2605, %v2655
    %v2678 = vmul.f32 %v2606, %v2651
    %v2679 = vmul.f32 %v2607, %v2655
    %v2680 = vmul.f32 %v2608, %v2651
    %v2681 = vmul.f32 %v2609, %v2655
    %v2682 = vmul.f32 %v2610, %v2651
    %v2683 = vmul.f32 %v2611, %v2655
    %v2684 = vmul.f32 %v2612, %v2651
    %v2685 = vmul.f32 %v2613, %v2655
    %v2686 = vmul.f32 %v2614, %v2651
    %v2687 = vmul.f32 %v2615, %v2655
    %v2688 = vmul.f32 %v2616, %v2651
    %v2689 = vmul.f32 %v2617, %v2655
    %v2690 = vmul.f32 %v2618, %v2651
    %v2691 = vmul.f32 %v2619, %v2655
    %v2692 = vmul.f32 %v2620, %v2651
    %v2693 = vmul.f32 %v2621, %v2655
    %v2694 = vmul.f32 %v2622, %v2651
    %v2695 = vmul.f32 %v2623, %v2655
    %v2696 = vmul.f32 %v2624, %v2651
    %v2697 = vmul.f32 %v2625, %v2655
    %v2698 = vmul.f32 %v2626, %v2651
    %v2699 = vmul.f32 %v2627, %v2655
    %v2700 = vmul.f32 %v2628, %v2651
    %v2701 = vmul.f32 %v2629, %v2655
    %v2702 = vmul.f32 %v2630, %v2651
    %v2703 = vmul.f32 %v2631, %v2655
    %v2704 = vmul.f32 %v2632, %v2651
    %v2705 = vmul.f32 %v2633, %v2655
    %v2706 = vmul.f32 %v2634, %v2651
    %v2707 = vmul.f32 %v2635, %v2655
    %v2708 = vmul.f32 %v2636, %v2651
    %v2709 = vmul.f32 %v2637, %v2655
    %v2710 = vmul.f32 %v2638, %v2651
    %v2711 = vmul.f32 %v2639, %v2655
    %v2712 = vmul.f32 %v2640, %v2651
    %v2713 = vmul.f32 %v2641, %v2655
    %v2714 = vmul.f32 %v2642, %v2651
    %v2715 = vmul.f32 %v2643, %v2655
    %v2716 = vmul.f32 %v2644, %v2651
    %v2717 = vmul.f32 %v2645, %v2655
    %v2718 = vmul.f32 %v2646, %v2651
    %v2719 = vmul.f32 %v2647, %v2655
    %v2784 = vrot.slane %v2656, 1
    %v2785 = vrot.slane %v2658, 1
    %v2786 = vsel %vm1958, %v2784, %v2785
    %v2787 = vrot.slane %v2657, 1
    %v2788 = vrot.slane %v2659, 1
    %v2789 = vsel %vm1958, %v2787, %v2788
    %v2790 = vrot.slane %v2660, 1
    %v2791 = vrot.slane %v2662, 1
    %v2792 = vsel %vm1958, %v2790, %v2791
    %v2793 = vrot.slane %v2661, 1
    %v2794 = vrot.slane %v2663, 1
    %v2795 = vsel %vm1958, %v2793, %v2794
    %v2796 = vrot.slane %v2664, 1
    %v2797 = vrot.slane %v2666, 1
    %v2798 = vsel %vm1958, %v2796, %v2797
    %v2799 = vrot.slane %v2665, 1
    %v2800 = vrot.slane %v2667, 1
    %v2801 = vsel %vm1958, %v2799, %v2800
    %v2802 = vrot.slane %v2668, 1
    %v2803 = vrot.slane %v2670, 1
    %v2804 = vsel %vm1958, %v2802, %v2803
    %v2805 = vrot.slane %v2669, 1
    %v2806 = vrot.slane %v2671, 1
    %v2807 = vsel %vm1958, %v2805, %v2806
    %v2808 = vrot.slane %v2672, 1
    %v2809 = vrot.slane %v2674, 1
    %v2810 = vsel %vm1958, %v2808, %v2809
    %v2811 = vrot.slane %v2673, 1
    %v2812 = vrot.slane %v2675, 1
    %v2813 = vsel %vm1958, %v2811, %v2812
    %v2814 = vrot.slane %v2676, 1
    %v2815 = vrot.slane %v2678, 1
    %v2816 = vsel %vm1958, %v2814, %v2815
    %v2817 = vrot.slane %v2677, 1
    %v2818 = vrot.slane %v2679, 1
    %v2819 = vsel %vm1958, %v2817, %v2818
    %v2820 = vrot.slane %v2680, 1
    %v2821 = vrot.slane %v2682, 1
    %v2822 = vsel %vm1958, %v2820, %v2821
    %v2823 = vrot.slane %v2681, 1
    %v2824 = vrot.slane %v2683, 1
    %v2825 = vsel %vm1958, %v2823, %v2824
    %v2826 = vrot.slane %v2684, 1
    %v2827 = vrot.slane %v2686, 1
    %v2828 = vsel %vm1958, %v2826, %v2827
    %v2829 = vrot.slane %v2685, 1
    %v2830 = vrot.slane %v2687, 1
    %v2831 = vsel %vm1958, %v2829, %v2830
    %v2832 = vrot.slane %v2688, 1
    %v2833 = vrot.slane %v2690, 1
    %v2834 = vsel %vm1958, %v2832, %v2833
    %v2835 = vrot.slane %v2689, 1
    %v2836 = vrot.slane %v2691, 1
    %v2837 = vsel %vm1958, %v2835, %v2836
    %v2838 = vrot.slane %v2692, 1
    %v2839 = vrot.slane %v2694, 1
    %v2840 = vsel %vm1958, %v2838, %v2839
    %v2841 = vrot.slane %v2693, 1
    %v2842 = vrot.slane %v2695, 1
    %v2843 = vsel %vm1958, %v2841, %v2842
    %v2844 = vrot.slane %v2696, 1
    %v2845 = vrot.slane %v2698, 1
    %v2846 = vsel %vm1958, %v2844, %v2845
    %v2847 = vrot.slane %v2697, 1
    %v2848 = vrot.slane %v2699, 1
    %v2849 = vsel %vm1958, %v2847, %v2848
    %v2850 = vrot.slane %v2700, 1
    %v2851 = vrot.slane %v2702, 1
    %v2852 = vsel %vm1958, %v2850, %v2851
    %v2853 = vrot.slane %v2701, 1
    %v2854 = vrot.slane %v2703, 1
    %v2855 = vsel %vm1958, %v2853, %v2854
    %v2856 = vrot.slane %v2704, 1
    %v2857 = vrot.slane %v2706, 1
    %v2858 = vsel %vm1958, %v2856, %v2857
    %v2859 = vrot.slane %v2705, 1
    %v2860 = vrot.slane %v2707, 1
    %v2861 = vsel %vm1958, %v2859, %v2860
    %v2862 = vrot.slane %v2708, 1
    %v2863 = vrot.slane %v2710, 1
    %v2864 = vsel %vm1958, %v2862, %v2863
    %v2865 = vrot.slane %v2709, 1
    %v2866 = vrot.slane %v2711, 1
    %v2867 = vsel %vm1958, %v2865, %v2866
    %v2868 = vrot.slane %v2712, 1
    %v2869 = vrot.slane %v2714, 1
    %v2870 = vsel %vm1958, %v2868, %v2869
    %v2871 = vrot.slane %v2713, 1
    %v2872 = vrot.slane %v2715, 1
    %v2873 = vsel %vm1958, %v2871, %v2872
    %v2874 = vrot.slane %v2716, 1
    %v2875 = vrot.slane %v2718, 1
    %v2876 = vsel %vm1958, %v2874, %v2875
    %v2877 = vrot.slane %v2717, 1
    %v2878 = vrot.slane %v2719, 1
    %v2879 = vsel %vm1958, %v2877, %v2878
    %v2912 = vadd.f32 %v2552, %v2786
    %v2913 = vadd.f32 %v2553, %v2789
    %v2914 = vadd.f32 %v2554, %v2792
    %v2915 = vadd.f32 %v2555, %v2795
    %v2916 = vadd.f32 %v2556, %v2798
    %v2917 = vadd.f32 %v2557, %v2801
    %v2918 = vadd.f32 %v2558, %v2804
    %v2919 = vadd.f32 %v2559, %v2807
    %v2920 = vadd.f32 %v2560, %v2810
    %v2921 = vadd.f32 %v2561, %v2813
    %v2922 = vadd.f32 %v2562, %v2816
    %v2923 = vadd.f32 %v2563, %v2819
    %v2924 = vadd.f32 %v2564, %v2822
    %v2925 = vadd.f32 %v2565, %v2825
    %v2926 = vadd.f32 %v2566, %v2828
    %v2927 = vadd.f32 %v2567, %v2831
    %v2928 = vadd.f32 %v2568, %v2834
    %v2929 = vadd.f32 %v2569, %v2837
    %v2930 = vadd.f32 %v2570, %v2840
    %v2931 = vadd.f32 %v2571, %v2843
    %v2932 = vadd.f32 %v2572, %v2846
    %v2933 = vadd.f32 %v2573, %v2849
    %v2934 = vadd.f32 %v2574, %v2852
    %v2935 = vadd.f32 %v2575, %v2855
    %v2936 = vadd.f32 %v2576, %v2858
    %v2937 = vadd.f32 %v2577, %v2861
    %v2938 = vadd.f32 %v2578, %v2864
    %v2939 = vadd.f32 %v2579, %v2867
    %v2940 = vadd.f32 %v2580, %v2870
    %v2941 = vadd.f32 %v2581, %v2873
    %v2942 = vadd.f32 %v2582, %v2876
    %v2943 = vadd.f32 %v2583, %v2879
    %v2944 = vld [vmem:[%s1378] sm:$0xfc]
    %v2945 = vld [vmem:[%s1378 + $0x8] sm:$0xfc]
    %v2946 = vld [vmem:[%s1378 + $0x10] sm:$0x3]
    %v2947 = vld [vmem:[%s1378 + $0x18] sm:$0x3]
    %v2948 = vld [vmem:[%s1378 + $0x20] sm:$0xfc]
    %v2949 = vld [vmem:[%s1378 + $0x28] sm:$0xfc]
    %v2950 = vld [vmem:[%s1378 + $0x30] sm:$0x3]
    %v2951 = vld [vmem:[%s1378 + $0x38] sm:$0x3]
    %v2952 = vld [vmem:[%s1378 + $0x40] sm:$0xfc]
    %v2953 = vld [vmem:[%s1378 + $0x48] sm:$0xfc]
    %v2954 = vld [vmem:[%s1378 + $0x50] sm:$0x3]
    %v2955 = vld [vmem:[%s1378 + $0x58] sm:$0x3]
    %v2956 = vld [vmem:[%s1378 + $0x60] sm:$0xfc]
    %v2957 = vld [vmem:[%s1378 + $0x68] sm:$0xfc]
    %v2958 = vld [vmem:[%s1378 + $0x70] sm:$0x3]
    %v2959 = vld [vmem:[%s1378 + $0x78] sm:$0x3]
    %v2960 = vld [vmem:[%s1378 + $0x80] sm:$0xfc]
    %v2961 = vld [vmem:[%s1378 + $0x88] sm:$0xfc]
    %v2962 = vld [vmem:[%s1378 + $0x90] sm:$0x3]
    %v2963 = vld [vmem:[%s1378 + $0x98] sm:$0x3]
    %v2964 = vld [vmem:[%s1378 + $0xa0] sm:$0xfc]
    %v2965 = vld [vmem:[%s1378 + $0xa8] sm:$0xfc]
    %v2966 = vld [vmem:[%s1378 + $0xb0] sm:$0x3]
    %v2967 = vld [vmem:[%s1378 + $0xb8] sm:$0x3]
    %v2968 = vld [vmem:[%s1378 + $0xc0] sm:$0xfc]
    %v2969 = vld [vmem:[%s1378 + $0xc8] sm:$0xfc]
    %v2970 = vld [vmem:[%s1378 + $0xd0] sm:$0x3]
    %v2971 = vld [vmem:[%s1378 + $0xd8] sm:$0x3]
    %v2972 = vld [vmem:[%s1378 + $0xe0] sm:$0xfc]
    %v2973 = vld [vmem:[%s1378 + $0xe8] sm:$0xfc]
    %v2974 = vld [vmem:[%s1378 + $0xf0] sm:$0x3]
    %v2975 = vld [vmem:[%s1378 + $0xf8] sm:$0x3]
    %v2976 = vld [vmem:[%s1378 + $0x140] sm:$0xfc]
    %v2977 = vld [vmem:[%s1378 + $0x148] sm:$0xfc]
    %v2978 = vld [vmem:[%s1378 + $0x150] sm:$0x3]
    %v2979 = vld [vmem:[%s1378 + $0x158] sm:$0x3]
    %v2980 = vld [vmem:[%s1378 + $0x160] sm:$0xfc]
    %v2981 = vld [vmem:[%s1378 + $0x168] sm:$0xfc]
    %v2982 = vld [vmem:[%s1378 + $0x170] sm:$0x3]
    %v2983 = vld [vmem:[%s1378 + $0x178] sm:$0x3]
    %v2984 = vld [vmem:[%s1378 + $0x180] sm:$0xfc]
    %v2985 = vld [vmem:[%s1378 + $0x188] sm:$0xfc]
    %v2986 = vld [vmem:[%s1378 + $0x190] sm:$0x3]
    %v2987 = vld [vmem:[%s1378 + $0x198] sm:$0x3]
    %v2988 = vld [vmem:[%s1378 + $0x1a0] sm:$0xfc]
    %v2989 = vld [vmem:[%s1378 + $0x1a8] sm:$0xfc]
    %v2990 = vld [vmem:[%s1378 + $0x1b0] sm:$0x3]
    %v2991 = vld [vmem:[%s1378 + $0x1b8] sm:$0x3]
    %v2992 = vld [vmem:[%s1378 + $0x1c0] sm:$0xfc]
    %v2993 = vld [vmem:[%s1378 + $0x1c8] sm:$0xfc]
    %v2994 = vld [vmem:[%s1378 + $0x1d0] sm:$0x3]
    %v2995 = vld [vmem:[%s1378 + $0x1d8] sm:$0x3]
    %v2996 = vld [vmem:[%s1378 + $0x1e0] sm:$0xfc]
    %v2997 = vld [vmem:[%s1378 + $0x1e8] sm:$0xfc]
    %v2998 = vld [vmem:[%s1378 + $0x1f0] sm:$0x3]
    %v2999 = vld [vmem:[%s1378 + $0x1f8] sm:$0x3]
    %v3000 = vld [vmem:[%s1378 + $0x200] sm:$0xfc]
    %v3001 = vld [vmem:[%s1378 + $0x208] sm:$0xfc]
    %v3002 = vld [vmem:[%s1378 + $0x210] sm:$0x3]
    %v3003 = vld [vmem:[%s1378 + $0x218] sm:$0x3]
    %v3004 = vld [vmem:[%s1378 + $0x220] sm:$0xfc]
    %v3005 = vld [vmem:[%s1378 + $0x228] sm:$0xfc]
    %v3006 = vld [vmem:[%s1378 + $0x230] sm:$0x3]
    %v3007 = vld [vmem:[%s1378 + $0x238] sm:$0x3]
    %v3008 = vlaneseq
    %v3009 = vshrl.u32 %v3008, 7
    %v3010 = vsub.s32 5, %v3009
    %v3011 = vrot.slane %v1638, %v3010
    %v3012 = vlaneseq
    %v3013 = vshrl.u32 %v3012, 7
    %v3014 = vsub.s32 5, %v3013
    %v3015 = vrot.slane %v1639, %v3014
    %v3016 = vmul.f32 %v2944, %v3011
    %v3017 = vmul.f32 %v2945, %v3015
    %v3018 = vmul.f32 %v2946, %v3011
    %v3019 = vmul.f32 %v2947, %v3015
    %v3020 = vmul.f32 %v2948, %v3011
    %v3021 = vmul.f32 %v2949, %v3015
    %v3022 = vmul.f32 %v2950, %v3011
    %v3023 = vmul.f32 %v2951, %v3015
    %v3024 = vmul.f32 %v2952, %v3011
    %v3025 = vmul.f32 %v2953, %v3015
    %v3026 = vmul.f32 %v2954, %v3011
    %v3027 = vmul.f32 %v2955, %v3015
    %v3028 = vmul.f32 %v2956, %v3011
    %v3029 = vmul.f32 %v2957, %v3015
    %v3030 = vmul.f32 %v2958, %v3011
    %v3031 = vmul.f32 %v2959, %v3015
    %v3032 = vmul.f32 %v2960, %v3011
    %v3033 = vmul.f32 %v2961, %v3015
    %v3034 = vmul.f32 %v2962, %v3011
    %v3035 = vmul.f32 %v2963, %v3015
    %v3036 = vmul.f32 %v2964, %v3011
    %v3037 = vmul.f32 %v2965, %v3015
    %v3038 = vmul.f32 %v2966, %v3011
    %v3039 = vmul.f32 %v2967, %v3015
    %v3040 = vmul.f32 %v2968, %v3011
    %v3041 = vmul.f32 %v2969, %v3015
    %v3042 = vmul.f32 %v2970, %v3011
    %v3043 = vmul.f32 %v2971, %v3015
    %v3044 = vmul.f32 %v2972, %v3011
    %v3045 = vmul.f32 %v2973, %v3015
    %v3046 = vmul.f32 %v2974, %v3011
    %v3047 = vmul.f32 %v2975, %v3015
    %v3048 = vmul.f32 %v2976, %v3011
    %v3049 = vmul.f32 %v2977, %v3015
    %v3050 = vmul.f32 %v2978, %v3011
    %v3051 = vmul.f32 %v2979, %v3015
    %v3052 = vmul.f32 %v2980, %v3011
    %v3053 = vmul.f32 %v2981, %v3015
    %v3054 = vmul.f32 %v2982, %v3011
    %v3055 = vmul.f32 %v2983, %v3015
    %v3056 = vmul.f32 %v2984, %v3011
    %v3057 = vmul.f32 %v2985, %v3015
    %v3058 = vmul.f32 %v2986, %v3011
    %v3059 = vmul.f32 %v2987, %v3015
    %v3060 = vmul.f32 %v2988, %v3011
    %v3061 = vmul.f32 %v2989, %v3015
    %v3062 = vmul.f32 %v2990, %v3011
    %v3063 = vmul.f32 %v2991, %v3015
    %v3064 = vmul.f32 %v2992, %v3011
    %v3065 = vmul.f32 %v2993, %v3015
    %v3066 = vmul.f32 %v2994, %v3011
    %v3067 = vmul.f32 %v2995, %v3015
    %v3068 = vmul.f32 %v2996, %v3011
    %v3069 = vmul.f32 %v2997, %v3015
    %v3070 = vmul.f32 %v2998, %v3011
    %v3071 = vmul.f32 %v2999, %v3015
    %v3072 = vmul.f32 %v3000, %v3011
    %v3073 = vmul.f32 %v3001, %v3015
    %v3074 = vmul.f32 %v3002, %v3011
    %v3075 = vmul.f32 %v3003, %v3015
    %v3076 = vmul.f32 %v3004, %v3011
    %v3077 = vmul.f32 %v3005, %v3015
    %v3078 = vmul.f32 %v3006, %v3011
    %v3079 = vmul.f32 %v3007, %v3015
    %v3144 = vrot.slane %v3016, 2
    %v3145 = vrot.slane %v3018, 2
    %v3146 = vsel %vm2319, %v3144, %v3145
    %v3147 = vrot.slane %v3017, 2
    %v3148 = vrot.slane %v3019, 2
    %v3149 = vsel %vm2319, %v3147, %v3148
    %v3150 = vrot.slane %v3020, 2
    %v3151 = vrot.slane %v3022, 2
    %v3152 = vsel %vm2319, %v3150, %v3151
    %v3153 = vrot.slane %v3021, 2
    %v3154 = vrot.slane %v3023, 2
    %v3155 = vsel %vm2319, %v3153, %v3154
    %v3156 = vrot.slane %v3024, 2
    %v3157 = vrot.slane %v3026, 2
    %v3158 = vsel %vm2319, %v3156, %v3157
    %v3159 = vrot.slane %v3025, 2
    %v3160 = vrot.slane %v3027, 2
    %v3161 = vsel %vm2319, %v3159, %v3160
    %v3162 = vrot.slane %v3028, 2
    %v3163 = vrot.slane %v3030, 2
    %v3164 = vsel %vm2319, %v3162, %v3163
    %v3165 = vrot.slane %v3029, 2
    %v3166 = vrot.slane %v3031, 2
    %v3167 = vsel %vm2319, %v3165, %v3166
    %v3168 = vrot.slane %v3032, 2
    %v3169 = vrot.slane %v3034, 2
    %v3170 = vsel %vm2319, %v3168, %v3169
    %v3171 = vrot.slane %v3033, 2
    %v3172 = vrot.slane %v3035, 2
    %v3173 = vsel %vm2319, %v3171, %v3172
    %v3174 = vrot.slane %v3036, 2
    %v3175 = vrot.slane %v3038, 2
    %v3176 = vsel %vm2319, %v3174, %v3175
    %v3177 = vrot.slane %v3037, 2
    %v3178 = vrot.slane %v3039, 2
    %v3179 = vsel %vm2319, %v3177, %v3178
    %v3180 = vrot.slane %v3040, 2
    %v3181 = vrot.slane %v3042, 2
    %v3182 = vsel %vm2319, %v3180, %v3181
    %v3183 = vrot.slane %v3041, 2
    %v3184 = vrot.slane %v3043, 2
    %v3185 = vsel %vm2319, %v3183, %v3184
    %v3186 = vrot.slane %v3044, 2
    %v3187 = vrot.slane %v3046, 2
    %v3188 = vsel %vm2319, %v3186, %v3187
    %v3189 = vrot.slane %v3045, 2
    %v3190 = vrot.slane %v3047, 2
    %v3191 = vsel %vm2319, %v3189, %v3190
    %v3192 = vrot.slane %v3048, 2
    %v3193 = vrot.slane %v3050, 2
    %v3194 = vsel %vm2319, %v3192, %v3193
    %v3195 = vrot.slane %v3049, 2
    %v3196 = vrot.slane %v3051, 2
    %v3197 = vsel %vm2319, %v3195, %v3196
    %v3198 = vrot.slane %v3052, 2
    %v3199 = vrot.slane %v3054, 2
    %v3200 = vsel %vm2319, %v3198, %v3199
    %v3201 = vrot.slane %v3053, 2
    %v3202 = vrot.slane %v3055, 2
    %v3203 = vsel %vm2319, %v3201, %v3202
    %v3204 = vrot.slane %v3056, 2
    %v3205 = vrot.slane %v3058, 2
    %v3206 = vsel %vm2319, %v3204, %v3205
    %v3207 = vrot.slane %v3057, 2
    %v3208 = vrot.slane %v3059, 2
    %v3209 = vsel %vm2319, %v3207, %v3208
    %v3210 = vrot.slane %v3060, 2
    %v3211 = vrot.slane %v3062, 2
    %v3212 = vsel %vm2319, %v3210, %v3211
    %v3213 = vrot.slane %v3061, 2
    %v3214 = vrot.slane %v3063, 2
    %v3215 = vsel %vm2319, %v3213, %v3214
    %v3216 = vrot.slane %v3064, 2
    %v3217 = vrot.slane %v3066, 2
    %v3218 = vsel %vm2319, %v3216, %v3217
    %v3219 = vrot.slane %v3065, 2
    %v3220 = vrot.slane %v3067, 2
    %v3221 = vsel %vm2319, %v3219, %v3220
    %v3222 = vrot.slane %v3068, 2
    %v3223 = vrot.slane %v3070, 2
    %v3224 = vsel %vm2319, %v3222, %v3223
    %v3225 = vrot.slane %v3069, 2
    %v3226 = vrot.slane %v3071, 2
    %v3227 = vsel %vm2319, %v3225, %v3226
    %v3228 = vrot.slane %v3072, 2
    %v3229 = vrot.slane %v3074, 2
    %v3230 = vsel %vm2319, %v3228, %v3229
    %v3231 = vrot.slane %v3073, 2
    %v3232 = vrot.slane %v3075, 2
    %v3233 = vsel %vm2319, %v3231, %v3232
    %v3234 = vrot.slane %v3076, 2
    %v3235 = vrot.slane %v3078, 2
    %v3236 = vsel %vm2319, %v3234, %v3235
    %v3237 = vrot.slane %v3077, 2
    %v3238 = vrot.slane %v3079, 2
    %v3239 = vsel %vm2319, %v3237, %v3238
    %v3272 = vadd.f32 %v2912, %v3146
    %v3273 = vadd.f32 %v2913, %v3149
    %v3274 = vadd.f32 %v2914, %v3152
    %v3275 = vadd.f32 %v2915, %v3155
    %v3276 = vadd.f32 %v2916, %v3158
    %v3277 = vadd.f32 %v2917, %v3161
    %v3278 = vadd.f32 %v2918, %v3164
    %v3279 = vadd.f32 %v2919, %v3167
    %v3280 = vadd.f32 %v2920, %v3170
    %v3281 = vadd.f32 %v2921, %v3173
    %v3282 = vadd.f32 %v2922, %v3176
    %v3283 = vadd.f32 %v2923, %v3179
    %v3284 = vadd.f32 %v2924, %v3182
    %v3285 = vadd.f32 %v2925, %v3185
    %v3286 = vadd.f32 %v2926, %v3188
    %v3287 = vadd.f32 %v2927, %v3191
    %v3288 = vadd.f32 %v2928, %v3194
    %v3289 = vadd.f32 %v2929, %v3197
    %v3290 = vadd.f32 %v2930, %v3200
    %v3291 = vadd.f32 %v2931, %v3203
    %v3292 = vadd.f32 %v2932, %v3206
    %v3293 = vadd.f32 %v2933, %v3209
    %v3294 = vadd.f32 %v2934, %v3212
    %v3295 = vadd.f32 %v2935, %v3215
    %v3296 = vadd.f32 %v2936, %v3218
    %v3297 = vadd.f32 %v2937, %v3221
    %v3298 = vadd.f32 %v2938, %v3224
    %v3299 = vadd.f32 %v2939, %v3227
    %v3300 = vadd.f32 %v2940, %v3230
    %v3301 = vadd.f32 %v2941, %v3233
    %v3302 = vadd.f32 %v2942, %v3236
    %v3303 = vadd.f32 %v2943, %v3239
    %s3304 = scalar_lea.vmem [#allocation3], 64
    %v3305 = vld [vmem:[%s3304] sm:$0xff]
    %v3306 = vld [vmem:[%s3304 + $0x8] sm:$0xff]
    %v3307 = vld [vmem:[%s3304 + $0x20] sm:$0xff]
    %v3308 = vld [vmem:[%s3304 + $0x28] sm:$0xff]
    %v3309 = vld [vmem:[%s3304 + $0x40] sm:$0xff]
    %v3310 = vld [vmem:[%s3304 + $0x48] sm:$0xff]
    %v3311 = vld [vmem:[%s3304 + $0x60] sm:$0xff]
    %v3312 = vld [vmem:[%s3304 + $0x68] sm:$0xff]
    %v3313 = vld [vmem:[%s3304 + $0x80] sm:$0xff]
    %v3314 = vld [vmem:[%s3304 + $0x88] sm:$0xff]
    %v3315 = vld [vmem:[%s3304 + $0xa0] sm:$0xff]
    %v3316 = vld [vmem:[%s3304 + $0xa8] sm:$0xff]
    %v3317 = vld [vmem:[%s3304 + $0xc0] sm:$0xff]
    %v3318 = vld [vmem:[%s3304 + $0xc8] sm:$0xff]
    %v3319 = vld [vmem:[%s3304 + $0xe0] sm:$0xff]
    %v3320 = vld [vmem:[%s3304 + $0xe8] sm:$0xff]
    %v3321 = vld [vmem:[%s3304 + $0x140] sm:$0xff]
    %v3322 = vld [vmem:[%s3304 + $0x148] sm:$0xff]
    %v3323 = vld [vmem:[%s3304 + $0x160] sm:$0xff]
    %v3324 = vld [vmem:[%s3304 + $0x168] sm:$0xff]
    %v3325 = vld [vmem:[%s3304 + $0x180] sm:$0xff]
    %v3326 = vld [vmem:[%s3304 + $0x188] sm:$0xff]
    %v3327 = vld [vmem:[%s3304 + $0x1a0] sm:$0xff]
    %v3328 = vld [vmem:[%s3304 + $0x1a8] sm:$0xff]
    %v3329 = vld [vmem:[%s3304 + $0x1c0] sm:$0xff]
    %v3330 = vld [vmem:[%s3304 + $0x1c8] sm:$0xff]
    %v3331 = vld [vmem:[%s3304 + $0x1e0] sm:$0xff]
    %v3332 = vld [vmem:[%s3304 + $0x1e8] sm:$0xff]
    %v3333 = vld [vmem:[%s3304 + $0x200] sm:$0xff]
    %v3334 = vld [vmem:[%s3304 + $0x208] sm:$0xff]
    %v3335 = vld [vmem:[%s3304 + $0x220] sm:$0xff]
    %v3336 = vld [vmem:[%s3304 + $0x228] sm:$0xff]
    %v3337 = vlaneseq
    %v3338 = vshrl.u32 %v3337, 7
    %v3339 = vsub.s32 6, %v3338
    %v3340 = vrot.slane %v1638, %v3339
    %v3341 = vlaneseq
    %v3342 = vshrl.u32 %v3341, 7
    %v3343 = vsub.s32 6, %v3342
    %v3344 = vrot.slane %v1639, %v3343
    %v3345 = vmul.f32 %v3305, %v3340
    %v3346 = vmul.f32 %v3306, %v3344
    %v3347 = vmul.f32 %v3307, %v3340
    %v3348 = vmul.f32 %v3308, %v3344
    %v3349 = vmul.f32 %v3309, %v3340
    %v3350 = vmul.f32 %v3310, %v3344
    %v3351 = vmul.f32 %v3311, %v3340
    %v3352 = vmul.f32 %v3312, %v3344
    %v3353 = vmul.f32 %v3313, %v3340
    %v3354 = vmul.f32 %v3314, %v3344
    %v3355 = vmul.f32 %v3315, %v3340
    %v3356 = vmul.f32 %v3316, %v3344
    %v3357 = vmul.f32 %v3317, %v3340
    %v3358 = vmul.f32 %v3318, %v3344
    %v3359 = vmul.f32 %v3319, %v3340
    %v3360 = vmul.f32 %v3320, %v3344
    %v3361 = vmul.f32 %v3321, %v3340
    %v3362 = vmul.f32 %v3322, %v3344
    %v3363 = vmul.f32 %v3323, %v3340
    %v3364 = vmul.f32 %v3324, %v3344
    %v3365 = vmul.f32 %v3325, %v3340
    %v3366 = vmul.f32 %v3326, %v3344
    %v3367 = vmul.f32 %v3327, %v3340
    %v3368 = vmul.f32 %v3328, %v3344
    %v3369 = vmul.f32 %v3329, %v3340
    %v3370 = vmul.f32 %v3330, %v3344
    %v3371 = vmul.f32 %v3331, %v3340
    %v3372 = vmul.f32 %v3332, %v3344
    %v3373 = vmul.f32 %v3333, %v3340
    %v3374 = vmul.f32 %v3334, %v3344
    %v3375 = vmul.f32 %v3335, %v3340
    %v3376 = vmul.f32 %v3336, %v3344
    %v3377 = vadd.f32 %v3272, %v3345
    %v3378 = vadd.f32 %v3273, %v3346
    %v3379 = vadd.f32 %v3274, %v3347
    %v3380 = vadd.f32 %v3275, %v3348
    %v3381 = vadd.f32 %v3276, %v3349
    %v3382 = vadd.f32 %v3277, %v3350
    %v3383 = vadd.f32 %v3278, %v3351
    %v3384 = vadd.f32 %v3279, %v3352
    %v3385 = vadd.f32 %v3280, %v3353
    %v3386 = vadd.f32 %v3281, %v3354
    %v3387 = vadd.f32 %v3282, %v3355
    %v3388 = vadd.f32 %v3283, %v3356
    %v3389 = vadd.f32 %v3284, %v3357
    %v3390 = vadd.f32 %v3285, %v3358
    %v3391 = vadd.f32 %v3286, %v3359
    %v3392 = vadd.f32 %v3287, %v3360
    %v3393 = vadd.f32 %v3288, %v3361
    %v3394 = vadd.f32 %v3289, %v3362
    %v3395 = vadd.f32 %v3290, %v3363
    %v3396 = vadd.f32 %v3291, %v3364
    %v3397 = vadd.f32 %v3292, %v3365
    %v3398 = vadd.f32 %v3293, %v3366
    %v3399 = vadd.f32 %v3294, %v3367
    %v3400 = vadd.f32 %v3295, %v3368
    %v3401 = vadd.f32 %v3296, %v3369
    %v3402 = vadd.f32 %v3297, %v3370
    %v3403 = vadd.f32 %v3298, %v3371
    %v3404 = vadd.f32 %v3299, %v3372
    %v3405 = vadd.f32 %v3300, %v3373
    %v3406 = vadd.f32 %v3301, %v3374
    %v3407 = vadd.f32 %v3302, %v3375
    %v3408 = vadd.f32 %v3303, %v3376
    %v3409 = vld [vmem:[%s3304] sm:$0xfe]
    %v3410 = vld [vmem:[%s3304 + $0x8] sm:$0xfe]
    %v3411 = vld [vmem:[%s3304 + $0x10] sm:$0x1]
    %v3412 = vld [vmem:[%s3304 + $0x18] sm:$0x1]
    %v3413 = vld [vmem:[%s3304 + $0x20] sm:$0xfe]
    %v3414 = vld [vmem:[%s3304 + $0x28] sm:$0xfe]
    %v3415 = vld [vmem:[%s3304 + $0x30] sm:$0x1]
    %v3416 = vld [vmem:[%s3304 + $0x38] sm:$0x1]
    %v3417 = vld [vmem:[%s3304 + $0x40] sm:$0xfe]
    %v3418 = vld [vmem:[%s3304 + $0x48] sm:$0xfe]
    %v3419 = vld [vmem:[%s3304 + $0x50] sm:$0x1]
    %v3420 = vld [vmem:[%s3304 + $0x58] sm:$0x1]
    %v3421 = vld [vmem:[%s3304 + $0x60] sm:$0xfe]
    %v3422 = vld [vmem:[%s3304 + $0x68] sm:$0xfe]
    %v3423 = vld [vmem:[%s3304 + $0x70] sm:$0x1]
    %v3424 = vld [vmem:[%s3304 + $0x78] sm:$0x1]
    %v3425 = vld [vmem:[%s3304 + $0x80] sm:$0xfe]
    %v3426 = vld [vmem:[%s3304 + $0x88] sm:$0xfe]
    %v3427 = vld [vmem:[%s3304 + $0x90] sm:$0x1]
    %v3428 = vld [vmem:[%s3304 + $0x98] sm:$0x1]
    %v3429 = vld [vmem:[%s3304 + $0xa0] sm:$0xfe]
    %v3430 = vld [vmem:[%s3304 + $0xa8] sm:$0xfe]
    %v3431 = vld [vmem:[%s3304 + $0xb0] sm:$0x1]
    %v3432 = vld [vmem:[%s3304 + $0xb8] sm:$0x1]
    %v3433 = vld [vmem:[%s3304 + $0xc0] sm:$0xfe]
    %v3434 = vld [vmem:[%s3304 + $0xc8] sm:$0xfe]
    %v3435 = vld [vmem:[%s3304 + $0xd0] sm:$0x1]
    %v3436 = vld [vmem:[%s3304 + $0xd8] sm:$0x1]
    %v3437 = vld [vmem:[%s3304 + $0xe0] sm:$0xfe]
    %v3438 = vld [vmem:[%s3304 + $0xe8] sm:$0xfe]
    %v3439 = vld [vmem:[%s3304 + $0xf0] sm:$0x1]
    %v3440 = vld [vmem:[%s3304 + $0xf8] sm:$0x1]
    %v3441 = vld [vmem:[%s3304 + $0x140] sm:$0xfe]
    %v3442 = vld [vmem:[%s3304 + $0x148] sm:$0xfe]
    %v3443 = vld [vmem:[%s3304 + $0x150] sm:$0x1]
    %v3444 = vld [vmem:[%s3304 + $0x158] sm:$0x1]
    %v3445 = vld [vmem:[%s3304 + $0x160] sm:$0xfe]
    %v3446 = vld [vmem:[%s3304 + $0x168] sm:$0xfe]
    %v3447 = vld [vmem:[%s3304 + $0x170] sm:$0x1]
    %v3448 = vld [vmem:[%s3304 + $0x178] sm:$0x1]
    %v3449 = vld [vmem:[%s3304 + $0x180] sm:$0xfe]
    %v3450 = vld [vmem:[%s3304 + $0x188] sm:$0xfe]
    %v3451 = vld [vmem:[%s3304 + $0x190] sm:$0x1]
    %v3452 = vld [vmem:[%s3304 + $0x198] sm:$0x1]
    %v3453 = vld [vmem:[%s3304 + $0x1a0] sm:$0xfe]
    %v3454 = vld [vmem:[%s3304 + $0x1a8] sm:$0xfe]
    %v3455 = vld [vmem:[%s3304 + $0x1b0] sm:$0x1]
    %v3456 = vld [vmem:[%s3304 + $0x1b8] sm:$0x1]
    %v3457 = vld [vmem:[%s3304 + $0x1c0] sm:$0xfe]
    %v3458 = vld [vmem:[%s3304 + $0x1c8] sm:$0xfe]
    %v3459 = vld [vmem:[%s3304 + $0x1d0] sm:$0x1]
    %v3460 = vld [vmem:[%s3304 + $0x1d8] sm:$0x1]
    %v3461 = vld [vmem:[%s3304 + $0x1e0] sm:$0xfe]
    %v3462 = vld [vmem:[%s3304 + $0x1e8] sm:$0xfe]
    %v3463 = vld [vmem:[%s3304 + $0x1f0] sm:$0x1]
    %v3464 = vld [vmem:[%s3304 + $0x1f8] sm:$0x1]
    %v3465 = vld [vmem:[%s3304 + $0x200] sm:$0xfe]
    %v3466 = vld [vmem:[%s3304 + $0x208] sm:$0xfe]
    %v3467 = vld [vmem:[%s3304 + $0x210] sm:$0x1]
    %v3468 = vld [vmem:[%s3304 + $0x218] sm:$0x1]
    %v3469 = vld [vmem:[%s3304 + $0x220] sm:$0xfe]
    %v3470 = vld [vmem:[%s3304 + $0x228] sm:$0xfe]
    %v3471 = vld [vmem:[%s3304 + $0x230] sm:$0x1]
    %v3472 = vld [vmem:[%s3304 + $0x238] sm:$0x1]
    %v3473 = vlaneseq
    %v3474 = vshrl.u32 %v3473, 7
    %v3475 = vsub.s32 7, %v3474
    %v3476 = vrot.slane %v1638, %v3475
    %v3477 = vlaneseq
    %v3478 = vshrl.u32 %v3477, 7
    %v3479 = vsub.s32 7, %v3478
    %v3480 = vrot.slane %v1639, %v3479
    %v3481 = vmul.f32 %v3409, %v3476
    %v3482 = vmul.f32 %v3410, %v3480
    %v3483 = vmul.f32 %v3411, %v3476
    %v3484 = vmul.f32 %v3412, %v3480
    %v3485 = vmul.f32 %v3413, %v3476
    %v3486 = vmul.f32 %v3414, %v3480
    %v3487 = vmul.f32 %v3415, %v3476
    %v3488 = vmul.f32 %v3416, %v3480
    %v3489 = vmul.f32 %v3417, %v3476
    %v3490 = vmul.f32 %v3418, %v3480
    %v3491 = vmul.f32 %v3419, %v3476
    %v3492 = vmul.f32 %v3420, %v3480
    %v3493 = vmul.f32 %v3421, %v3476
    %v3494 = vmul.f32 %v3422, %v3480
    %v3495 = vmul.f32 %v3423, %v3476
    %v3496 = vmul.f32 %v3424, %v3480
    %v3497 = vmul.f32 %v3425, %v3476
    %v3498 = vmul.f32 %v3426, %v3480
    %v3499 = vmul.f32 %v3427, %v3476
    %v3500 = vmul.f32 %v3428, %v3480
    %v3501 = vmul.f32 %v3429, %v3476
    %v3502 = vmul.f32 %v3430, %v3480
    %v3503 = vmul.f32 %v3431, %v3476
    %v3504 = vmul.f32 %v3432, %v3480
    %v3505 = vmul.f32 %v3433, %v3476
    %v3506 = vmul.f32 %v3434, %v3480
    %v3507 = vmul.f32 %v3435, %v3476
    %v3508 = vmul.f32 %v3436, %v3480
    %v3509 = vmul.f32 %v3437, %v3476
    %v3510 = vmul.f32 %v3438, %v3480
    %v3511 = vmul.f32 %v3439, %v3476
    %v3512 = vmul.f32 %v3440, %v3480
    %v3513 = vmul.f32 %v3441, %v3476
    %v3514 = vmul.f32 %v3442, %v3480
    %v3515 = vmul.f32 %v3443, %v3476
    %v3516 = vmul.f32 %v3444, %v3480
    %v3517 = vmul.f32 %v3445, %v3476
    %v3518 = vmul.f32 %v3446, %v3480
    %v3519 = vmul.f32 %v3447, %v3476
    %v3520 = vmul.f32 %v3448, %v3480
    %v3521 = vmul.f32 %v3449, %v3476
    %v3522 = vmul.f32 %v3450, %v3480
    %v3523 = vmul.f32 %v3451, %v3476
    %v3524 = vmul.f32 %v3452, %v3480
    %v3525 = vmul.f32 %v3453, %v3476
    %v3526 = vmul.f32 %v3454, %v3480
    %v3527 = vmul.f32 %v3455, %v3476
    %v3528 = vmul.f32 %v3456, %v3480
    %v3529 = vmul.f32 %v3457, %v3476
    %v3530 = vmul.f32 %v3458, %v3480
    %v3531 = vmul.f32 %v3459, %v3476
    %v3532 = vmul.f32 %v3460, %v3480
    %v3533 = vmul.f32 %v3461, %v3476
    %v3534 = vmul.f32 %v3462, %v3480
    %v3535 = vmul.f32 %v3463, %v3476
    %v3536 = vmul.f32 %v3464, %v3480
    %v3537 = vmul.f32 %v3465, %v3476
    %v3538 = vmul.f32 %v3466, %v3480
    %v3539 = vmul.f32 %v3467, %v3476
    %v3540 = vmul.f32 %v3468, %v3480
    %v3541 = vmul.f32 %v3469, %v3476
    %v3542 = vmul.f32 %v3470, %v3480
    %v3543 = vmul.f32 %v3471, %v3476
    %v3544 = vmul.f32 %v3472, %v3480
    %v3609 = vrot.slane %v3481, 1
    %v3610 = vrot.slane %v3483, 1
    %v3611 = vsel %vm1958, %v3609, %v3610
    %v3612 = vrot.slane %v3482, 1
    %v3613 = vrot.slane %v3484, 1
    %v3614 = vsel %vm1958, %v3612, %v3613
    %v3615 = vrot.slane %v3485, 1
    %v3616 = vrot.slane %v3487, 1
    %v3617 = vsel %vm1958, %v3615, %v3616
    %v3618 = vrot.slane %v3486, 1
    %v3619 = vrot.slane %v3488, 1
    %v3620 = vsel %vm1958, %v3618, %v3619
    %v3621 = vrot.slane %v3489, 1
    %v3622 = vrot.slane %v3491, 1
    %v3623 = vsel %vm1958, %v3621, %v3622
    %v3624 = vrot.slane %v3490, 1
    %v3625 = vrot.slane %v3492, 1
    %v3626 = vsel %vm1958, %v3624, %v3625
    %v3627 = vrot.slane %v3493, 1
    %v3628 = vrot.slane %v3495, 1
    %v3629 = vsel %vm1958, %v3627, %v3628
    %v3630 = vrot.slane %v3494, 1
    %v3631 = vrot.slane %v3496, 1
    %v3632 = vsel %vm1958, %v3630, %v3631
    %v3633 = vrot.slane %v3497, 1
    %v3634 = vrot.slane %v3499, 1
    %v3635 = vsel %vm1958, %v3633, %v3634
    %v3636 = vrot.slane %v3498, 1
    %v3637 = vrot.slane %v3500, 1
    %v3638 = vsel %vm1958, %v3636, %v3637
    %v3639 = vrot.slane %v3501, 1
    %v3640 = vrot.slane %v3503, 1
    %v3641 = vsel %vm1958, %v3639, %v3640
    %v3642 = vrot.slane %v3502, 1
    %v3643 = vrot.slane %v3504, 1
    %v3644 = vsel %vm1958, %v3642, %v3643
    %v3645 = vrot.slane %v3505, 1
    %v3646 = vrot.slane %v3507, 1
    %v3647 = vsel %vm1958, %v3645, %v3646
    %v3648 = vrot.slane %v3506, 1
    %v3649 = vrot.slane %v3508, 1
    %v3650 = vsel %vm1958, %v3648, %v3649
    %v3651 = vrot.slane %v3509, 1
    %v3652 = vrot.slane %v3511, 1
    %v3653 = vsel %vm1958, %v3651, %v3652
    %v3654 = vrot.slane %v3510, 1
    %v3655 = vrot.slane %v3512, 1
    %v3656 = vsel %vm1958, %v3654, %v3655
    %v3657 = vrot.slane %v3513, 1
    %v3658 = vrot.slane %v3515, 1
    %v3659 = vsel %vm1958, %v3657, %v3658
    %v3660 = vrot.slane %v3514, 1
    %v3661 = vrot.slane %v3516, 1
    %v3662 = vsel %vm1958, %v3660, %v3661
    %v3663 = vrot.slane %v3517, 1
    %v3664 = vrot.slane %v3519, 1
    %v3665 = vsel %vm1958, %v3663, %v3664
    %v3666 = vrot.slane %v3518, 1
    %v3667 = vrot.slane %v3520, 1
    %v3668 = vsel %vm1958, %v3666, %v3667
    %v3669 = vrot.slane %v3521, 1
    %v3670 = vrot.slane %v3523, 1
    %v3671 = vsel %vm1958, %v3669, %v3670
    %v3672 = vrot.slane %v3522, 1
    %v3673 = vrot.slane %v3524, 1
    %v3674 = vsel %vm1958, %v3672, %v3673
    %v3675 = vrot.slane %v3525, 1
    %v3676 = vrot.slane %v3527, 1
    %v3677 = vsel %vm1958, %v3675, %v3676
    %v3678 = vrot.slane %v3526, 1
    %v3679 = vrot.slane %v3528, 1
    %v3680 = vsel %vm1958, %v3678, %v3679
    %v3681 = vrot.slane %v3529, 1
    %v3682 = vrot.slane %v3531, 1
    %v3683 = vsel %vm1958, %v3681, %v3682
    %v3684 = vrot.slane %v3530, 1
    %v3685 = vrot.slane %v3532, 1
    %v3686 = vsel %vm1958, %v3684, %v3685
    %v3687 = vrot.slane %v3533, 1
    %v3688 = vrot.slane %v3535, 1
    %v3689 = vsel %vm1958, %v3687, %v3688
    %v3690 = vrot.slane %v3534, 1
    %v3691 = vrot.slane %v3536, 1
    %v3692 = vsel %vm1958, %v3690, %v3691
    %v3693 = vrot.slane %v3537, 1
    %v3694 = vrot.slane %v3539, 1
    %v3695 = vsel %vm1958, %v3693, %v3694
    %v3696 = vrot.slane %v3538, 1
    %v3697 = vrot.slane %v3540, 1
    %v3698 = vsel %vm1958, %v3696, %v3697
    %v3699 = vrot.slane %v3541, 1
    %v3700 = vrot.slane %v3543, 1
    %v3701 = vsel %vm1958, %v3699, %v3700
    %v3702 = vrot.slane %v3542, 1
    %v3703 = vrot.slane %v3544, 1
    %v3704 = vsel %vm1958, %v3702, %v3703
    %v3737 = vadd.f32 %v3377, %v3611
    %v3738 = vadd.f32 %v3378, %v3614
    %v3739 = vadd.f32 %v3379, %v3617
    %v3740 = vadd.f32 %v3380, %v3620
    %v3741 = vadd.f32 %v3381, %v3623
    %v3742 = vadd.f32 %v3382, %v3626
    %v3743 = vadd.f32 %v3383, %v3629
    %v3744 = vadd.f32 %v3384, %v3632
    %v3745 = vadd.f32 %v3385, %v3635
    %v3746 = vadd.f32 %v3386, %v3638
    %v3747 = vadd.f32 %v3387, %v3641
    %v3748 = vadd.f32 %v3388, %v3644
    %v3749 = vadd.f32 %v3389, %v3647
    %v3750 = vadd.f32 %v3390, %v3650
    %v3751 = vadd.f32 %v3391, %v3653
    %v3752 = vadd.f32 %v3392, %v3656
    %v3753 = vadd.f32 %v3393, %v3659
    %v3754 = vadd.f32 %v3394, %v3662
    %v3755 = vadd.f32 %v3395, %v3665
    %v3756 = vadd.f32 %v3396, %v3668
    %v3757 = vadd.f32 %v3397, %v3671
    %v3758 = vadd.f32 %v3398, %v3674
    %v3759 = vadd.f32 %v3399, %v3677
    %v3760 = vadd.f32 %v3400, %v3680
    %v3761 = vadd.f32 %v3401, %v3683
    %v3762 = vadd.f32 %v3402, %v3686
    %v3763 = vadd.f32 %v3403, %v3689
    %v3764 = vadd.f32 %v3404, %v3692
    %v3765 = vadd.f32 %v3405, %v3695
    %v3766 = vadd.f32 %v3406, %v3698
    %v3767 = vadd.f32 %v3407, %v3701
    %v3768 = vadd.f32 %v3408, %v3704
    %v3769 = vld [vmem:[%s3304] sm:$0xfc]
    %v3770 = vld [vmem:[%s3304 + $0x8] sm:$0xfc]
    %v3771 = vld [vmem:[%s3304 + $0x10] sm:$0x3]
    %v3772 = vld [vmem:[%s3304 + $0x18] sm:$0x3]
    %v3773 = vld [vmem:[%s3304 + $0x20] sm:$0xfc]
    %v3774 = vld [vmem:[%s3304 + $0x28] sm:$0xfc]
    %v3775 = vld [vmem:[%s3304 + $0x30] sm:$0x3]
    %v3776 = vld [vmem:[%s3304 + $0x38] sm:$0x3]
    %v3777 = vld [vmem:[%s3304 + $0x40] sm:$0xfc]
    %v3778 = vld [vmem:[%s3304 + $0x48] sm:$0xfc]
    %v3779 = vld [vmem:[%s3304 + $0x50] sm:$0x3]
    %v3780 = vld [vmem:[%s3304 + $0x58] sm:$0x3]
    %v3781 = vld [vmem:[%s3304 + $0x60] sm:$0xfc]
    %v3782 = vld [vmem:[%s3304 + $0x68] sm:$0xfc]
    %v3783 = vld [vmem:[%s3304 + $0x70] sm:$0x3]
    %v3784 = vld [vmem:[%s3304 + $0x78] sm:$0x3]
    %v3785 = vld [vmem:[%s3304 + $0x80] sm:$0xfc]
    %v3786 = vld [vmem:[%s3304 + $0x88] sm:$0xfc]
    %v3787 = vld [vmem:[%s3304 + $0x90] sm:$0x3]
    %v3788 = vld [vmem:[%s3304 + $0x98] sm:$0x3]
    %v3789 = vld [vmem:[%s3304 + $0xa0] sm:$0xfc]
    %v3790 = vld [vmem:[%s3304 + $0xa8] sm:$0xfc]
    %v3791 = vld [vmem:[%s3304 + $0xb0] sm:$0x3]
    %v3792 = vld [vmem:[%s3304 + $0xb8] sm:$0x3]
    %v3793 = vld [vmem:[%s3304 + $0xc0] sm:$0xfc]
    %v3794 = vld [vmem:[%s3304 + $0xc8] sm:$0xfc]
    %v3795 = vld [vmem:[%s3304 + $0xd0] sm:$0x3]
    %v3796 = vld [vmem:[%s3304 + $0xd8] sm:$0x3]
    %v3797 = vld [vmem:[%s3304 + $0xe0] sm:$0xfc]
    %v3798 = vld [vmem:[%s3304 + $0xe8] sm:$0xfc]
    %v3799 = vld [vmem:[%s3304 + $0xf0] sm:$0x3]
    %v3800 = vld [vmem:[%s3304 + $0xf8] sm:$0x3]
    %v3801 = vld [vmem:[%s3304 + $0x140] sm:$0xfc]
    %v3802 = vld [vmem:[%s3304 + $0x148] sm:$0xfc]
    %v3803 = vld [vmem:[%s3304 + $0x150] sm:$0x3]
    %v3804 = vld [vmem:[%s3304 + $0x158] sm:$0x3]
    %v3805 = vld [vmem:[%s3304 + $0x160] sm:$0xfc]
    %v3806 = vld [vmem:[%s3304 + $0x168] sm:$0xfc]
    %v3807 = vld [vmem:[%s3304 + $0x170] sm:$0x3]
    %v3808 = vld [vmem:[%s3304 + $0x178] sm:$0x3]
    %v3809 = vld [vmem:[%s3304 + $0x180] sm:$0xfc]
    %v3810 = vld [vmem:[%s3304 + $0x188] sm:$0xfc]
    %v3811 = vld [vmem:[%s3304 + $0x190] sm:$0x3]
    %v3812 = vld [vmem:[%s3304 + $0x198] sm:$0x3]
    %v3813 = vld [vmem:[%s3304 + $0x1a0] sm:$0xfc]
    %v3814 = vld [vmem:[%s3304 + $0x1a8] sm:$0xfc]
    %v3815 = vld [vmem:[%s3304 + $0x1b0] sm:$0x3]
    %v3816 = vld [vmem:[%s3304 + $0x1b8] sm:$0x3]
    %v3817 = vld [vmem:[%s3304 + $0x1c0] sm:$0xfc]
    %v3818 = vld [vmem:[%s3304 + $0x1c8] sm:$0xfc]
    %v3819 = vld [vmem:[%s3304 + $0x1d0] sm:$0x3]
    %v3820 = vld [vmem:[%s3304 + $0x1d8] sm:$0x3]
    %v3821 = vld [vmem:[%s3304 + $0x1e0] sm:$0xfc]
    %v3822 = vld [vmem:[%s3304 + $0x1e8] sm:$0xfc]
    %v3823 = vld [vmem:[%s3304 + $0x1f0] sm:$0x3]
    %v3824 = vld [vmem:[%s3304 + $0x1f8] sm:$0x3]
    %v3825 = vld [vmem:[%s3304 + $0x200] sm:$0xfc]
    %v3826 = vld [vmem:[%s3304 + $0x208] sm:$0xfc]
    %v3827 = vld [vmem:[%s3304 + $0x210] sm:$0x3]
    %v3828 = vld [vmem:[%s3304 + $0x218] sm:$0x3]
    %v3829 = vld [vmem:[%s3304 + $0x220] sm:$0xfc]
    %v3830 = vld [vmem:[%s3304 + $0x228] sm:$0xfc]
    %v3831 = vld [vmem:[%s3304 + $0x230] sm:$0x3]
    %v3832 = vld [vmem:[%s3304 + $0x238] sm:$0x3]
    %v3833 = vlaneseq
    %v3834 = vshrl.u32 %v3833, 7
    %v3835 = vsub.s32 0, %v3834
    %v3836 = vrot.slane %v1640, %v3835
    %v3837 = vlaneseq
    %v3838 = vshrl.u32 %v3837, 7
    %v3839 = vsub.s32 0, %v3838
    %v3840 = vrot.slane %v1641, %v3839
    %v3841 = vmul.f32 %v3769, %v3836
    %v3842 = vmul.f32 %v3770, %v3840
    %v3843 = vmul.f32 %v3771, %v3836
    %v3844 = vmul.f32 %v3772, %v3840
    %v3845 = vmul.f32 %v3773, %v3836
    %v3846 = vmul.f32 %v3774, %v3840
    %v3847 = vmul.f32 %v3775, %v3836
    %v3848 = vmul.f32 %v3776, %v3840
    %v3849 = vmul.f32 %v3777, %v3836
    %v3850 = vmul.f32 %v3778, %v3840
    %v3851 = vmul.f32 %v3779, %v3836
    %v3852 = vmul.f32 %v3780, %v3840
    %v3853 = vmul.f32 %v3781, %v3836
    %v3854 = vmul.f32 %v3782, %v3840
    %v3855 = vmul.f32 %v3783, %v3836
    %v3856 = vmul.f32 %v3784, %v3840
    %v3857 = vmul.f32 %v3785, %v3836
    %v3858 = vmul.f32 %v3786, %v3840
    %v3859 = vmul.f32 %v3787, %v3836
    %v3860 = vmul.f32 %v3788, %v3840
    %v3861 = vmul.f32 %v3789, %v3836
    %v3862 = vmul.f32 %v3790, %v3840
    %v3863 = vmul.f32 %v3791, %v3836
    %v3864 = vmul.f32 %v3792, %v3840
    %v3865 = vmul.f32 %v3793, %v3836
    %v3866 = vmul.f32 %v3794, %v3840
    %v3867 = vmul.f32 %v3795, %v3836
    %v3868 = vmul.f32 %v3796, %v3840
    %v3869 = vmul.f32 %v3797, %v3836
    %v3870 = vmul.f32 %v3798, %v3840
    %v3871 = vmul.f32 %v3799, %v3836
    %v3872 = vmul.f32 %v3800, %v3840
    %v3873 = vmul.f32 %v3801, %v3836
    %v3874 = vmul.f32 %v3802, %v3840
    %v3875 = vmul.f32 %v3803, %v3836
    %v3876 = vmul.f32 %v3804, %v3840
    %v3877 = vmul.f32 %v3805, %v3836
    %v3878 = vmul.f32 %v3806, %v3840
    %v3879 = vmul.f32 %v3807, %v3836
    %v3880 = vmul.f32 %v3808, %v3840
    %v3881 = vmul.f32 %v3809, %v3836
    %v3882 = vmul.f32 %v3810, %v3840
    %v3883 = vmul.f32 %v3811, %v3836
    %v3884 = vmul.f32 %v3812, %v3840
    %v3885 = vmul.f32 %v3813, %v3836
    %v3886 = vmul.f32 %v3814, %v3840
    %v3887 = vmul.f32 %v3815, %v3836
    %v3888 = vmul.f32 %v3816, %v3840
    %v3889 = vmul.f32 %v3817, %v3836
    %v3890 = vmul.f32 %v3818, %v3840
    %v3891 = vmul.f32 %v3819, %v3836
    %v3892 = vmul.f32 %v3820, %v3840
    %v3893 = vmul.f32 %v3821, %v3836
    %v3894 = vmul.f32 %v3822, %v3840
    %v3895 = vmul.f32 %v3823, %v3836
    %v3896 = vmul.f32 %v3824, %v3840
    %v3897 = vmul.f32 %v3825, %v3836
    %v3898 = vmul.f32 %v3826, %v3840
    %v3899 = vmul.f32 %v3827, %v3836
    %v3900 = vmul.f32 %v3828, %v3840
    %v3901 = vmul.f32 %v3829, %v3836
    %v3902 = vmul.f32 %v3830, %v3840
    %v3903 = vmul.f32 %v3831, %v3836
    %v3904 = vmul.f32 %v3832, %v3840
    %v3969 = vrot.slane %v3841, 2
    %v3970 = vrot.slane %v3843, 2
    %v3971 = vsel %vm2319, %v3969, %v3970
    %v3972 = vrot.slane %v3842, 2
    %v3973 = vrot.slane %v3844, 2
    %v3974 = vsel %vm2319, %v3972, %v3973
    %v3975 = vrot.slane %v3845, 2
    %v3976 = vrot.slane %v3847, 2
    %v3977 = vsel %vm2319, %v3975, %v3976
    %v3978 = vrot.slane %v3846, 2
    %v3979 = vrot.slane %v3848, 2
    %v3980 = vsel %vm2319, %v3978, %v3979
    %v3981 = vrot.slane %v3849, 2
    %v3982 = vrot.slane %v3851, 2
    %v3983 = vsel %vm2319, %v3981, %v3982
    %v3984 = vrot.slane %v3850, 2
    %v3985 = vrot.slane %v3852, 2
    %v3986 = vsel %vm2319, %v3984, %v3985
    %v3987 = vrot.slane %v3853, 2
    %v3988 = vrot.slane %v3855, 2
    %v3989 = vsel %vm2319, %v3987, %v3988
    %v3990 = vrot.slane %v3854, 2
    %v3991 = vrot.slane %v3856, 2
    %v3992 = vsel %vm2319, %v3990, %v3991
    %v3993 = vrot.slane %v3857, 2
    %v3994 = vrot.slane %v3859, 2
    %v3995 = vsel %vm2319, %v3993, %v3994
    %v3996 = vrot.slane %v3858, 2
    %v3997 = vrot.slane %v3860, 2
    %v3998 = vsel %vm2319, %v3996, %v3997
    %v3999 = vrot.slane %v3861, 2
    %v4000 = vrot.slane %v3863, 2
    %v4001 = vsel %vm2319, %v3999, %v4000
    %v4002 = vrot.slane %v3862, 2
    %v4003 = vrot.slane %v3864, 2
    %v4004 = vsel %vm2319, %v4002, %v4003
    %v4005 = vrot.slane %v3865, 2
    %v4006 = vrot.slane %v3867, 2
    %v4007 = vsel %vm2319, %v4005, %v4006
    %v4008 = vrot.slane %v3866, 2
    %v4009 = vrot.slane %v3868, 2
    %v4010 = vsel %vm2319, %v4008, %v4009
    %v4011 = vrot.slane %v3869, 2
    %v4012 = vrot.slane %v3871, 2
    %v4013 = vsel %vm2319, %v4011, %v4012
    %v4014 = vrot.slane %v3870, 2
    %v4015 = vrot.slane %v3872, 2
    %v4016 = vsel %vm2319, %v4014, %v4015
    %v4017 = vrot.slane %v3873, 2
    %v4018 = vrot.slane %v3875, 2
    %v4019 = vsel %vm2319, %v4017, %v4018
    %v4020 = vrot.slane %v3874, 2
    %v4021 = vrot.slane %v3876, 2
    %v4022 = vsel %vm2319, %v4020, %v4021
    %v4023 = vrot.slane %v3877, 2
    %v4024 = vrot.slane %v3879, 2
    %v4025 = vsel %vm2319, %v4023, %v4024
    %v4026 = vrot.slane %v3878, 2
    %v4027 = vrot.slane %v3880, 2
    %v4028 = vsel %vm2319, %v4026, %v4027
    %v4029 = vrot.slane %v3881, 2
    %v4030 = vrot.slane %v3883, 2
    %v4031 = vsel %vm2319, %v4029, %v4030
    %v4032 = vrot.slane %v3882, 2
    %v4033 = vrot.slane %v3884, 2
    %v4034 = vsel %vm2319, %v4032, %v4033
    %v4035 = vrot.slane %v3885, 2
    %v4036 = vrot.slane %v3887, 2
    %v4037 = vsel %vm2319, %v4035, %v4036
    %v4038 = vrot.slane %v3886, 2
    %v4039 = vrot.slane %v3888, 2
    %v4040 = vsel %vm2319, %v4038, %v4039
    %v4041 = vrot.slane %v3889, 2
    %v4042 = vrot.slane %v3891, 2
    %v4043 = vsel %vm2319, %v4041, %v4042
    %v4044 = vrot.slane %v3890, 2
    %v4045 = vrot.slane %v3892, 2
    %v4046 = vsel %vm2319, %v4044, %v4045
    %v4047 = vrot.slane %v3893, 2
    %v4048 = vrot.slane %v3895, 2
    %v4049 = vsel %vm2319, %v4047, %v4048
    %v4050 = vrot.slane %v3894, 2
    %v4051 = vrot.slane %v3896, 2
    %v4052 = vsel %vm2319, %v4050, %v4051
    %v4053 = vrot.slane %v3897, 2
    %v4054 = vrot.slane %v3899, 2
    %v4055 = vsel %vm2319, %v4053, %v4054
    %v4056 = vrot.slane %v3898, 2
    %v4057 = vrot.slane %v3900, 2
    %v4058 = vsel %vm2319, %v4056, %v4057
    %v4059 = vrot.slane %v3901, 2
    %v4060 = vrot.slane %v3903, 2
    %v4061 = vsel %vm2319, %v4059, %v4060
    %v4062 = vrot.slane %v3902, 2
    %v4063 = vrot.slane %v3904, 2
    %v4064 = vsel %vm2319, %v4062, %v4063
    %v4097 = vadd.f32 %v3737, %v3971
    %v4098 = vadd.f32 %v3738, %v3974
    %v4099 = vadd.f32 %v3739, %v3977
    %v4100 = vadd.f32 %v3740, %v3980
    %v4101 = vadd.f32 %v3741, %v3983
    %v4102 = vadd.f32 %v3742, %v3986
    %v4103 = vadd.f32 %v3743, %v3989
    %v4104 = vadd.f32 %v3744, %v3992
    %v4105 = vadd.f32 %v3745, %v3995
    %v4106 = vadd.f32 %v3746, %v3998
    %v4107 = vadd.f32 %v3747, %v4001
    %v4108 = vadd.f32 %v3748, %v4004
    %v4109 = vadd.f32 %v3749, %v4007
    %v4110 = vadd.f32 %v3750, %v4010
    %v4111 = vadd.f32 %v3751, %v4013
    %v4112 = vadd.f32 %v3752, %v4016
    %v4113 = vadd.f32 %v3753, %v4019
    %v4114 = vadd.f32 %v3754, %v4022
    %v4115 = vadd.f32 %v3755, %v4025
    %v4116 = vadd.f32 %v3756, %v4028
    %v4117 = vadd.f32 %v3757, %v4031
    %v4118 = vadd.f32 %v3758, %v4034
    %v4119 = vadd.f32 %v3759, %v4037
    %v4120 = vadd.f32 %v3760, %v4040
    %v4121 = vadd.f32 %v3761, %v4043
    %v4122 = vadd.f32 %v3762, %v4046
    %v4123 = vadd.f32 %v3763, %v4049
    %v4124 = vadd.f32 %v3764, %v4052
    %v4125 = vadd.f32 %v3765, %v4055
    %v4126 = vadd.f32 %v3766, %v4058
    %v4127 = vadd.f32 %v3767, %v4061
    %v4128 = vadd.f32 %v3768, %v4064
    %v4129 = vpack.c.bf16 %v4099, %v4097
    %v4130 = vpack.c.bf16 %v4100, %v4098
    %v4131 = vpack.c.bf16 %v4103, %v4101
    %v4132 = vpack.c.bf16 %v4104, %v4102
    %v4133 = vpack.c.bf16 %v4107, %v4105
    %v4134 = vpack.c.bf16 %v4108, %v4106
    %v4135 = vpack.c.bf16 %v4111, %v4109
    %v4136 = vpack.c.bf16 %v4112, %v4110
    %v4137 = vpack.c.bf16 %v4115, %v4113
    %v4138 = vpack.c.bf16 %v4116, %v4114
    %v4139 = vpack.c.bf16 %v4119, %v4117
    %v4140 = vpack.c.bf16 %v4120, %v4118
    %v4141 = vpack.c.bf16 %v4123, %v4121
    %v4142 = vpack.c.bf16 %v4124, %v4122
    %v4143 = vpack.c.bf16 %v4127, %v4125
    %v4144 = vpack.c.bf16 %v4128, %v4126
    %v4145 = vld [vmem:[#allocation21] sm:$0xff]
    %v4146 = vld [vmem:[#allocation21 + $0x8] sm:$0xff]
    %v4147 = vld [vmem:[#allocation21 + $0x10] sm:$0xff]
    %v4148 = vld [vmem:[#allocation21 + $0x18] sm:$0xff]
    %v4149 = vld [vmem:[#allocation21 + $0x20] sm:$0xff]
    %v4150 = vld [vmem:[#allocation21 + $0x28] sm:$0xff]
    %v4151 = vld [vmem:[#allocation21 + $0x30] sm:$0xff]
    %v4152 = vld [vmem:[#allocation21 + $0x38] sm:$0xff]
    %v4153 = vld [vmem:[#allocation21 + $0x40] sm:$0xff]
    %v4154 = vld [vmem:[#allocation21 + $0x48] sm:$0xff]
    %v4155 = vld [vmem:[#allocation21 + $0x50] sm:$0xff]
    %v4156 = vld [vmem:[#allocation21 + $0x58] sm:$0xff]
    %v4157 = vld [vmem:[#allocation21 + $0x60] sm:$0xff]
    %v4158 = vld [vmem:[#allocation21 + $0x68] sm:$0xff]
    %v4159 = vld [vmem:[#allocation21 + $0x70] sm:$0xff]
    %v4160 = vld [vmem:[#allocation21 + $0x78] sm:$0xff]
    %v4161 = vld [vmem:[#allocation21 + $0x80] sm:$0xff]
    %v4162 = vld [vmem:[#allocation21 + $0x88] sm:$0xff]
    %v4163 = vld [vmem:[#allocation21 + $0x90] sm:$0xff]
    %v4164 = vld [vmem:[#allocation21 + $0x98] sm:$0xff]
    %v4165 = vld [vmem:[#allocation21 + $0xa0] sm:$0xff]
    %v4166 = vld [vmem:[#allocation21 + $0xa8] sm:$0xff]
    %v4167 = vld [vmem:[#allocation21 + $0xb0] sm:$0xff]
    %v4168 = vld [vmem:[#allocation21 + $0xb8] sm:$0xff]
    %v4169 = vld [vmem:[#allocation21 + $0xc0] sm:$0xff]
    %v4170 = vld [vmem:[#allocation21 + $0xc8] sm:$0xff]
    %v4171 = vld [vmem:[#allocation21 + $0xd0] sm:$0xff]
    %v4172 = vld [vmem:[#allocation21 + $0xd8] sm:$0xff]
    %v4173 = vld [vmem:[#allocation21 + $0xe0] sm:$0xff]
    %v4174 = vld [vmem:[#allocation21 + $0xe8] sm:$0xff]
    %v4175 = vld [vmem:[#allocation21 + $0xf0] sm:$0xff]
    %v4176 = vld [vmem:[#allocation21 + $0xf8] sm:$0xff]
    %v4177 = vld [vmem:[#allocation22] sm:$0x3]
    %v4179 = vlaneseq
    %v4180 = vshrl.u32 %v4179, 7
    %v4181 = vsub.s32 0, %v4180
    %v4182 = vrot.slane %v4177, %v4181
    %v4183 = vlaneseq
    %v4184 = vshrl.u32 %v4183, 7
    %v4185 = vsub.s32 1, %v4184
    %v4186 = vrot.slane %v4177, %v4185
    %v4221 = vunpack.c.l.b16 %v4145
    %v4222 = vunpack.c.h.b16 %v4145
    %v4223 = vunpack.c.l.b16 %v4146
    %v4224 = vunpack.c.h.b16 %v4146
    %v4225 = vunpack.c.l.b16 %v4147
    %v4226 = vunpack.c.h.b16 %v4147
    %v4227 = vunpack.c.l.b16 %v4148
    %v4228 = vunpack.c.h.b16 %v4148
    %v4229 = vunpack.c.l.b16 %v4149
    %v4230 = vunpack.c.h.b16 %v4149
    %v4231 = vunpack.c.l.b16 %v4150
    %v4232 = vunpack.c.h.b16 %v4150
    %v4233 = vunpack.c.l.b16 %v4151
    %v4234 = vunpack.c.h.b16 %v4151
    %v4235 = vunpack.c.l.b16 %v4152
    %v4236 = vunpack.c.h.b16 %v4152
    %v4237 = vunpack.c.l.b16 %v4153
    %v4238 = vunpack.c.h.b16 %v4153
    %v4239 = vunpack.c.l.b16 %v4154
    %v4240 = vunpack.c.h.b16 %v4154
    %v4241 = vunpack.c.l.b16 %v4155
    %v4242 = vunpack.c.h.b16 %v4155
    %v4243 = vunpack.c.l.b16 %v4156
    %v4244 = vunpack.c.h.b16 %v4156
    %v4245 = vunpack.c.l.b16 %v4157
    %v4246 = vunpack.c.h.b16 %v4157
    %v4247 = vunpack.c.l.b16 %v4158
    %v4248 = vunpack.c.h.b16 %v4158
    %v4249 = vunpack.c.l.b16 %v4159
    %v4250 = vunpack.c.h.b16 %v4159
    %v4251 = vunpack.c.l.b16 %v4160
    %v4252 = vunpack.c.h.b16 %v4160
    %v4253 = vunpack.c.l.b16 %v4161
    %v4254 = vunpack.c.h.b16 %v4161
    %v4255 = vunpack.c.l.b16 %v4162
    %v4256 = vunpack.c.h.b16 %v4162
    %v4257 = vunpack.c.l.b16 %v4163
    %v4258 = vunpack.c.h.b16 %v4163
    %v4259 = vunpack.c.l.b16 %v4164
    %v4260 = vunpack.c.h.b16 %v4164
    %v4261 = vunpack.c.l.b16 %v4165
    %v4262 = vunpack.c.h.b16 %v4165
    %v4263 = vunpack.c.l.b16 %v4166
    %v4264 = vunpack.c.h.b16 %v4166
    %v4265 = vunpack.c.l.b16 %v4167
    %v4266 = vunpack.c.h.b16 %v4167
    %v4267 = vunpack.c.l.b16 %v4168
    %v4268 = vunpack.c.h.b16 %v4168
    %v4269 = vunpack.c.l.b16 %v4169
    %v4270 = vunpack.c.h.b16 %v4169
    %v4271 = vunpack.c.l.b16 %v4170
    %v4272 = vunpack.c.h.b16 %v4170
    %v4273 = vunpack.c.l.b16 %v4171
    %v4274 = vunpack.c.h.b16 %v4171
    %v4275 = vunpack.c.l.b16 %v4172
    %v4276 = vunpack.c.h.b16 %v4172
    %v4277 = vunpack.c.l.b16 %v4173
    %v4278 = vunpack.c.h.b16 %v4173
    %v4279 = vunpack.c.l.b16 %v4174
    %v4280 = vunpack.c.h.b16 %v4174
    %v4281 = vunpack.c.l.b16 %v4175
    %v4282 = vunpack.c.h.b16 %v4175
    %v4283 = vunpack.c.l.b16 %v4176
    %v4284 = vunpack.c.h.b16 %v4176
    %v4285 = vpack.c.b16 %v4223, %v4221
    %v4286 = vpack.c.b16 %v4224, %v4222
    %v4287 = vpack.c.b16 %v4227, %v4225
    %v4288 = vpack.c.b16 %v4228, %v4226
    %v4289 = vpack.c.b16 %v4231, %v4229
    %v4290 = vpack.c.b16 %v4232, %v4230
    %v4291 = vpack.c.b16 %v4235, %v4233
    %v4292 = vpack.c.b16 %v4236, %v4234
    %v4293 = vpack.c.b16 %v4239, %v4237
    %v4294 = vpack.c.b16 %v4240, %v4238
    %v4295 = vpack.c.b16 %v4243, %v4241
    %v4296 = vpack.c.b16 %v4244, %v4242
    %v4297 = vpack.c.b16 %v4247, %v4245
    %v4298 = vpack.c.b16 %v4248, %v4246
    %v4299 = vpack.c.b16 %v4251, %v4249
    %v4300 = vpack.c.b16 %v4252, %v4250
    %v4301 = vpack.c.b16 %v4255, %v4253
    %v4302 = vpack.c.b16 %v4256, %v4254
    %v4303 = vpack.c.b16 %v4259, %v4257
    %v4304 = vpack.c.b16 %v4260, %v4258
    %v4305 = vpack.c.b16 %v4263, %v4261
    %v4306 = vpack.c.b16 %v4264, %v4262
    %v4307 = vpack.c.b16 %v4267, %v4265
    %v4308 = vpack.c.b16 %v4268, %v4266
    %v4309 = vpack.c.b16 %v4271, %v4269
    %v4310 = vpack.c.b16 %v4272, %v4270
    %v4311 = vpack.c.b16 %v4275, %v4273
    %v4312 = vpack.c.b16 %v4276, %v4274
    %v4313 = vpack.c.b16 %v4279, %v4277
    %v4314 = vpack.c.b16 %v4280, %v4278
    %v4315 = vpack.c.b16 %v4283, %v4281
    %v4316 = vpack.c.b16 %v4284, %v4282
    %4349 = vmatprep.subr.bf16.mxu0 %v4286
    %4350 = vmatpush1.bf16.msra.mxu0 %v4285
    %4351 = vmatprep.subr.bf16.mxu0 %v4288
    %4352 = vmatpush1.bf16.msra.mxu0 %v4287
    %4353 = vmatprep.subr.bf16.mxu0 %v4290
    %4354 = vmatpush1.bf16.msra.mxu0 %v4289
    %4355 = vmatprep.subr.bf16.mxu0 %v4292
    %4356 = vmatpush1.bf16.msra.mxu0 %v4291
    %4357 = vmatprep.subr.bf16.mxu0 %v4294
    %4358 = vmatpush1.bf16.msra.mxu0 %v4293
    %4359 = vmatprep.subr.bf16.mxu0 %v4296
    %4360 = vmatpush1.bf16.msra.mxu0 %v4295
    %4361 = vmatprep.subr.bf16.mxu0 %v4298
    %4362 = vmatpush1.bf16.msra.mxu0 %v4297
    %4363 = vmatprep.subr.bf16.mxu0 %v4300
    %4364 = vmatpush1.bf16.msra.mxu0 %v4299
    %4365 = vmatprep.subr.bf16.mxu0 %v4302
    %4366 = vmatpush1.bf16.msra.mxu0 %v4301
    %4367 = vmatprep.subr.bf16.mxu0 %v4304
    %4368 = vmatpush1.bf16.msra.mxu0 %v4303
    %4369 = vmatprep.subr.bf16.mxu0 %v4306
    %4370 = vmatpush1.bf16.msra.mxu0 %v4305
    %4371 = vmatprep.subr.bf16.mxu0 %v4308
    %4372 = vmatpush1.bf16.msra.mxu0 %v4307
    %4373 = vmatprep.subr.bf16.mxu0 %v4310
    %4374 = vmatpush1.bf16.msra.mxu0 %v4309
    %4375 = vmatprep.subr.bf16.mxu0 %v4312
    %4376 = vmatpush1.bf16.msra.mxu0 %v4311
    %4377 = vmatprep.subr.bf16.mxu0 %v4314
    %4378 = vmatpush1.bf16.msra.mxu0 %v4313
    %4379 = vmatprep.subr.bf16.mxu0 %v4316
    %4380 = vmatpush1.bf16.msra.mxu0 %v4315
    %4381 = vmatprep.mubr.bf16.mxu0 %v4130
    %4382 = vmatmul.mubr.bf16.gmra.mrb[0].mxu0 %v4129
    %v4383 = vpop.f32.mrb[0].mxu0
    %v4384 = vadd.f32 %v4182, %v4383
    %v4385 = vpop.f32.mrb[0].mxu0
    %v4386 = vadd.f32 %v4186, %v4385
    %v4387 = vpop.f32.mrb[0].mxu0
    %v4388 = vadd.f32 %v4182, %v4387
    %v4389 = vpop.f32.mrb[0].mxu0
    %v4390 = vadd.f32 %v4186, %v4389
    %4391 = vmatprep.mubr.bf16.mxu0 %v4132
    %4392 = vmatmul.mubr.bf16.gmra.mrb[0].mxu0 %v4131
    %v4393 = vpop.f32.mrb[0].mxu0
    %v4394 = vadd.f32 %v4182, %v4393
    %v4395 = vpop.f32.mrb[0].mxu0
    %v4396 = vadd.f32 %v4186, %v4395
    %v4397 = vpop.f32.mrb[0].mxu0
    %v4398 = vadd.f32 %v4182, %v4397
    %v4399 = vpop.f32.mrb[0].mxu0
    %v4400 = vadd.f32 %v4186, %v4399
    %4401 = vmatprep.mubr.bf16.mxu0 %v4134
    %4402 = vmatmul.mubr.bf16.gmra.mrb[0].mxu0 %v4133
    %v4403 = vpop.f32.mrb[0].mxu0
    %v4404 = vadd.f32 %v4182, %v4403
    %v4405 = vpop.f32.mrb[0].mxu0
    %v4406 = vadd.f32 %v4186, %v4405
    %v4407 = vpop.f32.mrb[0].mxu0
    %v4408 = vadd.f32 %v4182, %v4407
    %v4409 = vpop.f32.mrb[0].mxu0
    %v4410 = vadd.f32 %v4186, %v4409
    %4411 = vmatprep.mubr.bf16.mxu0 %v4136
    %4412 = vmatmul.mubr.bf16.gmra.mrb[0].mxu0 %v4135
    %v4413 = vpop.f32.mrb[0].mxu0
    %v4414 = vadd.f32 %v4182, %v4413
    %v4415 = vpop.f32.mrb[0].mxu0
    %v4416 = vadd.f32 %v4186, %v4415
    %v4417 = vpop.f32.mrb[0].mxu0
    %v4418 = vadd.f32 %v4182, %v4417
    %v4419 = vpop.f32.mrb[0].mxu0
    %v4420 = vadd.f32 %v4186, %v4419
    %4421 = vmatprep.mubr.bf16.mxu0 %v4138
    %4422 = vmatmul.mubr.bf16.gmra.mrb[0].mxu0 %v4137
    %v4423 = vpop.f32.mrb[0].mxu0
    %v4424 = vadd.f32 %v4182, %v4423
    %v4425 = vpop.f32.mrb[0].mxu0
    %v4426 = vadd.f32 %v4186, %v4425
    %v4427 = vpop.f32.mrb[0].mxu0
    %v4428 = vadd.f32 %v4182, %v4427
    %v4429 = vpop.f32.mrb[0].mxu0
    %v4430 = vadd.f32 %v4186, %v4429
    %4431 = vmatprep.mubr.bf16.mxu0 %v4140
    %4432 = vmatmul.mubr.bf16.gmra.mrb[0].mxu0 %v4139
    %v4433 = vpop.f32.mrb[0].mxu0
    %v4434 = vadd.f32 %v4182, %v4433
    %v4435 = vpop.f32.mrb[0].mxu0
    %v4436 = vadd.f32 %v4186, %v4435
    %v4437 = vpop.f32.mrb[0].mxu0
    %v4438 = vadd.f32 %v4182, %v4437
    %v4439 = vpop.f32.mrb[0].mxu0
    %v4440 = vadd.f32 %v4186, %v4439
    %4441 = vmatprep.mubr.bf16.mxu0 %v4142
    %4442 = vmatmul.mubr.bf16.gmra.mrb[0].mxu0 %v4141
    %v4443 = vpop.f32.mrb[0].mxu0
    %v4444 = vadd.f32 %v4182, %v4443
    %v4445 = vpop.f32.mrb[0].mxu0
    %v4446 = vadd.f32 %v4186, %v4445
    %v4447 = vpop.f32.mrb[0].mxu0
    %v4448 = vadd.f32 %v4182, %v4447
    %v4449 = vpop.f32.mrb[0].mxu0
    %v4450 = vadd.f32 %v4186, %v4449
    %4451 = vmatprep.mubr.bf16.mxu0 %v4144
    %4452 = vmatmul.mubr.bf16.gmra.mrb[0].mxu0 %v4143
    %v4453 = vpop.f32.mrb[0].mxu0
    %v4454 = vadd.f32 %v4182, %v4453
    %v4455 = vpop.f32.mrb[0].mxu0
    %v4456 = vadd.f32 %v4186, %v4455
    %v4457 = vpop.f32.mrb[0].mxu0
    %v4458 = vadd.f32 %v4182, %v4457
    %v4459 = vpop.f32.mrb[0].mxu0
    %v4460 = vadd.f32 %v4186, %v4459
    %4461 = vdwg.mxu0
    %4462 = vst [vmem:[#allocation25] sm:$0xff] %v4384
    %4463 = vst [vmem:[#allocation25 + $0x8] sm:$0xff] %v4386
    %4464 = vst [vmem:[#allocation25 + $0x10] sm:$0xff] %v4388
    %4465 = vst [vmem:[#allocation25 + $0x18] sm:$0xff] %v4390
    %4466 = vst [vmem:[#allocation25 + $0x20] sm:$0xff] %v4394
    %4467 = vst [vmem:[#allocation25 + $0x28] sm:$0xff] %v4396
    %4468 = vst [vmem:[#allocation25 + $0x30] sm:$0xff] %v4398
    %4469 = vst [vmem:[#allocation25 + $0x38] sm:$0xff] %v4400
    %4470 = vst [vmem:[#allocation25 + $0x40] sm:$0xff] %v4404
    %4471 = vst [vmem:[#allocation25 + $0x48] sm:$0xff] %v4406
    %4472 = vst [vmem:[#allocation25 + $0x50] sm:$0xff] %v4408
    %4473 = vst [vmem:[#allocation25 + $0x58] sm:$0xff] %v4410
    %4474 = vst [vmem:[#allocation25 + $0x60] sm:$0xff] %v4414
    %4475 = vst [vmem:[#allocation25 + $0x68] sm:$0xff] %v4416
    %4476 = vst [vmem:[#allocation25 + $0x70] sm:$0xff] %v4418
    %4477 = vst [vmem:[#allocation25 + $0x78] sm:$0xff] %v4420
    %4478 = vst [vmem:[#allocation25 + $0x80] sm:$0xff] %v4424
    %4479 = vst [vmem:[#allocation25 + $0x88] sm:$0xff] %v4426
    %4480 = vst [vmem:[#allocation25 + $0x90] sm:$0xff] %v4428
    %4481 = vst [vmem:[#allocation25 + $0x98] sm:$0xff] %v4430
    %4482 = vst [vmem:[#allocation25 + $0xa0] sm:$0xff] %v4434
    %4483 = vst [vmem:[#allocation25 + $0xa8] sm:$0xff] %v4436
    %4484 = vst [vmem:[#allocation25 + $0xb0] sm:$0xff] %v4438
    %4485 = vst [vmem:[#allocation25 + $0xb8] sm:$0xff] %v4440
    %4486 = vst [vmem:[#allocation25 + $0xc0] sm:$0xff] %v4444
    %4487 = vst [vmem:[#allocation25 + $0xc8] sm:$0xff] %v4446
    %4488 = vst [vmem:[#allocation25 + $0xd0] sm:$0xff] %v4448
    %4489 = vst [vmem:[#allocation25 + $0xd8] sm:$0xff] %v4450
    %4490 = vst [vmem:[#allocation25 + $0xe0] sm:$0xff] %v4454
    %4491 = vst [vmem:[#allocation25 + $0xe8] sm:$0xff] %v4456
    %4492 = vst [vmem:[#allocation25 + $0xf0] sm:$0xff] %v4458
    %4493 = vst [vmem:[#allocation25 + $0xf8] sm:$0xff] %v4460
    // Predicated region
    $region106: #{feature_extractor_forward.1} parent=1 // pred_check
      _
    $region107: #{feature_extractor_forward.1} parent=1 // pred_check_branch
      %4495 = sbr.rel (0) target = $region109
    $region108: #{feature_extractor_forward.1} parent=1 // pred_region
      %s4497 = ssub.s32 2048, 2048
      %4498 = vsyncadd [#allocation6], %s4497
      %s4499 = sshll.u32 [#allocation24], 4
      %s4500 = int_to_ptr.vmem [resolvable:$true] %s4499
      %4505 = dma.vmem_to_hbm [thread:$0]  %s4500, 2048, %s14, [#allocation6], 128, 128, 8
    $region109: #{feature_extractor_forward.1} parent=1 // pred_fallthru
      _
    // Predicated region
    $region110: #{feature_extractor_forward.1} parent=1 // pred_check
      _
    $region111: #{feature_extractor_forward.1} parent=1 // pred_check_branch
      %4507 = sbr.rel (0) target = $region113
    $region112: #{feature_extractor_forward.1} parent=1 // pred_region
      %s4509 = ssub.s32 4096, 4096
      %4510 = vsyncadd [#allocation26], %s4509
      %s4511 = sshll.u32 [#allocation25], 4
      %s4512 = int_to_ptr.vmem [resolvable:$true] %s4511
      %4517 = dma.vmem_to_hbm [thread:$0]  %s4512, 4096, %s15, [#allocation26], 256, 256, 16
    $region113: #{feature_extractor_forward.1} parent=1 // pred_fallthru
      _
    // Predicated region
    $region114: #{feature_extractor_forward.1} parent=1 // pred_check
      _
    $region115: #{feature_extractor_forward.1} parent=1 // pred_check_branch
      %4519 = sbr.rel (0) target = $region117
    $region116: #{feature_extractor_forward.1} parent=1 // pred_region
      %4520 = dma.done [#allocation6], 2048
    $region117: #{feature_extractor_forward.1} parent=1 // pred_fallthru
      _
    // Predicated region
    $region118: #{feature_extractor_forward.1} parent=1 // pred_check
      _
    $region119: #{feature_extractor_forward.1} parent=1 // pred_check_branch
      %4522 = sbr.rel (0) target = $region121
    $region120: #{feature_extractor_forward.1} parent=1 // pred_region
      %4523 = dma.done [#allocation26], 4096
    $region121: #{feature_extractor_forward.1} parent=1 // pred_fallthru
      _
    %4524 = vsyncpa [#allocation5], 1
    %4525 = vsyncpa [#allocation8], 1
    %4526 = vsyncpa [#allocation11], 1
    %4527 = vsyncpa [#allocation14], 1
    %4528 = vsyncpa [#allocation17], 1
    %4529 = vsyncpa [#allocation20], 1
    %4530 = vsyncpa [#allocation23], 1
    %4531 = vsyncpa [#allocation6], 1
    %4532 = vsyncpa [#allocation26], 1

</llo_original>
